<compile_context>
chip_gen: v5e
topology: v5e:2x2
jax: 0.10.0
libtpu: 0.0.40
codegen_flags: <defaults>
</compile_context>

<pallas_src>
import functools

import numpy as np
import jax
import jax.numpy as jnp
from jax import lax
from jax.experimental import pallas as pl
from jax.experimental.pallas import tpu as pltpu

LANE = 128
SUBLANE = 8
VMEM_LIMIT = 48 * 1024 * 1024


def _round_up(x, m):
    return (x + m - 1) // m * m


# ---------------------------------------------------------------------------
# Shared depthwise 3x3 (BN folded) helper.
#
# Activation layout inside a block: (H+2, Wh, C) with valid pixels at rows
# [1, H+1) and cols [0, W); everything else is zero.  The left column halo is
# obtained "for free" through the wrap-around of pltpu.roll (the wrapped
# column is one of the zero pad columns >= W).
# ---------------------------------------------------------------------------
def _depthwise(x_ref, wdw_ref, H, pre_relu):
    Wh = x_ref.shape[2]
    acc = None
    for dy in range(3):
        rows = x_ref[0, pl.ds(dy, H), :, :].astype(jnp.float32)
        if pre_relu:
            rows = jnp.maximum(rows, 0.0)
        for dx in range(3):
            # want taps[w] = rows[w + dx - 1]  (zero outside the valid range)
            shift = (1 - dx) % Wh
            taps = rows if shift == 0 else pltpu.roll(rows, shift, axis=1)
            term = taps * wdw_ref[dy, dx, :]
            acc = term if acc is None else acc + term
    return acc  # (H, Wh, Cin) f32


# ---------------------------------------------------------------------------
# Generic SepConv kernel (BN1/BN2 folded, optional fused input/output ReLU).
# Used for SepConv1 (pre-relu) and SepConv3 (post-relu).
# ---------------------------------------------------------------------------
def sepconv_kernel(x_ref, wdw_ref, wpw_ref, bias_ref, out_ref, *,
                   H, W, pre_relu, post_relu):
    Wh = x_ref.shape[2]
    Cin = x_ref.shape[3]
    Cout = out_ref.shape[3]

    acc = _depthwise(x_ref, wdw_ref, H, pre_relu)
    z = jnp.dot(acc.astype(jnp.bfloat16).reshape(H * Wh, Cin), wpw_ref[...],
                preferred_element_type=jnp.float32)
    z = z + bias_ref[0]
    if post_relu:
        z = jnp.maximum(z, 0.0)
    z = z.reshape(H, Wh, Cout)

    # keep the padded columns exactly zero so the next stage's taps stay valid
    col = lax.broadcasted_iota(jnp.int32, (1, Wh, 1), 1)
    z = jnp.where(col < W, z, 0.0)

    out_ref[0, pl.ds(1, H)] = z.astype(out_ref.dtype)
    zrow = jnp.zeros((1, Wh, Cout), out_ref.dtype)
    out_ref[0, pl.ds(0, 1)] = zrow
    out_ref[0, pl.ds(H + 1, 1)] = zrow


# ---------------------------------------------------------------------------
# Fused SepConv2 kernel:
#   relu(x1) -> depthwise 3x3 -> pointwise 1x1 (BN folded)
#   -> 3x3 stride-2 max-pool (padding=1, -inf outside)
#   -> + BN(Conv1x1 stride-2 of the original input)        (residual shortcut)
# Stride-2 subsampling is a one-hot selection matmul (sel_ref) on the MXU.
# ---------------------------------------------------------------------------
def sepconv2_pool_add_kernel(x_ref, xs_ref, sel_ref, wdw_ref, wpw_ref,
                             bias_ref, ws_ref, bs_ref, out_ref, *,
                             H, W, H2, W2):
    Wh = x_ref.shape[2]
    Cin = x_ref.shape[3]
    Cout = out_ref.shape[3]
    W2h = out_ref.shape[2]
    Cin0 = xs_ref.shape[3]

    # SepConv2 (input relu fused, BN folded)
    acc = _depthwise(x_ref, wdw_ref, H, pre_relu=True)
    z = jnp.dot(acc.astype(jnp.bfloat16).reshape(H * Wh, Cin), wpw_ref[...],
                preferred_element_type=jnp.float32) + bias_ref[0]
    z = z.reshape(H, Wh, Cout)

    # full-resolution 3x3 neighbourhood max (finite "-inf" so the selection
    # matmul below never produces 0 * inf = NaN)
    NEG = jnp.float32(-1e30)
    col = lax.broadcasted_iota(jnp.int32, (1, Wh, 1), 1)
    zm = jnp.where(col < W, z, NEG)
    cm = jnp.maximum(jnp.maximum(zm, pltpu.roll(zm, 1, axis=1)),
                     pltpu.roll(zm, Wh - 1, axis=1))
    negrow = jnp.full((1, Wh, Cout), NEG, jnp.float32)
    up = jnp.concatenate([negrow, cm[:H - 1]], axis=0)
    dn = jnp.concatenate([cm[1:], negrow], axis=0)
    rm = jnp.maximum(jnp.maximum(cm, up), dn)          # (H, Wh, Cout)

    # stride-2 subsample: pooled[i, j] = rm[2i, 2j]  (one-hot MXU matmul)
    pooled = jnp.dot(sel_ref[...],
                     rm.reshape(H * Wh, Cout).astype(jnp.bfloat16),
                     preferred_element_type=jnp.float32)   # (H2*W2h, Cout)

    # shortcut branch: BN(Conv1x1 stride-2 of original x) as a matmul
    short = jnp.dot(xs_ref[0].astype(jnp.bfloat16).reshape(H2 * W2h, Cin0),
                    ws_ref[...], preferred_element_type=jnp.float32)
    short = short + bs_ref[0]

    y = (pooled + short).reshape(H2, W2h, Cout)
    col2 = lax.broadcasted_iota(jnp.int32, (1, W2h, 1), 1)
    y = jnp.where(col2 < W2, y, 0.0)

    out_ref[0, pl.ds(1, H2)] = y.astype(out_ref.dtype)
    zrow = jnp.zeros((1, W2h, Cout), out_ref.dtype)
    out_ref[0, pl.ds(0, 1)] = zrow
    out_ref[0, pl.ds(H2 + 1, 1)] = zrow


# ---------------------------------------------------------------------------
# Fused SepConv4 kernel: SepConv -> ReLU -> global average pool.
# Emits a (1, 1, Cout) vector per image, so x4 never goes back to HBM.
# ---------------------------------------------------------------------------
def sepconv_gap_kernel(x_ref, wdw_ref, wpw_ref, bias_ref, out_ref, *, H, W):
    Wh = x_ref.shape[2]
    Cin = x_ref.shape[3]
    Cout = out_ref.shape[2]

    acc = _depthwise(x_ref, wdw_ref, H, pre_relu=False)
    z = jnp.dot(acc.astype(jnp.bfloat16).reshape(H * Wh, Cin), wpw_ref[...],
                preferred_element_type=jnp.float32) + bias_ref[0]
    z = jnp.maximum(z, 0.0).reshape(H, Wh, Cout)

    col = lax.broadcasted_iota(jnp.int32, (1, Wh, 1), 1)
    z = jnp.where(col < W, z, 0.0)
    s = jnp.sum(z, axis=(0, 1)) * (1.0 / (H * W))
    out_ref[...] = s.reshape(1, 1, Cout).astype(out_ref.dtype)


# ---------------------------------------------------------------------------
# Wrappers (weight folding, padding-once, pallas_call plumbing).
# ---------------------------------------------------------------------------
def _prep_sepconv(w_dw, bn1, w_pw, bn2, cin_p, cout_p, eps):
    """Fold inference-mode BN into the depthwise/pointwise weights + bias."""
    g1, b1, m1, v1 = bn1
    g2, b2, m2, v2 = bn2
    s1 = g1 / jnp.sqrt(v1 + eps)
    o1 = b1 - m1 * s1
    s2 = g2 / jnp.sqrt(v2 + eps)
    o2 = b2 - m2 * s2

    cin = w_dw.shape[0]
    cout = w_pw.shape[0]
    wdw = jnp.transpose(w_dw[:, 0, :, :], (1, 2, 0)) * s1[None, None, :]  # (3,3,Cin)
    wpw = jnp.transpose(w_pw[:, :, 0, 0], (1, 0))                          # (Cin,Cout)
    bias = (o1 @ wpw) * s2 + o2
    wpw = wpw * s2[None, :]

    wdw_p = jnp.pad(wdw, ((0, 0), (0, 0), (0, cin_p - cin)))
    wpw_p = jnp.pad(wpw, ((0, cin_p - cin), (0, cout_p - cout))).astype(jnp.bfloat16)
    bias_p = jnp.pad(bias, (0, cout_p - cout)).reshape(1, cout_p).astype(jnp.float32)
    return wdw_p, wpw_p, bias_p


def _compiler_params():
    return pltpu.CompilerParams(dimension_semantics=("parallel",),
                                vmem_limit_bytes=VMEM_LIMIT)


def sepconv_stage(x_hal, prep, *, H, W, pre_relu, post_relu):
    wdw_p, wpw_p, bias_p = prep
    N, _, Wh, cin_p = x_hal.shape
    cout_p = wpw_p.shape[1]
    kernel = functools.partial(sepconv_kernel, H=H, W=W,
                               pre_relu=pre_relu, post_relu=post_relu)
    return pl.pallas_call(
        kernel,
        out_shape=jax.ShapeDtypeStruct((N, H + 2, Wh, cout_p), jnp.bfloat16),
        grid_spec=pltpu.PrefetchScalarGridSpec(
            num_scalar_prefetch=0,
            grid=(N,),
            in_specs=[
                pl.BlockSpec((1, H + 2, Wh, cin_p), lambda n: (n, 0, 0, 0)),
                pl.BlockSpec((3, 3, cin_p), lambda n: (0, 0, 0)),
                pl.BlockSpec((cin_p, cout_p), lambda n: (0, 0)),
                pl.BlockSpec((1, cout_p), lambda n: (0, 0)),
            ],
            out_specs=pl.BlockSpec((1, H + 2, Wh, cout_p),
                                   lambda n: (n, 0, 0, 0)),
        ),
        compiler_params=_compiler_params(),
    )(x_hal, wdw_p, wpw_p, bias_p)


def sepconv2_stage(x1_hal, xs_p, sel, prep2, ws_p, bs_p, *, H, W):
    wdw_p, wpw_p, bias_p = prep2
    N, _, Wh, cin_p = x1_hal.shape
    cout_p = wpw_p.shape[1]
    cin0_p = xs_p.shape[3]
    H2 = (H + 1) // 2
    W2 = (W + 1) // 2
    W2h = xs_p.shape[2]
    kernel = functools.partial(sepconv2_pool_add_kernel, H=H, W=W, H2=H2, W2=W2)
    out = pl.pallas_call(
        kernel,
        out_shape=jax.ShapeDtypeStruct((N, H2 + 2, W2h, cout_p), jnp.bfloat16),
        grid_spec=pltpu.PrefetchScalarGridSpec(
            num_scalar_prefetch=0,
            grid=(N,),
            in_specs=[
                pl.BlockSpec((1, H + 2, Wh, cin_p), lambda n: (n, 0, 0, 0)),
                pl.BlockSpec((1, H2, W2h, cin0_p), lambda n: (n, 0, 0, 0)),
                pl.BlockSpec((H2 * W2h, H * Wh), lambda n: (0, 0)),
                pl.BlockSpec((3, 3, cin_p), lambda n: (0, 0, 0)),
                pl.BlockSpec((cin_p, cout_p), lambda n: (0, 0)),
                pl.BlockSpec((1, cout_p), lambda n: (0, 0)),
                pl.BlockSpec((cin0_p, cout_p), lambda n: (0, 0)),
                pl.BlockSpec((1, cout_p), lambda n: (0, 0)),
            ],
            out_specs=pl.BlockSpec((1, H2 + 2, W2h, cout_p),
                                   lambda n: (n, 0, 0, 0)),
        ),
        compiler_params=_compiler_params(),
    )(x1_hal, xs_p, sel, wdw_p, wpw_p, bias_p, ws_p, bs_p)
    return out, H2, W2


def sepconv_gap_stage(x_hal, prep, *, H, W):
    wdw_p, wpw_p, bias_p = prep
    N, _, Wh, cin_p = x_hal.shape
    cout_p = wpw_p.shape[1]
    kernel = functools.partial(sepconv_gap_kernel, H=H, W=W)
    out = pl.pallas_call(
        kernel,
        out_shape=jax.ShapeDtypeStruct((N, 1, cout_p), jnp.float32),
        grid_spec=pltpu.PrefetchScalarGridSpec(
            num_scalar_prefetch=0,
            grid=(N,),
            in_specs=[
                pl.BlockSpec((1, H + 2, Wh, cin_p), lambda n: (n, 0, 0, 0)),
                pl.BlockSpec((3, 3, cin_p), lambda n: (0, 0, 0)),
                pl.BlockSpec((cin_p, cout_p), lambda n: (0, 0)),
                pl.BlockSpec((1, cout_p), lambda n: (0, 0)),
            ],
            out_specs=pl.BlockSpec((1, 1, cout_p), lambda n: (n, 0, 0)),
        ),
        compiler_params=_compiler_params(),
    )(x_hal, wdw_p, wpw_p, bias_p)
    return out.reshape(N, cout_p)


def _make_pool_select(H, W, Wh, H2, W2, W2h):
    """One-hot matrix S: S @ rm_flat gives pooled[i, j] = rm[2i, 2j]."""
    r = np.arange(H2 * W2h)
    i, j = r // W2h, r % W2h
    src = 2 * i * Wh + 2 * j
    s = np.arange(H * Wh)
    sel = (j[:, None] < W2) & (s[None, :] == src[:, None])
    return jnp.asarray(sel, dtype=jnp.bfloat16)


def exitflow_pallas(x_nchw, params, eps=1e-5):
    x = jnp.transpose(x_nchw, (0, 2, 3, 1))                 # NHWC once
    N, H, W, cin0 = x.shape
    Wh = _round_up(W + 2, SUBLANE)
    cin0_p = _round_up(cin0, LANE)

    nch = [params["conv1"][2].shape[0], params["conv2"][2].shape[0],
           params["conv3"][2].shape[0], params["conv4"][2].shape[0]]
    c_p = [_round_up(c, LANE) for c in nch]

    prep1 = _prep_sepconv(*params["conv1"], cin0_p, c_p[0], eps)
    prep2 = _prep_sepconv(*params["conv2"], c_p[0], c_p[1], eps)
    prep3 = _prep_sepconv(*params["conv3"], c_p[1], c_p[2], eps)
    prep4 = _prep_sepconv(*params["conv4"], c_p[2], c_p[3], eps)

    # conv2s shortcut: fold BN into the 1x1 stride-2 weights
    w2s, bn2s = params["conv2s"]
    g, b, m, v = bn2s
    s = g / jnp.sqrt(v + eps)
    o = b - m * s
    ws = jnp.transpose(w2s[:, :, 0, 0], (1, 0)) * s[None, :]
    ws_p = jnp.pad(ws, ((0, cin0_p - cin0), (0, c_p[1] - nch[1]))).astype(jnp.bfloat16)
    bs_p = jnp.pad(o, (0, c_p[1] - nch[1])).reshape(1, c_p[1]).astype(jnp.float32)

    # pad the external input once into the haloed NHWC layout
    x_hal = jnp.pad(x, ((0, 0), (1, 1), (0, Wh - W), (0, cin0_p - cin0)))

    # stride-2 subsample of the original input for the shortcut branch
    H2 = (H + 1) // 2
    W2 = (W + 1) // 2
    W2h = _round_up(W2 + 2, SUBLANE)
    xs = x[:, ::2, ::2, :]
    xs_p = jnp.pad(xs, ((0, 0), (0, 0), (0, W2h - W2),
                        (0, cin0_p - cin0))).astype(jnp.bfloat16)
    sel = _make_pool_select(H, W, Wh, H2, W2, W2h)

    x1 = sepconv_stage(x_hal, prep1, H=H, W=W, pre_relu=True, post_relu=False)
    x2, H2, W2 = sepconv2_stage(x1, xs_p, sel, prep2, ws_p, bs_p, H=H, W=W)
    x3 = sepconv_stage(x2, prep3, H=H2, W=W2, pre_relu=False, post_relu=True)
    out = sepconv_gap_stage(x3, prep4, H=H2, W=W2)
    return out[:, :nch[3]]


# ---------------------------------------------------------------------------
# Pure-JAX (f32, lax.conv) reference for correctness checking.
# ---------------------------------------------------------------------------
def _bn_ref(x, bn, eps):
    g, b, m, v = bn
    return ((x - m[None, :, None, None]) / jnp.sqrt(v[None, :, None, None] + eps)
            * g[None, :, None, None] + b[None, :, None, None])


def _sepconv_ref(x, p, eps):
    w_dw, bn1, w_pw, bn2 = p
    cin = x.shape[1]
    y = lax.conv_general_dilated(x, w_dw, (1, 1), ((1, 1), (1, 1)),
                                 dimension_numbers=("NCHW", "OIHW", "NCHW"),
                                 feature_group_count=cin)
    y = _bn_ref(y, bn1, eps)
    z = lax.conv_general_dilated(y, w_pw, (1, 1), "VALID",
                                 dimension_numbers=("NCHW", "OIHW", "NCHW"))
    return _bn_ref(z, bn2, eps)


def exitflow_reference(x, params, eps=1e-5):
    relu = lambda a: jnp.maximum(a, 0.0)
    x1 = _sepconv_ref(relu(x), params["conv1"], eps)
    x2 = _sepconv_ref(relu(x1), params["conv2"], eps)
    x2 = lax.reduce_window(x2, -jnp.inf, lax.max, (1, 1, 3, 3), (1, 1, 2, 2),
                           ((0, 0), (0, 0), (1, 1), (1, 1)))
    w2s, bn2s = params["conv2s"]
    x2s = lax.conv_general_dilated(x, w2s, (2, 2), "VALID",
                                   dimension_numbers=("NCHW", "OIHW", "NCHW"))
    x2s = _bn_ref(x2s, bn2s, eps)
    x2 = x2 + x2s
    x3 = relu(_sepconv_ref(x2, params["conv3"], eps))
    x4 = relu(_sepconv_ref(x3, params["conv4"], eps))
    return jnp.mean(x4, axis=(2, 3))


if __name__ == "__main__":
    N, Cin, H, W = 2, 8, 16, 16
    nch = (16, 24, 32, 40)

    key = jax.random.PRNGKey(0)

    def make_bn(k, c):
        kg, kb, km, kv = jax.random.split(k, 4)
        return (jax.random.normal(kg, (c,), jnp.float32) * 0.1 + 1.0,
                jax.random.normal(kb, (c,), jnp.float32) * 0.1,
                jax.random.normal(km, (c,), jnp.float32) * 0.1,
                jax.random.uniform(kv, (c,), jnp.float32, 0.5, 1.5))

    def make_sepconv(k, cin, cout):
        k1, k2, k3, k4 = jax.random.split(k, 4)
        w_dw = jax.random.normal(k1, (cin, 1, 3, 3), jnp.float32) * 0.2
        w_pw = jax.random.normal(k2, (cout, cin, 1, 1), jnp.float32) * 0.2
        return (w_dw, make_bn(k3, cin), w_pw, make_bn(k4, cout))

    kx, k1, k2, k2s, k3, k4 = jax.random.split(key, 6)
    k2s_w, k2s_bn = jax.random.split(k2s)

    x = jax.random.normal(kx, (N, Cin, H, W), jnp.float32)
    params = {
        "conv1": make_sepconv(k1, Cin, nch[0]),
        "conv2": make_sepconv(k2, nch[0], nch[1]),
        "conv2s": (jax.random.normal(k2s_w, (nch[1], Cin, 1, 1), jnp.float32) * 0.2,
                   make_bn(k2s_bn, nch[1])),
        "conv3": make_sepconv(k3, nch[1], nch[2]),
        "conv4": make_sepconv(k4, nch[2], nch[3]),
    }

    out = jax.jit(exitflow_pallas)(x, params)
    out = jax.block_until_ready(out)

    ref = jax.block_until_ready(exitflow_reference(x, params))
    assert out.shape == (N, nch[3]), out.shape
    # bf16 inter-stage activations + bf16 MXU matmuls over 5 fused stages ->
    # compare against the pure-f32 reference with a loosened tolerance.
    err = jnp.max(jnp.abs(out - ref))
    assert jnp.allclose(out, ref, atol=5e-2, rtol=5e-2), f"max abs err {err}"

    print("KERNEL_OK")
</pallas_src>

<mosaic_0001>
module attributes {stable_mosaic.version = 11 : i64} {
  func.func @sepconv_kernel(%arg0: i32, %arg1: memref<1x18x24x128xf32, #tpu.memory_space<vmem>>, %arg2: memref<3x3x128xf32, #tpu.memory_space<vmem>>, %arg3: memref<128x128xbf16, #tpu.memory_space<vmem>>, %arg4: memref<1x128xf32, #tpu.memory_space<vmem>>, %arg5: memref<1x18x24x128xbf16, #tpu.memory_space<vmem>>) attributes {dimension_semantics = [#tpu.dimension_semantics<parallel>], iteration_bounds = array<i64: 2>, scalar_prefetch = 0 : i64, scratch_operands = 0 : i64, tpu.core_type = #tpu.core_type<tc>, window_params = [{transform_indices = @transform_0, window_bounds = array<i64: 1, 18, 24, 128>}, {pipeline_mode = #tpu.pipeline_mode<synchronous>, transform_indices = @transform_1, window_bounds = array<i64: 3, 3, 128>}, {pipeline_mode = #tpu.pipeline_mode<synchronous>, transform_indices = @transform_2, window_bounds = array<i64: 128, 128>}, {pipeline_mode = #tpu.pipeline_mode<synchronous>, transform_indices = @transform_3, window_bounds = array<i64: 1, 128>}, {transform_indices = @transform_4, window_bounds = array<i64: 1, 18, 24, 128>}]} {
    %c0 = arith.constant 0 : index
    %c0_0 = arith.constant 0 : index
    %c0_1 = arith.constant 0 : index
    %c0_2 = arith.constant 0 : index
    %0 = vector.load %arg1[%c0, %c0_0, %c0_1, %c0_2] : memref<1x18x24x128xf32, #tpu.memory_space<vmem>>, vector<1x16x24x128xf32>
    %1 = vector.shape_cast %0 : vector<1x16x24x128xf32> to vector<16x24x128xf32>
    %cst = arith.constant 0.000000e+00 : f32
    %2 = vector.broadcast %cst : f32 to vector<16x24x128xf32>
    %3 = arith.maximumf %1, %2 : vector<16x24x128xf32>
    %c1_i32 = arith.constant 1 : i32
    %4 = tpu.dynamic_rotate %3 by %c1_i32 dim 1 : vector<16x24x128xf32>, i32 -> vector<16x24x128xf32>
    %c0_3 = arith.constant 0 : index
    %c0_4 = arith.constant 0 : index
    %c0_5 = arith.constant 0 : index
    %5 = vector.load %arg2[%c0_3, %c0_4, %c0_5] : memref<3x3x128xf32, #tpu.memory_space<vmem>>, vector<1x1x128xf32>
    %6 = vector.shape_cast %5 : vector<1x1x128xf32> to vector<128xf32>
    %7 = vector.shape_cast %6 : vector<128xf32> to vector<1x1x128xf32>
    %8 = vector.broadcast %7 : vector<1x1x128xf32> to vector<16x24x128xf32>
    %9 = arith.mulf %4, %8 : vector<16x24x128xf32>
    %c0_6 = arith.constant 0 : index
    %c1 = arith.constant 1 : index
    %c0_7 = arith.constant 0 : index
    %10 = vector.load %arg2[%c0_6, %c1, %c0_7] : memref<3x3x128xf32, #tpu.memory_space<vmem>>, vector<1x1x128xf32>
    %11 = vector.shape_cast %10 : vector<1x1x128xf32> to vector<128xf32>
    %12 = vector.shape_cast %11 : vector<128xf32> to vector<1x1x128xf32>
    %13 = vector.broadcast %12 : vector<1x1x128xf32> to vector<16x24x128xf32>
    %14 = arith.mulf %3, %13 : vector<16x24x128xf32>
    %15 = arith.addf %9, %14 : vector<16x24x128xf32>
    %c23_i32 = arith.constant 23 : i32
    %16 = tpu.dynamic_rotate %3 by %c23_i32 dim 1 : vector<16x24x128xf32>, i32 -> vector<16x24x128xf32>
    %c0_8 = arith.constant 0 : index
    %c2 = arith.constant 2 : index
    %c0_9 = arith.constant 0 : index
    %17 = vector.load %arg2[%c0_8, %c2, %c0_9] : memref<3x3x128xf32, #tpu.memory_space<vmem>>, vector<1x1x128xf32>
    %18 = vector.shape_cast %17 : vector<1x1x128xf32> to vector<128xf32>
    %19 = vector.shape_cast %18 : vector<128xf32> to vector<1x1x128xf32>
    %20 = vector.broadcast %19 : vector<1x1x128xf32> to vector<16x24x128xf32>
    %21 = arith.mulf %16, %20 : vector<16x24x128xf32>
    %22 = arith.addf %15, %21 : vector<16x24x128xf32>
    %c0_10 = arith.constant 0 : index
    %c1_11 = arith.constant 1 : index
    %c0_12 = arith.constant 0 : index
    %c0_13 = arith.constant 0 : index
    %23 = vector.load %arg1[%c0_10, %c1_11, %c0_12, %c0_13] : memref<1x18x24x128xf32, #tpu.memory_space<vmem>>, vector<1x16x24x128xf32>
    %24 = vector.shape_cast %23 : vector<1x16x24x128xf32> to vector<16x24x128xf32>
    %cst_14 = arith.constant 0.000000e+00 : f32
    %25 = vector.broadcast %cst_14 : f32 to vector<16x24x128xf32>
    %26 = arith.maximumf %24, %25 : vector<16x24x128xf32>
    %c1_i32_15 = arith.constant 1 : i32
    %27 = tpu.dynamic_rotate %26 by %c1_i32_15 dim 1 : vector<16x24x128xf32>, i32 -> vector<16x24x128xf32>
    %c1_16 = arith.constant 1 : index
    %c0_17 = arith.constant 0 : index
    %c0_18 = arith.constant 0 : index
    %28 = vector.load %arg2[%c1_16, %c0_17, %c0_18] : memref<3x3x128xf32, #tpu.memory_space<vmem>>, vector<1x1x128xf32>
    %29 = vector.shape_cast %28 : vector<1x1x128xf32> to vector<128xf32>
    %30 = vector.shape_cast %29 : vector<128xf32> to vector<1x1x128xf32>
    %31 = vector.broadcast %30 : vector<1x1x128xf32> to vector<16x24x128xf32>
    %32 = arith.mulf %27, %31 : vector<16x24x128xf32>
    %33 = arith.addf %22, %32 : vector<16x24x128xf32>
    %c1_19 = arith.constant 1 : index
    %c1_20 = arith.constant 1 : index
    %c0_21 = arith.constant 0 : index
    %34 = vector.load %arg2[%c1_19, %c1_20, %c0_21] : memref<3x3x128xf32, #tpu.memory_space<vmem>>, vector<1x1x128xf32>
    %35 = vector.shape_cast %34 : vector<1x1x128xf32> to vector<128xf32>
    %36 = vector.shape_cast %35 : vector<128xf32> to vector<1x1x128xf32>
    %37 = vector.broadcast %36 : vector<1x1x128xf32> to vector<16x24x128xf32>
    %38 = arith.mulf %26, %37 : vector<16x24x128xf32>
    %39 = arith.addf %33, %38 : vector<16x24x128xf32>
    %c23_i32_22 = arith.constant 23 : i32
    %40 = tpu.dynamic_rotate %26 by %c23_i32_22 dim 1 : vector<16x24x128xf32>, i32 -> vector<16x24x128xf32>
    %c1_23 = arith.constant 1 : index
    %c2_24 = arith.constant 2 : index
    %c0_25 = arith.constant 0 : index
    %41 = vector.load %arg2[%c1_23, %c2_24, %c0_25] : memref<3x3x128xf32, #tpu.memory_space<vmem>>, vector<1x1x128xf32>
    %42 = vector.shape_cast %41 : vector<1x1x128xf32> to vector<128xf32>
    %43 = vector.shape_cast %42 : vector<128xf32> to vector<1x1x128xf32>
    %44 = vector.broadcast %43 : vector<1x1x128xf32> to vector<16x24x128xf32>
    %45 = arith.mulf %40, %44 : vector<16x24x128xf32>
    %46 = arith.addf %39, %45 : vector<16x24x128xf32>
    %c0_26 = arith.constant 0 : index
    %c2_27 = arith.constant 2 : index
    %c0_28 = arith.constant 0 : index
    %c0_29 = arith.constant 0 : index
    %47 = vector.load %arg1[%c0_26, %c2_27, %c0_28, %c0_29] : memref<1x18x24x128xf32, #tpu.memory_space<vmem>>, vector<1x16x24x128xf32>
    %48 = vector.shape_cast %47 : vector<1x16x24x128xf32> to vector<16x24x128xf32>
    %cst_30 = arith.constant 0.000000e+00 : f32
    %49 = vector.broadcast %cst_30 : f32 to vector<16x24x128xf32>
    %50 = arith.maximumf %48, %49 : vector<16x24x128xf32>
    %c1_i32_31 = arith.constant 1 : i32
    %51 = tpu.dynamic_rotate %50 by %c1_i32_31 dim 1 : vector<16x24x128xf32>, i32 -> vector<16x24x128xf32>
    %c2_32 = arith.constant 2 : index
    %c0_33 = arith.constant 0 : index
    %c0_34 = arith.constant 0 : index
    %52 = vector.load %arg2[%c2_32, %c0_33, %c0_34] : memref<3x3x128xf32, #tpu.memory_space<vmem>>, vector<1x1x128xf32>
    %53 = vector.shape_cast %52 : vector<1x1x128xf32> to vector<128xf32>
    %54 = vector.shape_cast %53 : vector<128xf32> to vector<1x1x128xf32>
    %55 = vector.broadcast %54 : vector<1x1x128xf32> to vector<16x24x128xf32>
    %56 = arith.mulf %51, %55 : vector<16x24x128xf32>
    %57 = arith.addf %46, %56 : vector<16x24x128xf32>
    %c2_35 = arith.constant 2 : index
    %c1_36 = arith.constant 1 : index
    %c0_37 = arith.constant 0 : index
    %58 = vector.load %arg2[%c2_35, %c1_36, %c0_37] : memref<3x3x128xf32, #tpu.memory_space<vmem>>, vector<1x1x128xf32>
    %59 = vector.shape_cast %58 : vector<1x1x128xf32> to vector<128xf32>
    %60 = vector.shape_cast %59 : vector<128xf32> to vector<1x1x128xf32>
    %61 = vector.broadcast %60 : vector<1x1x128xf32> to vector<16x24x128xf32>
    %62 = arith.mulf %50, %61 : vector<16x24x128xf32>
    %63 = arith.addf %57, %62 : vector<16x24x128xf32>
    %c23_i32_38 = arith.constant 23 : i32
    %64 = tpu.dynamic_rotate %50 by %c23_i32_38 dim 1 : vector<16x24x128xf32>, i32 -> vector<16x24x128xf32>
    %c2_39 = arith.constant 2 : index
    %c2_40 = arith.constant 2 : index
    %c0_41 = arith.constant 0 : index
    %65 = vector.load %arg2[%c2_39, %c2_40, %c0_41] : memref<3x3x128xf32, #tpu.memory_space<vmem>>, vector<1x1x128xf32>
    %66 = vector.shape_cast %65 : vector<1x1x128xf32> to vector<128xf32>
    %67 = vector.shape_cast %66 : vector<128xf32> to vector<1x1x128xf32>
    %68 = vector.broadcast %67 : vector<1x1x128xf32> to vector<16x24x128xf32>
    %69 = arith.mulf %64, %68 : vector<16x24x128xf32>
    %70 = arith.addf %63, %69 : vector<16x24x128xf32>
    %71 = arith.truncf %70 : vector<16x24x128xf32> to vector<16x24x128xbf16>
    %72 = vector.shape_cast %71 : vector<16x24x128xbf16> to vector<384x128xbf16>
    %c0_42 = arith.constant 0 : index
    %c0_43 = arith.constant 0 : index
    %73 = vector.load %arg3[%c0_42, %c0_43] : memref<128x128xbf16, #tpu.memory_space<vmem>>, vector<128x128xbf16>
    %cst_44 = arith.constant dense<0.000000e+00> : vector<384x128xf32>
    %74 = tpu.matmul %72, %73, %cst_44 {dimension_numbers = #tpu.dot_dimension_numbers<[1], [0], [0], [1], [0, 0, 1, 1], [], []>} : vector<384x128xbf16>, vector<128x128xbf16>, vector<384x128xf32> -> vector<384x128xf32>
    %c0_45 = arith.constant 0 : index
    %c0_46 = arith.constant 0 : index
    %75 = vector.load %arg4[%c0_45, %c0_46] : memref<1x128xf32, #tpu.memory_space<vmem>>, vector<1x128xf32>
    %76 = vector.shape_cast %75 : vector<1x128xf32> to vector<128xf32>
    %77 = vector.shape_cast %76 : vector<128xf32> to vector<1x128xf32>
    %78 = vector.broadcast %77 : vector<1x128xf32> to vector<384x128xf32>
    %79 = arith.addf %74, %78 : vector<384x128xf32>
    %80 = vector.shape_cast %79 : vector<384x128xf32> to vector<16x24x128xf32>
    %81 = tpu.iota {dimensions = array<i32: 1>} : vector<1x24x1xi32>
    %c16_i32 = arith.constant 16 : i32
    %82 = vector.broadcast %c16_i32 : i32 to vector<1x24x1xi32>
    %83 = arith.cmpi slt, %81, %82 : vector<1x24x1xi32>
    %cst_47 = arith.constant 0.000000e+00 : f32
    %84 = vector.shape_cast %83 : vector<1x24x1xi1> to vector<1x24x1xi1>
    %85 = vector.broadcast %84 : vector<1x24x1xi1> to vector<16x24x128xi1>
    %86 = vector.broadcast %cst_47 : f32 to vector<16x24x128xf32>
    %87 = arith.select %85, %80, %86 : vector<16x24x128xi1>, vector<16x24x128xf32>
    %88 = arith.truncf %87 : vector<16x24x128xf32> to vector<16x24x128xbf16>
    %c0_48 = arith.constant 0 : index
    %c1_49 = arith.constant 1 : index
    %c0_50 = arith.constant 0 : index
    %c0_51 = arith.constant 0 : index
    %89 = vector.load %arg5[%c0_48, %c1_49, %c0_50, %c0_51] : memref<1x18x24x128xbf16, #tpu.memory_space<vmem>>, vector<1x16x24x128xbf16>
    %90 = vector.shape_cast %89 : vector<1x16x24x128xbf16> to vector<16x24x128xbf16>
    %91 = vector.shape_cast %88 : vector<16x24x128xbf16> to vector<1x16x24x128xbf16>
    tpu.vector_store %arg5[%c0_48, %c1_49, %c0_50, %c0_51], %91 {strides = array<i32>} : memref<1x18x24x128xbf16, #tpu.memory_space<vmem>>, vector<1x16x24x128xbf16>,
    %cst_52 = arith.constant 0.000000e+00 : bf16
    %92 = vector.broadcast %cst_52 : bf16 to vector<1x24x128xbf16>
    %c0_53 = arith.constant 0 : index
    %c0_54 = arith.constant 0 : index
    %c0_55 = arith.constant 0 : index
    %c0_56 = arith.constant 0 : index
    %93 = vector.load %arg5[%c0_53, %c0_54, %c0_55, %c0_56] : memref<1x18x24x128xbf16, #tpu.memory_space<vmem>>, vector<1x1x24x128xbf16>
    %94 = vector.shape_cast %93 : vector<1x1x24x128xbf16> to vector<1x24x128xbf16>
    %95 = vector.shape_cast %92 : vector<1x24x128xbf16> to vector<1x1x24x128xbf16>
    tpu.vector_store %arg5[%c0_53, %c0_54, %c0_55, %c0_56], %95 {strides = array<i32>} : memref<1x18x24x128xbf16, #tpu.memory_space<vmem>>, vector<1x1x24x128xbf16>,
    %c0_57 = arith.constant 0 : index
    %c17 = arith.constant 17 : index
    %c0_58 = arith.constant 0 : index
    %c0_59 = arith.constant 0 : index
    %96 = vector.load %arg5[%c0_57, %c17, %c0_58, %c0_59] : memref<1x18x24x128xbf16, #tpu.memory_space<vmem>>, vector<1x1x24x128xbf16>
    %97 = vector.shape_cast %96 : vector<1x1x24x128xbf16> to vector<1x24x128xbf16>
    %98 = vector.shape_cast %92 : vector<1x24x128xbf16> to vector<1x1x24x128xbf16>
    tpu.vector_store %arg5[%c0_57, %c17, %c0_58, %c0_59], %98 {strides = array<i32>} : memref<1x18x24x128xbf16, #tpu.memory_space<vmem>>, vector<1x1x24x128xbf16>,
    return
  }
  func.func @transform_0(%arg0: i32) -> (i32, i32, i32, i32) {
    %c0_i32 = arith.constant 0 : i32
    %c0_i32_0 = arith.constant 0 : i32
    %c0_i32_1 = arith.constant 0 : i32
    %c0_i32_2 = arith.constant 0 : i32
    return %arg0, %c0_i32, %c0_i32_0, %c0_i32_1 : i32, i32, i32, i32
  }
  func.func @transform_1(%arg0: i32) -> (i32, i32, i32) {
    %c0_i32 = arith.constant 0 : i32
    %c0_i32_0 = arith.constant 0 : i32
    %c0_i32_1 = arith.constant 0 : i32
    %c0_i32_2 = arith.constant 0 : i32
    return %c0_i32, %c0_i32_0, %c0_i32_1 : i32, i32, i32
  }
  func.func @transform_2(%arg0: i32) -> (i32, i32) {
    %c0_i32 = arith.constant 0 : i32
    %c0_i32_0 = arith.constant 0 : i32
    %c0_i32_1 = arith.constant 0 : i32
    return %c0_i32, %c0_i32_0 : i32, i32
  }
  func.func @transform_3(%arg0: i32) -> (i32, i32) {
    %c0_i32 = arith.constant 0 : i32
    %c0_i32_0 = arith.constant 0 : i32
    %c0_i32_1 = arith.constant 0 : i32
    return %c0_i32, %c0_i32_0 : i32, i32
  }
  func.func @transform_4(%arg0: i32) -> (i32, i32, i32, i32) {
    %c0_i32 = arith.constant 0 : i32
    %c0_i32_0 = arith.constant 0 : i32
    %c0_i32_1 = arith.constant 0 : i32
    %c0_i32_2 = arith.constant 0 : i32
    return %arg0, %c0_i32, %c0_i32_0, %c0_i32_1 : i32, i32, i32, i32
  }
}

module attributes {stable_mosaic.version = 11 : i64} {
  func.func @sepconv2_pool_add_kernel(%arg0: i32, %arg1: memref<1x18x24x128xbf16, #tpu.memory_space<vmem>>, %arg2: memref<1x8x16x128xbf16, #tpu.memory_space<vmem>>, %arg3: memref<128x384xbf16, #tpu.memory_space<vmem>>, %arg4: memref<3x3x128xf32, #tpu.memory_space<vmem>>, %arg5: memref<128x128xbf16, #tpu.memory_space<vmem>>, %arg6: memref<1x128xf32, #tpu.memory_space<vmem>>, %arg7: memref<128x128xbf16, #tpu.memory_space<vmem>>, %arg8: memref<1x128xf32, #tpu.memory_space<vmem>>, %arg9: memref<1x10x16x128xbf16, #tpu.memory_space<vmem>>) attributes {dimension_semantics = [#tpu.dimension_semantics<parallel>], iteration_bounds = array<i64: 2>, scalar_prefetch = 0 : i64, scratch_operands = 0 : i64, tpu.core_type = #tpu.core_type<tc>, window_params = [{transform_indices = @transform_0, window_bounds = array<i64: 1, 18, 24, 128>}, {transform_indices = @transform_1, window_bounds = array<i64: 1, 8, 16, 128>}, {pipeline_mode = #tpu.pipeline_mode<synchronous>, transform_indices = @transform_2, window_bounds = array<i64: 128, 384>}, {pipeline_mode = #tpu.pipeline_mode<synchronous>, transform_indices = @transform_3, window_bounds = array<i64: 3, 3, 128>}, {pipeline_mode = #tpu.pipeline_mode<synchronous>, transform_indices = @transform_4, window_bounds = array<i64: 128, 128>}, {pipeline_mode = #tpu.pipeline_mode<synchronous>, transform_indices = @transform_5, window_bounds = array<i64: 1, 128>}, {pipeline_mode = #tpu.pipeline_mode<synchronous>, transform_indices = @transform_6, window_bounds = array<i64: 128, 128>}, {pipeline_mode = #tpu.pipeline_mode<synchronous>, transform_indices = @transform_7, window_bounds = array<i64: 1, 128>}, {transform_indices = @transform_8, window_bounds = array<i64: 1, 10, 16, 128>}]} {
    %c0 = arith.constant 0 : index
    %c0_0 = arith.constant 0 : index
    %c0_1 = arith.constant 0 : index
    %c0_2 = arith.constant 0 : index
    %0 = vector.load %arg1[%c0, %c0_0, %c0_1, %c0_2] : memref<1x18x24x128xbf16, #tpu.memory_space<vmem>>, vector<1x16x24x128xbf16>
    %1 = vector.shape_cast %0 : vector<1x16x24x128xbf16> to vector<16x24x128xbf16>
    %2 = arith.extf %1 : vector<16x24x128xbf16> to vector<16x24x128xf32>
    %cst = arith.constant 0.000000e+00 : f32
    %3 = vector.broadcast %cst : f32 to vector<16x24x128xf32>
    %4 = arith.maximumf %2, %3 : vector<16x24x128xf32>
    %c1_i32 = arith.constant 1 : i32
    %5 = tpu.dynamic_rotate %4 by %c1_i32 dim 1 : vector<16x24x128xf32>, i32 -> vector<16x24x128xf32>
    %c0_3 = arith.constant 0 : index
    %c0_4 = arith.constant 0 : index
    %c0_5 = arith.constant 0 : index
    %6 = vector.load %arg4[%c0_3, %c0_4, %c0_5] : memref<3x3x128xf32, #tpu.memory_space<vmem>>, vector<1x1x128xf32>
    %7 = vector.shape_cast %6 : vector<1x1x128xf32> to vector<128xf32>
    %8 = vector.shape_cast %7 : vector<128xf32> to vector<1x1x128xf32>
    %9 = vector.broadcast %8 : vector<1x1x128xf32> to vector<16x24x128xf32>
    %10 = arith.mulf %5, %9 : vector<16x24x128xf32>
    %c0_6 = arith.constant 0 : index
    %c1 = arith.constant 1 : index
    %c0_7 = arith.constant 0 : index
    %11 = vector.load %arg4[%c0_6, %c1, %c0_7] : memref<3x3x128xf32, #tpu.memory_space<vmem>>, vector<1x1x128xf32>
    %12 = vector.shape_cast %11 : vector<1x1x128xf32> to vector<128xf32>
    %13 = vector.shape_cast %12 : vector<128xf32> to vector<1x1x128xf32>
    %14 = vector.broadcast %13 : vector<1x1x128xf32> to vector<16x24x128xf32>
    %15 = arith.mulf %4, %14 : vector<16x24x128xf32>
    %16 = arith.addf %10, %15 : vector<16x24x128xf32>
    %c23_i32 = arith.constant 23 : i32
    %17 = tpu.dynamic_rotate %4 by %c23_i32 dim 1 : vector<16x24x128xf32>, i32 -> vector<16x24x128xf32>
    %c0_8 = arith.constant 0 : index
    %c2 = arith.constant 2 : index
    %c0_9 = arith.constant 0 : index
    %18 = vector.load %arg4[%c0_8, %c2, %c0_9] : memref<3x3x128xf32, #tpu.memory_space<vmem>>, vector<1x1x128xf32>
    %19 = vector.shape_cast %18 : vector<1x1x128xf32> to vector<128xf32>
    %20 = vector.shape_cast %19 : vector<128xf32> to vector<1x1x128xf32>
    %21 = vector.broadcast %20 : vector<1x1x128xf32> to vector<16x24x128xf32>
    %22 = arith.mulf %17, %21 : vector<16x24x128xf32>
    %23 = arith.addf %16, %22 : vector<16x24x128xf32>
    %c0_10 = arith.constant 0 : index
    %c1_11 = arith.constant 1 : index
    %c0_12 = arith.constant 0 : index
    %c0_13 = arith.constant 0 : index
    %24 = vector.load %arg1[%c0_10, %c1_11, %c0_12, %c0_13] : memref<1x18x24x128xbf16, #tpu.memory_space<vmem>>, vector<1x16x24x128xbf16>
    %25 = vector.shape_cast %24 : vector<1x16x24x128xbf16> to vector<16x24x128xbf16>
    %26 = arith.extf %25 : vector<16x24x128xbf16> to vector<16x24x128xf32>
    %cst_14 = arith.constant 0.000000e+00 : f32
    %27 = vector.broadcast %cst_14 : f32 to vector<16x24x128xf32>
    %28 = arith.maximumf %26, %27 : vector<16x24x128xf32>
    %c1_i32_15 = arith.constant 1 : i32
    %29 = tpu.dynamic_rotate %28 by %c1_i32_15 dim 1 : vector<16x24x128xf32>, i32 -> vector<16x24x128xf32>
    %c1_16 = arith.constant 1 : index
    %c0_17 = arith.constant 0 : index
    %c0_18 = arith.constant 0 : index
    %30 = vector.load %arg4[%c1_16, %c0_17, %c0_18] : memref<3x3x128xf32, #tpu.memory_space<vmem>>, vector<1x1x128xf32>
    %31 = vector.shape_cast %30 : vector<1x1x128xf32> to vector<128xf32>
    %32 = vector.shape_cast %31 : vector<128xf32> to vector<1x1x128xf32>
    %33 = vector.broadcast %32 : vector<1x1x128xf32> to vector<16x24x128xf32>
    %34 = arith.mulf %29, %33 : vector<16x24x128xf32>
    %35 = arith.addf %23, %34 : vector<16x24x128xf32>
    %c1_19 = arith.constant 1 : index
    %c1_20 = arith.constant 1 : index
    %c0_21 = arith.constant 0 : index
    %36 = vector.load %arg4[%c1_19, %c1_20, %c0_21] : memref<3x3x128xf32, #tpu.memory_space<vmem>>, vector<1x1x128xf32>
    %37 = vector.shape_cast %36 : vector<1x1x128xf32> to vector<128xf32>
    %38 = vector.shape_cast %37 : vector<128xf32> to vector<1x1x128xf32>
    %39 = vector.broadcast %38 : vector<1x1x128xf32> to vector<16x24x128xf32>
    %40 = arith.mulf %28, %39 : vector<16x24x128xf32>
    %41 = arith.addf %35, %40 : vector<16x24x128xf32>
    %c23_i32_22 = arith.constant 23 : i32
    %42 = tpu.dynamic_rotate %28 by %c23_i32_22 dim 1 : vector<16x24x128xf32>, i32 -> vector<16x24x128xf32>
    %c1_23 = arith.constant 1 : index
    %c2_24 = arith.constant 2 : index
    %c0_25 = arith.constant 0 : index
    %43 = vector.load %arg4[%c1_23, %c2_24, %c0_25] : memref<3x3x128xf32, #tpu.memory_space<vmem>>, vector<1x1x128xf32>
    %44 = vector.shape_cast %43 : vector<1x1x128xf32> to vector<128xf32>
    %45 = vector.shape_cast %44 : vector<128xf32> to vector<1x1x128xf32>
    %46 = vector.broadcast %45 : vector<1x1x128xf32> to vector<16x24x128xf32>
    %47 = arith.mulf %42, %46 : vector<16x24x128xf32>
    %48 = arith.addf %41, %47 : vector<16x24x128xf32>
    %c0_26 = arith.constant 0 : index
    %c2_27 = arith.constant 2 : index
    %c0_28 = arith.constant 0 : index
    %c0_29 = arith.constant 0 : index
    %49 = vector.load %arg1[%c0_26, %c2_27, %c0_28, %c0_29] : memref<1x18x24x128xbf16, #tpu.memory_space<vmem>>, vector<1x16x24x128xbf16>
    %50 = vector.shape_cast %49 : vector<1x16x24x128xbf16> to vector<16x24x128xbf16>
    %51 = arith.extf %50 : vector<16x24x128xbf16> to vector<16x24x128xf32>
    %cst_30 = arith.constant 0.000000e+00 : f32
    %52 = vector.broadcast %cst_30 : f32 to vector<16x24x128xf32>
    %53 = arith.maximumf %51, %52 : vector<16x24x128xf32>
    %c1_i32_31 = arith.constant 1 : i32
    %54 = tpu.dynamic_rotate %53 by %c1_i32_31 dim 1 : vector<16x24x128xf32>, i32 -> vector<16x24x128xf32>
    %c2_32 = arith.constant 2 : index
    %c0_33 = arith.constant 0 : index
    %c0_34 = arith.constant 0 : index
    %55 = vector.load %arg4[%c2_32, %c0_33, %c0_34] : memref<3x3x128xf32, #tpu.memory_space<vmem>>, vector<1x1x128xf32>
    %56 = vector.shape_cast %55 : vector<1x1x128xf32> to vector<128xf32>
    %57 = vector.shape_cast %56 : vector<128xf32> to vector<1x1x128xf32>
    %58 = vector.broadcast %57 : vector<1x1x128xf32> to vector<16x24x128xf32>
    %59 = arith.mulf %54, %58 : vector<16x24x128xf32>
    %60 = arith.addf %48, %59 : vector<16x24x128xf32>
    %c2_35 = arith.constant 2 : index
    %c1_36 = arith.constant 1 : index
    %c0_37 = arith.constant 0 : index
    %61 = vector.load %arg4[%c2_35, %c1_36, %c0_37] : memref<3x3x128xf32, #tpu.memory_space<vmem>>, vector<1x1x128xf32>
    %62 = vector.shape_cast %61 : vector<1x1x128xf32> to vector<128xf32>
    %63 = vector.shape_cast %62 : vector<128xf32> to vector<1x1x128xf32>
    %64 = vector.broadcast %63 : vector<1x1x128xf32> to vector<16x24x128xf32>
    %65 = arith.mulf %53, %64 : vector<16x24x128xf32>
    %66 = arith.addf %60, %65 : vector<16x24x128xf32>
    %c23_i32_38 = arith.constant 23 : i32
    %67 = tpu.dynamic_rotate %53 by %c23_i32_38 dim 1 : vector<16x24x128xf32>, i32 -> vector<16x24x128xf32>
    %c2_39 = arith.constant 2 : index
    %c2_40 = arith.constant 2 : index
    %c0_41 = arith.constant 0 : index
    %68 = vector.load %arg4[%c2_39, %c2_40, %c0_41] : memref<3x3x128xf32, #tpu.memory_space<vmem>>, vector<1x1x128xf32>
    %69 = vector.shape_cast %68 : vector<1x1x128xf32> to vector<128xf32>
    %70 = vector.shape_cast %69 : vector<128xf32> to vector<1x1x128xf32>
    %71 = vector.broadcast %70 : vector<1x1x128xf32> to vector<16x24x128xf32>
    %72 = arith.mulf %67, %71 : vector<16x24x128xf32>
    %73 = arith.addf %66, %72 : vector<16x24x128xf32>
    %74 = arith.truncf %73 : vector<16x24x128xf32> to vector<16x24x128xbf16>
    %75 = vector.shape_cast %74 : vector<16x24x128xbf16> to vector<384x128xbf16>
    %c0_42 = arith.constant 0 : index
    %c0_43 = arith.constant 0 : index
    %76 = vector.load %arg5[%c0_42, %c0_43] : memref<128x128xbf16, #tpu.memory_space<vmem>>, vector<128x128xbf16>
    %cst_44 = arith.constant dense<0.000000e+00> : vector<384x128xf32>
    %77 = tpu.matmul %75, %76, %cst_44 {dimension_numbers = #tpu.dot_dimension_numbers<[1], [0], [0], [1], [0, 0, 1, 1], [], []>} : vector<384x128xbf16>, vector<128x128xbf16>, vector<384x128xf32> -> vector<384x128xf32>
    %c0_45 = arith.constant 0 : index
    %c0_46 = arith.constant 0 : index
    %78 = vector.load %arg6[%c0_45, %c0_46] : memref<1x128xf32, #tpu.memory_space<vmem>>, vector<1x128xf32>
    %79 = vector.shape_cast %78 : vector<1x128xf32> to vector<128xf32>
    %80 = vector.shape_cast %79 : vector<128xf32> to vector<1x128xf32>
    %81 = vector.broadcast %80 : vector<1x128xf32> to vector<384x128xf32>
    %82 = arith.addf %77, %81 : vector<384x128xf32>
    %83 = vector.shape_cast %82 : vector<384x128xf32> to vector<16x24x128xf32>
    %84 = tpu.iota {dimensions = array<i32: 1>} : vector<1x24x1xi32>
    %c16_i32 = arith.constant 16 : i32
    %85 = vector.broadcast %c16_i32 : i32 to vector<1x24x1xi32>
    %86 = arith.cmpi slt, %84, %85 : vector<1x24x1xi32>
    %cst_47 = arith.constant -1.000000e+30 : f32
    %87 = vector.shape_cast %86 : vector<1x24x1xi1> to vector<1x24x1xi1>
    %88 = vector.broadcast %87 : vector<1x24x1xi1> to vector<16x24x128xi1>
    %89 = vector.broadcast %cst_47 : f32 to vector<16x24x128xf32>
    %90 = arith.select %88, %83, %89 : vector<16x24x128xi1>, vector<16x24x128xf32>
    %c1_i32_48 = arith.constant 1 : i32
    %91 = tpu.dynamic_rotate %90 by %c1_i32_48 dim 1 : vector<16x24x128xf32>, i32 -> vector<16x24x128xf32>
    %92 = arith.maximumf %90, %91 : vector<16x24x128xf32>
    %c23_i32_49 = arith.constant 23 : i32
    %93 = tpu.dynamic_rotate %90 by %c23_i32_49 dim 1 : vector<16x24x128xf32>, i32 -> vector<16x24x128xf32>
    %94 = arith.maximumf %92, %93 : vector<16x24x128xf32>
    %cst_50 = arith.constant -1.000000e+30 : f32
    %95 = vector.broadcast %cst_50 : f32 to vector<1x24x128xf32>
    %96 = vector.extract_strided_slice %94 {offsets = [0, 0, 0], sizes = [15, 24, 128], strides = [1, 1, 1]} : vector<16x24x128xf32> to vector<15x24x128xf32>
    %97 = tpu.concatenate %95, %96 in 0 : vector<1x24x128xf32>, vector<15x24x128xf32> -> vector<16x24x128xf32>
    %98 = vector.extract_strided_slice %94 {offsets = [1, 0, 0], sizes = [15, 24, 128], strides = [1, 1, 1]} : vector<16x24x128xf32> to vector<15x24x128xf32>
    %99 = tpu.concatenate %98, %95 in 0 : vector<15x24x128xf32>, vector<1x24x128xf32> -> vector<16x24x128xf32>
    %100 = arith.maximumf %94, %97 : vector<16x24x128xf32>
    %101 = arith.maximumf %100, %99 : vector<16x24x128xf32>
    %c0_51 = arith.constant 0 : index
    %c0_52 = arith.constant 0 : index
    %102 = vector.load %arg3[%c0_51, %c0_52] : memref<128x384xbf16, #tpu.memory_space<vmem>>, vector<128x384xbf16>
    %103 = vector.shape_cast %101 : vector<16x24x128xf32> to vector<384x128xf32>
    %104 = arith.truncf %103 : vector<384x128xf32> to vector<384x128xbf16>
    %cst_53 = arith.constant dense<0.000000e+00> : vector<128x128xf32>
    %105 = tpu.matmul %102, %104, %cst_53 {dimension_numbers = #tpu.dot_dimension_numbers<[1], [0], [0], [1], [0, 0, 1, 1], [], []>} : vector<128x384xbf16>, vector<384x128xbf16>, vector<128x128xf32> -> vector<128x128xf32>
    %c0_54 = arith.constant 0 : index
    %c0_55 = arith.constant 0 : index
    %c0_56 = arith.constant 0 : index
    %c0_57 = arith.constant 0 : index
    %106 = vector.load %arg2[%c0_54, %c0_55, %c0_56, %c0_57] : memref<1x8x16x128xbf16, #tpu.memory_space<vmem>>, vector<1x8x16x128xbf16>
    %107 = vector.shape_cast %106 : vector<1x8x16x128xbf16> to vector<8x16x128xbf16>
    %108 = vector.shape_cast %107 : vector<8x16x128xbf16> to vector<128x128xbf16>
    %c0_58 = arith.constant 0 : index
    %c0_59 = arith.constant 0 : index
    %109 = vector.load %arg7[%c0_58, %c0_59] : memref<128x128xbf16, #tpu.memory_space<vmem>>, vector<128x128xbf16>
    %cst_60 = arith.constant dense<0.000000e+00> : vector<128x128xf32>
    %110 = tpu.matmul %108, %109, %cst_60 {dimension_numbers = #tpu.dot_dimension_numbers<[1], [0], [0], [1], [0, 0, 1, 1], [], []>} : vector<128x128xbf16>, vector<128x128xbf16>, vector<128x128xf32> -> vector<128x128xf32>
    %c0_61 = arith.constant 0 : index
    %c0_62 = arith.constant 0 : index
    %111 = vector.load %arg8[%c0_61, %c0_62] : memref<1x128xf32, #tpu.memory_space<vmem>>, vector<1x128xf32>
    %112 = vector.shape_cast %111 : vector<1x128xf32> to vector<128xf32>
    %113 = vector.shape_cast %112 : vector<128xf32> to vector<1x128xf32>
    %114 = vector.broadcast %113 : vector<1x128xf32> to vector<128x128xf32>
    %115 = arith.addf %110, %114 : vector<128x128xf32>
    %116 = arith.addf %105, %115 : vector<128x128xf32>
    %117 = vector.shape_cast %116 : vector<128x128xf32> to vector<8x16x128xf32>
    %118 = tpu.iota {dimensions = array<i32: 1>} : vector<1x16x1xi32>
    %c8_i32 = arith.constant 8 : i32
    %119 = vector.broadcast %c8_i32 : i32 to vector<1x16x1xi32>
    %120 = arith.cmpi slt, %118, %119 : vector<1x16x1xi32>
    %cst_63 = arith.constant 0.000000e+00 : f32
    %121 = vector.shape_cast %120 : vector<1x16x1xi1> to vector<1x16x1xi1>
    %122 = vector.broadcast %121 : vector<1x16x1xi1> to vector<8x16x128xi1>
    %123 = vector.broadcast %cst_63 : f32 to vector<8x16x128xf32>
    %124 = arith.select %122, %117, %123 : vector<8x16x128xi1>, vector<8x16x128xf32>
    %125 = arith.truncf %124 : vector<8x16x128xf32> to vector<8x16x128xbf16>
    %c0_64 = arith.constant 0 : index
    %c1_65 = arith.constant 1 : index
    %c0_66 = arith.constant 0 : index
    %c0_67 = arith.constant 0 : index
    %126 = vector.load %arg9[%c0_64, %c1_65, %c0_66, %c0_67] : memref<1x10x16x128xbf16, #tpu.memory_space<vmem>>, vector<1x8x16x128xbf16>
    %127 = vector.shape_cast %126 : vector<1x8x16x128xbf16> to vector<8x16x128xbf16>
    %128 = vector.shape_cast %125 : vector<8x16x128xbf16> to vector<1x8x16x128xbf16>
    tpu.vector_store %arg9[%c0_64, %c1_65, %c0_66, %c0_67], %128 {strides = array<i32>} : memref<1x10x16x128xbf16, #tpu.memory_space<vmem>>, vector<1x8x16x128xbf16>,
    %cst_68 = arith.constant 0.000000e+00 : bf16
    %129 = vector.broadcast %cst_68 : bf16 to vector<1x16x128xbf16>
    %c0_69 = arith.constant 0 : index
    %c0_70 = arith.constant 0 : index
    %c0_71 = arith.constant 0 : index
    %c0_72 = arith.constant 0 : index
    %130 = vector.load %arg9[%c0_69, %c0_70, %c0_71, %c0_72] : memref<1x10x16x128xbf16, #tpu.memory_space<vmem>>, vector<1x1x16x128xbf16>
    %131 = vector.shape_cast %130 : vector<1x1x16x128xbf16> to vector<1x16x128xbf16>
    %132 = vector.shape_cast %129 : vector<1x16x128xbf16> to vector<1x1x16x128xbf16>
    tpu.vector_store %arg9[%c0_69, %c0_70, %c0_71, %c0_72], %132 {strides = array<i32>} : memref<1x10x16x128xbf16, #tpu.memory_space<vmem>>, vector<1x1x16x128xbf16>,
    %c0_73 = arith.constant 0 : index
    %c9 = arith.constant 9 : index
    %c0_74 = arith.constant 0 : index
    %c0_75 = arith.constant 0 : index
    %133 = vector.load %arg9[%c0_73, %c9, %c0_74, %c0_75] : memref<1x10x16x128xbf16, #tpu.memory_space<vmem>>, vector<1x1x16x128xbf16>
    %134 = vector.shape_cast %133 : vector<1x1x16x128xbf16> to vector<1x16x128xbf16>
    %135 = vector.shape_cast %129 : vector<1x16x128xbf16> to vector<1x1x16x128xbf16>
    tpu.vector_store %arg9[%c0_73, %c9, %c0_74, %c0_75], %135 {strides = array<i32>} : memref<1x10x16x128xbf16, #tpu.memory_space<vmem>>, vector<1x1x16x128xbf16>,
    return
  }
  func.func @transform_0(%arg0: i32) -> (i32, i32, i32, i32) {
    %c0_i32 = arith.constant 0 : i32
    %c0_i32_0 = arith.constant 0 : i32
    %c0_i32_1 = arith.constant 0 : i32
    %c0_i32_2 = arith.constant 0 : i32
    return %arg0, %c0_i32, %c0_i32_0, %c0_i32_1 : i32, i32, i32, i32
  }
  func.func @transform_1(%arg0: i32) -> (i32, i32, i32, i32) {
    %c0_i32 = arith.constant 0 : i32
    %c0_i32_0 = arith.constant 0 : i32
    %c0_i32_1 = arith.constant 0 : i32
    %c0_i32_2 = arith.constant 0 : i32
    return %arg0, %c0_i32, %c0_i32_0, %c0_i32_1 : i32, i32, i32, i32
  }
  func.func @transform_2(%arg0: i32) -> (i32, i32) {
    %c0_i32 = arith.constant 0 : i32
    %c0_i32_0 = arith.constant 0 : i32
    %c0_i32_1 = arith.constant 0 : i32
    return %c0_i32, %c0_i32_0 : i32, i32
  }
  func.func @transform_3(%arg0: i32) -> (i32, i32, i32) {
    %c0_i32 = arith.constant 0 : i32
    %c0_i32_0 = arith.constant 0 : i32
    %c0_i32_1 = arith.constant 0 : i32
    %c0_i32_2 = arith.constant 0 : i32
    return %c0_i32, %c0_i32_0, %c0_i32_1 : i32, i32, i32
  }
  func.func @transform_4(%arg0: i32) -> (i32, i32) {
    %c0_i32 = arith.constant 0 : i32
    %c0_i32_0 = arith.constant 0 : i32
    %c0_i32_1 = arith.constant 0 : i32
    return %c0_i32, %c0_i32_0 : i32, i32
  }
  func.func @transform_5(%arg0: i32) -> (i32, i32) {
    %c0_i32 = arith.constant 0 : i32
    %c0_i32_0 = arith.constant 0 : i32
    %c0_i32_1 = arith.constant 0 : i32
    return %c0_i32, %c0_i32_0 : i32, i32
  }
  func.func @transform_6(%arg0: i32) -> (i32, i32) {
    %c0_i32 = arith.constant 0 : i32
    %c0_i32_0 = arith.constant 0 : i32
    %c0_i32_1 = arith.constant 0 : i32
    return %c0_i32, %c0_i32_0 : i32, i32
  }
  func.func @transform_7(%arg0: i32) -> (i32, i32) {
    %c0_i32 = arith.constant 0 : i32
    %c0_i32_0 = arith.constant 0 : i32
    %c0_i32_1 = arith.constant 0 : i32
    return %c0_i32, %c0_i32_0 : i32, i32
  }
  func.func @transform_8(%arg0: i32) -> (i32, i32, i32, i32) {
    %c0_i32 = arith.constant 0 : i32
    %c0_i32_0 = arith.constant 0 : i32
    %c0_i32_1 = arith.constant 0 : i32
    %c0_i32_2 = arith.constant 0 : i32
    return %arg0, %c0_i32, %c0_i32_0, %c0_i32_1 : i32, i32, i32, i32
  }
}

module attributes {stable_mosaic.version = 11 : i64} {
  func.func @sepconv_kernel(%arg0: i32, %arg1: memref<1x10x16x128xbf16, #tpu.memory_space<vmem>>, %arg2: memref<3x3x128xf32, #tpu.memory_space<vmem>>, %arg3: memref<128x128xbf16, #tpu.memory_space<vmem>>, %arg4: memref<1x128xf32, #tpu.memory_space<vmem>>, %arg5: memref<1x10x16x128xbf16, #tpu.memory_space<vmem>>) attributes {dimension_semantics = [#tpu.dimension_semantics<parallel>], iteration_bounds = array<i64: 2>, scalar_prefetch = 0 : i64, scratch_operands = 0 : i64, tpu.core_type = #tpu.core_type<tc>, window_params = [{transform_indices = @transform_0, window_bounds = array<i64: 1, 10, 16, 128>}, {pipeline_mode = #tpu.pipeline_mode<synchronous>, transform_indices = @transform_1, window_bounds = array<i64: 3, 3, 128>}, {pipeline_mode = #tpu.pipeline_mode<synchronous>, transform_indices = @transform_2, window_bounds = array<i64: 128, 128>}, {pipeline_mode = #tpu.pipeline_mode<synchronous>, transform_indices = @transform_3, window_bounds = array<i64: 1, 128>}, {transform_indices = @transform_4, window_bounds = array<i64: 1, 10, 16, 128>}]} {
    %c0 = arith.constant 0 : index
    %c0_0 = arith.constant 0 : index
    %c0_1 = arith.constant 0 : index
    %c0_2 = arith.constant 0 : index
    %0 = vector.load %arg1[%c0, %c0_0, %c0_1, %c0_2] : memref<1x10x16x128xbf16, #tpu.memory_space<vmem>>, vector<1x8x16x128xbf16>
    %1 = vector.shape_cast %0 : vector<1x8x16x128xbf16> to vector<8x16x128xbf16>
    %2 = arith.extf %1 : vector<8x16x128xbf16> to vector<8x16x128xf32>
    %c1_i32 = arith.constant 1 : i32
    %3 = tpu.dynamic_rotate %2 by %c1_i32 dim 1 : vector<8x16x128xf32>, i32 -> vector<8x16x128xf32>
    %c0_3 = arith.constant 0 : index
    %c0_4 = arith.constant 0 : index
    %c0_5 = arith.constant 0 : index
    %4 = vector.load %arg2[%c0_3, %c0_4, %c0_5] : memref<3x3x128xf32, #tpu.memory_space<vmem>>, vector<1x1x128xf32>
    %5 = vector.shape_cast %4 : vector<1x1x128xf32> to vector<128xf32>
    %6 = vector.shape_cast %5 : vector<128xf32> to vector<1x1x128xf32>
    %7 = vector.broadcast %6 : vector<1x1x128xf32> to vector<8x16x128xf32>
    %8 = arith.mulf %3, %7 : vector<8x16x128xf32>
    %c0_6 = arith.constant 0 : index
    %c1 = arith.constant 1 : index
    %c0_7 = arith.constant 0 : index
    %9 = vector.load %arg2[%c0_6, %c1, %c0_7] : memref<3x3x128xf32, #tpu.memory_space<vmem>>, vector<1x1x128xf32>
    %10 = vector.shape_cast %9 : vector<1x1x128xf32> to vector<128xf32>
    %11 = vector.shape_cast %10 : vector<128xf32> to vector<1x1x128xf32>
    %12 = vector.broadcast %11 : vector<1x1x128xf32> to vector<8x16x128xf32>
    %13 = arith.mulf %2, %12 : vector<8x16x128xf32>
    %14 = arith.addf %8, %13 : vector<8x16x128xf32>
    %c15_i32 = arith.constant 15 : i32
    %15 = tpu.dynamic_rotate %2 by %c15_i32 dim 1 : vector<8x16x128xf32>, i32 -> vector<8x16x128xf32>
    %c0_8 = arith.constant 0 : index
    %c2 = arith.constant 2 : index
    %c0_9 = arith.constant 0 : index
    %16 = vector.load %arg2[%c0_8, %c2, %c0_9] : memref<3x3x128xf32, #tpu.memory_space<vmem>>, vector<1x1x128xf32>
    %17 = vector.shape_cast %16 : vector<1x1x128xf32> to vector<128xf32>
    %18 = vector.shape_cast %17 : vector<128xf32> to vector<1x1x128xf32>
    %19 = vector.broadcast %18 : vector<1x1x128xf32> to vector<8x16x128xf32>
    %20 = arith.mulf %15, %19 : vector<8x16x128xf32>
    %21 = arith.addf %14, %20 : vector<8x16x128xf32>
    %c0_10 = arith.constant 0 : index
    %c1_11 = arith.constant 1 : index
    %c0_12 = arith.constant 0 : index
    %c0_13 = arith.constant 0 : index
    %22 = vector.load %arg1[%c0_10, %c1_11, %c0_12, %c0_13] : memref<1x10x16x128xbf16, #tpu.memory_space<vmem>>, vector<1x8x16x128xbf16>
    %23 = vector.shape_cast %22 : vector<1x8x16x128xbf16> to vector<8x16x128xbf16>
    %24 = arith.extf %23 : vector<8x16x128xbf16> to vector<8x16x128xf32>
    %c1_i32_14 = arith.constant 1 : i32
    %25 = tpu.dynamic_rotate %24 by %c1_i32_14 dim 1 : vector<8x16x128xf32>, i32 -> vector<8x16x128xf32>
    %c1_15 = arith.constant 1 : index
    %c0_16 = arith.constant 0 : index
    %c0_17 = arith.constant 0 : index
    %26 = vector.load %arg2[%c1_15, %c0_16, %c0_17] : memref<3x3x128xf32, #tpu.memory_space<vmem>>, vector<1x1x128xf32>
    %27 = vector.shape_cast %26 : vector<1x1x128xf32> to vector<128xf32>
    %28 = vector.shape_cast %27 : vector<128xf32> to vector<1x1x128xf32>
    %29 = vector.broadcast %28 : vector<1x1x128xf32> to vector<8x16x128xf32>
    %30 = arith.mulf %25, %29 : vector<8x16x128xf32>
    %31 = arith.addf %21, %30 : vector<8x16x128xf32>
    %c1_18 = arith.constant 1 : index
    %c1_19 = arith.constant 1 : index
    %c0_20 = arith.constant 0 : index
    %32 = vector.load %arg2[%c1_18, %c1_19, %c0_20] : memref<3x3x128xf32, #tpu.memory_space<vmem>>, vector<1x1x128xf32>
    %33 = vector.shape_cast %32 : vector<1x1x128xf32> to vector<128xf32>
    %34 = vector.shape_cast %33 : vector<128xf32> to vector<1x1x128xf32>
    %35 = vector.broadcast %34 : vector<1x1x128xf32> to vector<8x16x128xf32>
    %36 = arith.mulf %24, %35 : vector<8x16x128xf32>
    %37 = arith.addf %31, %36 : vector<8x16x128xf32>
    %c15_i32_21 = arith.constant 15 : i32
    %38 = tpu.dynamic_rotate %24 by %c15_i32_21 dim 1 : vector<8x16x128xf32>, i32 -> vector<8x16x128xf32>
    %c1_22 = arith.constant 1 : index
    %c2_23 = arith.constant 2 : index
    %c0_24 = arith.constant 0 : index
    %39 = vector.load %arg2[%c1_22, %c2_23, %c0_24] : memref<3x3x128xf32, #tpu.memory_space<vmem>>, vector<1x1x128xf32>
    %40 = vector.shape_cast %39 : vector<1x1x128xf32> to vector<128xf32>
    %41 = vector.shape_cast %40 : vector<128xf32> to vector<1x1x128xf32>
    %42 = vector.broadcast %41 : vector<1x1x128xf32> to vector<8x16x128xf32>
    %43 = arith.mulf %38, %42 : vector<8x16x128xf32>
    %44 = arith.addf %37, %43 : vector<8x16x128xf32>
    %c0_25 = arith.constant 0 : index
    %c2_26 = arith.constant 2 : index
    %c0_27 = arith.constant 0 : index
    %c0_28 = arith.constant 0 : index
    %45 = vector.load %arg1[%c0_25, %c2_26, %c0_27, %c0_28] : memref<1x10x16x128xbf16, #tpu.memory_space<vmem>>, vector<1x8x16x128xbf16>
    %46 = vector.shape_cast %45 : vector<1x8x16x128xbf16> to vector<8x16x128xbf16>
    %47 = arith.extf %46 : vector<8x16x128xbf16> to vector<8x16x128xf32>
    %c1_i32_29 = arith.constant 1 : i32
    %48 = tpu.dynamic_rotate %47 by %c1_i32_29 dim 1 : vector<8x16x128xf32>, i32 -> vector<8x16x128xf32>
    %c2_30 = arith.constant 2 : index
    %c0_31 = arith.constant 0 : index
    %c0_32 = arith.constant 0 : index
    %49 = vector.load %arg2[%c2_30, %c0_31, %c0_32] : memref<3x3x128xf32, #tpu.memory_space<vmem>>, vector<1x1x128xf32>
    %50 = vector.shape_cast %49 : vector<1x1x128xf32> to vector<128xf32>
    %51 = vector.shape_cast %50 : vector<128xf32> to vector<1x1x128xf32>
    %52 = vector.broadcast %51 : vector<1x1x128xf32> to vector<8x16x128xf32>
    %53 = arith.mulf %48, %52 : vector<8x16x128xf32>
    %54 = arith.addf %44, %53 : vector<8x16x128xf32>
    %c2_33 = arith.constant 2 : index
    %c1_34 = arith.constant 1 : index
    %c0_35 = arith.constant 0 : index
    %55 = vector.load %arg2[%c2_33, %c1_34, %c0_35] : memref<3x3x128xf32, #tpu.memory_space<vmem>>, vector<1x1x128xf32>
    %56 = vector.shape_cast %55 : vector<1x1x128xf32> to vector<128xf32>
    %57 = vector.shape_cast %56 : vector<128xf32> to vector<1x1x128xf32>
    %58 = vector.broadcast %57 : vector<1x1x128xf32> to vector<8x16x128xf32>
    %59 = arith.mulf %47, %58 : vector<8x16x128xf32>
    %60 = arith.addf %54, %59 : vector<8x16x128xf32>
    %c15_i32_36 = arith.constant 15 : i32
    %61 = tpu.dynamic_rotate %47 by %c15_i32_36 dim 1 : vector<8x16x128xf32>, i32 -> vector<8x16x128xf32>
    %c2_37 = arith.constant 2 : index
    %c2_38 = arith.constant 2 : index
    %c0_39 = arith.constant 0 : index
    %62 = vector.load %arg2[%c2_37, %c2_38, %c0_39] : memref<3x3x128xf32, #tpu.memory_space<vmem>>, vector<1x1x128xf32>
    %63 = vector.shape_cast %62 : vector<1x1x128xf32> to vector<128xf32>
    %64 = vector.shape_cast %63 : vector<128xf32> to vector<1x1x128xf32>
    %65 = vector.broadcast %64 : vector<1x1x128xf32> to vector<8x16x128xf32>
    %66 = arith.mulf %61, %65 : vector<8x16x128xf32>
    %67 = arith.addf %60, %66 : vector<8x16x128xf32>
    %68 = arith.truncf %67 : vector<8x16x128xf32> to vector<8x16x128xbf16>
    %69 = vector.shape_cast %68 : vector<8x16x128xbf16> to vector<128x128xbf16>
    %c0_40 = arith.constant 0 : index
    %c0_41 = arith.constant 0 : index
    %70 = vector.load %arg3[%c0_40, %c0_41] : memref<128x128xbf16, #tpu.memory_space<vmem>>, vector<128x128xbf16>
    %cst = arith.constant dense<0.000000e+00> : vector<128x128xf32>
    %71 = tpu.matmul %69, %70, %cst {dimension_numbers = #tpu.dot_dimension_numbers<[1], [0], [0], [1], [0, 0, 1, 1], [], []>} : vector<128x128xbf16>, vector<128x128xbf16>, vector<128x128xf32> -> vector<128x128xf32>
    %c0_42 = arith.constant 0 : index
    %c0_43 = arith.constant 0 : index
    %72 = vector.load %arg4[%c0_42, %c0_43] : memref<1x128xf32, #tpu.memory_space<vmem>>, vector<1x128xf32>
    %73 = vector.shape_cast %72 : vector<1x128xf32> to vector<128xf32>
    %74 = vector.shape_cast %73 : vector<128xf32> to vector<1x128xf32>
    %75 = vector.broadcast %74 : vector<1x128xf32> to vector<128x128xf32>
    %76 = arith.addf %71, %75 : vector<128x128xf32>
    %cst_44 = arith.constant 0.000000e+00 : f32
    %77 = vector.broadcast %cst_44 : f32 to vector<128x128xf32>
    %78 = arith.maximumf %76, %77 : vector<128x128xf32>
    %79 = vector.shape_cast %78 : vector<128x128xf32> to vector<8x16x128xf32>
    %80 = tpu.iota {dimensions = array<i32: 1>} : vector<1x16x1xi32>
    %c8_i32 = arith.constant 8 : i32
    %81 = vector.broadcast %c8_i32 : i32 to vector<1x16x1xi32>
    %82 = arith.cmpi slt, %80, %81 : vector<1x16x1xi32>
    %cst_45 = arith.constant 0.000000e+00 : f32
    %83 = vector.shape_cast %82 : vector<1x16x1xi1> to vector<1x16x1xi1>
    %84 = vector.broadcast %83 : vector<1x16x1xi1> to vector<8x16x128xi1>
    %85 = vector.broadcast %cst_45 : f32 to vector<8x16x128xf32>
    %86 = arith.select %84, %79, %85 : vector<8x16x128xi1>, vector<8x16x128xf32>
    %87 = arith.truncf %86 : vector<8x16x128xf32> to vector<8x16x128xbf16>
    %c0_46 = arith.constant 0 : index
    %c1_47 = arith.constant 1 : index
    %c0_48 = arith.constant 0 : index
    %c0_49 = arith.constant 0 : index
    %88 = vector.load %arg5[%c0_46, %c1_47, %c0_48, %c0_49] : memref<1x10x16x128xbf16, #tpu.memory_space<vmem>>, vector<1x8x16x128xbf16>
    %89 = vector.shape_cast %88 : vector<1x8x16x128xbf16> to vector<8x16x128xbf16>
    %90 = vector.shape_cast %87 : vector<8x16x128xbf16> to vector<1x8x16x128xbf16>
    tpu.vector_store %arg5[%c0_46, %c1_47, %c0_48, %c0_49], %90 {strides = array<i32>} : memref<1x10x16x128xbf16, #tpu.memory_space<vmem>>, vector<1x8x16x128xbf16>,
    %cst_50 = arith.constant 0.000000e+00 : bf16
    %91 = vector.broadcast %cst_50 : bf16 to vector<1x16x128xbf16>
    %c0_51 = arith.constant 0 : index
    %c0_52 = arith.constant 0 : index
    %c0_53 = arith.constant 0 : index
    %c0_54 = arith.constant 0 : index
    %92 = vector.load %arg5[%c0_51, %c0_52, %c0_53, %c0_54] : memref<1x10x16x128xbf16, #tpu.memory_space<vmem>>, vector<1x1x16x128xbf16>
    %93 = vector.shape_cast %92 : vector<1x1x16x128xbf16> to vector<1x16x128xbf16>
    %94 = vector.shape_cast %91 : vector<1x16x128xbf16> to vector<1x1x16x128xbf16>
    tpu.vector_store %arg5[%c0_51, %c0_52, %c0_53, %c0_54], %94 {strides = array<i32>} : memref<1x10x16x128xbf16, #tpu.memory_space<vmem>>, vector<1x1x16x128xbf16>,
    %c0_55 = arith.constant 0 : index
    %c9 = arith.constant 9 : index
    %c0_56 = arith.constant 0 : index
    %c0_57 = arith.constant 0 : index
    %95 = vector.load %arg5[%c0_55, %c9, %c0_56, %c0_57] : memref<1x10x16x128xbf16, #tpu.memory_space<vmem>>, vector<1x1x16x128xbf16>
    %96 = vector.shape_cast %95 : vector<1x1x16x128xbf16> to vector<1x16x128xbf16>
    %97 = vector.shape_cast %91 : vector<1x16x128xbf16> to vector<1x1x16x128xbf16>
    tpu.vector_store %arg5[%c0_55, %c9, %c0_56, %c0_57], %97 {strides = array<i32>} : memref<1x10x16x128xbf16, #tpu.memory_space<vmem>>, vector<1x1x16x128xbf16>,
    return
  }
  func.func @transform_0(%arg0: i32) -> (i32, i32, i32, i32) {
    %c0_i32 = arith.constant 0 : i32
    %c0_i32_0 = arith.constant 0 : i32
    %c0_i32_1 = arith.constant 0 : i32
    %c0_i32_2 = arith.constant 0 : i32
    return %arg0, %c0_i32, %c0_i32_0, %c0_i32_1 : i32, i32, i32, i32
  }
  func.func @transform_1(%arg0: i32) -> (i32, i32, i32) {
    %c0_i32 = arith.constant 0 : i32
    %c0_i32_0 = arith.constant 0 : i32
    %c0_i32_1 = arith.constant 0 : i32
    %c0_i32_2 = arith.constant 0 : i32
    return %c0_i32, %c0_i32_0, %c0_i32_1 : i32, i32, i32
  }
  func.func @transform_2(%arg0: i32) -> (i32, i32) {
    %c0_i32 = arith.constant 0 : i32
    %c0_i32_0 = arith.constant 0 : i32
    %c0_i32_1 = arith.constant 0 : i32
    return %c0_i32, %c0_i32_0 : i32, i32
  }
  func.func @transform_3(%arg0: i32) -> (i32, i32) {
    %c0_i32 = arith.constant 0 : i32
    %c0_i32_0 = arith.constant 0 : i32
    %c0_i32_1 = arith.constant 0 : i32
    return %c0_i32, %c0_i32_0 : i32, i32
  }
  func.func @transform_4(%arg0: i32) -> (i32, i32, i32, i32) {
    %c0_i32 = arith.constant 0 : i32
    %c0_i32_0 = arith.constant 0 : i32
    %c0_i32_1 = arith.constant 0 : i32
    %c0_i32_2 = arith.constant 0 : i32
    return %arg0, %c0_i32, %c0_i32_0, %c0_i32_1 : i32, i32, i32, i32
  }
}

module attributes {stable_mosaic.version = 11 : i64} {
  func.func @sepconv_gap_kernel(%arg0: i32, %arg1: memref<1x10x16x128xbf16, #tpu.memory_space<vmem>>, %arg2: memref<3x3x128xf32, #tpu.memory_space<vmem>>, %arg3: memref<128x128xbf16, #tpu.memory_space<vmem>>, %arg4: memref<1x128xf32, #tpu.memory_space<vmem>>, %arg5: memref<1x1x128xf32, #tpu.memory_space<vmem>>) attributes {dimension_semantics = [#tpu.dimension_semantics<parallel>], iteration_bounds = array<i64: 2>, scalar_prefetch = 0 : i64, scratch_operands = 0 : i64, tpu.core_type = #tpu.core_type<tc>, window_params = [{transform_indices = @transform_0, window_bounds = array<i64: 1, 10, 16, 128>}, {pipeline_mode = #tpu.pipeline_mode<synchronous>, transform_indices = @transform_1, window_bounds = array<i64: 3, 3, 128>}, {pipeline_mode = #tpu.pipeline_mode<synchronous>, transform_indices = @transform_2, window_bounds = array<i64: 128, 128>}, {pipeline_mode = #tpu.pipeline_mode<synchronous>, transform_indices = @transform_3, window_bounds = array<i64: 1, 128>}, {transform_indices = @transform_4, window_bounds = array<i64: 1, 1, 128>}]} {
    %c0 = arith.constant 0 : index
    %c0_0 = arith.constant 0 : index
    %c0_1 = arith.constant 0 : index
    %c0_2 = arith.constant 0 : index
    %0 = vector.load %arg1[%c0, %c0_0, %c0_1, %c0_2] : memref<1x10x16x128xbf16, #tpu.memory_space<vmem>>, vector<1x8x16x128xbf16>
    %1 = vector.shape_cast %0 : vector<1x8x16x128xbf16> to vector<8x16x128xbf16>
    %2 = arith.extf %1 : vector<8x16x128xbf16> to vector<8x16x128xf32>
    %c1_i32 = arith.constant 1 : i32
    %3 = tpu.dynamic_rotate %2 by %c1_i32 dim 1 : vector<8x16x128xf32>, i32 -> vector<8x16x128xf32>
    %c0_3 = arith.constant 0 : index
    %c0_4 = arith.constant 0 : index
    %c0_5 = arith.constant 0 : index
    %4 = vector.load %arg2[%c0_3, %c0_4, %c0_5] : memref<3x3x128xf32, #tpu.memory_space<vmem>>, vector<1x1x128xf32>
    %5 = vector.shape_cast %4 : vector<1x1x128xf32> to vector<128xf32>
    %6 = vector.shape_cast %5 : vector<128xf32> to vector<1x1x128xf32>
    %7 = vector.broadcast %6 : vector<1x1x128xf32> to vector<8x16x128xf32>
    %8 = arith.mulf %3, %7 : vector<8x16x128xf32>
    %c0_6 = arith.constant 0 : index
    %c1 = arith.constant 1 : index
    %c0_7 = arith.constant 0 : index
    %9 = vector.load %arg2[%c0_6, %c1, %c0_7] : memref<3x3x128xf32, #tpu.memory_space<vmem>>, vector<1x1x128xf32>
    %10 = vector.shape_cast %9 : vector<1x1x128xf32> to vector<128xf32>
    %11 = vector.shape_cast %10 : vector<128xf32> to vector<1x1x128xf32>
    %12 = vector.broadcast %11 : vector<1x1x128xf32> to vector<8x16x128xf32>
    %13 = arith.mulf %2, %12 : vector<8x16x128xf32>
    %14 = arith.addf %8, %13 : vector<8x16x128xf32>
    %c15_i32 = arith.constant 15 : i32
    %15 = tpu.dynamic_rotate %2 by %c15_i32 dim 1 : vector<8x16x128xf32>, i32 -> vector<8x16x128xf32>
    %c0_8 = arith.constant 0 : index
    %c2 = arith.constant 2 : index
    %c0_9 = arith.constant 0 : index
    %16 = vector.load %arg2[%c0_8, %c2, %c0_9] : memref<3x3x128xf32, #tpu.memory_space<vmem>>, vector<1x1x128xf32>
    %17 = vector.shape_cast %16 : vector<1x1x128xf32> to vector<128xf32>
    %18 = vector.shape_cast %17 : vector<128xf32> to vector<1x1x128xf32>
    %19 = vector.broadcast %18 : vector<1x1x128xf32> to vector<8x16x128xf32>
    %20 = arith.mulf %15, %19 : vector<8x16x128xf32>
    %21 = arith.addf %14, %20 : vector<8x16x128xf32>
    %c0_10 = arith.constant 0 : index
    %c1_11 = arith.constant 1 : index
    %c0_12 = arith.constant 0 : index
    %c0_13 = arith.constant 0 : index
    %22 = vector.load %arg1[%c0_10, %c1_11, %c0_12, %c0_13] : memref<1x10x16x128xbf16, #tpu.memory_space<vmem>>, vector<1x8x16x128xbf16>
    %23 = vector.shape_cast %22 : vector<1x8x16x128xbf16> to vector<8x16x128xbf16>
    %24 = arith.extf %23 : vector<8x16x128xbf16> to vector<8x16x128xf32>
    %c1_i32_14 = arith.constant 1 : i32
    %25 = tpu.dynamic_rotate %24 by %c1_i32_14 dim 1 : vector<8x16x128xf32>, i32 -> vector<8x16x128xf32>
    %c1_15 = arith.constant 1 : index
    %c0_16 = arith.constant 0 : index
    %c0_17 = arith.constant 0 : index
    %26 = vector.load %arg2[%c1_15, %c0_16, %c0_17] : memref<3x3x128xf32, #tpu.memory_space<vmem>>, vector<1x1x128xf32>
    %27 = vector.shape_cast %26 : vector<1x1x128xf32> to vector<128xf32>
    %28 = vector.shape_cast %27 : vector<128xf32> to vector<1x1x128xf32>
    %29 = vector.broadcast %28 : vector<1x1x128xf32> to vector<8x16x128xf32>
    %30 = arith.mulf %25, %29 : vector<8x16x128xf32>
    %31 = arith.addf %21, %30 : vector<8x16x128xf32>
    %c1_18 = arith.constant 1 : index
    %c1_19 = arith.constant 1 : index
    %c0_20 = arith.constant 0 : index
    %32 = vector.load %arg2[%c1_18, %c1_19, %c0_20] : memref<3x3x128xf32, #tpu.memory_space<vmem>>, vector<1x1x128xf32>
    %33 = vector.shape_cast %32 : vector<1x1x128xf32> to vector<128xf32>
    %34 = vector.shape_cast %33 : vector<128xf32> to vector<1x1x128xf32>
    %35 = vector.broadcast %34 : vector<1x1x128xf32> to vector<8x16x128xf32>
    %36 = arith.mulf %24, %35 : vector<8x16x128xf32>
    %37 = arith.addf %31, %36 : vector<8x16x128xf32>
    %c15_i32_21 = arith.constant 15 : i32
    %38 = tpu.dynamic_rotate %24 by %c15_i32_21 dim 1 : vector<8x16x128xf32>, i32 -> vector<8x16x128xf32>
    %c1_22 = arith.constant 1 : index
    %c2_23 = arith.constant 2 : index
    %c0_24 = arith.constant 0 : index
    %39 = vector.load %arg2[%c1_22, %c2_23, %c0_24] : memref<3x3x128xf32, #tpu.memory_space<vmem>>, vector<1x1x128xf32>
    %40 = vector.shape_cast %39 : vector<1x1x128xf32> to vector<128xf32>
    %41 = vector.shape_cast %40 : vector<128xf32> to vector<1x1x128xf32>
    %42 = vector.broadcast %41 : vector<1x1x128xf32> to vector<8x16x128xf32>
    %43 = arith.mulf %38, %42 : vector<8x16x128xf32>
    %44 = arith.addf %37, %43 : vector<8x16x128xf32>
    %c0_25 = arith.constant 0 : index
    %c2_26 = arith.constant 2 : index
    %c0_27 = arith.constant 0 : index
    %c0_28 = arith.constant 0 : index
    %45 = vector.load %arg1[%c0_25, %c2_26, %c0_27, %c0_28] : memref<1x10x16x128xbf16, #tpu.memory_space<vmem>>, vector<1x8x16x128xbf16>
    %46 = vector.shape_cast %45 : vector<1x8x16x128xbf16> to vector<8x16x128xbf16>
    %47 = arith.extf %46 : vector<8x16x128xbf16> to vector<8x16x128xf32>
    %c1_i32_29 = arith.constant 1 : i32
    %48 = tpu.dynamic_rotate %47 by %c1_i32_29 dim 1 : vector<8x16x128xf32>, i32 -> vector<8x16x128xf32>
    %c2_30 = arith.constant 2 : index
    %c0_31 = arith.constant 0 : index
    %c0_32 = arith.constant 0 : index
    %49 = vector.load %arg2[%c2_30, %c0_31, %c0_32] : memref<3x3x128xf32, #tpu.memory_space<vmem>>, vector<1x1x128xf32>
    %50 = vector.shape_cast %49 : vector<1x1x128xf32> to vector<128xf32>
    %51 = vector.shape_cast %50 : vector<128xf32> to vector<1x1x128xf32>
    %52 = vector.broadcast %51 : vector<1x1x128xf32> to vector<8x16x128xf32>
    %53 = arith.mulf %48, %52 : vector<8x16x128xf32>
    %54 = arith.addf %44, %53 : vector<8x16x128xf32>
    %c2_33 = arith.constant 2 : index
    %c1_34 = arith.constant 1 : index
    %c0_35 = arith.constant 0 : index
    %55 = vector.load %arg2[%c2_33, %c1_34, %c0_35] : memref<3x3x128xf32, #tpu.memory_space<vmem>>, vector<1x1x128xf32>
    %56 = vector.shape_cast %55 : vector<1x1x128xf32> to vector<128xf32>
    %57 = vector.shape_cast %56 : vector<128xf32> to vector<1x1x128xf32>
    %58 = vector.broadcast %57 : vector<1x1x128xf32> to vector<8x16x128xf32>
    %59 = arith.mulf %47, %58 : vector<8x16x128xf32>
    %60 = arith.addf %54, %59 : vector<8x16x128xf32>
    %c15_i32_36 = arith.constant 15 : i32
    %61 = tpu.dynamic_rotate %47 by %c15_i32_36 dim 1 : vector<8x16x128xf32>, i32 -> vector<8x16x128xf32>
    %c2_37 = arith.constant 2 : index
    %c2_38 = arith.constant 2 : index
    %c0_39 = arith.constant 0 : index
    %62 = vector.load %arg2[%c2_37, %c2_38, %c0_39] : memref<3x3x128xf32, #tpu.memory_space<vmem>>, vector<1x1x128xf32>
    %63 = vector.shape_cast %62 : vector<1x1x128xf32> to vector<128xf32>
    %64 = vector.shape_cast %63 : vector<128xf32> to vector<1x1x128xf32>
    %65 = vector.broadcast %64 : vector<1x1x128xf32> to vector<8x16x128xf32>
    %66 = arith.mulf %61, %65 : vector<8x16x128xf32>
    %67 = arith.addf %60, %66 : vector<8x16x128xf32>
    %68 = arith.truncf %67 : vector<8x16x128xf32> to vector<8x16x128xbf16>
    %69 = vector.shape_cast %68 : vector<8x16x128xbf16> to vector<128x128xbf16>
    %c0_40 = arith.constant 0 : index
    %c0_41 = arith.constant 0 : index
    %70 = vector.load %arg3[%c0_40, %c0_41] : memref<128x128xbf16, #tpu.memory_space<vmem>>, vector<128x128xbf16>
    %cst = arith.constant dense<0.000000e+00> : vector<128x128xf32>
    %71 = tpu.matmul %69, %70, %cst {dimension_numbers = #tpu.dot_dimension_numbers<[1], [0], [0], [1], [0, 0, 1, 1], [], []>} : vector<128x128xbf16>, vector<128x128xbf16>, vector<128x128xf32> -> vector<128x128xf32>
    %c0_42 = arith.constant 0 : index
    %c0_43 = arith.constant 0 : index
    %72 = vector.load %arg4[%c0_42, %c0_43] : memref<1x128xf32, #tpu.memory_space<vmem>>, vector<1x128xf32>
    %73 = vector.shape_cast %72 : vector<1x128xf32> to vector<128xf32>
    %74 = vector.shape_cast %73 : vector<128xf32> to vector<1x128xf32>
    %75 = vector.broadcast %74 : vector<1x128xf32> to vector<128x128xf32>
    %76 = arith.addf %71, %75 : vector<128x128xf32>
    %cst_44 = arith.constant 0.000000e+00 : f32
    %77 = vector.broadcast %cst_44 : f32 to vector<128x128xf32>
    %78 = arith.maximumf %76, %77 : vector<128x128xf32>
    %79 = vector.shape_cast %78 : vector<128x128xf32> to vector<8x16x128xf32>
    %80 = tpu.iota {dimensions = array<i32: 1>} : vector<1x16x1xi32>
    %c8_i32 = arith.constant 8 : i32
    %81 = vector.broadcast %c8_i32 : i32 to vector<1x16x1xi32>
    %82 = arith.cmpi slt, %80, %81 : vector<1x16x1xi32>
    %cst_45 = arith.constant 0.000000e+00 : f32
    %83 = vector.shape_cast %82 : vector<1x16x1xi1> to vector<1x16x1xi1>
    %84 = vector.broadcast %83 : vector<1x16x1xi1> to vector<8x16x128xi1>
    %85 = vector.broadcast %cst_45 : f32 to vector<8x16x128xf32>
    %86 = arith.select %84, %79, %85 : vector<8x16x128xi1>, vector<8x16x128xf32>
    %cst_46 = arith.constant dense<0.000000e+00> : vector<128xf32>
    %87 = vector.multi_reduction <add>, %86, %cst_46 [0, 1] : vector<8x16x128xf32> to vector<128xf32>
    %cst_47 = arith.constant 1.562500e-02 : f32
    %88 = vector.broadcast %cst_47 : f32 to vector<128xf32>
    %89 = arith.mulf %87, %88 : vector<128xf32>
    %90 = vector.shape_cast %89 : vector<128xf32> to vector<1x1x128xf32>
    %c0_48 = arith.constant 0 : index
    %c0_49 = arith.constant 0 : index
    %c0_50 = arith.constant 0 : index
    %91 = vector.load %arg5[%c0_48, %c0_49, %c0_50] : memref<1x1x128xf32, #tpu.memory_space<vmem>>, vector<1x1x128xf32>
    tpu.vector_store %arg5[%c0_48, %c0_49, %c0_50], %90 {strides = array<i32>} : memref<1x1x128xf32, #tpu.memory_space<vmem>>, vector<1x1x128xf32>,
    return
  }
  func.func @transform_0(%arg0: i32) -> (i32, i32, i32, i32) {
    %c0_i32 = arith.constant 0 : i32
    %c0_i32_0 = arith.constant 0 : i32
    %c0_i32_1 = arith.constant 0 : i32
    %c0_i32_2 = arith.constant 0 : i32
    return %arg0, %c0_i32, %c0_i32_0, %c0_i32_1 : i32, i32, i32, i32
  }
  func.func @transform_1(%arg0: i32) -> (i32, i32, i32) {
    %c0_i32 = arith.constant 0 : i32
    %c0_i32_0 = arith.constant 0 : i32
    %c0_i32_1 = arith.constant 0 : i32
    %c0_i32_2 = arith.constant 0 : i32
    return %c0_i32, %c0_i32_0, %c0_i32_1 : i32, i32, i32
  }
  func.func @transform_2(%arg0: i32) -> (i32, i32) {
    %c0_i32 = arith.constant 0 : i32
    %c0_i32_0 = arith.constant 0 : i32
    %c0_i32_1 = arith.constant 0 : i32
    return %c0_i32, %c0_i32_0 : i32, i32
  }
  func.func @transform_3(%arg0: i32) -> (i32, i32) {
    %c0_i32 = arith.constant 0 : i32
    %c0_i32_0 = arith.constant 0 : i32
    %c0_i32_1 = arith.constant 0 : i32
    return %c0_i32, %c0_i32_0 : i32, i32
  }
  func.func @transform_4(%arg0: i32) -> (i32, i32, i32) {
    %c0_i32 = arith.constant 0 : i32
    %c0_i32_0 = arith.constant 0 : i32
    %c0_i32_1 = arith.constant 0 : i32
    return %arg0, %c0_i32, %c0_i32_0 : i32, i32, i32
  }
}

</mosaic_0001>

<llo_original>
// kernel: exitflow_pallas.6
$region0: #{exitflow_pallas.6}
  #allocation0 [shape = 'u32[]', space=smem, size = 0x4, offset = 0x4, fixed_abs, tag = 'smem constant byte address 0x4 - core index']
  #allocation1 [shape = 'u32[72,128]{1,0:T(1,128)}', space=vmem, size = 0x9000, scoped, tag = 'internal scratch']
  %s0 = inlined_call_operand.vmem [shape: bf16[2,10,16,128], index: 0, kind: input, shape index: {}]
  %s1 = inlined_call_operand.vmem [shape: f32[3,3,128], index: 1, kind: input, shape index: {}]
  %s2 = inlined_call_operand.vmem [shape: bf16[128,128], index: 2, kind: input, shape index: {}]
  %s3 = inlined_call_operand.vmem [shape: f32[1,128], index: 3, kind: input, shape index: {}]
  %s4 = inlined_call_operand.vmem [shape: bf16[2,10,16,128], index: 4, kind: output, shape index: {}]
  %s5 = sld [smem:[#allocation0]]
  $region49: #{exitflow_pallas.6} parent=0
    _
  %s7 = ssub.s32 1, %s5
  %s8 = scalar_select 0, %s7, %s5
  loop: start=0, step=1, limit=4
  $region2: #{exitflow_pallas.6} parent=0 // loop_pre_header
    _
  $region3: #{exitflow_pallas.6} parent=0 // loop_header
    %s10 = sphi 0, %s14
    %p11 = scmp.ge.s32.totalorder %s10, 4
    %s20 = sphi 0, %s22
    %s23 = sphi 0, %s20
    %s24 = sphi 0, %s23
    %s40 = sphi 0, %s24
    %s44 = sphi 0, %s44
    %s46 = sphi 0, %s44
    %s47 = sphi 0, %s46
    %s61 = sphi 0, %s47
    %s65 = sphi 0, %s65
    %s67 = sphi 0, %s65
    %s68 = sphi 0, %s67
    %s82 = sphi 0, %s68
    %s86 = sphi 0, %s86
    %s88 = sphi 0, %s86
    %s89 = sphi 0, %s88
    %s103 = sphi 0, %s89
    %s109 = sphi 0, %s111
    %s112 = sphi 0, %s109
    %s113 = sphi 0, %s112
    %s129 = sphi 0, %s113
  $region4: #{exitflow_pallas.6} parent=0 // loop_header_branch
    %13 = sbr.rel (%p11) target = $region8
  $region5: #{exitflow_pallas.6} parent=0 // loop_body
    %s15 = ssub.s32 %s10, 1
    %s16 = ssub.s32 %s10, 2
    %s17 = sadd.s32 %s10, 1
    %s18 = ssub.s32 %s10, %s17
    %p19 = scmp.eq.s32.totalorder %s18, 0
    %s21 = sadd.s32 %s20, 1
    %s22 = scalar_select %p19, %s20, %s21
    %p25 = pneg %p19
    %p26 = scmp.eq.s32.totalorder %s10, 1
    %p27 = por %p25, %p26
    %p28 = scmp.ne.s32.totalorder %s20, %s23
    %p29 = scmp.eq.s32.totalorder %s10, 0
    %p30 = por %p28, %p29
    %p31 = scmp.ne.s32.totalorder %s20, %s23
    %p32 = scmp.eq.s32.totalorder %s15, 1
    %p33 = por %p31, %p32
    %p34 = scmp.ne.s32.totalorder %s23, %s24
    %p35 = scmp.eq.s32.totalorder %s15, 0
    %p36 = por %p34, %p35
    %p37 = scmp.ne.s32.totalorder %s23, %s24
    %p38 = scmp.eq.s32.totalorder %s16, 1
    %p39 = por %p37, %p38
    %p41 = scmp.ne.s32.totalorder %s24, %s40
    %p42 = scmp.eq.s32.totalorder %s16, 0
    %p43 = por %p41, %p42
    %s45 = sadd.s32 %s44, 1
    %p48 = scmp.eq.s32.totalorder %s10, 1
    %p49 = scmp.ne.s32.totalorder %s44, %s46
    %p50 = scmp.eq.s32.totalorder %s10, 0
    %p51 = por %p49, %p50
    %p52 = scmp.ne.s32.totalorder %s44, %s46
    %p53 = scmp.eq.s32.totalorder %s15, 1
    %p54 = por %p52, %p53
    %p55 = scmp.ne.s32.totalorder %s46, %s47
    %p56 = scmp.eq.s32.totalorder %s15, 0
    %p57 = por %p55, %p56
    %p58 = scmp.ne.s32.totalorder %s46, %s47
    %p59 = scmp.eq.s32.totalorder %s16, 1
    %p60 = por %p58, %p59
    %p62 = scmp.ne.s32.totalorder %s47, %s61
    %p63 = scmp.eq.s32.totalorder %s16, 0
    %p64 = por %p62, %p63
    %s66 = sadd.s32 %s65, 1
    %p69 = scmp.eq.s32.totalorder %s10, 1
    %p70 = scmp.ne.s32.totalorder %s65, %s67
    %p71 = scmp.eq.s32.totalorder %s10, 0
    %p72 = por %p70, %p71
    %p73 = scmp.ne.s32.totalorder %s65, %s67
    %p74 = scmp.eq.s32.totalorder %s15, 1
    %p75 = por %p73, %p74
    %p76 = scmp.ne.s32.totalorder %s67, %s68
    %p77 = scmp.eq.s32.totalorder %s15, 0
    %p78 = por %p76, %p77
    %p79 = scmp.ne.s32.totalorder %s67, %s68
    %p80 = scmp.eq.s32.totalorder %s16, 1
    %p81 = por %p79, %p80
    %p83 = scmp.ne.s32.totalorder %s68, %s82
    %p84 = scmp.eq.s32.totalorder %s16, 0
    %p85 = por %p83, %p84
    %s87 = sadd.s32 %s86, 1
    %p90 = scmp.eq.s32.totalorder %s10, 1
    %p91 = scmp.ne.s32.totalorder %s86, %s88
    %p92 = scmp.eq.s32.totalorder %s10, 0
    %p93 = por %p91, %p92
    %p94 = scmp.ne.s32.totalorder %s86, %s88
    %p95 = scmp.eq.s32.totalorder %s15, 1
    %p96 = por %p94, %p95
    %p97 = scmp.ne.s32.totalorder %s88, %s89
    %p98 = scmp.eq.s32.totalorder %s15, 0
    %p99 = por %p97, %p98
    %p100 = scmp.ne.s32.totalorder %s88, %s89
    %p101 = scmp.eq.s32.totalorder %s16, 1
    %p102 = por %p100, %p101
    %p104 = scmp.ne.s32.totalorder %s89, %s103
    %p105 = scmp.eq.s32.totalorder %s16, 0
    %p106 = por %p104, %p105
    %s107 = ssub.s32 %s10, %s17
    %p108 = scmp.eq.s32.totalorder %s107, 0
    %s110 = sadd.s32 %s109, 1
    %s111 = scalar_select %p108, %s109, %s110
    %p114 = pneg %p108
    %p115 = scmp.eq.s32.totalorder %s10, 1
    %p116 = por %p114, %p115
    %p117 = scmp.ne.s32.totalorder %s109, %s112
    %p118 = scmp.eq.s32.totalorder %s10, 0
    %p119 = por %p117, %p118
    %p120 = scmp.ne.s32.totalorder %s109, %s112
    %p121 = scmp.eq.s32.totalorder %s15, 1
    %p122 = por %p120, %p121
    %p123 = scmp.ne.s32.totalorder %s112, %s113
    %p124 = scmp.eq.s32.totalorder %s15, 0
    %p125 = por %p123, %p124
    %p126 = scmp.ne.s32.totalorder %s112, %s113
    %p127 = scmp.eq.s32.totalorder %s16, 1
    %p128 = por %p126, %p127
    %p130 = scmp.ne.s32.totalorder %s113, %s129
    %p131 = scmp.eq.s32.totalorder %s16, 0
    %p132 = por %p130, %p131
    %p133 = scmp.le.s32.totalorder 1, %s10
    %p134 = scmp.lt.s32.totalorder %s10, 3
    %p135 = pnand %p133, %p134
    %p136 = pneg %p135
    // Predicated region
    $region9: #{exitflow_pallas.6} parent=5 // pred_check
      _
    $region10: #{exitflow_pallas.6} parent=5 // pred_check_branch
      %138 = sbr.rel (%p135) target = $region12
    $region11: #{exitflow_pallas.6} parent=5 // pred_region
      %s139 = ssub.s32 %s10, 1
      // Predicated region
      $region13: #{exitflow_pallas.6} parent=11 // pred_check
        %p140 = pneg %p57
      $region14: #{exitflow_pallas.6} parent=11 // pred_check_branch
        %142 = sbr.rel (%p140) target = $region16
      $region15: #{exitflow_pallas.6} parent=11 // pred_region
        _
      $region16: #{exitflow_pallas.6} parent=11 // pred_fallthru
        _
      // Predicated region
      $region17: #{exitflow_pallas.6} parent=11 // pred_check
        %p143 = pneg %p78
      $region18: #{exitflow_pallas.6} parent=11 // pred_check_branch
        %145 = sbr.rel (%p143) target = $region20
      $region19: #{exitflow_pallas.6} parent=11 // pred_region
        _
      $region20: #{exitflow_pallas.6} parent=11 // pred_fallthru
        _
      // Predicated region
      $region21: #{exitflow_pallas.6} parent=11 // pred_check
        %p146 = pneg %p99
      $region22: #{exitflow_pallas.6} parent=11 // pred_check_branch
        %148 = sbr.rel (%p146) target = $region24
      $region23: #{exitflow_pallas.6} parent=11 // pred_region
        _
      $region24: #{exitflow_pallas.6} parent=11 // pred_fallthru
        _
    $region12: #{exitflow_pallas.6} parent=5 // pred_fallthru
      _
    %p149 = scmp.lt.s32.totalorder %s10, 2
    // Predicated region
    $region25: #{exitflow_pallas.6} parent=5 // pred_check
      %p150 = pneg %p149
    $region26: #{exitflow_pallas.6} parent=5 // pred_check_branch
      %152 = sbr.rel (%p150) target = $region28
    $region27: #{exitflow_pallas.6} parent=5 // pred_region
      // Predicated region
      $region29: #{exitflow_pallas.6} parent=27 // pred_check
        %p153 = pneg %p30
      $region30: #{exitflow_pallas.6} parent=27 // pred_check_branch
        %155 = sbr.rel (%p153) target = $region32
      $region31: #{exitflow_pallas.6} parent=27 // pred_region
        %p156 = scmp.lt.s32.totalorder %s10, 1
        %s157 = scalar_select %p156, %s10, 1
        %s158 = smul.addr %s157, 20
        %s159 = smul.addr %s158, 4
        %s160 = scalar_lea.vmem %s0, %s159
      $region32: #{exitflow_pallas.6} parent=27 // pred_fallthru
        _
    $region28: #{exitflow_pallas.6} parent=5 // pred_fallthru
      _
    %p161 = scmp.le.s32.totalorder 1, %s10
    %p162 = scmp.lt.s32.totalorder %s10, 3
    %p163 = pnand %p161, %p162
    %p164 = pneg %p163
    // Predicated region
    $region33: #{exitflow_pallas.6} parent=5 // pred_check
      _
    $region34: #{exitflow_pallas.6} parent=5 // pred_check_branch
      %166 = sbr.rel (%p163) target = $region36
    $region35: #{exitflow_pallas.6} parent=5 // pred_region
      %s167 = ssub.s32 %s10, 1
      %p168 = scmp.lt.s32.totalorder %s15, 1
      %s169 = scalar_select %p168, %s15, 1
      %s170 = smul.addr %s169, 20
      %s171 = smul.addr %s170, 4
      %s172 = scalar_lea.vmem %s0, %s171
      %p173 = pneg %p36
      %p174 = pneg %p33
      %p175 = pneg %p57
      %p176 = pneg %p54
      %p177 = pneg %p78
      %p178 = pneg %p75
      %p179 = pneg %p99
      %p180 = pneg %p96
      %p181 = pneg %p125
      %p182 = pneg %p122
      %p183 = scmp.lt.s32.totalorder %s15, 1
      %s184 = scalar_select %p183, %s15, 1
      %s185 = smul.addr %s184, 20
      %s186 = smul.addr %s185, 4
      %s187 = scalar_lea.vmem %s4, %s186
      %p188 = scmp.lt.s32.totalorder %s15, 1
      %s189 = scalar_select %p188, %s15, 1
      %s190 = smul.addr %s189, 20
      %s191 = smul.addr %s190, 4
      %s192 = scalar_lea.vmem %s0, %s191
      %p193 = scmp.lt.s32.totalorder %s15, 1
      %s194 = scalar_select %p193, %s15, 1
      %s195 = smul.addr %s194, 20
      %s196 = smul.addr %s195, 4
      %s197 = scalar_lea.vmem %s4, %s196
      %v199 = vld [vmem:[%s192] sm:$0xf]
      %v200 = vld [vmem:[%s192 + $0x4] sm:$0xf]
      %v201 = vld [vmem:[%s192 + $0x8] sm:$0xf]
      %v202 = vld [vmem:[%s192 + $0xc] sm:$0xf]
      %v203 = vld [vmem:[%s192 + $0x10] sm:$0xf]
      %v204 = vld [vmem:[%s192 + $0x14] sm:$0xf]
      %v205 = vld [vmem:[%s192 + $0x18] sm:$0xf]
      %v206 = vld [vmem:[%s192 + $0x1c] sm:$0xf]
      %v207 = vld [vmem:[%s192 + $0x20] sm:$0xf]
      %v208 = vld [vmem:[%s192 + $0x24] sm:$0xf]
      %v209 = vld [vmem:[%s192 + $0x28] sm:$0xf]
      %v210 = vld [vmem:[%s192 + $0x2c] sm:$0xf]
      %v211 = vld [vmem:[%s192 + $0x30] sm:$0xf]
      %v212 = vld [vmem:[%s192 + $0x34] sm:$0xf]
      %v213 = vld [vmem:[%s192 + $0x38] sm:$0xf]
      %v214 = vld [vmem:[%s192 + $0x3c] sm:$0xf]
      %v215 = vunpack.c.l.bf16 %v199
      %v216 = vunpack.c.l.bf16 %v200
      %v217 = vunpack.c.l.bf16 %v201
      %v218 = vunpack.c.l.bf16 %v202
      %v219 = vunpack.c.l.bf16 %v203
      %v220 = vunpack.c.l.bf16 %v204
      %v221 = vunpack.c.l.bf16 %v205
      %v222 = vunpack.c.l.bf16 %v206
      %v223 = vunpack.c.l.bf16 %v207
      %v224 = vunpack.c.l.bf16 %v208
      %v225 = vunpack.c.l.bf16 %v209
      %v226 = vunpack.c.l.bf16 %v210
      %v227 = vunpack.c.l.bf16 %v211
      %v228 = vunpack.c.l.bf16 %v212
      %v229 = vunpack.c.l.bf16 %v213
      %v230 = vunpack.c.l.bf16 %v214
      %v231 = vrot.slane %v215, 7
      %v232 = vrot.slane %v217, 7
      %v233 = vrot.slane %v219, 7
      %v234 = vrot.slane %v221, 7
      %v235 = vrot.slane %v223, 7
      %v236 = vrot.slane %v225, 7
      %v237 = vrot.slane %v227, 7
      %v238 = vrot.slane %v229, 7
      %v239 = vrot.slane %v216, 7
      %v240 = vrot.slane %v218, 7
      %v241 = vrot.slane %v220, 7
      %v242 = vrot.slane %v222, 7
      %v243 = vrot.slane %v224, 7
      %v244 = vrot.slane %v226, 7
      %v245 = vrot.slane %v228, 7
      %v246 = vrot.slane %v230, 7
      %v247 = vlaneseq
      %v248 = vshrl.u32 %v247, 7
      %vm249 = vcmp.lt.s32.totalorder %v248, 1
      %v250 = vsel %vm249, %v231, %v239
      %v251 = vsel %vm249, %v232, %v240
      %v252 = vsel %vm249, %v233, %v241
      %v253 = vsel %vm249, %v234, %v242
      %v254 = vsel %vm249, %v235, %v243
      %v255 = vsel %vm249, %v236, %v244
      %v256 = vsel %vm249, %v237, %v245
      %v257 = vsel %vm249, %v238, %v246
      %v258 = vsel %vm249, %v239, %v231
      %v259 = vsel %vm249, %v240, %v232
      %v260 = vsel %vm249, %v241, %v233
      %v261 = vsel %vm249, %v242, %v234
      %v262 = vsel %vm249, %v243, %v235
      %v263 = vsel %vm249, %v244, %v236
      %v264 = vsel %vm249, %v245, %v237
      %v265 = vsel %vm249, %v246, %v238
      %v266 = vld [vmem:[%s1] sm:$0x1]
      %v267 = vperm.slane %v266, 0
      %v268 = vmul.f32 %v258, %v267
      %v269 = vmul.f32 %v250, %v267
      %v270 = vmul.f32 %v259, %v267
      %v271 = vmul.f32 %v251, %v267
      %v272 = vmul.f32 %v260, %v267
      %v273 = vmul.f32 %v252, %v267
      %v274 = vmul.f32 %v261, %v267
      %v275 = vmul.f32 %v253, %v267
      %v276 = vmul.f32 %v262, %v267
      %v277 = vmul.f32 %v254, %v267
      %v278 = vmul.f32 %v263, %v267
      %v279 = vmul.f32 %v255, %v267
      %v280 = vmul.f32 %v264, %v267
      %v281 = vmul.f32 %v256, %v267
      %v282 = vmul.f32 %v265, %v267
      %v283 = vmul.f32 %v257, %v267
      %v284 = vld [vmem:[%s1 + $0x1] sm:$0x1]
      %v285 = vperm.slane %v284, 0
      %v286 = vmul.f32 %v215, %v285
      %v287 = vmul.f32 %v216, %v285
      %v288 = vmul.f32 %v217, %v285
      %v289 = vmul.f32 %v218, %v285
      %v290 = vmul.f32 %v219, %v285
      %v291 = vmul.f32 %v220, %v285
      %v292 = vmul.f32 %v221, %v285
      %v293 = vmul.f32 %v222, %v285
      %v294 = vmul.f32 %v223, %v285
      %v295 = vmul.f32 %v224, %v285
      %v296 = vmul.f32 %v225, %v285
      %v297 = vmul.f32 %v226, %v285
      %v298 = vmul.f32 %v227, %v285
      %v299 = vmul.f32 %v228, %v285
      %v300 = vmul.f32 %v229, %v285
      %v301 = vmul.f32 %v230, %v285
      %v302 = vadd.f32 %v268, %v286
      %v303 = vadd.f32 %v269, %v287
      %v304 = vadd.f32 %v270, %v288
      %v305 = vadd.f32 %v271, %v289
      %v306 = vadd.f32 %v272, %v290
      %v307 = vadd.f32 %v273, %v291
      %v308 = vadd.f32 %v274, %v292
      %v309 = vadd.f32 %v275, %v293
      %v310 = vadd.f32 %v276, %v294
      %v311 = vadd.f32 %v277, %v295
      %v312 = vadd.f32 %v278, %v296
      %v313 = vadd.f32 %v279, %v297
      %v314 = vadd.f32 %v280, %v298
      %v315 = vadd.f32 %v281, %v299
      %v316 = vadd.f32 %v282, %v300
      %v317 = vadd.f32 %v283, %v301
      %v318 = vrot.slane %v215, 1
      %v319 = vrot.slane %v217, 1
      %v320 = vrot.slane %v219, 1
      %v321 = vrot.slane %v221, 1
      %v322 = vrot.slane %v223, 1
      %v323 = vrot.slane %v225, 1
      %v324 = vrot.slane %v227, 1
      %v325 = vrot.slane %v229, 1
      %v326 = vrot.slane %v216, 1
      %v327 = vrot.slane %v218, 1
      %v328 = vrot.slane %v220, 1
      %v329 = vrot.slane %v222, 1
      %v330 = vrot.slane %v224, 1
      %v331 = vrot.slane %v226, 1
      %v332 = vrot.slane %v228, 1
      %v333 = vrot.slane %v230, 1
      %vm334 = vcmp.lt.s32.totalorder %v248, 7
      %v335 = vsel %vm334, %v318, %v326
      %v336 = vsel %vm334, %v319, %v327
      %v337 = vsel %vm334, %v320, %v328
      %v338 = vsel %vm334, %v321, %v329
      %v339 = vsel %vm334, %v322, %v330
      %v340 = vsel %vm334, %v323, %v331
      %v341 = vsel %vm334, %v324, %v332
      %v342 = vsel %vm334, %v325, %v333
      %v343 = vsel %vm334, %v326, %v318
      %v344 = vsel %vm334, %v327, %v319
      %v345 = vsel %vm334, %v328, %v320
      %v346 = vsel %vm334, %v329, %v321
      %v347 = vsel %vm334, %v330, %v322
      %v348 = vsel %vm334, %v331, %v323
      %v349 = vsel %vm334, %v332, %v324
      %v350 = vsel %vm334, %v333, %v325
      %v351 = vld [vmem:[%s1 + $0x2] sm:$0x1]
      %v352 = vperm.slane %v351, 0
      %v353 = vmul.f32 %v335, %v352
      %v354 = vmul.f32 %v343, %v352
      %v355 = vmul.f32 %v336, %v352
      %v356 = vmul.f32 %v344, %v352
      %v357 = vmul.f32 %v337, %v352
      %v358 = vmul.f32 %v345, %v352
      %v359 = vmul.f32 %v338, %v352
      %v360 = vmul.f32 %v346, %v352
      %v361 = vmul.f32 %v339, %v352
      %v362 = vmul.f32 %v347, %v352
      %v363 = vmul.f32 %v340, %v352
      %v364 = vmul.f32 %v348, %v352
      %v365 = vmul.f32 %v341, %v352
      %v366 = vmul.f32 %v349, %v352
      %v367 = vmul.f32 %v342, %v352
      %v368 = vmul.f32 %v350, %v352
      %v369 = vadd.f32 %v302, %v353
      %v370 = vadd.f32 %v303, %v354
      %v371 = vadd.f32 %v304, %v355
      %v372 = vadd.f32 %v305, %v356
      %v373 = vadd.f32 %v306, %v357
      %v374 = vadd.f32 %v307, %v358
      %v375 = vadd.f32 %v308, %v359
      %v376 = vadd.f32 %v309, %v360
      %v377 = vadd.f32 %v310, %v361
      %v378 = vadd.f32 %v311, %v362
      %v379 = vadd.f32 %v312, %v363
      %v380 = vadd.f32 %v313, %v364
      %v381 = vadd.f32 %v314, %v365
      %v382 = vadd.f32 %v315, %v366
      %v383 = vadd.f32 %v316, %v367
      %v384 = vadd.f32 %v317, %v368
      %s385 = scalar_lea.vmem %s192, 8
      %v386 = vld [vmem:[%s385] sm:$0xf]
      %v387 = vld [vmem:[%s385 + $0x4] sm:$0xf]
      %v388 = vld [vmem:[%s385 + $0x8] sm:$0xf]
      %v389 = vld [vmem:[%s385 + $0xc] sm:$0xf]
      %v390 = vld [vmem:[%s385 + $0x10] sm:$0xf]
      %v391 = vld [vmem:[%s385 + $0x14] sm:$0xf]
      %v392 = vld [vmem:[%s385 + $0x18] sm:$0xf]
      %v393 = vld [vmem:[%s385 + $0x1c] sm:$0xf]
      %v394 = vld [vmem:[%s385 + $0x20] sm:$0xf]
      %v395 = vld [vmem:[%s385 + $0x24] sm:$0xf]
      %v396 = vld [vmem:[%s385 + $0x28] sm:$0xf]
      %v397 = vld [vmem:[%s385 + $0x2c] sm:$0xf]
      %v398 = vld [vmem:[%s385 + $0x30] sm:$0xf]
      %v399 = vld [vmem:[%s385 + $0x34] sm:$0xf]
      %v400 = vld [vmem:[%s385 + $0x38] sm:$0xf]
      %v401 = vld [vmem:[%s385 + $0x3c] sm:$0xf]
      %v402 = vunpack.c.l.bf16 %v386
      %v403 = vunpack.c.l.bf16 %v387
      %v404 = vunpack.c.l.bf16 %v388
      %v405 = vunpack.c.l.bf16 %v389
      %v406 = vunpack.c.l.bf16 %v390
      %v407 = vunpack.c.l.bf16 %v391
      %v408 = vunpack.c.l.bf16 %v392
      %v409 = vunpack.c.l.bf16 %v393
      %v410 = vunpack.c.l.bf16 %v394
      %v411 = vunpack.c.l.bf16 %v395
      %v412 = vunpack.c.l.bf16 %v396
      %v413 = vunpack.c.l.bf16 %v397
      %v414 = vunpack.c.l.bf16 %v398
      %v415 = vunpack.c.l.bf16 %v399
      %v416 = vunpack.c.l.bf16 %v400
      %v417 = vunpack.c.l.bf16 %v401
      %v418 = vrot.slane %v402, 7
      %v419 = vrot.slane %v404, 7
      %v420 = vrot.slane %v406, 7
      %v421 = vrot.slane %v408, 7
      %v422 = vrot.slane %v410, 7
      %v423 = vrot.slane %v412, 7
      %v424 = vrot.slane %v414, 7
      %v425 = vrot.slane %v416, 7
      %v426 = vrot.slane %v403, 7
      %v427 = vrot.slane %v405, 7
      %v428 = vrot.slane %v407, 7
      %v429 = vrot.slane %v409, 7
      %v430 = vrot.slane %v411, 7
      %v431 = vrot.slane %v413, 7
      %v432 = vrot.slane %v415, 7
      %v433 = vrot.slane %v417, 7
      %v434 = vsel %vm249, %v418, %v426
      %v435 = vsel %vm249, %v419, %v427
      %v436 = vsel %vm249, %v420, %v428
      %v437 = vsel %vm249, %v421, %v429
      %v438 = vsel %vm249, %v422, %v430
      %v439 = vsel %vm249, %v423, %v431
      %v440 = vsel %vm249, %v424, %v432
      %v441 = vsel %vm249, %v425, %v433
      %v442 = vsel %vm249, %v426, %v418
      %v443 = vsel %vm249, %v427, %v419
      %v444 = vsel %vm249, %v428, %v420
      %v445 = vsel %vm249, %v429, %v421
      %v446 = vsel %vm249, %v430, %v422
      %v447 = vsel %vm249, %v431, %v423
      %v448 = vsel %vm249, %v432, %v424
      %v449 = vsel %vm249, %v433, %v425
      %s450 = scalar_lea.vmem %s1, 4
      %v451 = vld [vmem:[%s450] sm:$0x1]
      %v452 = vperm.slane %v451, 0
      %v453 = vmul.f32 %v442, %v452
      %v454 = vmul.f32 %v434, %v452
      %v455 = vmul.f32 %v443, %v452
      %v456 = vmul.f32 %v435, %v452
      %v457 = vmul.f32 %v444, %v452
      %v458 = vmul.f32 %v436, %v452
      %v459 = vmul.f32 %v445, %v452
      %v460 = vmul.f32 %v437, %v452
      %v461 = vmul.f32 %v446, %v452
      %v462 = vmul.f32 %v438, %v452
      %v463 = vmul.f32 %v447, %v452
      %v464 = vmul.f32 %v439, %v452
      %v465 = vmul.f32 %v448, %v452
      %v466 = vmul.f32 %v440, %v452
      %v467 = vmul.f32 %v449, %v452
      %v468 = vmul.f32 %v441, %v452
      %v469 = vadd.f32 %v369, %v453
      %v470 = vadd.f32 %v370, %v454
      %v471 = vadd.f32 %v371, %v455
      %v472 = vadd.f32 %v372, %v456
      %v473 = vadd.f32 %v373, %v457
      %v474 = vadd.f32 %v374, %v458
      %v475 = vadd.f32 %v375, %v459
      %v476 = vadd.f32 %v376, %v460
      %v477 = vadd.f32 %v377, %v461
      %v478 = vadd.f32 %v378, %v462
      %v479 = vadd.f32 %v379, %v463
      %v480 = vadd.f32 %v380, %v464
      %v481 = vadd.f32 %v381, %v465
      %v482 = vadd.f32 %v382, %v466
      %v483 = vadd.f32 %v383, %v467
      %v484 = vadd.f32 %v384, %v468
      %v485 = vld [vmem:[%s450 + $0x1] sm:$0x1]
      %v486 = vperm.slane %v485, 0
      %v487 = vmul.f32 %v402, %v486
      %v488 = vmul.f32 %v403, %v486
      %v489 = vmul.f32 %v404, %v486
      %v490 = vmul.f32 %v405, %v486
      %v491 = vmul.f32 %v406, %v486
      %v492 = vmul.f32 %v407, %v486
      %v493 = vmul.f32 %v408, %v486
      %v494 = vmul.f32 %v409, %v486
      %v495 = vmul.f32 %v410, %v486
      %v496 = vmul.f32 %v411, %v486
      %v497 = vmul.f32 %v412, %v486
      %v498 = vmul.f32 %v413, %v486
      %v499 = vmul.f32 %v414, %v486
      %v500 = vmul.f32 %v415, %v486
      %v501 = vmul.f32 %v416, %v486
      %v502 = vmul.f32 %v417, %v486
      %v503 = vadd.f32 %v469, %v487
      %v504 = vadd.f32 %v470, %v488
      %v505 = vadd.f32 %v471, %v489
      %v506 = vadd.f32 %v472, %v490
      %v507 = vadd.f32 %v473, %v491
      %v508 = vadd.f32 %v474, %v492
      %v509 = vadd.f32 %v475, %v493
      %v510 = vadd.f32 %v476, %v494
      %v511 = vadd.f32 %v477, %v495
      %v512 = vadd.f32 %v478, %v496
      %v513 = vadd.f32 %v479, %v497
      %v514 = vadd.f32 %v480, %v498
      %v515 = vadd.f32 %v481, %v499
      %v516 = vadd.f32 %v482, %v500
      %v517 = vadd.f32 %v483, %v501
      %v518 = vadd.f32 %v484, %v502
      %v519 = vrot.slane %v402, 1
      %v520 = vrot.slane %v404, 1
      %v521 = vrot.slane %v406, 1
      %v522 = vrot.slane %v408, 1
      %v523 = vrot.slane %v410, 1
      %v524 = vrot.slane %v412, 1
      %v525 = vrot.slane %v414, 1
      %v526 = vrot.slane %v416, 1
      %v527 = vrot.slane %v403, 1
      %v528 = vrot.slane %v405, 1
      %v529 = vrot.slane %v407, 1
      %v530 = vrot.slane %v409, 1
      %v531 = vrot.slane %v411, 1
      %v532 = vrot.slane %v413, 1
      %v533 = vrot.slane %v415, 1
      %v534 = vrot.slane %v417, 1
      %v535 = vsel %vm334, %v519, %v527
      %v536 = vsel %vm334, %v520, %v528
      %v537 = vsel %vm334, %v521, %v529
      %v538 = vsel %vm334, %v522, %v530
      %v539 = vsel %vm334, %v523, %v531
      %v540 = vsel %vm334, %v524, %v532
      %v541 = vsel %vm334, %v525, %v533
      %v542 = vsel %vm334, %v526, %v534
      %v543 = vsel %vm334, %v527, %v519
      %v544 = vsel %vm334, %v528, %v520
      %v545 = vsel %vm334, %v529, %v521
      %v546 = vsel %vm334, %v530, %v522
      %v547 = vsel %vm334, %v531, %v523
      %v548 = vsel %vm334, %v532, %v524
      %v549 = vsel %vm334, %v533, %v525
      %v550 = vsel %vm334, %v534, %v526
      %v551 = vld [vmem:[%s450 + $0x2] sm:$0x1]
      %v552 = vperm.slane %v551, 0
      %v553 = vmul.f32 %v535, %v552
      %v554 = vmul.f32 %v543, %v552
      %v555 = vmul.f32 %v536, %v552
      %v556 = vmul.f32 %v544, %v552
      %v557 = vmul.f32 %v537, %v552
      %v558 = vmul.f32 %v545, %v552
      %v559 = vmul.f32 %v538, %v552
      %v560 = vmul.f32 %v546, %v552
      %v561 = vmul.f32 %v539, %v552
      %v562 = vmul.f32 %v547, %v552
      %v563 = vmul.f32 %v540, %v552
      %v564 = vmul.f32 %v548, %v552
      %v565 = vmul.f32 %v541, %v552
      %v566 = vmul.f32 %v549, %v552
      %v567 = vmul.f32 %v542, %v552
      %v568 = vmul.f32 %v550, %v552
      %v569 = vadd.f32 %v503, %v553
      %v570 = vadd.f32 %v504, %v554
      %v571 = vadd.f32 %v505, %v555
      %v572 = vadd.f32 %v506, %v556
      %v573 = vadd.f32 %v507, %v557
      %v574 = vadd.f32 %v508, %v558
      %v575 = vadd.f32 %v509, %v559
      %v576 = vadd.f32 %v510, %v560
      %v577 = vadd.f32 %v511, %v561
      %v578 = vadd.f32 %v512, %v562
      %v579 = vadd.f32 %v513, %v563
      %v580 = vadd.f32 %v514, %v564
      %v581 = vadd.f32 %v515, %v565
      %v582 = vadd.f32 %v516, %v566
      %v583 = vadd.f32 %v517, %v567
      %v584 = vadd.f32 %v518, %v568
      %s585 = scalar_lea.vmem %s192, 16
      %v586 = vld [vmem:[%s585] sm:$0xf]
      %v587 = vld [vmem:[%s585 + $0x4] sm:$0xf]
      %v588 = vld [vmem:[%s585 + $0x8] sm:$0xf]
      %v589 = vld [vmem:[%s585 + $0xc] sm:$0xf]
      %v590 = vld [vmem:[%s585 + $0x10] sm:$0xf]
      %v591 = vld [vmem:[%s585 + $0x14] sm:$0xf]
      %v592 = vld [vmem:[%s585 + $0x18] sm:$0xf]
      %v593 = vld [vmem:[%s585 + $0x1c] sm:$0xf]
      %v594 = vld [vmem:[%s585 + $0x20] sm:$0xf]
      %v595 = vld [vmem:[%s585 + $0x24] sm:$0xf]
      %v596 = vld [vmem:[%s585 + $0x28] sm:$0xf]
      %v597 = vld [vmem:[%s585 + $0x2c] sm:$0xf]
      %v598 = vld [vmem:[%s585 + $0x30] sm:$0xf]
      %v599 = vld [vmem:[%s585 + $0x34] sm:$0xf]
      %v600 = vld [vmem:[%s585 + $0x38] sm:$0xf]
      %v601 = vld [vmem:[%s585 + $0x3c] sm:$0xf]
      %v602 = vunpack.c.l.bf16 %v586
      %v603 = vunpack.c.l.bf16 %v587
      %v604 = vunpack.c.l.bf16 %v588
      %v605 = vunpack.c.l.bf16 %v589
      %v606 = vunpack.c.l.bf16 %v590
      %v607 = vunpack.c.l.bf16 %v591
      %v608 = vunpack.c.l.bf16 %v592
      %v609 = vunpack.c.l.bf16 %v593
      %v610 = vunpack.c.l.bf16 %v594
      %v611 = vunpack.c.l.bf16 %v595
      %v612 = vunpack.c.l.bf16 %v596
      %v613 = vunpack.c.l.bf16 %v597
      %v614 = vunpack.c.l.bf16 %v598
      %v615 = vunpack.c.l.bf16 %v599
      %v616 = vunpack.c.l.bf16 %v600
      %v617 = vunpack.c.l.bf16 %v601
      %v618 = vrot.slane %v602, 7
      %v619 = vrot.slane %v604, 7
      %v620 = vrot.slane %v606, 7
      %v621 = vrot.slane %v608, 7
      %v622 = vrot.slane %v610, 7
      %v623 = vrot.slane %v612, 7
      %v624 = vrot.slane %v614, 7
      %v625 = vrot.slane %v616, 7
      %v626 = vrot.slane %v603, 7
      %v627 = vrot.slane %v605, 7
      %v628 = vrot.slane %v607, 7
      %v629 = vrot.slane %v609, 7
      %v630 = vrot.slane %v611, 7
      %v631 = vrot.slane %v613, 7
      %v632 = vrot.slane %v615, 7
      %v633 = vrot.slane %v617, 7
      %v634 = vsel %vm249, %v618, %v626
      %v635 = vsel %vm249, %v619, %v627
      %v636 = vsel %vm249, %v620, %v628
      %v637 = vsel %vm249, %v621, %v629
      %v638 = vsel %vm249, %v622, %v630
      %v639 = vsel %vm249, %v623, %v631
      %v640 = vsel %vm249, %v624, %v632
      %v641 = vsel %vm249, %v625, %v633
      %v642 = vsel %vm249, %v626, %v618
      %v643 = vsel %vm249, %v627, %v619
      %v644 = vsel %vm249, %v628, %v620
      %v645 = vsel %vm249, %v629, %v621
      %v646 = vsel %vm249, %v630, %v622
      %v647 = vsel %vm249, %v631, %v623
      %v648 = vsel %vm249, %v632, %v624
      %v649 = vsel %vm249, %v633, %v625
      %s650 = scalar_lea.vmem %s1, 8
      %v651 = vld [vmem:[%s650] sm:$0x1]
      %v652 = vperm.slane %v651, 0
      %v653 = vmul.f32 %v642, %v652
      %v654 = vmul.f32 %v634, %v652
      %v655 = vmul.f32 %v643, %v652
      %v656 = vmul.f32 %v635, %v652
      %v657 = vmul.f32 %v644, %v652
      %v658 = vmul.f32 %v636, %v652
      %v659 = vmul.f32 %v645, %v652
      %v660 = vmul.f32 %v637, %v652
      %v661 = vmul.f32 %v646, %v652
      %v662 = vmul.f32 %v638, %v652
      %v663 = vmul.f32 %v647, %v652
      %v664 = vmul.f32 %v639, %v652
      %v665 = vmul.f32 %v648, %v652
      %v666 = vmul.f32 %v640, %v652
      %v667 = vmul.f32 %v649, %v652
      %v668 = vmul.f32 %v641, %v652
      %v669 = vadd.f32 %v569, %v653
      %v670 = vadd.f32 %v570, %v654
      %v671 = vadd.f32 %v571, %v655
      %v672 = vadd.f32 %v572, %v656
      %v673 = vadd.f32 %v573, %v657
      %v674 = vadd.f32 %v574, %v658
      %v675 = vadd.f32 %v575, %v659
      %v676 = vadd.f32 %v576, %v660
      %v677 = vadd.f32 %v577, %v661
      %v678 = vadd.f32 %v578, %v662
      %v679 = vadd.f32 %v579, %v663
      %v680 = vadd.f32 %v580, %v664
      %v681 = vadd.f32 %v581, %v665
      %v682 = vadd.f32 %v582, %v666
      %v683 = vadd.f32 %v583, %v667
      %v684 = vadd.f32 %v584, %v668
      %v685 = vld [vmem:[%s650 + $0x1] sm:$0x1]
      %v686 = vperm.slane %v685, 0
      %v687 = vmul.f32 %v602, %v686
      %v688 = vmul.f32 %v603, %v686
      %v689 = vmul.f32 %v604, %v686
      %v690 = vmul.f32 %v605, %v686
      %v691 = vmul.f32 %v606, %v686
      %v692 = vmul.f32 %v607, %v686
      %v693 = vmul.f32 %v608, %v686
      %v694 = vmul.f32 %v609, %v686
      %v695 = vmul.f32 %v610, %v686
      %v696 = vmul.f32 %v611, %v686
      %v697 = vmul.f32 %v612, %v686
      %v698 = vmul.f32 %v613, %v686
      %v699 = vmul.f32 %v614, %v686
      %v700 = vmul.f32 %v615, %v686
      %v701 = vmul.f32 %v616, %v686
      %v702 = vmul.f32 %v617, %v686
      %v703 = vadd.f32 %v669, %v687
      %v704 = vadd.f32 %v670, %v688
      %v705 = vadd.f32 %v671, %v689
      %v706 = vadd.f32 %v672, %v690
      %v707 = vadd.f32 %v673, %v691
      %v708 = vadd.f32 %v674, %v692
      %v709 = vadd.f32 %v675, %v693
      %v710 = vadd.f32 %v676, %v694
      %v711 = vadd.f32 %v677, %v695
      %v712 = vadd.f32 %v678, %v696
      %v713 = vadd.f32 %v679, %v697
      %v714 = vadd.f32 %v680, %v698
      %v715 = vadd.f32 %v681, %v699
      %v716 = vadd.f32 %v682, %v700
      %v717 = vadd.f32 %v683, %v701
      %v718 = vadd.f32 %v684, %v702
      %v719 = vrot.slane %v602, 1
      %v720 = vrot.slane %v604, 1
      %v721 = vrot.slane %v606, 1
      %v722 = vrot.slane %v608, 1
      %v723 = vrot.slane %v610, 1
      %v724 = vrot.slane %v612, 1
      %v725 = vrot.slane %v614, 1
      %v726 = vrot.slane %v616, 1
      %v727 = vrot.slane %v603, 1
      %v728 = vrot.slane %v605, 1
      %v729 = vrot.slane %v607, 1
      %v730 = vrot.slane %v609, 1
      %v731 = vrot.slane %v611, 1
      %v732 = vrot.slane %v613, 1
      %v733 = vrot.slane %v615, 1
      %v734 = vrot.slane %v617, 1
      %v735 = vsel %vm334, %v719, %v727
      %v736 = vsel %vm334, %v720, %v728
      %v737 = vsel %vm334, %v721, %v729
      %v738 = vsel %vm334, %v722, %v730
      %v739 = vsel %vm334, %v723, %v731
      %v740 = vsel %vm334, %v724, %v732
      %v741 = vsel %vm334, %v725, %v733
      %v742 = vsel %vm334, %v726, %v734
      %v743 = vsel %vm334, %v727, %v719
      %v744 = vsel %vm334, %v728, %v720
      %v745 = vsel %vm334, %v729, %v721
      %v746 = vsel %vm334, %v730, %v722
      %v747 = vsel %vm334, %v731, %v723
      %v748 = vsel %vm334, %v732, %v724
      %v749 = vsel %vm334, %v733, %v725
      %v750 = vsel %vm334, %v734, %v726
      %v751 = vld [vmem:[%s650 + $0x2] sm:$0x1]
      %v752 = vperm.slane %v751, 0
      %v753 = vmul.f32 %v735, %v752
      %v754 = vmul.f32 %v743, %v752
      %v755 = vmul.f32 %v736, %v752
      %v756 = vmul.f32 %v744, %v752
      %v757 = vmul.f32 %v737, %v752
      %v758 = vmul.f32 %v745, %v752
      %v759 = vmul.f32 %v738, %v752
      %v760 = vmul.f32 %v746, %v752
      %v761 = vmul.f32 %v739, %v752
      %v762 = vmul.f32 %v747, %v752
      %v763 = vmul.f32 %v740, %v752
      %v764 = vmul.f32 %v748, %v752
      %v765 = vmul.f32 %v741, %v752
      %v766 = vmul.f32 %v749, %v752
      %v767 = vmul.f32 %v742, %v752
      %v768 = vmul.f32 %v750, %v752
      %v769 = vadd.f32 %v703, %v753
      %v770 = vadd.f32 %v704, %v754
      %v771 = vadd.f32 %v705, %v755
      %v772 = vadd.f32 %v706, %v756
      %v773 = vadd.f32 %v707, %v757
      %v774 = vadd.f32 %v708, %v758
      %v775 = vadd.f32 %v709, %v759
      %v776 = vadd.f32 %v710, %v760
      %v777 = vadd.f32 %v711, %v761
      %v778 = vadd.f32 %v712, %v762
      %v779 = vadd.f32 %v713, %v763
      %v780 = vadd.f32 %v714, %v764
      %v781 = vadd.f32 %v715, %v765
      %v782 = vadd.f32 %v716, %v766
      %v783 = vadd.f32 %v717, %v767
      %v784 = vadd.f32 %v718, %v768
      %v785 = vpack.c.bf16 %v769, %v769
      %v786 = vpack.c.bf16 %v770, %v770
      %v787 = vpack.c.bf16 %v771, %v771
      %v788 = vpack.c.bf16 %v772, %v772
      %v789 = vpack.c.bf16 %v773, %v773
      %v790 = vpack.c.bf16 %v774, %v774
      %v791 = vpack.c.bf16 %v775, %v775
      %v792 = vpack.c.bf16 %v776, %v776
      %v793 = vpack.c.bf16 %v777, %v777
      %v794 = vpack.c.bf16 %v778, %v778
      %v795 = vpack.c.bf16 %v779, %v779
      %v796 = vpack.c.bf16 %v780, %v780
      %v797 = vpack.c.bf16 %v781, %v781
      %v798 = vpack.c.bf16 %v782, %v782
      %v799 = vpack.c.bf16 %v783, %v783
      %v800 = vpack.c.bf16 %v784, %v784
      %v801 = vld [vmem:[%s2] sm:$0xf]
      %v802 = vld [vmem:[%s2 + $0x4] sm:$0xf]
      %v803 = vld [vmem:[%s2 + $0x8] sm:$0xf]
      %v804 = vld [vmem:[%s2 + $0xc] sm:$0xf]
      %v805 = vld [vmem:[%s2 + $0x10] sm:$0xf]
      %v806 = vld [vmem:[%s2 + $0x14] sm:$0xf]
      %v807 = vld [vmem:[%s2 + $0x18] sm:$0xf]
      %v808 = vld [vmem:[%s2 + $0x1c] sm:$0xf]
      %v809 = vld [vmem:[%s2 + $0x20] sm:$0xf]
      %v810 = vld [vmem:[%s2 + $0x24] sm:$0xf]
      %v811 = vld [vmem:[%s2 + $0x28] sm:$0xf]
      %v812 = vld [vmem:[%s2 + $0x2c] sm:$0xf]
      %v813 = vld [vmem:[%s2 + $0x30] sm:$0xf]
      %v814 = vld [vmem:[%s2 + $0x34] sm:$0xf]
      %v815 = vld [vmem:[%s2 + $0x38] sm:$0xf]
      %v816 = vld [vmem:[%s2 + $0x3c] sm:$0xf]
      %v817 = vld [vmem:[%s3] sm:$0x1]
      %v819 = vperm.slane %v817, 0
      %v837 = vunpack.c.l.b16 %v785
      %v838 = vunpack.c.l.b16 %v786
      %v839 = vunpack.c.l.b16 %v787
      %v840 = vunpack.c.l.b16 %v788
      %v841 = vunpack.c.l.b16 %v789
      %v842 = vunpack.c.l.b16 %v790
      %v843 = vunpack.c.l.b16 %v791
      %v844 = vunpack.c.l.b16 %v792
      %v845 = vunpack.c.l.b16 %v793
      %v846 = vunpack.c.l.b16 %v794
      %v847 = vunpack.c.l.b16 %v795
      %v848 = vunpack.c.l.b16 %v796
      %v849 = vunpack.c.l.b16 %v797
      %v850 = vunpack.c.l.b16 %v798
      %v851 = vunpack.c.l.b16 %v799
      %v852 = vunpack.c.l.b16 %v800
      %v853 = vpack.c.b16 %v838, %v837
      %v854 = vpack.c.b16 %v840, %v839
      %v855 = vpack.c.b16 %v842, %v841
      %v856 = vpack.c.b16 %v844, %v843
      %v857 = vpack.c.b16 %v846, %v845
      %v858 = vpack.c.b16 %v848, %v847
      %v859 = vpack.c.b16 %v850, %v849
      %v860 = vpack.c.b16 %v852, %v851
      %v885 = vunpack.c.l.b16 %v801
      %v886 = vunpack.c.l.b16 %v802
      %v887 = vunpack.c.l.b16 %v803
      %v888 = vunpack.c.l.b16 %v804
      %v889 = vunpack.c.l.b16 %v805
      %v890 = vunpack.c.l.b16 %v806
      %v891 = vunpack.c.l.b16 %v807
      %v892 = vunpack.c.l.b16 %v808
      %v893 = vunpack.c.l.b16 %v809
      %v894 = vunpack.c.l.b16 %v810
      %v895 = vunpack.c.l.b16 %v811
      %v896 = vunpack.c.l.b16 %v812
      %v897 = vunpack.c.l.b16 %v813
      %v898 = vunpack.c.l.b16 %v814
      %v899 = vunpack.c.l.b16 %v815
      %v900 = vunpack.c.l.b16 %v816
      %v901 = vpack.c.b16 %v886, %v885
      %v902 = vpack.c.b16 %v888, %v887
      %v903 = vpack.c.b16 %v890, %v889
      %v904 = vpack.c.b16 %v892, %v891
      %v905 = vpack.c.b16 %v894, %v893
      %v906 = vpack.c.b16 %v896, %v895
      %v907 = vpack.c.b16 %v898, %v897
      %v908 = vpack.c.b16 %v900, %v899
      %917 = vmatpush.bf16.msra.mxu0 %v908
      %918 = vmatpush.bf16.msra.mxu0 %v907
      %919 = vmatpush.bf16.msra.mxu0 %v906
      %920 = vmatpush.bf16.msra.mxu0 %v905
      %921 = vmatpush.bf16.msra.mxu0 %v904
      %922 = vmatpush.bf16.msra.mxu0 %v903
      %923 = vmatpush.bf16.msra.mxu0 %v902
      %924 = vmatpush.bf16.msra.mxu0 %v901
      %925 = vmatmul.bf16.gmra.mxu0 %v853
      %v926 = vpop.f32.mrf.mxu0
      %v927 = vadd.f32 %v819, %v926
      %v928 = vpop.f32.mrf.mxu0
      %v929 = vadd.f32 %v819, %v928
      %930 = vmatmul.bf16.gmra.mxu0 %v854
      %v931 = vpop.f32.mrf.mxu0
      %v932 = vadd.f32 %v819, %v931
      %v933 = vpop.f32.mrf.mxu0
      %v934 = vadd.f32 %v819, %v933
      %935 = vmatmul.bf16.gmra.mxu0 %v855
      %v936 = vpop.f32.mrf.mxu0
      %v937 = vadd.f32 %v819, %v936
      %v938 = vpop.f32.mrf.mxu0
      %v939 = vadd.f32 %v819, %v938
      %940 = vmatmul.bf16.gmra.mxu0 %v856
      %v941 = vpop.f32.mrf.mxu0
      %v942 = vadd.f32 %v819, %v941
      %v943 = vpop.f32.mrf.mxu0
      %v944 = vadd.f32 %v819, %v943
      %945 = vmatmul.bf16.gmra.mxu0 %v857
      %v946 = vpop.f32.mrf.mxu0
      %v947 = vadd.f32 %v819, %v946
      %v948 = vpop.f32.mrf.mxu0
      %v949 = vadd.f32 %v819, %v948
      %950 = vmatmul.bf16.gmra.mxu0 %v858
      %v951 = vpop.f32.mrf.mxu0
      %v952 = vadd.f32 %v819, %v951
      %v953 = vpop.f32.mrf.mxu0
      %v954 = vadd.f32 %v819, %v953
      %955 = vmatmul.bf16.gmra.mxu0 %v859
      %v956 = vpop.f32.mrf.mxu0
      %v957 = vadd.f32 %v819, %v956
      %v958 = vpop.f32.mrf.mxu0
      %v959 = vadd.f32 %v819, %v958
      %960 = vmatmul.bf16.gmra.mxu0 %v860
      %v961 = vpop.f32.mrf.mxu0
      %v962 = vadd.f32 %v819, %v961
      %v963 = vpop.f32.mrf.mxu0
      %v964 = vadd.f32 %v819, %v963
      %965 = vdwg.mxu0
      %v966 = vmax.f32 %v927, 0.0
      %v967 = vmax.f32 %v929, 0.0
      %v968 = vmax.f32 %v932, 0.0
      %v969 = vmax.f32 %v934, 0.0
      %v970 = vmax.f32 %v937, 0.0
      %v971 = vmax.f32 %v939, 0.0
      %v972 = vmax.f32 %v942, 0.0
      %v973 = vmax.f32 %v944, 0.0
      %v974 = vmax.f32 %v947, 0.0
      %v975 = vmax.f32 %v949, 0.0
      %v976 = vmax.f32 %v952, 0.0
      %v977 = vmax.f32 %v954, 0.0
      %v978 = vmax.f32 %v957, 0.0
      %v979 = vmax.f32 %v959, 0.0
      %v980 = vmax.f32 %v962, 0.0
      %v981 = vmax.f32 %v964, 0.0
      %v982 = vadd.s32 %v248, 8
      %vm983 = vcmp.lt.s32.totalorder %v248, 8
      %vm984 = vcmp.lt.s32.totalorder %v982, 8
      %v985 = vsel %vm983, 1, 0
      %v986 = vsel %vm984, 1, 0
      %vm987 = vcmp.eq.s32.totalorder %v985, 1
      %vm988 = vcmp.eq.s32.totalorder %v986, 1
      %v989 = vsel %vm987, %v966, 0.0
      %v990 = vsel %vm988, %v967, 0.0
      %v991 = vsel %vm987, %v968, 0.0
      %v992 = vsel %vm988, %v969, 0.0
      %v993 = vsel %vm987, %v970, 0.0
      %v994 = vsel %vm988, %v971, 0.0
      %v995 = vsel %vm987, %v972, 0.0
      %v996 = vsel %vm988, %v973, 0.0
      %v997 = vsel %vm987, %v974, 0.0
      %v998 = vsel %vm988, %v975, 0.0
      %v999 = vsel %vm987, %v976, 0.0
      %v1000 = vsel %vm988, %v977, 0.0
      %v1001 = vsel %vm987, %v978, 0.0
      %v1002 = vsel %vm988, %v979, 0.0
      %v1003 = vsel %vm987, %v980, 0.0
      %v1004 = vsel %vm988, %v981, 0.0
      %v1005 = vpack.c.bf16 %v989, %v989
      %v1006 = vpack.c.bf16 %v990, %v990
      %v1007 = vpack.c.bf16 %v991, %v991
      %v1008 = vpack.c.bf16 %v992, %v992
      %v1009 = vpack.c.bf16 %v993, %v993
      %v1010 = vpack.c.bf16 %v994, %v994
      %v1011 = vpack.c.bf16 %v995, %v995
      %v1012 = vpack.c.bf16 %v996, %v996
      %v1013 = vpack.c.bf16 %v997, %v997
      %v1014 = vpack.c.bf16 %v998, %v998
      %v1015 = vpack.c.bf16 %v999, %v999
      %v1016 = vpack.c.bf16 %v1000, %v1000
      %v1017 = vpack.c.bf16 %v1001, %v1001
      %v1018 = vpack.c.bf16 %v1002, %v1002
      %v1019 = vpack.c.bf16 %v1003, %v1003
      %v1020 = vpack.c.bf16 %v1004, %v1004
      %s1021 = scalar_lea.vmem %s197, 8
      %1022 = vst [vmem:[%s1021] sm:$0xf] %v1005
      %1023 = vst [vmem:[%s1021 + $0x4] sm:$0xf] %v1006
      %1024 = vst [vmem:[%s1021 + $0x8] sm:$0xf] %v1007
      %1025 = vst [vmem:[%s1021 + $0xc] sm:$0xf] %v1008
      %1026 = vst [vmem:[%s1021 + $0x10] sm:$0xf] %v1009
      %1027 = vst [vmem:[%s1021 + $0x14] sm:$0xf] %v1010
      %1028 = vst [vmem:[%s1021 + $0x18] sm:$0xf] %v1011
      %1029 = vst [vmem:[%s1021 + $0x1c] sm:$0xf] %v1012
      %1030 = vst [vmem:[%s1021 + $0x20] sm:$0xf] %v1013
      %1031 = vst [vmem:[%s1021 + $0x24] sm:$0xf] %v1014
      %1032 = vst [vmem:[%s1021 + $0x28] sm:$0xf] %v1015
      %1033 = vst [vmem:[%s1021 + $0x2c] sm:$0xf] %v1016
      %1034 = vst [vmem:[%s1021 + $0x30] sm:$0xf] %v1017
      %1035 = vst [vmem:[%s1021 + $0x34] sm:$0xf] %v1018
      %1036 = vst [vmem:[%s1021 + $0x38] sm:$0xf] %v1019
      %1037 = vst [vmem:[%s1021 + $0x3c] sm:$0xf] %v1020
      %1038 = vst [vmem:[%s197] sm:$0xf] 0
      %1039 = vst [vmem:[%s197 + $0x4] sm:$0xf] 0
      %s1040 = scalar_lea.vmem %s197, 72
      %1041 = vst [vmem:[%s1040] sm:$0xf] 0
      %1042 = vst [vmem:[%s1040 + $0x4] sm:$0xf] 0
      %p1043 = scmp.lt.s32.totalorder %s15, 1
      %s1044 = scalar_select %p1043, %s15, 1
      %s1045 = smul.addr %s1044, 20
      %s1046 = smul.addr %s1045, 4
      %s1047 = scalar_lea.vmem %s4, %s1046
      // Predicated region
      $region37: #{exitflow_pallas.6} parent=35 // pred_check
        %p1048 = pneg %p122
      $region38: #{exitflow_pallas.6} parent=35 // pred_check_branch
        %1050 = sbr.rel (%p1048) target = $region40
      $region39: #{exitflow_pallas.6} parent=35 // pred_region
        _
      $region40: #{exitflow_pallas.6} parent=35 // pred_fallthru
        _
    $region36: #{exitflow_pallas.6} parent=5 // pred_fallthru
      _
    %p1051 = scmp.le.s32.totalorder 2, %s10
    // Predicated region
    $region41: #{exitflow_pallas.6} parent=5 // pred_check
      %p1052 = pneg %p1051
    $region42: #{exitflow_pallas.6} parent=5 // pred_check_branch
      %1054 = sbr.rel (%p1052) target = $region44
    $region43: #{exitflow_pallas.6} parent=5 // pred_region
      %s1055 = ssub.s32 %s10, 2
      // Predicated region
      $region45: #{exitflow_pallas.6} parent=43 // pred_check
        %p1056 = pneg %p128
      $region46: #{exitflow_pallas.6} parent=43 // pred_check_branch
        %1058 = sbr.rel (%p1056) target = $region48
      $region47: #{exitflow_pallas.6} parent=43 // pred_region
        %p1059 = scmp.lt.s32.totalorder %s16, 1
        %s1060 = scalar_select %p1059, %s16, 1
        %s1061 = smul.addr %s1060, 20
        %s1062 = smul.addr %s1061, 4
        %s1063 = scalar_lea.vmem %s4, %s1062
      $region48: #{exitflow_pallas.6} parent=43 // pred_fallthru
        _
    $region44: #{exitflow_pallas.6} parent=5 // pred_fallthru
      _
  $region6: #{exitflow_pallas.6} parent=0 // loop_footer
    %s14 = sadd.s32 1, %s10
  $region7: #{exitflow_pallas.6} parent=0 // loop_footer_branch
    %9 = sbr.rel target = $region3
  $region8: #{exitflow_pallas.6} parent=0 // loop_exit
    _

// kernel: exitflow_pallas.7
$region0: #{exitflow_pallas.7}
  #allocation0 [shape = 'u32[]', space=smem, size = 0x4, offset = 0x4, fixed_abs, tag = 'smem constant byte address 0x4 - core index']
  #allocation1 [shape = 'u32[72,128]{1,0:T(1,128)}', space=vmem, size = 0x9000, scoped, tag = 'internal scratch']
  %s0 = inlined_call_operand.vmem [shape: bf16[2,10,16,128], index: 0, kind: input, shape index: {}]
  %s1 = inlined_call_operand.vmem [shape: f32[3,3,128], index: 1, kind: input, shape index: {}]
  %s2 = inlined_call_operand.vmem [shape: bf16[128,128], index: 2, kind: input, shape index: {}]
  %s3 = inlined_call_operand.vmem [shape: f32[1,128], index: 3, kind: input, shape index: {}]
  %s4 = inlined_call_operand.hbm [shape: f32[2,1,128], index: 4, kind: output, shape index: {}]
  %s5 = sld [smem:[#allocation0]]
  $region49: #{exitflow_pallas.7} parent=0
    _
  %s7 = ssub.s32 1, %s5
  %s8 = scalar_select 0, %s7, %s5
  $region1: #{exitflow_pallas.7} parent=0
    #allocation2 [shape = 'u8[1024]{0}', space=vmem, size = 0x400, scoped, tag = 'output window, operand 0']
    #allocation3 [shape = 's32[2]{0}', space=sflag, size = 0x8, scoped, tag = 'scoped memory for exitflow_pallas.7']
    %9 = vsyncpa [#allocation3], 0
    %s10 = scalar_lea.sflag [#allocation3], 1
    %11 = vsyncpa %s10, 0
    loop: start=0, step=1, limit=4
    $region2: #{exitflow_pallas.7} parent=1 // loop_pre_header
      _
    $region3: #{exitflow_pallas.7} parent=1 // loop_header
      %s13 = sphi 0, %s17
      %p14 = scmp.ge.s32.totalorder %s13, 4
      %s23 = sphi 0, %s25
      %s26 = sphi 0, %s23
      %s27 = sphi 0, %s26
      %s43 = sphi 0, %s27
      %s47 = sphi 0, %s47
      %s49 = sphi 0, %s47
      %s50 = sphi 0, %s49
      %s64 = sphi 0, %s50
      %s68 = sphi 0, %s68
      %s70 = sphi 0, %s68
      %s71 = sphi 0, %s70
      %s85 = sphi 0, %s71
      %s89 = sphi 0, %s89
      %s91 = sphi 0, %s89
      %s92 = sphi 0, %s91
      %s106 = sphi 0, %s92
      %s112 = sphi 0, %s114
      %s115 = sphi 0, %s112
      %s116 = sphi 0, %s115
      %s132 = sphi 0, %s116
    $region4: #{exitflow_pallas.7} parent=1 // loop_header_branch
      %16 = sbr.rel (%p14) target = $region8
    $region5: #{exitflow_pallas.7} parent=1 // loop_body
      %s18 = ssub.s32 %s13, 1
      %s19 = ssub.s32 %s13, 2
      %s20 = sadd.s32 %s13, 1
      %s21 = ssub.s32 %s13, %s20
      %p22 = scmp.eq.s32.totalorder %s21, 0
      %s24 = sadd.s32 %s23, 1
      %s25 = scalar_select %p22, %s23, %s24
      %p28 = pneg %p22
      %p29 = scmp.eq.s32.totalorder %s13, 1
      %p30 = por %p28, %p29
      %p31 = scmp.ne.s32.totalorder %s23, %s26
      %p32 = scmp.eq.s32.totalorder %s13, 0
      %p33 = por %p31, %p32
      %p34 = scmp.ne.s32.totalorder %s23, %s26
      %p35 = scmp.eq.s32.totalorder %s18, 1
      %p36 = por %p34, %p35
      %p37 = scmp.ne.s32.totalorder %s26, %s27
      %p38 = scmp.eq.s32.totalorder %s18, 0
      %p39 = por %p37, %p38
      %p40 = scmp.ne.s32.totalorder %s26, %s27
      %p41 = scmp.eq.s32.totalorder %s19, 1
      %p42 = por %p40, %p41
      %p44 = scmp.ne.s32.totalorder %s27, %s43
      %p45 = scmp.eq.s32.totalorder %s19, 0
      %p46 = por %p44, %p45
      %s48 = sadd.s32 %s47, 1
      %p51 = scmp.eq.s32.totalorder %s13, 1
      %p52 = scmp.ne.s32.totalorder %s47, %s49
      %p53 = scmp.eq.s32.totalorder %s13, 0
      %p54 = por %p52, %p53
      %p55 = scmp.ne.s32.totalorder %s47, %s49
      %p56 = scmp.eq.s32.totalorder %s18, 1
      %p57 = por %p55, %p56
      %p58 = scmp.ne.s32.totalorder %s49, %s50
      %p59 = scmp.eq.s32.totalorder %s18, 0
      %p60 = por %p58, %p59
      %p61 = scmp.ne.s32.totalorder %s49, %s50
      %p62 = scmp.eq.s32.totalorder %s19, 1
      %p63 = por %p61, %p62
      %p65 = scmp.ne.s32.totalorder %s50, %s64
      %p66 = scmp.eq.s32.totalorder %s19, 0
      %p67 = por %p65, %p66
      %s69 = sadd.s32 %s68, 1
      %p72 = scmp.eq.s32.totalorder %s13, 1
      %p73 = scmp.ne.s32.totalorder %s68, %s70
      %p74 = scmp.eq.s32.totalorder %s13, 0
      %p75 = por %p73, %p74
      %p76 = scmp.ne.s32.totalorder %s68, %s70
      %p77 = scmp.eq.s32.totalorder %s18, 1
      %p78 = por %p76, %p77
      %p79 = scmp.ne.s32.totalorder %s70, %s71
      %p80 = scmp.eq.s32.totalorder %s18, 0
      %p81 = por %p79, %p80
      %p82 = scmp.ne.s32.totalorder %s70, %s71
      %p83 = scmp.eq.s32.totalorder %s19, 1
      %p84 = por %p82, %p83
      %p86 = scmp.ne.s32.totalorder %s71, %s85
      %p87 = scmp.eq.s32.totalorder %s19, 0
      %p88 = por %p86, %p87
      %s90 = sadd.s32 %s89, 1
      %p93 = scmp.eq.s32.totalorder %s13, 1
      %p94 = scmp.ne.s32.totalorder %s89, %s91
      %p95 = scmp.eq.s32.totalorder %s13, 0
      %p96 = por %p94, %p95
      %p97 = scmp.ne.s32.totalorder %s89, %s91
      %p98 = scmp.eq.s32.totalorder %s18, 1
      %p99 = por %p97, %p98
      %p100 = scmp.ne.s32.totalorder %s91, %s92
      %p101 = scmp.eq.s32.totalorder %s18, 0
      %p102 = por %p100, %p101
      %p103 = scmp.ne.s32.totalorder %s91, %s92
      %p104 = scmp.eq.s32.totalorder %s19, 1
      %p105 = por %p103, %p104
      %p107 = scmp.ne.s32.totalorder %s92, %s106
      %p108 = scmp.eq.s32.totalorder %s19, 0
      %p109 = por %p107, %p108
      %s110 = ssub.s32 %s13, %s20
      %p111 = scmp.eq.s32.totalorder %s110, 0
      %s113 = sadd.s32 %s112, 1
      %s114 = scalar_select %p111, %s112, %s113
      %p117 = pneg %p111
      %p118 = scmp.eq.s32.totalorder %s13, 1
      %p119 = por %p117, %p118
      %p120 = scmp.ne.s32.totalorder %s112, %s115
      %p121 = scmp.eq.s32.totalorder %s13, 0
      %p122 = por %p120, %p121
      %p123 = scmp.ne.s32.totalorder %s112, %s115
      %p124 = scmp.eq.s32.totalorder %s18, 1
      %p125 = por %p123, %p124
      %p126 = scmp.ne.s32.totalorder %s115, %s116
      %p127 = scmp.eq.s32.totalorder %s18, 0
      %p128 = por %p126, %p127
      %p129 = scmp.ne.s32.totalorder %s115, %s116
      %p130 = scmp.eq.s32.totalorder %s19, 1
      %p131 = por %p129, %p130
      %p133 = scmp.ne.s32.totalorder %s116, %s132
      %p134 = scmp.eq.s32.totalorder %s19, 0
      %p135 = por %p133, %p134
      %p136 = scmp.le.s32.totalorder 1, %s13
      %p137 = scmp.lt.s32.totalorder %s13, 3
      %p138 = pnand %p136, %p137
      %p139 = pneg %p138
      // Predicated region
      $region9: #{exitflow_pallas.7} parent=5 // pred_check
        _
      $region10: #{exitflow_pallas.7} parent=5 // pred_check_branch
        %141 = sbr.rel (%p138) target = $region12
      $region11: #{exitflow_pallas.7} parent=5 // pred_region
        %s142 = ssub.s32 %s13, 1
        // Predicated region
        $region13: #{exitflow_pallas.7} parent=11 // pred_check
          %p143 = pneg %p60
        $region14: #{exitflow_pallas.7} parent=11 // pred_check_branch
          %145 = sbr.rel (%p143) target = $region16
        $region15: #{exitflow_pallas.7} parent=11 // pred_region
          _
        $region16: #{exitflow_pallas.7} parent=11 // pred_fallthru
          _
        // Predicated region
        $region17: #{exitflow_pallas.7} parent=11 // pred_check
          %p146 = pneg %p81
        $region18: #{exitflow_pallas.7} parent=11 // pred_check_branch
          %148 = sbr.rel (%p146) target = $region20
        $region19: #{exitflow_pallas.7} parent=11 // pred_region
          _
        $region20: #{exitflow_pallas.7} parent=11 // pred_fallthru
          _
        // Predicated region
        $region21: #{exitflow_pallas.7} parent=11 // pred_check
          %p149 = pneg %p102
        $region22: #{exitflow_pallas.7} parent=11 // pred_check_branch
          %151 = sbr.rel (%p149) target = $region24
        $region23: #{exitflow_pallas.7} parent=11 // pred_region
          _
        $region24: #{exitflow_pallas.7} parent=11 // pred_fallthru
          _
      $region12: #{exitflow_pallas.7} parent=5 // pred_fallthru
        _
      %p152 = scmp.lt.s32.totalorder %s13, 2
      // Predicated region
      $region25: #{exitflow_pallas.7} parent=5 // pred_check
        %p153 = pneg %p152
      $region26: #{exitflow_pallas.7} parent=5 // pred_check_branch
        %155 = sbr.rel (%p153) target = $region28
      $region27: #{exitflow_pallas.7} parent=5 // pred_region
        // Predicated region
        $region29: #{exitflow_pallas.7} parent=27 // pred_check
          %p156 = pneg %p33
        $region30: #{exitflow_pallas.7} parent=27 // pred_check_branch
          %158 = sbr.rel (%p156) target = $region32
        $region31: #{exitflow_pallas.7} parent=27 // pred_region
          %p159 = scmp.lt.s32.totalorder %s13, 1
          %s160 = scalar_select %p159, %s13, 1
          %s161 = smul.addr %s160, 20
          %s162 = smul.addr %s161, 4
          %s163 = scalar_lea.vmem %s0, %s162
        $region32: #{exitflow_pallas.7} parent=27 // pred_fallthru
          _
      $region28: #{exitflow_pallas.7} parent=5 // pred_fallthru
        _
      %p164 = scmp.le.s32.totalorder 1, %s13
      %p165 = scmp.lt.s32.totalorder %s13, 3
      %p166 = pnand %p164, %p165
      %p167 = pneg %p166
      // Predicated region
      $region33: #{exitflow_pallas.7} parent=5 // pred_check
        _
      $region34: #{exitflow_pallas.7} parent=5 // pred_check_branch
        %169 = sbr.rel (%p166) target = $region36
      $region35: #{exitflow_pallas.7} parent=5 // pred_region
        %s170 = ssub.s32 %s13, 1
        %p171 = scmp.lt.s32.totalorder %s18, 1
        %s172 = scalar_select %p171, %s18, 1
        %s173 = smul.addr %s172, 20
        %s174 = smul.addr %s173, 4
        %s175 = scalar_lea.vmem %s0, %s174
        %p176 = pneg %p39
        %p177 = pneg %p36
        %p178 = pneg %p60
        %p179 = pneg %p57
        %p180 = pneg %p81
        %p181 = pneg %p78
        %p182 = pneg %p102
        %p183 = pneg %p99
        %p184 = pneg %p128
        %p185 = pneg %p125
        %s186 = sand.u32 %s115, 1
        %s187 = scalar_lea.sflag [#allocation3], %s186
        %s188 = sand.u32 %s115, 1
        %s189 = scalar_lea.vmem [#allocation2], %s188
        %p190 = scmp.lt.s32.totalorder %s18, 1
        %s191 = scalar_select %p190, %s18, 1
        %s192 = smul.addr %s191, 20
        %s193 = smul.addr %s192, 4
        %s194 = scalar_lea.vmem %s0, %s193
        %v195 = vld [vmem:[%s194] sm:$0xf]
        %v196 = vld [vmem:[%s194 + $0x4] sm:$0xf]
        %v197 = vld [vmem:[%s194 + $0x8] sm:$0xf]
        %v198 = vld [vmem:[%s194 + $0xc] sm:$0xf]
        %v199 = vld [vmem:[%s194 + $0x10] sm:$0xf]
        %v200 = vld [vmem:[%s194 + $0x14] sm:$0xf]
        %v201 = vld [vmem:[%s194 + $0x18] sm:$0xf]
        %v202 = vld [vmem:[%s194 + $0x1c] sm:$0xf]
        %v203 = vld [vmem:[%s194 + $0x20] sm:$0xf]
        %v204 = vld [vmem:[%s194 + $0x24] sm:$0xf]
        %v205 = vld [vmem:[%s194 + $0x28] sm:$0xf]
        %v206 = vld [vmem:[%s194 + $0x2c] sm:$0xf]
        %v207 = vld [vmem:[%s194 + $0x30] sm:$0xf]
        %v208 = vld [vmem:[%s194 + $0x34] sm:$0xf]
        %v209 = vld [vmem:[%s194 + $0x38] sm:$0xf]
        %v210 = vld [vmem:[%s194 + $0x3c] sm:$0xf]
        %v211 = vunpack.c.l.bf16 %v195
        %v212 = vunpack.c.l.bf16 %v196
        %v213 = vunpack.c.l.bf16 %v197
        %v214 = vunpack.c.l.bf16 %v198
        %v215 = vunpack.c.l.bf16 %v199
        %v216 = vunpack.c.l.bf16 %v200
        %v217 = vunpack.c.l.bf16 %v201
        %v218 = vunpack.c.l.bf16 %v202
        %v219 = vunpack.c.l.bf16 %v203
        %v220 = vunpack.c.l.bf16 %v204
        %v221 = vunpack.c.l.bf16 %v205
        %v222 = vunpack.c.l.bf16 %v206
        %v223 = vunpack.c.l.bf16 %v207
        %v224 = vunpack.c.l.bf16 %v208
        %v225 = vunpack.c.l.bf16 %v209
        %v226 = vunpack.c.l.bf16 %v210
        %v227 = vrot.slane %v211, 7
        %v228 = vrot.slane %v213, 7
        %v229 = vrot.slane %v215, 7
        %v230 = vrot.slane %v217, 7
        %v231 = vrot.slane %v219, 7
        %v232 = vrot.slane %v221, 7
        %v233 = vrot.slane %v223, 7
        %v234 = vrot.slane %v225, 7
        %v235 = vrot.slane %v212, 7
        %v236 = vrot.slane %v214, 7
        %v237 = vrot.slane %v216, 7
        %v238 = vrot.slane %v218, 7
        %v239 = vrot.slane %v220, 7
        %v240 = vrot.slane %v222, 7
        %v241 = vrot.slane %v224, 7
        %v242 = vrot.slane %v226, 7
        %v243 = vlaneseq
        %v244 = vshrl.u32 %v243, 7
        %vm245 = vcmp.lt.s32.totalorder %v244, 1
        %v246 = vsel %vm245, %v227, %v235
        %v247 = vsel %vm245, %v228, %v236
        %v248 = vsel %vm245, %v229, %v237
        %v249 = vsel %vm245, %v230, %v238
        %v250 = vsel %vm245, %v231, %v239
        %v251 = vsel %vm245, %v232, %v240
        %v252 = vsel %vm245, %v233, %v241
        %v253 = vsel %vm245, %v234, %v242
        %v254 = vsel %vm245, %v235, %v227
        %v255 = vsel %vm245, %v236, %v228
        %v256 = vsel %vm245, %v237, %v229
        %v257 = vsel %vm245, %v238, %v230
        %v258 = vsel %vm245, %v239, %v231
        %v259 = vsel %vm245, %v240, %v232
        %v260 = vsel %vm245, %v241, %v233
        %v261 = vsel %vm245, %v242, %v234
        %v262 = vld [vmem:[%s1] sm:$0x1]
        %v263 = vperm.slane %v262, 0
        %v264 = vmul.f32 %v254, %v263
        %v265 = vmul.f32 %v246, %v263
        %v266 = vmul.f32 %v255, %v263
        %v267 = vmul.f32 %v247, %v263
        %v268 = vmul.f32 %v256, %v263
        %v269 = vmul.f32 %v248, %v263
        %v270 = vmul.f32 %v257, %v263
        %v271 = vmul.f32 %v249, %v263
        %v272 = vmul.f32 %v258, %v263
        %v273 = vmul.f32 %v250, %v263
        %v274 = vmul.f32 %v259, %v263
        %v275 = vmul.f32 %v251, %v263
        %v276 = vmul.f32 %v260, %v263
        %v277 = vmul.f32 %v252, %v263
        %v278 = vmul.f32 %v261, %v263
        %v279 = vmul.f32 %v253, %v263
        %v280 = vld [vmem:[%s1 + $0x1] sm:$0x1]
        %v281 = vperm.slane %v280, 0
        %v282 = vmul.f32 %v211, %v281
        %v283 = vmul.f32 %v212, %v281
        %v284 = vmul.f32 %v213, %v281
        %v285 = vmul.f32 %v214, %v281
        %v286 = vmul.f32 %v215, %v281
        %v287 = vmul.f32 %v216, %v281
        %v288 = vmul.f32 %v217, %v281
        %v289 = vmul.f32 %v218, %v281
        %v290 = vmul.f32 %v219, %v281
        %v291 = vmul.f32 %v220, %v281
        %v292 = vmul.f32 %v221, %v281
        %v293 = vmul.f32 %v222, %v281
        %v294 = vmul.f32 %v223, %v281
        %v295 = vmul.f32 %v224, %v281
        %v296 = vmul.f32 %v225, %v281
        %v297 = vmul.f32 %v226, %v281
        %v298 = vadd.f32 %v264, %v282
        %v299 = vadd.f32 %v265, %v283
        %v300 = vadd.f32 %v266, %v284
        %v301 = vadd.f32 %v267, %v285
        %v302 = vadd.f32 %v268, %v286
        %v303 = vadd.f32 %v269, %v287
        %v304 = vadd.f32 %v270, %v288
        %v305 = vadd.f32 %v271, %v289
        %v306 = vadd.f32 %v272, %v290
        %v307 = vadd.f32 %v273, %v291
        %v308 = vadd.f32 %v274, %v292
        %v309 = vadd.f32 %v275, %v293
        %v310 = vadd.f32 %v276, %v294
        %v311 = vadd.f32 %v277, %v295
        %v312 = vadd.f32 %v278, %v296
        %v313 = vadd.f32 %v279, %v297
        %v314 = vrot.slane %v211, 1
        %v315 = vrot.slane %v213, 1
        %v316 = vrot.slane %v215, 1
        %v317 = vrot.slane %v217, 1
        %v318 = vrot.slane %v219, 1
        %v319 = vrot.slane %v221, 1
        %v320 = vrot.slane %v223, 1
        %v321 = vrot.slane %v225, 1
        %v322 = vrot.slane %v212, 1
        %v323 = vrot.slane %v214, 1
        %v324 = vrot.slane %v216, 1
        %v325 = vrot.slane %v218, 1
        %v326 = vrot.slane %v220, 1
        %v327 = vrot.slane %v222, 1
        %v328 = vrot.slane %v224, 1
        %v329 = vrot.slane %v226, 1
        %vm330 = vcmp.lt.s32.totalorder %v244, 7
        %v331 = vsel %vm330, %v314, %v322
        %v332 = vsel %vm330, %v315, %v323
        %v333 = vsel %vm330, %v316, %v324
        %v334 = vsel %vm330, %v317, %v325
        %v335 = vsel %vm330, %v318, %v326
        %v336 = vsel %vm330, %v319, %v327
        %v337 = vsel %vm330, %v320, %v328
        %v338 = vsel %vm330, %v321, %v329
        %v339 = vsel %vm330, %v322, %v314
        %v340 = vsel %vm330, %v323, %v315
        %v341 = vsel %vm330, %v324, %v316
        %v342 = vsel %vm330, %v325, %v317
        %v343 = vsel %vm330, %v326, %v318
        %v344 = vsel %vm330, %v327, %v319
        %v345 = vsel %vm330, %v328, %v320
        %v346 = vsel %vm330, %v329, %v321
        %v347 = vld [vmem:[%s1 + $0x2] sm:$0x1]
        %v348 = vperm.slane %v347, 0
        %v349 = vmul.f32 %v331, %v348
        %v350 = vmul.f32 %v339, %v348
        %v351 = vmul.f32 %v332, %v348
        %v352 = vmul.f32 %v340, %v348
        %v353 = vmul.f32 %v333, %v348
        %v354 = vmul.f32 %v341, %v348
        %v355 = vmul.f32 %v334, %v348
        %v356 = vmul.f32 %v342, %v348
        %v357 = vmul.f32 %v335, %v348
        %v358 = vmul.f32 %v343, %v348
        %v359 = vmul.f32 %v336, %v348
        %v360 = vmul.f32 %v344, %v348
        %v361 = vmul.f32 %v337, %v348
        %v362 = vmul.f32 %v345, %v348
        %v363 = vmul.f32 %v338, %v348
        %v364 = vmul.f32 %v346, %v348
        %v365 = vadd.f32 %v298, %v349
        %v366 = vadd.f32 %v299, %v350
        %v367 = vadd.f32 %v300, %v351
        %v368 = vadd.f32 %v301, %v352
        %v369 = vadd.f32 %v302, %v353
        %v370 = vadd.f32 %v303, %v354
        %v371 = vadd.f32 %v304, %v355
        %v372 = vadd.f32 %v305, %v356
        %v373 = vadd.f32 %v306, %v357
        %v374 = vadd.f32 %v307, %v358
        %v375 = vadd.f32 %v308, %v359
        %v376 = vadd.f32 %v309, %v360
        %v377 = vadd.f32 %v310, %v361
        %v378 = vadd.f32 %v311, %v362
        %v379 = vadd.f32 %v312, %v363
        %v380 = vadd.f32 %v313, %v364
        %s381 = scalar_lea.vmem %s194, 8
        %v382 = vld [vmem:[%s381] sm:$0xf]
        %v383 = vld [vmem:[%s381 + $0x4] sm:$0xf]
        %v384 = vld [vmem:[%s381 + $0x8] sm:$0xf]
        %v385 = vld [vmem:[%s381 + $0xc] sm:$0xf]
        %v386 = vld [vmem:[%s381 + $0x10] sm:$0xf]
        %v387 = vld [vmem:[%s381 + $0x14] sm:$0xf]
        %v388 = vld [vmem:[%s381 + $0x18] sm:$0xf]
        %v389 = vld [vmem:[%s381 + $0x1c] sm:$0xf]
        %v390 = vld [vmem:[%s381 + $0x20] sm:$0xf]
        %v391 = vld [vmem:[%s381 + $0x24] sm:$0xf]
        %v392 = vld [vmem:[%s381 + $0x28] sm:$0xf]
        %v393 = vld [vmem:[%s381 + $0x2c] sm:$0xf]
        %v394 = vld [vmem:[%s381 + $0x30] sm:$0xf]
        %v395 = vld [vmem:[%s381 + $0x34] sm:$0xf]
        %v396 = vld [vmem:[%s381 + $0x38] sm:$0xf]
        %v397 = vld [vmem:[%s381 + $0x3c] sm:$0xf]
        %v398 = vunpack.c.l.bf16 %v382
        %v399 = vunpack.c.l.bf16 %v383
        %v400 = vunpack.c.l.bf16 %v384
        %v401 = vunpack.c.l.bf16 %v385
        %v402 = vunpack.c.l.bf16 %v386
        %v403 = vunpack.c.l.bf16 %v387
        %v404 = vunpack.c.l.bf16 %v388
        %v405 = vunpack.c.l.bf16 %v389
        %v406 = vunpack.c.l.bf16 %v390
        %v407 = vunpack.c.l.bf16 %v391
        %v408 = vunpack.c.l.bf16 %v392
        %v409 = vunpack.c.l.bf16 %v393
        %v410 = vunpack.c.l.bf16 %v394
        %v411 = vunpack.c.l.bf16 %v395
        %v412 = vunpack.c.l.bf16 %v396
        %v413 = vunpack.c.l.bf16 %v397
        %v414 = vrot.slane %v398, 7
        %v415 = vrot.slane %v400, 7
        %v416 = vrot.slane %v402, 7
        %v417 = vrot.slane %v404, 7
        %v418 = vrot.slane %v406, 7
        %v419 = vrot.slane %v408, 7
        %v420 = vrot.slane %v410, 7
        %v421 = vrot.slane %v412, 7
        %v422 = vrot.slane %v399, 7
        %v423 = vrot.slane %v401, 7
        %v424 = vrot.slane %v403, 7
        %v425 = vrot.slane %v405, 7
        %v426 = vrot.slane %v407, 7
        %v427 = vrot.slane %v409, 7
        %v428 = vrot.slane %v411, 7
        %v429 = vrot.slane %v413, 7
        %v430 = vsel %vm245, %v414, %v422
        %v431 = vsel %vm245, %v415, %v423
        %v432 = vsel %vm245, %v416, %v424
        %v433 = vsel %vm245, %v417, %v425
        %v434 = vsel %vm245, %v418, %v426
        %v435 = vsel %vm245, %v419, %v427
        %v436 = vsel %vm245, %v420, %v428
        %v437 = vsel %vm245, %v421, %v429
        %v438 = vsel %vm245, %v422, %v414
        %v439 = vsel %vm245, %v423, %v415
        %v440 = vsel %vm245, %v424, %v416
        %v441 = vsel %vm245, %v425, %v417
        %v442 = vsel %vm245, %v426, %v418
        %v443 = vsel %vm245, %v427, %v419
        %v444 = vsel %vm245, %v428, %v420
        %v445 = vsel %vm245, %v429, %v421
        %s446 = scalar_lea.vmem %s1, 4
        %v447 = vld [vmem:[%s446] sm:$0x1]
        %v448 = vperm.slane %v447, 0
        %v449 = vmul.f32 %v438, %v448
        %v450 = vmul.f32 %v430, %v448
        %v451 = vmul.f32 %v439, %v448
        %v452 = vmul.f32 %v431, %v448
        %v453 = vmul.f32 %v440, %v448
        %v454 = vmul.f32 %v432, %v448
        %v455 = vmul.f32 %v441, %v448
        %v456 = vmul.f32 %v433, %v448
        %v457 = vmul.f32 %v442, %v448
        %v458 = vmul.f32 %v434, %v448
        %v459 = vmul.f32 %v443, %v448
        %v460 = vmul.f32 %v435, %v448
        %v461 = vmul.f32 %v444, %v448
        %v462 = vmul.f32 %v436, %v448
        %v463 = vmul.f32 %v445, %v448
        %v464 = vmul.f32 %v437, %v448
        %v465 = vadd.f32 %v365, %v449
        %v466 = vadd.f32 %v366, %v450
        %v467 = vadd.f32 %v367, %v451
        %v468 = vadd.f32 %v368, %v452
        %v469 = vadd.f32 %v369, %v453
        %v470 = vadd.f32 %v370, %v454
        %v471 = vadd.f32 %v371, %v455
        %v472 = vadd.f32 %v372, %v456
        %v473 = vadd.f32 %v373, %v457
        %v474 = vadd.f32 %v374, %v458
        %v475 = vadd.f32 %v375, %v459
        %v476 = vadd.f32 %v376, %v460
        %v477 = vadd.f32 %v377, %v461
        %v478 = vadd.f32 %v378, %v462
        %v479 = vadd.f32 %v379, %v463
        %v480 = vadd.f32 %v380, %v464
        %v481 = vld [vmem:[%s446 + $0x1] sm:$0x1]
        %v482 = vperm.slane %v481, 0
        %v483 = vmul.f32 %v398, %v482
        %v484 = vmul.f32 %v399, %v482
        %v485 = vmul.f32 %v400, %v482
        %v486 = vmul.f32 %v401, %v482
        %v487 = vmul.f32 %v402, %v482
        %v488 = vmul.f32 %v403, %v482
        %v489 = vmul.f32 %v404, %v482
        %v490 = vmul.f32 %v405, %v482
        %v491 = vmul.f32 %v406, %v482
        %v492 = vmul.f32 %v407, %v482
        %v493 = vmul.f32 %v408, %v482
        %v494 = vmul.f32 %v409, %v482
        %v495 = vmul.f32 %v410, %v482
        %v496 = vmul.f32 %v411, %v482
        %v497 = vmul.f32 %v412, %v482
        %v498 = vmul.f32 %v413, %v482
        %v499 = vadd.f32 %v465, %v483
        %v500 = vadd.f32 %v466, %v484
        %v501 = vadd.f32 %v467, %v485
        %v502 = vadd.f32 %v468, %v486
        %v503 = vadd.f32 %v469, %v487
        %v504 = vadd.f32 %v470, %v488
        %v505 = vadd.f32 %v471, %v489
        %v506 = vadd.f32 %v472, %v490
        %v507 = vadd.f32 %v473, %v491
        %v508 = vadd.f32 %v474, %v492
        %v509 = vadd.f32 %v475, %v493
        %v510 = vadd.f32 %v476, %v494
        %v511 = vadd.f32 %v477, %v495
        %v512 = vadd.f32 %v478, %v496
        %v513 = vadd.f32 %v479, %v497
        %v514 = vadd.f32 %v480, %v498
        %v515 = vrot.slane %v398, 1
        %v516 = vrot.slane %v400, 1
        %v517 = vrot.slane %v402, 1
        %v518 = vrot.slane %v404, 1
        %v519 = vrot.slane %v406, 1
        %v520 = vrot.slane %v408, 1
        %v521 = vrot.slane %v410, 1
        %v522 = vrot.slane %v412, 1
        %v523 = vrot.slane %v399, 1
        %v524 = vrot.slane %v401, 1
        %v525 = vrot.slane %v403, 1
        %v526 = vrot.slane %v405, 1
        %v527 = vrot.slane %v407, 1
        %v528 = vrot.slane %v409, 1
        %v529 = vrot.slane %v411, 1
        %v530 = vrot.slane %v413, 1
        %v531 = vsel %vm330, %v515, %v523
        %v532 = vsel %vm330, %v516, %v524
        %v533 = vsel %vm330, %v517, %v525
        %v534 = vsel %vm330, %v518, %v526
        %v535 = vsel %vm330, %v519, %v527
        %v536 = vsel %vm330, %v520, %v528
        %v537 = vsel %vm330, %v521, %v529
        %v538 = vsel %vm330, %v522, %v530
        %v539 = vsel %vm330, %v523, %v515
        %v540 = vsel %vm330, %v524, %v516
        %v541 = vsel %vm330, %v525, %v517
        %v542 = vsel %vm330, %v526, %v518
        %v543 = vsel %vm330, %v527, %v519
        %v544 = vsel %vm330, %v528, %v520
        %v545 = vsel %vm330, %v529, %v521
        %v546 = vsel %vm330, %v530, %v522
        %v547 = vld [vmem:[%s446 + $0x2] sm:$0x1]
        %v548 = vperm.slane %v547, 0
        %v549 = vmul.f32 %v531, %v548
        %v550 = vmul.f32 %v539, %v548
        %v551 = vmul.f32 %v532, %v548
        %v552 = vmul.f32 %v540, %v548
        %v553 = vmul.f32 %v533, %v548
        %v554 = vmul.f32 %v541, %v548
        %v555 = vmul.f32 %v534, %v548
        %v556 = vmul.f32 %v542, %v548
        %v557 = vmul.f32 %v535, %v548
        %v558 = vmul.f32 %v543, %v548
        %v559 = vmul.f32 %v536, %v548
        %v560 = vmul.f32 %v544, %v548
        %v561 = vmul.f32 %v537, %v548
        %v562 = vmul.f32 %v545, %v548
        %v563 = vmul.f32 %v538, %v548
        %v564 = vmul.f32 %v546, %v548
        %v565 = vadd.f32 %v499, %v549
        %v566 = vadd.f32 %v500, %v550
        %v567 = vadd.f32 %v501, %v551
        %v568 = vadd.f32 %v502, %v552
        %v569 = vadd.f32 %v503, %v553
        %v570 = vadd.f32 %v504, %v554
        %v571 = vadd.f32 %v505, %v555
        %v572 = vadd.f32 %v506, %v556
        %v573 = vadd.f32 %v507, %v557
        %v574 = vadd.f32 %v508, %v558
        %v575 = vadd.f32 %v509, %v559
        %v576 = vadd.f32 %v510, %v560
        %v577 = vadd.f32 %v511, %v561
        %v578 = vadd.f32 %v512, %v562
        %v579 = vadd.f32 %v513, %v563
        %v580 = vadd.f32 %v514, %v564
        %s581 = scalar_lea.vmem %s194, 16
        %v582 = vld [vmem:[%s581] sm:$0xf]
        %v583 = vld [vmem:[%s581 + $0x4] sm:$0xf]
        %v584 = vld [vmem:[%s581 + $0x8] sm:$0xf]
        %v585 = vld [vmem:[%s581 + $0xc] sm:$0xf]
        %v586 = vld [vmem:[%s581 + $0x10] sm:$0xf]
        %v587 = vld [vmem:[%s581 + $0x14] sm:$0xf]
        %v588 = vld [vmem:[%s581 + $0x18] sm:$0xf]
        %v589 = vld [vmem:[%s581 + $0x1c] sm:$0xf]
        %v590 = vld [vmem:[%s581 + $0x20] sm:$0xf]
        %v591 = vld [vmem:[%s581 + $0x24] sm:$0xf]
        %v592 = vld [vmem:[%s581 + $0x28] sm:$0xf]
        %v593 = vld [vmem:[%s581 + $0x2c] sm:$0xf]
        %v594 = vld [vmem:[%s581 + $0x30] sm:$0xf]
        %v595 = vld [vmem:[%s581 + $0x34] sm:$0xf]
        %v596 = vld [vmem:[%s581 + $0x38] sm:$0xf]
        %v597 = vld [vmem:[%s581 + $0x3c] sm:$0xf]
        %v598 = vunpack.c.l.bf16 %v582
        %v599 = vunpack.c.l.bf16 %v583
        %v600 = vunpack.c.l.bf16 %v584
        %v601 = vunpack.c.l.bf16 %v585
        %v602 = vunpack.c.l.bf16 %v586
        %v603 = vunpack.c.l.bf16 %v587
        %v604 = vunpack.c.l.bf16 %v588
        %v605 = vunpack.c.l.bf16 %v589
        %v606 = vunpack.c.l.bf16 %v590
        %v607 = vunpack.c.l.bf16 %v591
        %v608 = vunpack.c.l.bf16 %v592
        %v609 = vunpack.c.l.bf16 %v593
        %v610 = vunpack.c.l.bf16 %v594
        %v611 = vunpack.c.l.bf16 %v595
        %v612 = vunpack.c.l.bf16 %v596
        %v613 = vunpack.c.l.bf16 %v597
        %v614 = vrot.slane %v598, 7
        %v615 = vrot.slane %v600, 7
        %v616 = vrot.slane %v602, 7
        %v617 = vrot.slane %v604, 7
        %v618 = vrot.slane %v606, 7
        %v619 = vrot.slane %v608, 7
        %v620 = vrot.slane %v610, 7
        %v621 = vrot.slane %v612, 7
        %v622 = vrot.slane %v599, 7
        %v623 = vrot.slane %v601, 7
        %v624 = vrot.slane %v603, 7
        %v625 = vrot.slane %v605, 7
        %v626 = vrot.slane %v607, 7
        %v627 = vrot.slane %v609, 7
        %v628 = vrot.slane %v611, 7
        %v629 = vrot.slane %v613, 7
        %v630 = vsel %vm245, %v614, %v622
        %v631 = vsel %vm245, %v615, %v623
        %v632 = vsel %vm245, %v616, %v624
        %v633 = vsel %vm245, %v617, %v625
        %v634 = vsel %vm245, %v618, %v626
        %v635 = vsel %vm245, %v619, %v627
        %v636 = vsel %vm245, %v620, %v628
        %v637 = vsel %vm245, %v621, %v629
        %v638 = vsel %vm245, %v622, %v614
        %v639 = vsel %vm245, %v623, %v615
        %v640 = vsel %vm245, %v624, %v616
        %v641 = vsel %vm245, %v625, %v617
        %v642 = vsel %vm245, %v626, %v618
        %v643 = vsel %vm245, %v627, %v619
        %v644 = vsel %vm245, %v628, %v620
        %v645 = vsel %vm245, %v629, %v621
        %s646 = scalar_lea.vmem %s1, 8
        %v647 = vld [vmem:[%s646] sm:$0x1]
        %v648 = vperm.slane %v647, 0
        %v649 = vmul.f32 %v638, %v648
        %v650 = vmul.f32 %v630, %v648
        %v651 = vmul.f32 %v639, %v648
        %v652 = vmul.f32 %v631, %v648
        %v653 = vmul.f32 %v640, %v648
        %v654 = vmul.f32 %v632, %v648
        %v655 = vmul.f32 %v641, %v648
        %v656 = vmul.f32 %v633, %v648
        %v657 = vmul.f32 %v642, %v648
        %v658 = vmul.f32 %v634, %v648
        %v659 = vmul.f32 %v643, %v648
        %v660 = vmul.f32 %v635, %v648
        %v661 = vmul.f32 %v644, %v648
        %v662 = vmul.f32 %v636, %v648
        %v663 = vmul.f32 %v645, %v648
        %v664 = vmul.f32 %v637, %v648
        %v665 = vadd.f32 %v565, %v649
        %v666 = vadd.f32 %v566, %v650
        %v667 = vadd.f32 %v567, %v651
        %v668 = vadd.f32 %v568, %v652
        %v669 = vadd.f32 %v569, %v653
        %v670 = vadd.f32 %v570, %v654
        %v671 = vadd.f32 %v571, %v655
        %v672 = vadd.f32 %v572, %v656
        %v673 = vadd.f32 %v573, %v657
        %v674 = vadd.f32 %v574, %v658
        %v675 = vadd.f32 %v575, %v659
        %v676 = vadd.f32 %v576, %v660
        %v677 = vadd.f32 %v577, %v661
        %v678 = vadd.f32 %v578, %v662
        %v679 = vadd.f32 %v579, %v663
        %v680 = vadd.f32 %v580, %v664
        %v681 = vld [vmem:[%s646 + $0x1] sm:$0x1]
        %v682 = vperm.slane %v681, 0
        %v683 = vmul.f32 %v598, %v682
        %v684 = vmul.f32 %v599, %v682
        %v685 = vmul.f32 %v600, %v682
        %v686 = vmul.f32 %v601, %v682
        %v687 = vmul.f32 %v602, %v682
        %v688 = vmul.f32 %v603, %v682
        %v689 = vmul.f32 %v604, %v682
        %v690 = vmul.f32 %v605, %v682
        %v691 = vmul.f32 %v606, %v682
        %v692 = vmul.f32 %v607, %v682
        %v693 = vmul.f32 %v608, %v682
        %v694 = vmul.f32 %v609, %v682
        %v695 = vmul.f32 %v610, %v682
        %v696 = vmul.f32 %v611, %v682
        %v697 = vmul.f32 %v612, %v682
        %v698 = vmul.f32 %v613, %v682
        %v699 = vadd.f32 %v665, %v683
        %v700 = vadd.f32 %v666, %v684
        %v701 = vadd.f32 %v667, %v685
        %v702 = vadd.f32 %v668, %v686
        %v703 = vadd.f32 %v669, %v687
        %v704 = vadd.f32 %v670, %v688
        %v705 = vadd.f32 %v671, %v689
        %v706 = vadd.f32 %v672, %v690
        %v707 = vadd.f32 %v673, %v691
        %v708 = vadd.f32 %v674, %v692
        %v709 = vadd.f32 %v675, %v693
        %v710 = vadd.f32 %v676, %v694
        %v711 = vadd.f32 %v677, %v695
        %v712 = vadd.f32 %v678, %v696
        %v713 = vadd.f32 %v679, %v697
        %v714 = vadd.f32 %v680, %v698
        %v715 = vrot.slane %v598, 1
        %v716 = vrot.slane %v600, 1
        %v717 = vrot.slane %v602, 1
        %v718 = vrot.slane %v604, 1
        %v719 = vrot.slane %v606, 1
        %v720 = vrot.slane %v608, 1
        %v721 = vrot.slane %v610, 1
        %v722 = vrot.slane %v612, 1
        %v723 = vrot.slane %v599, 1
        %v724 = vrot.slane %v601, 1
        %v725 = vrot.slane %v603, 1
        %v726 = vrot.slane %v605, 1
        %v727 = vrot.slane %v607, 1
        %v728 = vrot.slane %v609, 1
        %v729 = vrot.slane %v611, 1
        %v730 = vrot.slane %v613, 1
        %v731 = vsel %vm330, %v715, %v723
        %v732 = vsel %vm330, %v716, %v724
        %v733 = vsel %vm330, %v717, %v725
        %v734 = vsel %vm330, %v718, %v726
        %v735 = vsel %vm330, %v719, %v727
        %v736 = vsel %vm330, %v720, %v728
        %v737 = vsel %vm330, %v721, %v729
        %v738 = vsel %vm330, %v722, %v730
        %v739 = vsel %vm330, %v723, %v715
        %v740 = vsel %vm330, %v724, %v716
        %v741 = vsel %vm330, %v725, %v717
        %v742 = vsel %vm330, %v726, %v718
        %v743 = vsel %vm330, %v727, %v719
        %v744 = vsel %vm330, %v728, %v720
        %v745 = vsel %vm330, %v729, %v721
        %v746 = vsel %vm330, %v730, %v722
        %v747 = vld [vmem:[%s646 + $0x2] sm:$0x1]
        %v748 = vperm.slane %v747, 0
        %v749 = vmul.f32 %v731, %v748
        %v750 = vmul.f32 %v739, %v748
        %v751 = vmul.f32 %v732, %v748
        %v752 = vmul.f32 %v740, %v748
        %v753 = vmul.f32 %v733, %v748
        %v754 = vmul.f32 %v741, %v748
        %v755 = vmul.f32 %v734, %v748
        %v756 = vmul.f32 %v742, %v748
        %v757 = vmul.f32 %v735, %v748
        %v758 = vmul.f32 %v743, %v748
        %v759 = vmul.f32 %v736, %v748
        %v760 = vmul.f32 %v744, %v748
        %v761 = vmul.f32 %v737, %v748
        %v762 = vmul.f32 %v745, %v748
        %v763 = vmul.f32 %v738, %v748
        %v764 = vmul.f32 %v746, %v748
        %v765 = vadd.f32 %v699, %v749
        %v766 = vadd.f32 %v700, %v750
        %v767 = vadd.f32 %v701, %v751
        %v768 = vadd.f32 %v702, %v752
        %v769 = vadd.f32 %v703, %v753
        %v770 = vadd.f32 %v704, %v754
        %v771 = vadd.f32 %v705, %v755
        %v772 = vadd.f32 %v706, %v756
        %v773 = vadd.f32 %v707, %v757
        %v774 = vadd.f32 %v708, %v758
        %v775 = vadd.f32 %v709, %v759
        %v776 = vadd.f32 %v710, %v760
        %v777 = vadd.f32 %v711, %v761
        %v778 = vadd.f32 %v712, %v762
        %v779 = vadd.f32 %v713, %v763
        %v780 = vadd.f32 %v714, %v764
        %v781 = vpack.c.bf16 %v765, %v765
        %v782 = vpack.c.bf16 %v766, %v766
        %v783 = vpack.c.bf16 %v767, %v767
        %v784 = vpack.c.bf16 %v768, %v768
        %v785 = vpack.c.bf16 %v769, %v769
        %v786 = vpack.c.bf16 %v770, %v770
        %v787 = vpack.c.bf16 %v771, %v771
        %v788 = vpack.c.bf16 %v772, %v772
        %v789 = vpack.c.bf16 %v773, %v773
        %v790 = vpack.c.bf16 %v774, %v774
        %v791 = vpack.c.bf16 %v775, %v775
        %v792 = vpack.c.bf16 %v776, %v776
        %v793 = vpack.c.bf16 %v777, %v777
        %v794 = vpack.c.bf16 %v778, %v778
        %v795 = vpack.c.bf16 %v779, %v779
        %v796 = vpack.c.bf16 %v780, %v780
        %v797 = vld [vmem:[%s2] sm:$0xf]
        %v798 = vld [vmem:[%s2 + $0x4] sm:$0xf]
        %v799 = vld [vmem:[%s2 + $0x8] sm:$0xf]
        %v800 = vld [vmem:[%s2 + $0xc] sm:$0xf]
        %v801 = vld [vmem:[%s2 + $0x10] sm:$0xf]
        %v802 = vld [vmem:[%s2 + $0x14] sm:$0xf]
        %v803 = vld [vmem:[%s2 + $0x18] sm:$0xf]
        %v804 = vld [vmem:[%s2 + $0x1c] sm:$0xf]
        %v805 = vld [vmem:[%s2 + $0x20] sm:$0xf]
        %v806 = vld [vmem:[%s2 + $0x24] sm:$0xf]
        %v807 = vld [vmem:[%s2 + $0x28] sm:$0xf]
        %v808 = vld [vmem:[%s2 + $0x2c] sm:$0xf]
        %v809 = vld [vmem:[%s2 + $0x30] sm:$0xf]
        %v810 = vld [vmem:[%s2 + $0x34] sm:$0xf]
        %v811 = vld [vmem:[%s2 + $0x38] sm:$0xf]
        %v812 = vld [vmem:[%s2 + $0x3c] sm:$0xf]
        %v813 = vld [vmem:[%s3] sm:$0x1]
        %v815 = vperm.slane %v813, 0
        %v833 = vunpack.c.l.b16 %v781
        %v834 = vunpack.c.l.b16 %v782
        %v835 = vunpack.c.l.b16 %v783
        %v836 = vunpack.c.l.b16 %v784
        %v837 = vunpack.c.l.b16 %v785
        %v838 = vunpack.c.l.b16 %v786
        %v839 = vunpack.c.l.b16 %v787
        %v840 = vunpack.c.l.b16 %v788
        %v841 = vunpack.c.l.b16 %v789
        %v842 = vunpack.c.l.b16 %v790
        %v843 = vunpack.c.l.b16 %v791
        %v844 = vunpack.c.l.b16 %v792
        %v845 = vunpack.c.l.b16 %v793
        %v846 = vunpack.c.l.b16 %v794
        %v847 = vunpack.c.l.b16 %v795
        %v848 = vunpack.c.l.b16 %v796
        %v849 = vpack.c.b16 %v834, %v833
        %v850 = vpack.c.b16 %v836, %v835
        %v851 = vpack.c.b16 %v838, %v837
        %v852 = vpack.c.b16 %v840, %v839
        %v853 = vpack.c.b16 %v842, %v841
        %v854 = vpack.c.b16 %v844, %v843
        %v855 = vpack.c.b16 %v846, %v845
        %v856 = vpack.c.b16 %v848, %v847
        %v881 = vunpack.c.l.b16 %v797
        %v882 = vunpack.c.l.b16 %v798
        %v883 = vunpack.c.l.b16 %v799
        %v884 = vunpack.c.l.b16 %v800
        %v885 = vunpack.c.l.b16 %v801
        %v886 = vunpack.c.l.b16 %v802
        %v887 = vunpack.c.l.b16 %v803
        %v888 = vunpack.c.l.b16 %v804
        %v889 = vunpack.c.l.b16 %v805
        %v890 = vunpack.c.l.b16 %v806
        %v891 = vunpack.c.l.b16 %v807
        %v892 = vunpack.c.l.b16 %v808
        %v893 = vunpack.c.l.b16 %v809
        %v894 = vunpack.c.l.b16 %v810
        %v895 = vunpack.c.l.b16 %v811
        %v896 = vunpack.c.l.b16 %v812
        %v897 = vpack.c.b16 %v882, %v881
        %v898 = vpack.c.b16 %v884, %v883
        %v899 = vpack.c.b16 %v886, %v885
        %v900 = vpack.c.b16 %v888, %v887
        %v901 = vpack.c.b16 %v890, %v889
        %v902 = vpack.c.b16 %v892, %v891
        %v903 = vpack.c.b16 %v894, %v893
        %v904 = vpack.c.b16 %v896, %v895
        %913 = vmatpush.bf16.msra.mxu0 %v904
        %914 = vmatpush.bf16.msra.mxu0 %v903
        %915 = vmatpush.bf16.msra.mxu0 %v902
        %916 = vmatpush.bf16.msra.mxu0 %v901
        %917 = vmatpush.bf16.msra.mxu0 %v900
        %918 = vmatpush.bf16.msra.mxu0 %v899
        %919 = vmatpush.bf16.msra.mxu0 %v898
        %920 = vmatpush.bf16.msra.mxu0 %v897
        %921 = vmatmul.bf16.gmra.mxu0 %v849
        %v922 = vpop.f32.mrf.mxu0
        %v923 = vadd.f32 %v815, %v922
        %v924 = vpop.f32.mrf.mxu0
        %v925 = vadd.f32 %v815, %v924
        %926 = vmatmul.bf16.gmra.mxu0 %v850
        %v927 = vpop.f32.mrf.mxu0
        %v928 = vadd.f32 %v815, %v927
        %v929 = vpop.f32.mrf.mxu0
        %v930 = vadd.f32 %v815, %v929
        %931 = vmatmul.bf16.gmra.mxu0 %v851
        %v932 = vpop.f32.mrf.mxu0
        %v933 = vadd.f32 %v815, %v932
        %v934 = vpop.f32.mrf.mxu0
        %v935 = vadd.f32 %v815, %v934
        %936 = vmatmul.bf16.gmra.mxu0 %v852
        %v937 = vpop.f32.mrf.mxu0
        %v938 = vadd.f32 %v815, %v937
        %v939 = vpop.f32.mrf.mxu0
        %v940 = vadd.f32 %v815, %v939
        %941 = vmatmul.bf16.gmra.mxu0 %v853
        %v942 = vpop.f32.mrf.mxu0
        %v943 = vadd.f32 %v815, %v942
        %v944 = vpop.f32.mrf.mxu0
        %v945 = vadd.f32 %v815, %v944
        %946 = vmatmul.bf16.gmra.mxu0 %v854
        %v947 = vpop.f32.mrf.mxu0
        %v948 = vadd.f32 %v815, %v947
        %v949 = vpop.f32.mrf.mxu0
        %v950 = vadd.f32 %v815, %v949
        %951 = vmatmul.bf16.gmra.mxu0 %v855
        %v952 = vpop.f32.mrf.mxu0
        %v953 = vadd.f32 %v815, %v952
        %v954 = vpop.f32.mrf.mxu0
        %v955 = vadd.f32 %v815, %v954
        %956 = vmatmul.bf16.gmra.mxu0 %v856
        %v957 = vpop.f32.mrf.mxu0
        %v958 = vadd.f32 %v815, %v957
        %v959 = vpop.f32.mrf.mxu0
        %v960 = vadd.f32 %v815, %v959
        %961 = vdwg.mxu0
        %v962 = vmax.f32 %v923, 0.0
        %v963 = vmax.f32 %v925, 0.0
        %v964 = vmax.f32 %v928, 0.0
        %v965 = vmax.f32 %v930, 0.0
        %v966 = vmax.f32 %v933, 0.0
        %v967 = vmax.f32 %v935, 0.0
        %v968 = vmax.f32 %v938, 0.0
        %v969 = vmax.f32 %v940, 0.0
        %v970 = vmax.f32 %v943, 0.0
        %v971 = vmax.f32 %v945, 0.0
        %v972 = vmax.f32 %v948, 0.0
        %v973 = vmax.f32 %v950, 0.0
        %v974 = vmax.f32 %v953, 0.0
        %v975 = vmax.f32 %v955, 0.0
        %v976 = vmax.f32 %v958, 0.0
        %v977 = vmax.f32 %v960, 0.0
        %v978 = vadd.s32 %v244, 8
        %vm979 = vcmp.lt.s32.totalorder %v244, 8
        %vm980 = vcmp.lt.s32.totalorder %v978, 8
        %v981 = vsel %vm979, 1, 0
        %v982 = vsel %vm980, 1, 0
        %vm983 = vcmp.eq.s32.totalorder %v981, 1
        %vm984 = vcmp.eq.s32.totalorder %v982, 1
        %v985 = vsel %vm983, %v962, 0.0
        %v986 = vsel %vm984, %v963, 0.0
        %v987 = vsel %vm983, %v964, 0.0
        %v988 = vsel %vm984, %v965, 0.0
        %v989 = vsel %vm983, %v966, 0.0
        %v990 = vsel %vm984, %v967, 0.0
        %v991 = vsel %vm983, %v968, 0.0
        %v992 = vsel %vm984, %v969, 0.0
        %v993 = vsel %vm983, %v970, 0.0
        %v994 = vsel %vm984, %v971, 0.0
        %v995 = vsel %vm983, %v972, 0.0
        %v996 = vsel %vm984, %v973, 0.0
        %v997 = vsel %vm983, %v974, 0.0
        %v998 = vsel %vm984, %v975, 0.0
        %v999 = vsel %vm983, %v976, 0.0
        %v1000 = vsel %vm984, %v977, 0.0
        %v1001 = vadd.f32 %v985, %v986
        %v1002 = vadd.f32 %v1001, %v987
        %v1003 = vadd.f32 %v1002, %v988
        %v1004 = vadd.f32 %v1003, %v989
        %v1005 = vadd.f32 %v1004, %v990
        %v1006 = vadd.f32 %v1005, %v991
        %v1007 = vadd.f32 %v1006, %v992
        %v1008 = vadd.f32 %v1007, %v993
        %v1009 = vadd.f32 %v1008, %v994
        %v1010 = vadd.f32 %v1009, %v995
        %v1011 = vadd.f32 %v1010, %v996
        %v1012 = vadd.f32 %v1011, %v997
        %v1013 = vadd.f32 %v1012, %v998
        %v1014 = vadd.f32 %v1013, %v999
        %v1015 = vadd.f32 %v1014, %v1000
        %v1016 = vrot.slane %v1015, 4
        %v1017 = vadd.f32 %v1015, %v1016
        %v1018 = vrot.slane %v1017, 2
        %v1019 = vadd.f32 %v1017, %v1018
        %v1020 = vrot.slane %v1019, 1
        %v1021 = vadd.f32 %v1019, %v1020
        %v1022 = vmul.f32 %v1021, 0.015625
        %1023 = vst [vmem:[%s189] sm:$0x1] %v1022
        %s1024 = sand.u32 %s115, 1
        %s1025 = scalar_lea.sflag [#allocation3], %s1024
        %s1026 = sand.u32 %s115, 1
        %s1027 = scalar_lea.vmem [#allocation2], %s1026
        // Predicated region
        $region37: #{exitflow_pallas.7} parent=35 // pred_check
          %p1028 = pneg %p125
        $region38: #{exitflow_pallas.7} parent=35 // pred_check_branch
          %1030 = sbr.rel (%p1028) target = $region40
        $region39: #{exitflow_pallas.7} parent=35 // pred_region
          %1032 = vsyncadd %s1025, 0
          %s1033 = scalar_lea.hbm %s4, %s18
          %s1035 = sshll.u32 %s1027, 4
          %s1036 = int_to_ptr.vmem [resolvable:$true] %s1035
          %s1037 = sshll.u32 %s1033, 4
          %s1038 = int_to_ptr.hbm [resolvable:$true] %s1037
          %1040 = dma.vmem_to_hbm [thread:$0]  %s1036, 16, %s1038, %s1025
        $region40: #{exitflow_pallas.7} parent=35 // pred_fallthru
          _
      $region36: #{exitflow_pallas.7} parent=5 // pred_fallthru
        _
      %p1041 = scmp.le.s32.totalorder 2, %s13
      // Predicated region
      $region41: #{exitflow_pallas.7} parent=5 // pred_check
        %p1042 = pneg %p1041
      $region42: #{exitflow_pallas.7} parent=5 // pred_check_branch
        %1044 = sbr.rel (%p1042) target = $region44
      $region43: #{exitflow_pallas.7} parent=5 // pred_region
        %s1045 = ssub.s32 %s13, 2
        // Predicated region
        $region45: #{exitflow_pallas.7} parent=43 // pred_check
          %p1046 = pneg %p131
        $region46: #{exitflow_pallas.7} parent=43 // pred_check_branch
          %1048 = sbr.rel (%p1046) target = $region48
        $region47: #{exitflow_pallas.7} parent=43 // pred_region
          %s1049 = sand.u32 %s116, 1
          %s1050 = scalar_lea.sflag [#allocation3], %s1049
          %s1051 = sand.u32 %s116, 1
          %s1052 = scalar_lea.vmem [#allocation2], %s1051
          %1054 = dma.done %s1050, 16
        $region48: #{exitflow_pallas.7} parent=43 // pred_fallthru
          _
      $region44: #{exitflow_pallas.7} parent=5 // pred_fallthru
        _
    $region6: #{exitflow_pallas.7} parent=1 // loop_footer
      %s17 = sadd.s32 1, %s13
    $region7: #{exitflow_pallas.7} parent=1 // loop_footer_branch
      %12 = sbr.rel target = $region3
    $region8: #{exitflow_pallas.7} parent=1 // loop_exit
      _
    %1055 = vsyncpa [#allocation3], 1
    %s1056 = scalar_lea.sflag [#allocation3], 1
    %1057 = vsyncpa %s1056, 1

// kernel: exitflow_pallas.4
$region0: #{exitflow_pallas.4}
  #allocation0 [shape = 'u32[]', space=smem, size = 0x4, offset = 0x4, fixed_abs, tag = 'smem constant byte address 0x4 - core index']
  #allocation1 [shape = 'u32[72,128]{1,0:T(1,128)}', space=vmem, size = 0x9000, scoped, tag = 'internal scratch']
  %s0 = inlined_call_operand.vmem [shape: f32[2,18,24,128], index: 0, kind: input, shape index: {}]
  %s1 = inlined_call_operand.vmem [shape: f32[3,3,128], index: 1, kind: input, shape index: {}]
  %s2 = inlined_call_operand.vmem [shape: bf16[128,128], index: 2, kind: input, shape index: {}]
  %s3 = inlined_call_operand.vmem [shape: f32[1,128], index: 3, kind: input, shape index: {}]
  %s4 = inlined_call_operand.vmem [shape: bf16[2,18,24,128], index: 4, kind: output, shape index: {}]
  %s5 = sld [smem:[#allocation0]]
  $region49: #{exitflow_pallas.4} parent=0
    _
  %s7 = ssub.s32 1, %s5
  %s8 = scalar_select 0, %s7, %s5
  loop: start=0, step=1, limit=4
  $region2: #{exitflow_pallas.4} parent=0 // loop_pre_header
    _
  $region3: #{exitflow_pallas.4} parent=0 // loop_header
    %s10 = sphi 0, %s14
    %p11 = scmp.ge.s32.totalorder %s10, 4
    %s20 = sphi 0, %s22
    %s23 = sphi 0, %s20
    %s24 = sphi 0, %s23
    %s40 = sphi 0, %s24
    %s44 = sphi 0, %s44
    %s46 = sphi 0, %s44
    %s47 = sphi 0, %s46
    %s61 = sphi 0, %s47
    %s65 = sphi 0, %s65
    %s67 = sphi 0, %s65
    %s68 = sphi 0, %s67
    %s82 = sphi 0, %s68
    %s86 = sphi 0, %s86
    %s88 = sphi 0, %s86
    %s89 = sphi 0, %s88
    %s103 = sphi 0, %s89
    %s109 = sphi 0, %s111
    %s112 = sphi 0, %s109
    %s113 = sphi 0, %s112
    %s129 = sphi 0, %s113
  $region4: #{exitflow_pallas.4} parent=0 // loop_header_branch
    %13 = sbr.rel (%p11) target = $region8
  $region5: #{exitflow_pallas.4} parent=0 // loop_body
    %s15 = ssub.s32 %s10, 1
    %s16 = ssub.s32 %s10, 2
    %s17 = sadd.s32 %s10, 1
    %s18 = ssub.s32 %s10, %s17
    %p19 = scmp.eq.s32.totalorder %s18, 0
    %s21 = sadd.s32 %s20, 1
    %s22 = scalar_select %p19, %s20, %s21
    %p25 = pneg %p19
    %p26 = scmp.eq.s32.totalorder %s10, 1
    %p27 = por %p25, %p26
    %p28 = scmp.ne.s32.totalorder %s20, %s23
    %p29 = scmp.eq.s32.totalorder %s10, 0
    %p30 = por %p28, %p29
    %p31 = scmp.ne.s32.totalorder %s20, %s23
    %p32 = scmp.eq.s32.totalorder %s15, 1
    %p33 = por %p31, %p32
    %p34 = scmp.ne.s32.totalorder %s23, %s24
    %p35 = scmp.eq.s32.totalorder %s15, 0
    %p36 = por %p34, %p35
    %p37 = scmp.ne.s32.totalorder %s23, %s24
    %p38 = scmp.eq.s32.totalorder %s16, 1
    %p39 = por %p37, %p38
    %p41 = scmp.ne.s32.totalorder %s24, %s40
    %p42 = scmp.eq.s32.totalorder %s16, 0
    %p43 = por %p41, %p42
    %s45 = sadd.s32 %s44, 1
    %p48 = scmp.eq.s32.totalorder %s10, 1
    %p49 = scmp.ne.s32.totalorder %s44, %s46
    %p50 = scmp.eq.s32.totalorder %s10, 0
    %p51 = por %p49, %p50
    %p52 = scmp.ne.s32.totalorder %s44, %s46
    %p53 = scmp.eq.s32.totalorder %s15, 1
    %p54 = por %p52, %p53
    %p55 = scmp.ne.s32.totalorder %s46, %s47
    %p56 = scmp.eq.s32.totalorder %s15, 0
    %p57 = por %p55, %p56
    %p58 = scmp.ne.s32.totalorder %s46, %s47
    %p59 = scmp.eq.s32.totalorder %s16, 1
    %p60 = por %p58, %p59
    %p62 = scmp.ne.s32.totalorder %s47, %s61
    %p63 = scmp.eq.s32.totalorder %s16, 0
    %p64 = por %p62, %p63
    %s66 = sadd.s32 %s65, 1
    %p69 = scmp.eq.s32.totalorder %s10, 1
    %p70 = scmp.ne.s32.totalorder %s65, %s67
    %p71 = scmp.eq.s32.totalorder %s10, 0
    %p72 = por %p70, %p71
    %p73 = scmp.ne.s32.totalorder %s65, %s67
    %p74 = scmp.eq.s32.totalorder %s15, 1
    %p75 = por %p73, %p74
    %p76 = scmp.ne.s32.totalorder %s67, %s68
    %p77 = scmp.eq.s32.totalorder %s15, 0
    %p78 = por %p76, %p77
    %p79 = scmp.ne.s32.totalorder %s67, %s68
    %p80 = scmp.eq.s32.totalorder %s16, 1
    %p81 = por %p79, %p80
    %p83 = scmp.ne.s32.totalorder %s68, %s82
    %p84 = scmp.eq.s32.totalorder %s16, 0
    %p85 = por %p83, %p84
    %s87 = sadd.s32 %s86, 1
    %p90 = scmp.eq.s32.totalorder %s10, 1
    %p91 = scmp.ne.s32.totalorder %s86, %s88
    %p92 = scmp.eq.s32.totalorder %s10, 0
    %p93 = por %p91, %p92
    %p94 = scmp.ne.s32.totalorder %s86, %s88
    %p95 = scmp.eq.s32.totalorder %s15, 1
    %p96 = por %p94, %p95
    %p97 = scmp.ne.s32.totalorder %s88, %s89
    %p98 = scmp.eq.s32.totalorder %s15, 0
    %p99 = por %p97, %p98
    %p100 = scmp.ne.s32.totalorder %s88, %s89
    %p101 = scmp.eq.s32.totalorder %s16, 1
    %p102 = por %p100, %p101
    %p104 = scmp.ne.s32.totalorder %s89, %s103
    %p105 = scmp.eq.s32.totalorder %s16, 0
    %p106 = por %p104, %p105
    %s107 = ssub.s32 %s10, %s17
    %p108 = scmp.eq.s32.totalorder %s107, 0
    %s110 = sadd.s32 %s109, 1
    %s111 = scalar_select %p108, %s109, %s110
    %p114 = pneg %p108
    %p115 = scmp.eq.s32.totalorder %s10, 1
    %p116 = por %p114, %p115
    %p117 = scmp.ne.s32.totalorder %s109, %s112
    %p118 = scmp.eq.s32.totalorder %s10, 0
    %p119 = por %p117, %p118
    %p120 = scmp.ne.s32.totalorder %s109, %s112
    %p121 = scmp.eq.s32.totalorder %s15, 1
    %p122 = por %p120, %p121
    %p123 = scmp.ne.s32.totalorder %s112, %s113
    %p124 = scmp.eq.s32.totalorder %s15, 0
    %p125 = por %p123, %p124
    %p126 = scmp.ne.s32.totalorder %s112, %s113
    %p127 = scmp.eq.s32.totalorder %s16, 1
    %p128 = por %p126, %p127
    %p130 = scmp.ne.s32.totalorder %s113, %s129
    %p131 = scmp.eq.s32.totalorder %s16, 0
    %p132 = por %p130, %p131
    %p133 = scmp.le.s32.totalorder 1, %s10
    %p134 = scmp.lt.s32.totalorder %s10, 3
    %p135 = pnand %p133, %p134
    %p136 = pneg %p135
    // Predicated region
    $region9: #{exitflow_pallas.4} parent=5 // pred_check
      _
    $region10: #{exitflow_pallas.4} parent=5 // pred_check_branch
      %138 = sbr.rel (%p135) target = $region12
    $region11: #{exitflow_pallas.4} parent=5 // pred_region
      %s139 = ssub.s32 %s10, 1
      // Predicated region
      $region13: #{exitflow_pallas.4} parent=11 // pred_check
        %p140 = pneg %p57
      $region14: #{exitflow_pallas.4} parent=11 // pred_check_branch
        %142 = sbr.rel (%p140) target = $region16
      $region15: #{exitflow_pallas.4} parent=11 // pred_region
        _
      $region16: #{exitflow_pallas.4} parent=11 // pred_fallthru
        _
      // Predicated region
      $region17: #{exitflow_pallas.4} parent=11 // pred_check
        %p143 = pneg %p78
      $region18: #{exitflow_pallas.4} parent=11 // pred_check_branch
        %145 = sbr.rel (%p143) target = $region20
      $region19: #{exitflow_pallas.4} parent=11 // pred_region
        _
      $region20: #{exitflow_pallas.4} parent=11 // pred_fallthru
        _
      // Predicated region
      $region21: #{exitflow_pallas.4} parent=11 // pred_check
        %p146 = pneg %p99
      $region22: #{exitflow_pallas.4} parent=11 // pred_check_branch
        %148 = sbr.rel (%p146) target = $region24
      $region23: #{exitflow_pallas.4} parent=11 // pred_region
        _
      $region24: #{exitflow_pallas.4} parent=11 // pred_fallthru
        _
    $region12: #{exitflow_pallas.4} parent=5 // pred_fallthru
      _
    %p149 = scmp.lt.s32.totalorder %s10, 2
    // Predicated region
    $region25: #{exitflow_pallas.4} parent=5 // pred_check
      %p150 = pneg %p149
    $region26: #{exitflow_pallas.4} parent=5 // pred_check_branch
      %152 = sbr.rel (%p150) target = $region28
    $region27: #{exitflow_pallas.4} parent=5 // pred_region
      // Predicated region
      $region29: #{exitflow_pallas.4} parent=27 // pred_check
        %p153 = pneg %p30
      $region30: #{exitflow_pallas.4} parent=27 // pred_check_branch
        %155 = sbr.rel (%p153) target = $region32
      $region31: #{exitflow_pallas.4} parent=27 // pred_region
        %p156 = scmp.lt.s32.totalorder %s10, 1
        %s157 = scalar_select %p156, %s10, 1
        %s158 = smul.addr %s157, 54
        %s159 = smul.addr %s158, 8
        %s160 = scalar_lea.vmem %s0, %s159
      $region32: #{exitflow_pallas.4} parent=27 // pred_fallthru
        _
    $region28: #{exitflow_pallas.4} parent=5 // pred_fallthru
      _
    %p161 = scmp.le.s32.totalorder 1, %s10
    %p162 = scmp.lt.s32.totalorder %s10, 3
    %p163 = pnand %p161, %p162
    %p164 = pneg %p163
    // Predicated region
    $region33: #{exitflow_pallas.4} parent=5 // pred_check
      _
    $region34: #{exitflow_pallas.4} parent=5 // pred_check_branch
      %166 = sbr.rel (%p163) target = $region36
    $region35: #{exitflow_pallas.4} parent=5 // pred_region
      %s167 = ssub.s32 %s10, 1
      %p168 = scmp.lt.s32.totalorder %s15, 1
      %s169 = scalar_select %p168, %s15, 1
      %s170 = smul.addr %s169, 54
      %s171 = smul.addr %s170, 8
      %s172 = scalar_lea.vmem %s0, %s171
      %p173 = pneg %p36
      %p174 = pneg %p33
      %p175 = pneg %p57
      %p176 = pneg %p54
      %p177 = pneg %p78
      %p178 = pneg %p75
      %p179 = pneg %p99
      %p180 = pneg %p96
      %p181 = pneg %p125
      %p182 = pneg %p122
      %p183 = scmp.lt.s32.totalorder %s15, 1
      %s184 = scalar_select %p183, %s15, 1
      %s185 = smul.addr %s184, 54
      %s186 = smul.addr %s185, 4
      %s187 = scalar_lea.vmem %s4, %s186
      %p188 = scmp.lt.s32.totalorder %s15, 1
      %s189 = scalar_select %p188, %s15, 1
      %s190 = smul.addr %s189, 54
      %s191 = smul.addr %s190, 8
      %s192 = scalar_lea.vmem %s0, %s191
      %p193 = scmp.lt.s32.totalorder %s15, 1
      %s194 = scalar_select %p193, %s15, 1
      %s195 = smul.addr %s194, 54
      %s196 = smul.addr %s195, 4
      %s197 = scalar_lea.vmem %s4, %s196
      %v199 = vld [vmem:[%s192] sm:$0xff]
      %v200 = vld [vmem:[%s192 + $0x8] sm:$0xff]
      %v201 = vld [vmem:[%s192 + $0x10] sm:$0xff]
      %v202 = vld [vmem:[%s192 + $0x18] sm:$0xff]
      %v203 = vld [vmem:[%s192 + $0x20] sm:$0xff]
      %v204 = vld [vmem:[%s192 + $0x28] sm:$0xff]
      %v205 = vld [vmem:[%s192 + $0x30] sm:$0xff]
      %v206 = vld [vmem:[%s192 + $0x38] sm:$0xff]
      %v207 = vld [vmem:[%s192 + $0x40] sm:$0xff]
      %v208 = vld [vmem:[%s192 + $0x48] sm:$0xff]
      %v209 = vld [vmem:[%s192 + $0x50] sm:$0xff]
      %v210 = vld [vmem:[%s192 + $0x58] sm:$0xff]
      %v211 = vld [vmem:[%s192 + $0x60] sm:$0xff]
      %v212 = vld [vmem:[%s192 + $0x68] sm:$0xff]
      %v213 = vld [vmem:[%s192 + $0x70] sm:$0xff]
      %v214 = vld [vmem:[%s192 + $0x78] sm:$0xff]
      %v215 = vld [vmem:[%s192 + $0x80] sm:$0xff]
      %v216 = vld [vmem:[%s192 + $0x88] sm:$0xff]
      %v217 = vld [vmem:[%s192 + $0x90] sm:$0xff]
      %v218 = vld [vmem:[%s192 + $0x98] sm:$0xff]
      %v219 = vld [vmem:[%s192 + $0xa0] sm:$0xff]
      %v220 = vld [vmem:[%s192 + $0xa8] sm:$0xff]
      %v221 = vld [vmem:[%s192 + $0xb0] sm:$0xff]
      %v222 = vld [vmem:[%s192 + $0xb8] sm:$0xff]
      %v223 = vld [vmem:[%s192 + $0xc0] sm:$0xff]
      %v224 = vld [vmem:[%s192 + $0xc8] sm:$0xff]
      %v225 = vld [vmem:[%s192 + $0xd0] sm:$0xff]
      %v226 = vld [vmem:[%s192 + $0xd8] sm:$0xff]
      %v227 = vld [vmem:[%s192 + $0xe0] sm:$0xff]
      %v228 = vld [vmem:[%s192 + $0xe8] sm:$0xff]
      %v229 = vld [vmem:[%s192 + $0xf0] sm:$0xff]
      %v230 = vld [vmem:[%s192 + $0xf8] sm:$0xff]
      %v231 = vld [vmem:[%s192 + $0x100] sm:$0xff]
      %v232 = vld [vmem:[%s192 + $0x108] sm:$0xff]
      %v233 = vld [vmem:[%s192 + $0x110] sm:$0xff]
      %v234 = vld [vmem:[%s192 + $0x118] sm:$0xff]
      %v235 = vld [vmem:[%s192 + $0x120] sm:$0xff]
      %v236 = vld [vmem:[%s192 + $0x128] sm:$0xff]
      %v237 = vld [vmem:[%s192 + $0x130] sm:$0xff]
      %v238 = vld [vmem:[%s192 + $0x138] sm:$0xff]
      %v239 = vld [vmem:[%s192 + $0x140] sm:$0xff]
      %v240 = vld [vmem:[%s192 + $0x148] sm:$0xff]
      %v241 = vld [vmem:[%s192 + $0x150] sm:$0xff]
      %v242 = vld [vmem:[%s192 + $0x158] sm:$0xff]
      %v243 = vld [vmem:[%s192 + $0x160] sm:$0xff]
      %v244 = vld [vmem:[%s192 + $0x168] sm:$0xff]
      %v245 = vld [vmem:[%s192 + $0x170] sm:$0xff]
      %v246 = vld [vmem:[%s192 + $0x178] sm:$0xff]
      %v247 = vmax.f32 %v199, 0.0
      %v248 = vmax.f32 %v200, 0.0
      %v249 = vmax.f32 %v201, 0.0
      %v250 = vmax.f32 %v202, 0.0
      %v251 = vmax.f32 %v203, 0.0
      %v252 = vmax.f32 %v204, 0.0
      %v253 = vmax.f32 %v205, 0.0
      %v254 = vmax.f32 %v206, 0.0
      %v255 = vmax.f32 %v207, 0.0
      %v256 = vmax.f32 %v208, 0.0
      %v257 = vmax.f32 %v209, 0.0
      %v258 = vmax.f32 %v210, 0.0
      %v259 = vmax.f32 %v211, 0.0
      %v260 = vmax.f32 %v212, 0.0
      %v261 = vmax.f32 %v213, 0.0
      %v262 = vmax.f32 %v214, 0.0
      %v263 = vmax.f32 %v215, 0.0
      %v264 = vmax.f32 %v216, 0.0
      %v265 = vmax.f32 %v217, 0.0
      %v266 = vmax.f32 %v218, 0.0
      %v267 = vmax.f32 %v219, 0.0
      %v268 = vmax.f32 %v220, 0.0
      %v269 = vmax.f32 %v221, 0.0
      %v270 = vmax.f32 %v222, 0.0
      %v271 = vmax.f32 %v223, 0.0
      %v272 = vmax.f32 %v224, 0.0
      %v273 = vmax.f32 %v225, 0.0
      %v274 = vmax.f32 %v226, 0.0
      %v275 = vmax.f32 %v227, 0.0
      %v276 = vmax.f32 %v228, 0.0
      %v277 = vmax.f32 %v229, 0.0
      %v278 = vmax.f32 %v230, 0.0
      %v279 = vmax.f32 %v231, 0.0
      %v280 = vmax.f32 %v232, 0.0
      %v281 = vmax.f32 %v233, 0.0
      %v282 = vmax.f32 %v234, 0.0
      %v283 = vmax.f32 %v235, 0.0
      %v284 = vmax.f32 %v236, 0.0
      %v285 = vmax.f32 %v237, 0.0
      %v286 = vmax.f32 %v238, 0.0
      %v287 = vmax.f32 %v239, 0.0
      %v288 = vmax.f32 %v240, 0.0
      %v289 = vmax.f32 %v241, 0.0
      %v290 = vmax.f32 %v242, 0.0
      %v291 = vmax.f32 %v243, 0.0
      %v292 = vmax.f32 %v244, 0.0
      %v293 = vmax.f32 %v245, 0.0
      %v294 = vmax.f32 %v246, 0.0
      %v295 = vrot.slane %v247, 7
      %v296 = vrot.slane %v250, 7
      %v297 = vrot.slane %v253, 7
      %v298 = vrot.slane %v256, 7
      %v299 = vrot.slane %v259, 7
      %v300 = vrot.slane %v262, 7
      %v301 = vrot.slane %v265, 7
      %v302 = vrot.slane %v268, 7
      %v303 = vrot.slane %v271, 7
      %v304 = vrot.slane %v274, 7
      %v305 = vrot.slane %v277, 7
      %v306 = vrot.slane %v280, 7
      %v307 = vrot.slane %v283, 7
      %v308 = vrot.slane %v286, 7
      %v309 = vrot.slane %v289, 7
      %v310 = vrot.slane %v292, 7
      %v311 = vrot.slane %v248, 7
      %v312 = vrot.slane %v251, 7
      %v313 = vrot.slane %v254, 7
      %v314 = vrot.slane %v257, 7
      %v315 = vrot.slane %v260, 7
      %v316 = vrot.slane %v263, 7
      %v317 = vrot.slane %v266, 7
      %v318 = vrot.slane %v269, 7
      %v319 = vrot.slane %v272, 7
      %v320 = vrot.slane %v275, 7
      %v321 = vrot.slane %v278, 7
      %v322 = vrot.slane %v281, 7
      %v323 = vrot.slane %v284, 7
      %v324 = vrot.slane %v287, 7
      %v325 = vrot.slane %v290, 7
      %v326 = vrot.slane %v293, 7
      %v327 = vrot.slane %v249, 7
      %v328 = vrot.slane %v252, 7
      %v329 = vrot.slane %v255, 7
      %v330 = vrot.slane %v258, 7
      %v331 = vrot.slane %v261, 7
      %v332 = vrot.slane %v264, 7
      %v333 = vrot.slane %v267, 7
      %v334 = vrot.slane %v270, 7
      %v335 = vrot.slane %v273, 7
      %v336 = vrot.slane %v276, 7
      %v337 = vrot.slane %v279, 7
      %v338 = vrot.slane %v282, 7
      %v339 = vrot.slane %v285, 7
      %v340 = vrot.slane %v288, 7
      %v341 = vrot.slane %v291, 7
      %v342 = vrot.slane %v294, 7
      %v343 = vlaneseq
      %v344 = vshrl.u32 %v343, 7
      %vm345 = vcmp.lt.s32.totalorder %v344, 1
      %v346 = vsel %vm345, %v311, %v327
      %v347 = vsel %vm345, %v312, %v328
      %v348 = vsel %vm345, %v313, %v329
      %v349 = vsel %vm345, %v314, %v330
      %v350 = vsel %vm345, %v315, %v331
      %v351 = vsel %vm345, %v316, %v332
      %v352 = vsel %vm345, %v317, %v333
      %v353 = vsel %vm345, %v318, %v334
      %v354 = vsel %vm345, %v319, %v335
      %v355 = vsel %vm345, %v320, %v336
      %v356 = vsel %vm345, %v321, %v337
      %v357 = vsel %vm345, %v322, %v338
      %v358 = vsel %vm345, %v323, %v339
      %v359 = vsel %vm345, %v324, %v340
      %v360 = vsel %vm345, %v325, %v341
      %v361 = vsel %vm345, %v326, %v342
      %v362 = vsel %vm345, %v295, %v311
      %v363 = vsel %vm345, %v296, %v312
      %v364 = vsel %vm345, %v297, %v313
      %v365 = vsel %vm345, %v298, %v314
      %v366 = vsel %vm345, %v299, %v315
      %v367 = vsel %vm345, %v300, %v316
      %v368 = vsel %vm345, %v301, %v317
      %v369 = vsel %vm345, %v302, %v318
      %v370 = vsel %vm345, %v303, %v319
      %v371 = vsel %vm345, %v304, %v320
      %v372 = vsel %vm345, %v305, %v321
      %v373 = vsel %vm345, %v306, %v322
      %v374 = vsel %vm345, %v307, %v323
      %v375 = vsel %vm345, %v308, %v324
      %v376 = vsel %vm345, %v309, %v325
      %v377 = vsel %vm345, %v310, %v326
      %v378 = vsel %vm345, %v327, %v295
      %v379 = vsel %vm345, %v328, %v296
      %v380 = vsel %vm345, %v329, %v297
      %v381 = vsel %vm345, %v330, %v298
      %v382 = vsel %vm345, %v331, %v299
      %v383 = vsel %vm345, %v332, %v300
      %v384 = vsel %vm345, %v333, %v301
      %v385 = vsel %vm345, %v334, %v302
      %v386 = vsel %vm345, %v335, %v303
      %v387 = vsel %vm345, %v336, %v304
      %v388 = vsel %vm345, %v337, %v305
      %v389 = vsel %vm345, %v338, %v306
      %v390 = vsel %vm345, %v339, %v307
      %v391 = vsel %vm345, %v340, %v308
      %v392 = vsel %vm345, %v341, %v309
      %v393 = vsel %vm345, %v342, %v310
      %v394 = vld [vmem:[%s1] sm:$0x1]
      %v395 = vperm.slane %v394, 0
      %v396 = vmul.f32 %v378, %v395
      %v397 = vmul.f32 %v362, %v395
      %v398 = vmul.f32 %v346, %v395
      %v399 = vmul.f32 %v379, %v395
      %v400 = vmul.f32 %v363, %v395
      %v401 = vmul.f32 %v347, %v395
      %v402 = vmul.f32 %v380, %v395
      %v403 = vmul.f32 %v364, %v395
      %v404 = vmul.f32 %v348, %v395
      %v405 = vmul.f32 %v381, %v395
      %v406 = vmul.f32 %v365, %v395
      %v407 = vmul.f32 %v349, %v395
      %v408 = vmul.f32 %v382, %v395
      %v409 = vmul.f32 %v366, %v395
      %v410 = vmul.f32 %v350, %v395
      %v411 = vmul.f32 %v383, %v395
      %v412 = vmul.f32 %v367, %v395
      %v413 = vmul.f32 %v351, %v395
      %v414 = vmul.f32 %v384, %v395
      %v415 = vmul.f32 %v368, %v395
      %v416 = vmul.f32 %v352, %v395
      %v417 = vmul.f32 %v385, %v395
      %v418 = vmul.f32 %v369, %v395
      %v419 = vmul.f32 %v353, %v395
      %v420 = vmul.f32 %v386, %v395
      %v421 = vmul.f32 %v370, %v395
      %v422 = vmul.f32 %v354, %v395
      %v423 = vmul.f32 %v387, %v395
      %v424 = vmul.f32 %v371, %v395
      %v425 = vmul.f32 %v355, %v395
      %v426 = vmul.f32 %v388, %v395
      %v427 = vmul.f32 %v372, %v395
      %v428 = vmul.f32 %v356, %v395
      %v429 = vmul.f32 %v389, %v395
      %v430 = vmul.f32 %v373, %v395
      %v431 = vmul.f32 %v357, %v395
      %v432 = vmul.f32 %v390, %v395
      %v433 = vmul.f32 %v374, %v395
      %v434 = vmul.f32 %v358, %v395
      %v435 = vmul.f32 %v391, %v395
      %v436 = vmul.f32 %v375, %v395
      %v437 = vmul.f32 %v359, %v395
      %v438 = vmul.f32 %v392, %v395
      %v439 = vmul.f32 %v376, %v395
      %v440 = vmul.f32 %v360, %v395
      %v441 = vmul.f32 %v393, %v395
      %v442 = vmul.f32 %v377, %v395
      %v443 = vmul.f32 %v361, %v395
      %v444 = vld [vmem:[%s1 + $0x1] sm:$0x1]
      %v445 = vperm.slane %v444, 0
      %v446 = vmul.f32 %v247, %v445
      %v447 = vmul.f32 %v248, %v445
      %v448 = vmul.f32 %v249, %v445
      %v449 = vmul.f32 %v250, %v445
      %v450 = vmul.f32 %v251, %v445
      %v451 = vmul.f32 %v252, %v445
      %v452 = vmul.f32 %v253, %v445
      %v453 = vmul.f32 %v254, %v445
      %v454 = vmul.f32 %v255, %v445
      %v455 = vmul.f32 %v256, %v445
      %v456 = vmul.f32 %v257, %v445
      %v457 = vmul.f32 %v258, %v445
      %v458 = vmul.f32 %v259, %v445
      %v459 = vmul.f32 %v260, %v445
      %v460 = vmul.f32 %v261, %v445
      %v461 = vmul.f32 %v262, %v445
      %v462 = vmul.f32 %v263, %v445
      %v463 = vmul.f32 %v264, %v445
      %v464 = vmul.f32 %v265, %v445
      %v465 = vmul.f32 %v266, %v445
      %v466 = vmul.f32 %v267, %v445
      %v467 = vmul.f32 %v268, %v445
      %v468 = vmul.f32 %v269, %v445
      %v469 = vmul.f32 %v270, %v445
      %v470 = vmul.f32 %v271, %v445
      %v471 = vmul.f32 %v272, %v445
      %v472 = vmul.f32 %v273, %v445
      %v473 = vmul.f32 %v274, %v445
      %v474 = vmul.f32 %v275, %v445
      %v475 = vmul.f32 %v276, %v445
      %v476 = vmul.f32 %v277, %v445
      %v477 = vmul.f32 %v278, %v445
      %v478 = vmul.f32 %v279, %v445
      %v479 = vmul.f32 %v280, %v445
      %v480 = vmul.f32 %v281, %v445
      %v481 = vmul.f32 %v282, %v445
      %v482 = vmul.f32 %v283, %v445
      %v483 = vmul.f32 %v284, %v445
      %v484 = vmul.f32 %v285, %v445
      %v485 = vmul.f32 %v286, %v445
      %v486 = vmul.f32 %v287, %v445
      %v487 = vmul.f32 %v288, %v445
      %v488 = vmul.f32 %v289, %v445
      %v489 = vmul.f32 %v290, %v445
      %v490 = vmul.f32 %v291, %v445
      %v491 = vmul.f32 %v292, %v445
      %v492 = vmul.f32 %v293, %v445
      %v493 = vmul.f32 %v294, %v445
      %v494 = vadd.f32 %v396, %v446
      %v495 = vadd.f32 %v397, %v447
      %v496 = vadd.f32 %v398, %v448
      %v497 = vadd.f32 %v399, %v449
      %v498 = vadd.f32 %v400, %v450
      %v499 = vadd.f32 %v401, %v451
      %v500 = vadd.f32 %v402, %v452
      %v501 = vadd.f32 %v403, %v453
      %v502 = vadd.f32 %v404, %v454
      %v503 = vadd.f32 %v405, %v455
      %v504 = vadd.f32 %v406, %v456
      %v505 = vadd.f32 %v407, %v457
      %v506 = vadd.f32 %v408, %v458
      %v507 = vadd.f32 %v409, %v459
      %v508 = vadd.f32 %v410, %v460
      %v509 = vadd.f32 %v411, %v461
      %v510 = vadd.f32 %v412, %v462
      %v511 = vadd.f32 %v413, %v463
      %v512 = vadd.f32 %v414, %v464
      %v513 = vadd.f32 %v415, %v465
      %v514 = vadd.f32 %v416, %v466
      %v515 = vadd.f32 %v417, %v467
      %v516 = vadd.f32 %v418, %v468
      %v517 = vadd.f32 %v419, %v469
      %v518 = vadd.f32 %v420, %v470
      %v519 = vadd.f32 %v421, %v471
      %v520 = vadd.f32 %v422, %v472
      %v521 = vadd.f32 %v423, %v473
      %v522 = vadd.f32 %v424, %v474
      %v523 = vadd.f32 %v425, %v475
      %v524 = vadd.f32 %v426, %v476
      %v525 = vadd.f32 %v427, %v477
      %v526 = vadd.f32 %v428, %v478
      %v527 = vadd.f32 %v429, %v479
      %v528 = vadd.f32 %v430, %v480
      %v529 = vadd.f32 %v431, %v481
      %v530 = vadd.f32 %v432, %v482
      %v531 = vadd.f32 %v433, %v483
      %v532 = vadd.f32 %v434, %v484
      %v533 = vadd.f32 %v435, %v485
      %v534 = vadd.f32 %v436, %v486
      %v535 = vadd.f32 %v437, %v487
      %v536 = vadd.f32 %v438, %v488
      %v537 = vadd.f32 %v439, %v489
      %v538 = vadd.f32 %v440, %v490
      %v539 = vadd.f32 %v441, %v491
      %v540 = vadd.f32 %v442, %v492
      %v541 = vadd.f32 %v443, %v493
      %v542 = vrot.slane %v247, 1
      %v543 = vrot.slane %v250, 1
      %v544 = vrot.slane %v253, 1
      %v545 = vrot.slane %v256, 1
      %v546 = vrot.slane %v259, 1
      %v547 = vrot.slane %v262, 1
      %v548 = vrot.slane %v265, 1
      %v549 = vrot.slane %v268, 1
      %v550 = vrot.slane %v271, 1
      %v551 = vrot.slane %v274, 1
      %v552 = vrot.slane %v277, 1
      %v553 = vrot.slane %v280, 1
      %v554 = vrot.slane %v283, 1
      %v555 = vrot.slane %v286, 1
      %v556 = vrot.slane %v289, 1
      %v557 = vrot.slane %v292, 1
      %v558 = vrot.slane %v248, 1
      %v559 = vrot.slane %v251, 1
      %v560 = vrot.slane %v254, 1
      %v561 = vrot.slane %v257, 1
      %v562 = vrot.slane %v260, 1
      %v563 = vrot.slane %v263, 1
      %v564 = vrot.slane %v266, 1
      %v565 = vrot.slane %v269, 1
      %v566 = vrot.slane %v272, 1
      %v567 = vrot.slane %v275, 1
      %v568 = vrot.slane %v278, 1
      %v569 = vrot.slane %v281, 1
      %v570 = vrot.slane %v284, 1
      %v571 = vrot.slane %v287, 1
      %v572 = vrot.slane %v290, 1
      %v573 = vrot.slane %v293, 1
      %v574 = vrot.slane %v249, 1
      %v575 = vrot.slane %v252, 1
      %v576 = vrot.slane %v255, 1
      %v577 = vrot.slane %v258, 1
      %v578 = vrot.slane %v261, 1
      %v579 = vrot.slane %v264, 1
      %v580 = vrot.slane %v267, 1
      %v581 = vrot.slane %v270, 1
      %v582 = vrot.slane %v273, 1
      %v583 = vrot.slane %v276, 1
      %v584 = vrot.slane %v279, 1
      %v585 = vrot.slane %v282, 1
      %v586 = vrot.slane %v285, 1
      %v587 = vrot.slane %v288, 1
      %v588 = vrot.slane %v291, 1
      %v589 = vrot.slane %v294, 1
      %vm590 = vcmp.lt.s32.totalorder %v344, 7
      %v591 = vsel %vm590, %v558, %v574
      %v592 = vsel %vm590, %v559, %v575
      %v593 = vsel %vm590, %v560, %v576
      %v594 = vsel %vm590, %v561, %v577
      %v595 = vsel %vm590, %v562, %v578
      %v596 = vsel %vm590, %v563, %v579
      %v597 = vsel %vm590, %v564, %v580
      %v598 = vsel %vm590, %v565, %v581
      %v599 = vsel %vm590, %v566, %v582
      %v600 = vsel %vm590, %v567, %v583
      %v601 = vsel %vm590, %v568, %v584
      %v602 = vsel %vm590, %v569, %v585
      %v603 = vsel %vm590, %v570, %v586
      %v604 = vsel %vm590, %v571, %v587
      %v605 = vsel %vm590, %v572, %v588
      %v606 = vsel %vm590, %v573, %v589
      %v607 = vsel %vm590, %v542, %v558
      %v608 = vsel %vm590, %v543, %v559
      %v609 = vsel %vm590, %v544, %v560
      %v610 = vsel %vm590, %v545, %v561
      %v611 = vsel %vm590, %v546, %v562
      %v612 = vsel %vm590, %v547, %v563
      %v613 = vsel %vm590, %v548, %v564
      %v614 = vsel %vm590, %v549, %v565
      %v615 = vsel %vm590, %v550, %v566
      %v616 = vsel %vm590, %v551, %v567
      %v617 = vsel %vm590, %v552, %v568
      %v618 = vsel %vm590, %v553, %v569
      %v619 = vsel %vm590, %v554, %v570
      %v620 = vsel %vm590, %v555, %v571
      %v621 = vsel %vm590, %v556, %v572
      %v622 = vsel %vm590, %v557, %v573
      %v623 = vsel %vm590, %v574, %v542
      %v624 = vsel %vm590, %v575, %v543
      %v625 = vsel %vm590, %v576, %v544
      %v626 = vsel %vm590, %v577, %v545
      %v627 = vsel %vm590, %v578, %v546
      %v628 = vsel %vm590, %v579, %v547
      %v629 = vsel %vm590, %v580, %v548
      %v630 = vsel %vm590, %v581, %v549
      %v631 = vsel %vm590, %v582, %v550
      %v632 = vsel %vm590, %v583, %v551
      %v633 = vsel %vm590, %v584, %v552
      %v634 = vsel %vm590, %v585, %v553
      %v635 = vsel %vm590, %v586, %v554
      %v636 = vsel %vm590, %v587, %v555
      %v637 = vsel %vm590, %v588, %v556
      %v638 = vsel %vm590, %v589, %v557
      %v639 = vld [vmem:[%s1 + $0x2] sm:$0x1]
      %v640 = vperm.slane %v639, 0
      %v641 = vmul.f32 %v607, %v640
      %v642 = vmul.f32 %v591, %v640
      %v643 = vmul.f32 %v623, %v640
      %v644 = vmul.f32 %v608, %v640
      %v645 = vmul.f32 %v592, %v640
      %v646 = vmul.f32 %v624, %v640
      %v647 = vmul.f32 %v609, %v640
      %v648 = vmul.f32 %v593, %v640
      %v649 = vmul.f32 %v625, %v640
      %v650 = vmul.f32 %v610, %v640
      %v651 = vmul.f32 %v594, %v640
      %v652 = vmul.f32 %v626, %v640
      %v653 = vmul.f32 %v611, %v640
      %v654 = vmul.f32 %v595, %v640
      %v655 = vmul.f32 %v627, %v640
      %v656 = vmul.f32 %v612, %v640
      %v657 = vmul.f32 %v596, %v640
      %v658 = vmul.f32 %v628, %v640
      %v659 = vmul.f32 %v613, %v640
      %v660 = vmul.f32 %v597, %v640
      %v661 = vmul.f32 %v629, %v640
      %v662 = vmul.f32 %v614, %v640
      %v663 = vmul.f32 %v598, %v640
      %v664 = vmul.f32 %v630, %v640
      %v665 = vmul.f32 %v615, %v640
      %v666 = vmul.f32 %v599, %v640
      %v667 = vmul.f32 %v631, %v640
      %v668 = vmul.f32 %v616, %v640
      %v669 = vmul.f32 %v600, %v640
      %v670 = vmul.f32 %v632, %v640
      %v671 = vmul.f32 %v617, %v640
      %v672 = vmul.f32 %v601, %v640
      %v673 = vmul.f32 %v633, %v640
      %v674 = vmul.f32 %v618, %v640
      %v675 = vmul.f32 %v602, %v640
      %v676 = vmul.f32 %v634, %v640
      %v677 = vmul.f32 %v619, %v640
      %v678 = vmul.f32 %v603, %v640
      %v679 = vmul.f32 %v635, %v640
      %v680 = vmul.f32 %v620, %v640
      %v681 = vmul.f32 %v604, %v640
      %v682 = vmul.f32 %v636, %v640
      %v683 = vmul.f32 %v621, %v640
      %v684 = vmul.f32 %v605, %v640
      %v685 = vmul.f32 %v637, %v640
      %v686 = vmul.f32 %v622, %v640
      %v687 = vmul.f32 %v606, %v640
      %v688 = vmul.f32 %v638, %v640
      %v689 = vadd.f32 %v494, %v641
      %v690 = vadd.f32 %v495, %v642
      %v691 = vadd.f32 %v496, %v643
      %v692 = vadd.f32 %v497, %v644
      %v693 = vadd.f32 %v498, %v645
      %v694 = vadd.f32 %v499, %v646
      %v695 = vadd.f32 %v500, %v647
      %v696 = vadd.f32 %v501, %v648
      %v697 = vadd.f32 %v502, %v649
      %v698 = vadd.f32 %v503, %v650
      %v699 = vadd.f32 %v504, %v651
      %v700 = vadd.f32 %v505, %v652
      %v701 = vadd.f32 %v506, %v653
      %v702 = vadd.f32 %v507, %v654
      %v703 = vadd.f32 %v508, %v655
      %v704 = vadd.f32 %v509, %v656
      %v705 = vadd.f32 %v510, %v657
      %v706 = vadd.f32 %v511, %v658
      %v707 = vadd.f32 %v512, %v659
      %v708 = vadd.f32 %v513, %v660
      %v709 = vadd.f32 %v514, %v661
      %v710 = vadd.f32 %v515, %v662
      %v711 = vadd.f32 %v516, %v663
      %v712 = vadd.f32 %v517, %v664
      %v713 = vadd.f32 %v518, %v665
      %v714 = vadd.f32 %v519, %v666
      %v715 = vadd.f32 %v520, %v667
      %v716 = vadd.f32 %v521, %v668
      %v717 = vadd.f32 %v522, %v669
      %v718 = vadd.f32 %v523, %v670
      %v719 = vadd.f32 %v524, %v671
      %v720 = vadd.f32 %v525, %v672
      %v721 = vadd.f32 %v526, %v673
      %v722 = vadd.f32 %v527, %v674
      %v723 = vadd.f32 %v528, %v675
      %v724 = vadd.f32 %v529, %v676
      %v725 = vadd.f32 %v530, %v677
      %v726 = vadd.f32 %v531, %v678
      %v727 = vadd.f32 %v532, %v679
      %v728 = vadd.f32 %v533, %v680
      %v729 = vadd.f32 %v534, %v681
      %v730 = vadd.f32 %v535, %v682
      %v731 = vadd.f32 %v536, %v683
      %v732 = vadd.f32 %v537, %v684
      %v733 = vadd.f32 %v538, %v685
      %v734 = vadd.f32 %v539, %v686
      %v735 = vadd.f32 %v540, %v687
      %v736 = vadd.f32 %v541, %v688
      %s737 = scalar_lea.vmem %s192, 24
      %v738 = vld [vmem:[%s737] sm:$0xff]
      %v739 = vld [vmem:[%s737 + $0x8] sm:$0xff]
      %v740 = vld [vmem:[%s737 + $0x10] sm:$0xff]
      %v741 = vld [vmem:[%s737 + $0x18] sm:$0xff]
      %v742 = vld [vmem:[%s737 + $0x20] sm:$0xff]
      %v743 = vld [vmem:[%s737 + $0x28] sm:$0xff]
      %v744 = vld [vmem:[%s737 + $0x30] sm:$0xff]
      %v745 = vld [vmem:[%s737 + $0x38] sm:$0xff]
      %v746 = vld [vmem:[%s737 + $0x40] sm:$0xff]
      %v747 = vld [vmem:[%s737 + $0x48] sm:$0xff]
      %v748 = vld [vmem:[%s737 + $0x50] sm:$0xff]
      %v749 = vld [vmem:[%s737 + $0x58] sm:$0xff]
      %v750 = vld [vmem:[%s737 + $0x60] sm:$0xff]
      %v751 = vld [vmem:[%s737 + $0x68] sm:$0xff]
      %v752 = vld [vmem:[%s737 + $0x70] sm:$0xff]
      %v753 = vld [vmem:[%s737 + $0x78] sm:$0xff]
      %v754 = vld [vmem:[%s737 + $0x80] sm:$0xff]
      %v755 = vld [vmem:[%s737 + $0x88] sm:$0xff]
      %v756 = vld [vmem:[%s737 + $0x90] sm:$0xff]
      %v757 = vld [vmem:[%s737 + $0x98] sm:$0xff]
      %v758 = vld [vmem:[%s737 + $0xa0] sm:$0xff]
      %v759 = vld [vmem:[%s737 + $0xa8] sm:$0xff]
      %v760 = vld [vmem:[%s737 + $0xb0] sm:$0xff]
      %v761 = vld [vmem:[%s737 + $0xb8] sm:$0xff]
      %v762 = vld [vmem:[%s737 + $0xc0] sm:$0xff]
      %v763 = vld [vmem:[%s737 + $0xc8] sm:$0xff]
      %v764 = vld [vmem:[%s737 + $0xd0] sm:$0xff]
      %v765 = vld [vmem:[%s737 + $0xd8] sm:$0xff]
      %v766 = vld [vmem:[%s737 + $0xe0] sm:$0xff]
      %v767 = vld [vmem:[%s737 + $0xe8] sm:$0xff]
      %v768 = vld [vmem:[%s737 + $0xf0] sm:$0xff]
      %v769 = vld [vmem:[%s737 + $0xf8] sm:$0xff]
      %v770 = vld [vmem:[%s737 + $0x100] sm:$0xff]
      %v771 = vld [vmem:[%s737 + $0x108] sm:$0xff]
      %v772 = vld [vmem:[%s737 + $0x110] sm:$0xff]
      %v773 = vld [vmem:[%s737 + $0x118] sm:$0xff]
      %v774 = vld [vmem:[%s737 + $0x120] sm:$0xff]
      %v775 = vld [vmem:[%s737 + $0x128] sm:$0xff]
      %v776 = vld [vmem:[%s737 + $0x130] sm:$0xff]
      %v777 = vld [vmem:[%s737 + $0x138] sm:$0xff]
      %v778 = vld [vmem:[%s737 + $0x140] sm:$0xff]
      %v779 = vld [vmem:[%s737 + $0x148] sm:$0xff]
      %v780 = vld [vmem:[%s737 + $0x150] sm:$0xff]
      %v781 = vld [vmem:[%s737 + $0x158] sm:$0xff]
      %v782 = vld [vmem:[%s737 + $0x160] sm:$0xff]
      %v783 = vld [vmem:[%s737 + $0x168] sm:$0xff]
      %v784 = vld [vmem:[%s737 + $0x170] sm:$0xff]
      %v785 = vld [vmem:[%s737 + $0x178] sm:$0xff]
      %v786 = vmax.f32 %v738, 0.0
      %v787 = vmax.f32 %v739, 0.0
      %v788 = vmax.f32 %v740, 0.0
      %v789 = vmax.f32 %v741, 0.0
      %v790 = vmax.f32 %v742, 0.0
      %v791 = vmax.f32 %v743, 0.0
      %v792 = vmax.f32 %v744, 0.0
      %v793 = vmax.f32 %v745, 0.0
      %v794 = vmax.f32 %v746, 0.0
      %v795 = vmax.f32 %v747, 0.0
      %v796 = vmax.f32 %v748, 0.0
      %v797 = vmax.f32 %v749, 0.0
      %v798 = vmax.f32 %v750, 0.0
      %v799 = vmax.f32 %v751, 0.0
      %v800 = vmax.f32 %v752, 0.0
      %v801 = vmax.f32 %v753, 0.0
      %v802 = vmax.f32 %v754, 0.0
      %v803 = vmax.f32 %v755, 0.0
      %v804 = vmax.f32 %v756, 0.0
      %v805 = vmax.f32 %v757, 0.0
      %v806 = vmax.f32 %v758, 0.0
      %v807 = vmax.f32 %v759, 0.0
      %v808 = vmax.f32 %v760, 0.0
      %v809 = vmax.f32 %v761, 0.0
      %v810 = vmax.f32 %v762, 0.0
      %v811 = vmax.f32 %v763, 0.0
      %v812 = vmax.f32 %v764, 0.0
      %v813 = vmax.f32 %v765, 0.0
      %v814 = vmax.f32 %v766, 0.0
      %v815 = vmax.f32 %v767, 0.0
      %v816 = vmax.f32 %v768, 0.0
      %v817 = vmax.f32 %v769, 0.0
      %v818 = vmax.f32 %v770, 0.0
      %v819 = vmax.f32 %v771, 0.0
      %v820 = vmax.f32 %v772, 0.0
      %v821 = vmax.f32 %v773, 0.0
      %v822 = vmax.f32 %v774, 0.0
      %v823 = vmax.f32 %v775, 0.0
      %v824 = vmax.f32 %v776, 0.0
      %v825 = vmax.f32 %v777, 0.0
      %v826 = vmax.f32 %v778, 0.0
      %v827 = vmax.f32 %v779, 0.0
      %v828 = vmax.f32 %v780, 0.0
      %v829 = vmax.f32 %v781, 0.0
      %v830 = vmax.f32 %v782, 0.0
      %v831 = vmax.f32 %v783, 0.0
      %v832 = vmax.f32 %v784, 0.0
      %v833 = vmax.f32 %v785, 0.0
      %v834 = vrot.slane %v786, 7
      %v835 = vrot.slane %v789, 7
      %v836 = vrot.slane %v792, 7
      %v837 = vrot.slane %v795, 7
      %v838 = vrot.slane %v798, 7
      %v839 = vrot.slane %v801, 7
      %v840 = vrot.slane %v804, 7
      %v841 = vrot.slane %v807, 7
      %v842 = vrot.slane %v810, 7
      %v843 = vrot.slane %v813, 7
      %v844 = vrot.slane %v816, 7
      %v845 = vrot.slane %v819, 7
      %v846 = vrot.slane %v822, 7
      %v847 = vrot.slane %v825, 7
      %v848 = vrot.slane %v828, 7
      %v849 = vrot.slane %v831, 7
      %v850 = vrot.slane %v787, 7
      %v851 = vrot.slane %v790, 7
      %v852 = vrot.slane %v793, 7
      %v853 = vrot.slane %v796, 7
      %v854 = vrot.slane %v799, 7
      %v855 = vrot.slane %v802, 7
      %v856 = vrot.slane %v805, 7
      %v857 = vrot.slane %v808, 7
      %v858 = vrot.slane %v811, 7
      %v859 = vrot.slane %v814, 7
      %v860 = vrot.slane %v817, 7
      %v861 = vrot.slane %v820, 7
      %v862 = vrot.slane %v823, 7
      %v863 = vrot.slane %v826, 7
      %v864 = vrot.slane %v829, 7
      %v865 = vrot.slane %v832, 7
      %v866 = vrot.slane %v788, 7
      %v867 = vrot.slane %v791, 7
      %v868 = vrot.slane %v794, 7
      %v869 = vrot.slane %v797, 7
      %v870 = vrot.slane %v800, 7
      %v871 = vrot.slane %v803, 7
      %v872 = vrot.slane %v806, 7
      %v873 = vrot.slane %v809, 7
      %v874 = vrot.slane %v812, 7
      %v875 = vrot.slane %v815, 7
      %v876 = vrot.slane %v818, 7
      %v877 = vrot.slane %v821, 7
      %v878 = vrot.slane %v824, 7
      %v879 = vrot.slane %v827, 7
      %v880 = vrot.slane %v830, 7
      %v881 = vrot.slane %v833, 7
      %v882 = vsel %vm345, %v850, %v866
      %v883 = vsel %vm345, %v851, %v867
      %v884 = vsel %vm345, %v852, %v868
      %v885 = vsel %vm345, %v853, %v869
      %v886 = vsel %vm345, %v854, %v870
      %v887 = vsel %vm345, %v855, %v871
      %v888 = vsel %vm345, %v856, %v872
      %v889 = vsel %vm345, %v857, %v873
      %v890 = vsel %vm345, %v858, %v874
      %v891 = vsel %vm345, %v859, %v875
      %v892 = vsel %vm345, %v860, %v876
      %v893 = vsel %vm345, %v861, %v877
      %v894 = vsel %vm345, %v862, %v878
      %v895 = vsel %vm345, %v863, %v879
      %v896 = vsel %vm345, %v864, %v880
      %v897 = vsel %vm345, %v865, %v881
      %v898 = vsel %vm345, %v834, %v850
      %v899 = vsel %vm345, %v835, %v851
      %v900 = vsel %vm345, %v836, %v852
      %v901 = vsel %vm345, %v837, %v853
      %v902 = vsel %vm345, %v838, %v854
      %v903 = vsel %vm345, %v839, %v855
      %v904 = vsel %vm345, %v840, %v856
      %v905 = vsel %vm345, %v841, %v857
      %v906 = vsel %vm345, %v842, %v858
      %v907 = vsel %vm345, %v843, %v859
      %v908 = vsel %vm345, %v844, %v860
      %v909 = vsel %vm345, %v845, %v861
      %v910 = vsel %vm345, %v846, %v862
      %v911 = vsel %vm345, %v847, %v863
      %v912 = vsel %vm345, %v848, %v864
      %v913 = vsel %vm345, %v849, %v865
      %v914 = vsel %vm345, %v866, %v834
      %v915 = vsel %vm345, %v867, %v835
      %v916 = vsel %vm345, %v868, %v836
      %v917 = vsel %vm345, %v869, %v837
      %v918 = vsel %vm345, %v870, %v838
      %v919 = vsel %vm345, %v871, %v839
      %v920 = vsel %vm345, %v872, %v840
      %v921 = vsel %vm345, %v873, %v841
      %v922 = vsel %vm345, %v874, %v842
      %v923 = vsel %vm345, %v875, %v843
      %v924 = vsel %vm345, %v876, %v844
      %v925 = vsel %vm345, %v877, %v845
      %v926 = vsel %vm345, %v878, %v846
      %v927 = vsel %vm345, %v879, %v847
      %v928 = vsel %vm345, %v880, %v848
      %v929 = vsel %vm345, %v881, %v849
      %s930 = scalar_lea.vmem %s1, 4
      %v931 = vld [vmem:[%s930] sm:$0x1]
      %v932 = vperm.slane %v931, 0
      %v933 = vmul.f32 %v914, %v932
      %v934 = vmul.f32 %v898, %v932
      %v935 = vmul.f32 %v882, %v932
      %v936 = vmul.f32 %v915, %v932
      %v937 = vmul.f32 %v899, %v932
      %v938 = vmul.f32 %v883, %v932
      %v939 = vmul.f32 %v916, %v932
      %v940 = vmul.f32 %v900, %v932
      %v941 = vmul.f32 %v884, %v932
      %v942 = vmul.f32 %v917, %v932
      %v943 = vmul.f32 %v901, %v932
      %v944 = vmul.f32 %v885, %v932
      %v945 = vmul.f32 %v918, %v932
      %v946 = vmul.f32 %v902, %v932
      %v947 = vmul.f32 %v886, %v932
      %v948 = vmul.f32 %v919, %v932
      %v949 = vmul.f32 %v903, %v932
      %v950 = vmul.f32 %v887, %v932
      %v951 = vmul.f32 %v920, %v932
      %v952 = vmul.f32 %v904, %v932
      %v953 = vmul.f32 %v888, %v932
      %v954 = vmul.f32 %v921, %v932
      %v955 = vmul.f32 %v905, %v932
      %v956 = vmul.f32 %v889, %v932
      %v957 = vmul.f32 %v922, %v932
      %v958 = vmul.f32 %v906, %v932
      %v959 = vmul.f32 %v890, %v932
      %v960 = vmul.f32 %v923, %v932
      %v961 = vmul.f32 %v907, %v932
      %v962 = vmul.f32 %v891, %v932
      %v963 = vmul.f32 %v924, %v932
      %v964 = vmul.f32 %v908, %v932
      %v965 = vmul.f32 %v892, %v932
      %v966 = vmul.f32 %v925, %v932
      %v967 = vmul.f32 %v909, %v932
      %v968 = vmul.f32 %v893, %v932
      %v969 = vmul.f32 %v926, %v932
      %v970 = vmul.f32 %v910, %v932
      %v971 = vmul.f32 %v894, %v932
      %v972 = vmul.f32 %v927, %v932
      %v973 = vmul.f32 %v911, %v932
      %v974 = vmul.f32 %v895, %v932
      %v975 = vmul.f32 %v928, %v932
      %v976 = vmul.f32 %v912, %v932
      %v977 = vmul.f32 %v896, %v932
      %v978 = vmul.f32 %v929, %v932
      %v979 = vmul.f32 %v913, %v932
      %v980 = vmul.f32 %v897, %v932
      %v981 = vadd.f32 %v689, %v933
      %v982 = vadd.f32 %v690, %v934
      %v983 = vadd.f32 %v691, %v935
      %v984 = vadd.f32 %v692, %v936
      %v985 = vadd.f32 %v693, %v937
      %v986 = vadd.f32 %v694, %v938
      %v987 = vadd.f32 %v695, %v939
      %v988 = vadd.f32 %v696, %v940
      %v989 = vadd.f32 %v697, %v941
      %v990 = vadd.f32 %v698, %v942
      %v991 = vadd.f32 %v699, %v943
      %v992 = vadd.f32 %v700, %v944
      %v993 = vadd.f32 %v701, %v945
      %v994 = vadd.f32 %v702, %v946
      %v995 = vadd.f32 %v703, %v947
      %v996 = vadd.f32 %v704, %v948
      %v997 = vadd.f32 %v705, %v949
      %v998 = vadd.f32 %v706, %v950
      %v999 = vadd.f32 %v707, %v951
      %v1000 = vadd.f32 %v708, %v952
      %v1001 = vadd.f32 %v709, %v953
      %v1002 = vadd.f32 %v710, %v954
      %v1003 = vadd.f32 %v711, %v955
      %v1004 = vadd.f32 %v712, %v956
      %v1005 = vadd.f32 %v713, %v957
      %v1006 = vadd.f32 %v714, %v958
      %v1007 = vadd.f32 %v715, %v959
      %v1008 = vadd.f32 %v716, %v960
      %v1009 = vadd.f32 %v717, %v961
      %v1010 = vadd.f32 %v718, %v962
      %v1011 = vadd.f32 %v719, %v963
      %v1012 = vadd.f32 %v720, %v964
      %v1013 = vadd.f32 %v721, %v965
      %v1014 = vadd.f32 %v722, %v966
      %v1015 = vadd.f32 %v723, %v967
      %v1016 = vadd.f32 %v724, %v968
      %v1017 = vadd.f32 %v725, %v969
      %v1018 = vadd.f32 %v726, %v970
      %v1019 = vadd.f32 %v727, %v971
      %v1020 = vadd.f32 %v728, %v972
      %v1021 = vadd.f32 %v729, %v973
      %v1022 = vadd.f32 %v730, %v974
      %v1023 = vadd.f32 %v731, %v975
      %v1024 = vadd.f32 %v732, %v976
      %v1025 = vadd.f32 %v733, %v977
      %v1026 = vadd.f32 %v734, %v978
      %v1027 = vadd.f32 %v735, %v979
      %v1028 = vadd.f32 %v736, %v980
      %v1029 = vld [vmem:[%s930 + $0x1] sm:$0x1]
      %v1030 = vperm.slane %v1029, 0
      %v1031 = vmul.f32 %v786, %v1030
      %v1032 = vmul.f32 %v787, %v1030
      %v1033 = vmul.f32 %v788, %v1030
      %v1034 = vmul.f32 %v789, %v1030
      %v1035 = vmul.f32 %v790, %v1030
      %v1036 = vmul.f32 %v791, %v1030
      %v1037 = vmul.f32 %v792, %v1030
      %v1038 = vmul.f32 %v793, %v1030
      %v1039 = vmul.f32 %v794, %v1030
      %v1040 = vmul.f32 %v795, %v1030
      %v1041 = vmul.f32 %v796, %v1030
      %v1042 = vmul.f32 %v797, %v1030
      %v1043 = vmul.f32 %v798, %v1030
      %v1044 = vmul.f32 %v799, %v1030
      %v1045 = vmul.f32 %v800, %v1030
      %v1046 = vmul.f32 %v801, %v1030
      %v1047 = vmul.f32 %v802, %v1030
      %v1048 = vmul.f32 %v803, %v1030
      %v1049 = vmul.f32 %v804, %v1030
      %v1050 = vmul.f32 %v805, %v1030
      %v1051 = vmul.f32 %v806, %v1030
      %v1052 = vmul.f32 %v807, %v1030
      %v1053 = vmul.f32 %v808, %v1030
      %v1054 = vmul.f32 %v809, %v1030
      %v1055 = vmul.f32 %v810, %v1030
      %v1056 = vmul.f32 %v811, %v1030
      %v1057 = vmul.f32 %v812, %v1030
      %v1058 = vmul.f32 %v813, %v1030
      %v1059 = vmul.f32 %v814, %v1030
      %v1060 = vmul.f32 %v815, %v1030
      %v1061 = vmul.f32 %v816, %v1030
      %v1062 = vmul.f32 %v817, %v1030
      %v1063 = vmul.f32 %v818, %v1030
      %v1064 = vmul.f32 %v819, %v1030
      %v1065 = vmul.f32 %v820, %v1030
      %v1066 = vmul.f32 %v821, %v1030
      %v1067 = vmul.f32 %v822, %v1030
      %v1068 = vmul.f32 %v823, %v1030
      %v1069 = vmul.f32 %v824, %v1030
      %v1070 = vmul.f32 %v825, %v1030
      %v1071 = vmul.f32 %v826, %v1030
      %v1072 = vmul.f32 %v827, %v1030
      %v1073 = vmul.f32 %v828, %v1030
      %v1074 = vmul.f32 %v829, %v1030
      %v1075 = vmul.f32 %v830, %v1030
      %v1076 = vmul.f32 %v831, %v1030
      %v1077 = vmul.f32 %v832, %v1030
      %v1078 = vmul.f32 %v833, %v1030
      %v1079 = vadd.f32 %v981, %v1031
      %v1080 = vadd.f32 %v982, %v1032
      %v1081 = vadd.f32 %v983, %v1033
      %v1082 = vadd.f32 %v984, %v1034
      %v1083 = vadd.f32 %v985, %v1035
      %v1084 = vadd.f32 %v986, %v1036
      %v1085 = vadd.f32 %v987, %v1037
      %v1086 = vadd.f32 %v988, %v1038
      %v1087 = vadd.f32 %v989, %v1039
      %v1088 = vadd.f32 %v990, %v1040
      %v1089 = vadd.f32 %v991, %v1041
      %v1090 = vadd.f32 %v992, %v1042
      %v1091 = vadd.f32 %v993, %v1043
      %v1092 = vadd.f32 %v994, %v1044
      %v1093 = vadd.f32 %v995, %v1045
      %v1094 = vadd.f32 %v996, %v1046
      %v1095 = vadd.f32 %v997, %v1047
      %v1096 = vadd.f32 %v998, %v1048
      %v1097 = vadd.f32 %v999, %v1049
      %v1098 = vadd.f32 %v1000, %v1050
      %v1099 = vadd.f32 %v1001, %v1051
      %v1100 = vadd.f32 %v1002, %v1052
      %v1101 = vadd.f32 %v1003, %v1053
      %v1102 = vadd.f32 %v1004, %v1054
      %v1103 = vadd.f32 %v1005, %v1055
      %v1104 = vadd.f32 %v1006, %v1056
      %v1105 = vadd.f32 %v1007, %v1057
      %v1106 = vadd.f32 %v1008, %v1058
      %v1107 = vadd.f32 %v1009, %v1059
      %v1108 = vadd.f32 %v1010, %v1060
      %v1109 = vadd.f32 %v1011, %v1061
      %v1110 = vadd.f32 %v1012, %v1062
      %v1111 = vadd.f32 %v1013, %v1063
      %v1112 = vadd.f32 %v1014, %v1064
      %v1113 = vadd.f32 %v1015, %v1065
      %v1114 = vadd.f32 %v1016, %v1066
      %v1115 = vadd.f32 %v1017, %v1067
      %v1116 = vadd.f32 %v1018, %v1068
      %v1117 = vadd.f32 %v1019, %v1069
      %v1118 = vadd.f32 %v1020, %v1070
      %v1119 = vadd.f32 %v1021, %v1071
      %v1120 = vadd.f32 %v1022, %v1072
      %v1121 = vadd.f32 %v1023, %v1073
      %v1122 = vadd.f32 %v1024, %v1074
      %v1123 = vadd.f32 %v1025, %v1075
      %v1124 = vadd.f32 %v1026, %v1076
      %v1125 = vadd.f32 %v1027, %v1077
      %v1126 = vadd.f32 %v1028, %v1078
      %v1127 = vrot.slane %v786, 1
      %v1128 = vrot.slane %v789, 1
      %v1129 = vrot.slane %v792, 1
      %v1130 = vrot.slane %v795, 1
      %v1131 = vrot.slane %v798, 1
      %v1132 = vrot.slane %v801, 1
      %v1133 = vrot.slane %v804, 1
      %v1134 = vrot.slane %v807, 1
      %v1135 = vrot.slane %v810, 1
      %v1136 = vrot.slane %v813, 1
      %v1137 = vrot.slane %v816, 1
      %v1138 = vrot.slane %v819, 1
      %v1139 = vrot.slane %v822, 1
      %v1140 = vrot.slane %v825, 1
      %v1141 = vrot.slane %v828, 1
      %v1142 = vrot.slane %v831, 1
      %v1143 = vrot.slane %v787, 1
      %v1144 = vrot.slane %v790, 1
      %v1145 = vrot.slane %v793, 1
      %v1146 = vrot.slane %v796, 1
      %v1147 = vrot.slane %v799, 1
      %v1148 = vrot.slane %v802, 1
      %v1149 = vrot.slane %v805, 1
      %v1150 = vrot.slane %v808, 1
      %v1151 = vrot.slane %v811, 1
      %v1152 = vrot.slane %v814, 1
      %v1153 = vrot.slane %v817, 1
      %v1154 = vrot.slane %v820, 1
      %v1155 = vrot.slane %v823, 1
      %v1156 = vrot.slane %v826, 1
      %v1157 = vrot.slane %v829, 1
      %v1158 = vrot.slane %v832, 1
      %v1159 = vrot.slane %v788, 1
      %v1160 = vrot.slane %v791, 1
      %v1161 = vrot.slane %v794, 1
      %v1162 = vrot.slane %v797, 1
      %v1163 = vrot.slane %v800, 1
      %v1164 = vrot.slane %v803, 1
      %v1165 = vrot.slane %v806, 1
      %v1166 = vrot.slane %v809, 1
      %v1167 = vrot.slane %v812, 1
      %v1168 = vrot.slane %v815, 1
      %v1169 = vrot.slane %v818, 1
      %v1170 = vrot.slane %v821, 1
      %v1171 = vrot.slane %v824, 1
      %v1172 = vrot.slane %v827, 1
      %v1173 = vrot.slane %v830, 1
      %v1174 = vrot.slane %v833, 1
      %v1175 = vsel %vm590, %v1143, %v1159
      %v1176 = vsel %vm590, %v1144, %v1160
      %v1177 = vsel %vm590, %v1145, %v1161
      %v1178 = vsel %vm590, %v1146, %v1162
      %v1179 = vsel %vm590, %v1147, %v1163
      %v1180 = vsel %vm590, %v1148, %v1164
      %v1181 = vsel %vm590, %v1149, %v1165
      %v1182 = vsel %vm590, %v1150, %v1166
      %v1183 = vsel %vm590, %v1151, %v1167
      %v1184 = vsel %vm590, %v1152, %v1168
      %v1185 = vsel %vm590, %v1153, %v1169
      %v1186 = vsel %vm590, %v1154, %v1170
      %v1187 = vsel %vm590, %v1155, %v1171
      %v1188 = vsel %vm590, %v1156, %v1172
      %v1189 = vsel %vm590, %v1157, %v1173
      %v1190 = vsel %vm590, %v1158, %v1174
      %v1191 = vsel %vm590, %v1127, %v1143
      %v1192 = vsel %vm590, %v1128, %v1144
      %v1193 = vsel %vm590, %v1129, %v1145
      %v1194 = vsel %vm590, %v1130, %v1146
      %v1195 = vsel %vm590, %v1131, %v1147
      %v1196 = vsel %vm590, %v1132, %v1148
      %v1197 = vsel %vm590, %v1133, %v1149
      %v1198 = vsel %vm590, %v1134, %v1150
      %v1199 = vsel %vm590, %v1135, %v1151
      %v1200 = vsel %vm590, %v1136, %v1152
      %v1201 = vsel %vm590, %v1137, %v1153
      %v1202 = vsel %vm590, %v1138, %v1154
      %v1203 = vsel %vm590, %v1139, %v1155
      %v1204 = vsel %vm590, %v1140, %v1156
      %v1205 = vsel %vm590, %v1141, %v1157
      %v1206 = vsel %vm590, %v1142, %v1158
      %v1207 = vsel %vm590, %v1159, %v1127
      %v1208 = vsel %vm590, %v1160, %v1128
      %v1209 = vsel %vm590, %v1161, %v1129
      %v1210 = vsel %vm590, %v1162, %v1130
      %v1211 = vsel %vm590, %v1163, %v1131
      %v1212 = vsel %vm590, %v1164, %v1132
      %v1213 = vsel %vm590, %v1165, %v1133
      %v1214 = vsel %vm590, %v1166, %v1134
      %v1215 = vsel %vm590, %v1167, %v1135
      %v1216 = vsel %vm590, %v1168, %v1136
      %v1217 = vsel %vm590, %v1169, %v1137
      %v1218 = vsel %vm590, %v1170, %v1138
      %v1219 = vsel %vm590, %v1171, %v1139
      %v1220 = vsel %vm590, %v1172, %v1140
      %v1221 = vsel %vm590, %v1173, %v1141
      %v1222 = vsel %vm590, %v1174, %v1142
      %v1223 = vld [vmem:[%s930 + $0x2] sm:$0x1]
      %v1224 = vperm.slane %v1223, 0
      %v1225 = vmul.f32 %v1191, %v1224
      %v1226 = vmul.f32 %v1175, %v1224
      %v1227 = vmul.f32 %v1207, %v1224
      %v1228 = vmul.f32 %v1192, %v1224
      %v1229 = vmul.f32 %v1176, %v1224
      %v1230 = vmul.f32 %v1208, %v1224
      %v1231 = vmul.f32 %v1193, %v1224
      %v1232 = vmul.f32 %v1177, %v1224
      %v1233 = vmul.f32 %v1209, %v1224
      %v1234 = vmul.f32 %v1194, %v1224
      %v1235 = vmul.f32 %v1178, %v1224
      %v1236 = vmul.f32 %v1210, %v1224
      %v1237 = vmul.f32 %v1195, %v1224
      %v1238 = vmul.f32 %v1179, %v1224
      %v1239 = vmul.f32 %v1211, %v1224
      %v1240 = vmul.f32 %v1196, %v1224
      %v1241 = vmul.f32 %v1180, %v1224
      %v1242 = vmul.f32 %v1212, %v1224
      %v1243 = vmul.f32 %v1197, %v1224
      %v1244 = vmul.f32 %v1181, %v1224
      %v1245 = vmul.f32 %v1213, %v1224
      %v1246 = vmul.f32 %v1198, %v1224
      %v1247 = vmul.f32 %v1182, %v1224
      %v1248 = vmul.f32 %v1214, %v1224
      %v1249 = vmul.f32 %v1199, %v1224
      %v1250 = vmul.f32 %v1183, %v1224
      %v1251 = vmul.f32 %v1215, %v1224
      %v1252 = vmul.f32 %v1200, %v1224
      %v1253 = vmul.f32 %v1184, %v1224
      %v1254 = vmul.f32 %v1216, %v1224
      %v1255 = vmul.f32 %v1201, %v1224
      %v1256 = vmul.f32 %v1185, %v1224
      %v1257 = vmul.f32 %v1217, %v1224
      %v1258 = vmul.f32 %v1202, %v1224
      %v1259 = vmul.f32 %v1186, %v1224
      %v1260 = vmul.f32 %v1218, %v1224
      %v1261 = vmul.f32 %v1203, %v1224
      %v1262 = vmul.f32 %v1187, %v1224
      %v1263 = vmul.f32 %v1219, %v1224
      %v1264 = vmul.f32 %v1204, %v1224
      %v1265 = vmul.f32 %v1188, %v1224
      %v1266 = vmul.f32 %v1220, %v1224
      %v1267 = vmul.f32 %v1205, %v1224
      %v1268 = vmul.f32 %v1189, %v1224
      %v1269 = vmul.f32 %v1221, %v1224
      %v1270 = vmul.f32 %v1206, %v1224
      %v1271 = vmul.f32 %v1190, %v1224
      %v1272 = vmul.f32 %v1222, %v1224
      %v1273 = vadd.f32 %v1079, %v1225
      %v1274 = vadd.f32 %v1080, %v1226
      %v1275 = vadd.f32 %v1081, %v1227
      %v1276 = vadd.f32 %v1082, %v1228
      %v1277 = vadd.f32 %v1083, %v1229
      %v1278 = vadd.f32 %v1084, %v1230
      %v1279 = vadd.f32 %v1085, %v1231
      %v1280 = vadd.f32 %v1086, %v1232
      %v1281 = vadd.f32 %v1087, %v1233
      %v1282 = vadd.f32 %v1088, %v1234
      %v1283 = vadd.f32 %v1089, %v1235
      %v1284 = vadd.f32 %v1090, %v1236
      %v1285 = vadd.f32 %v1091, %v1237
      %v1286 = vadd.f32 %v1092, %v1238
      %v1287 = vadd.f32 %v1093, %v1239
      %v1288 = vadd.f32 %v1094, %v1240
      %v1289 = vadd.f32 %v1095, %v1241
      %v1290 = vadd.f32 %v1096, %v1242
      %v1291 = vadd.f32 %v1097, %v1243
      %v1292 = vadd.f32 %v1098, %v1244
      %v1293 = vadd.f32 %v1099, %v1245
      %v1294 = vadd.f32 %v1100, %v1246
      %v1295 = vadd.f32 %v1101, %v1247
      %v1296 = vadd.f32 %v1102, %v1248
      %v1297 = vadd.f32 %v1103, %v1249
      %v1298 = vadd.f32 %v1104, %v1250
      %v1299 = vadd.f32 %v1105, %v1251
      %v1300 = vadd.f32 %v1106, %v1252
      %v1301 = vadd.f32 %v1107, %v1253
      %v1302 = vadd.f32 %v1108, %v1254
      %v1303 = vadd.f32 %v1109, %v1255
      %v1304 = vadd.f32 %v1110, %v1256
      %v1305 = vadd.f32 %v1111, %v1257
      %v1306 = vadd.f32 %v1112, %v1258
      %v1307 = vadd.f32 %v1113, %v1259
      %v1308 = vadd.f32 %v1114, %v1260
      %v1309 = vadd.f32 %v1115, %v1261
      %v1310 = vadd.f32 %v1116, %v1262
      %v1311 = vadd.f32 %v1117, %v1263
      %v1312 = vadd.f32 %v1118, %v1264
      %v1313 = vadd.f32 %v1119, %v1265
      %v1314 = vadd.f32 %v1120, %v1266
      %v1315 = vadd.f32 %v1121, %v1267
      %v1316 = vadd.f32 %v1122, %v1268
      %v1317 = vadd.f32 %v1123, %v1269
      %v1318 = vadd.f32 %v1124, %v1270
      %v1319 = vadd.f32 %v1125, %v1271
      %v1320 = vadd.f32 %v1126, %v1272
      %s1321 = scalar_lea.vmem %s192, 48
      %v1322 = vld [vmem:[%s1321] sm:$0xff]
      %v1323 = vld [vmem:[%s1321 + $0x8] sm:$0xff]
      %v1324 = vld [vmem:[%s1321 + $0x10] sm:$0xff]
      %v1325 = vld [vmem:[%s1321 + $0x18] sm:$0xff]
      %v1326 = vld [vmem:[%s1321 + $0x20] sm:$0xff]
      %v1327 = vld [vmem:[%s1321 + $0x28] sm:$0xff]
      %v1328 = vld [vmem:[%s1321 + $0x30] sm:$0xff]
      %v1329 = vld [vmem:[%s1321 + $0x38] sm:$0xff]
      %v1330 = vld [vmem:[%s1321 + $0x40] sm:$0xff]
      %v1331 = vld [vmem:[%s1321 + $0x48] sm:$0xff]
      %v1332 = vld [vmem:[%s1321 + $0x50] sm:$0xff]
      %v1333 = vld [vmem:[%s1321 + $0x58] sm:$0xff]
      %v1334 = vld [vmem:[%s1321 + $0x60] sm:$0xff]
      %v1335 = vld [vmem:[%s1321 + $0x68] sm:$0xff]
      %v1336 = vld [vmem:[%s1321 + $0x70] sm:$0xff]
      %v1337 = vld [vmem:[%s1321 + $0x78] sm:$0xff]
      %v1338 = vld [vmem:[%s1321 + $0x80] sm:$0xff]
      %v1339 = vld [vmem:[%s1321 + $0x88] sm:$0xff]
      %v1340 = vld [vmem:[%s1321 + $0x90] sm:$0xff]
      %v1341 = vld [vmem:[%s1321 + $0x98] sm:$0xff]
      %v1342 = vld [vmem:[%s1321 + $0xa0] sm:$0xff]
      %v1343 = vld [vmem:[%s1321 + $0xa8] sm:$0xff]
      %v1344 = vld [vmem:[%s1321 + $0xb0] sm:$0xff]
      %v1345 = vld [vmem:[%s1321 + $0xb8] sm:$0xff]
      %v1346 = vld [vmem:[%s1321 + $0xc0] sm:$0xff]
      %v1347 = vld [vmem:[%s1321 + $0xc8] sm:$0xff]
      %v1348 = vld [vmem:[%s1321 + $0xd0] sm:$0xff]
      %v1349 = vld [vmem:[%s1321 + $0xd8] sm:$0xff]
      %v1350 = vld [vmem:[%s1321 + $0xe0] sm:$0xff]
      %v1351 = vld [vmem:[%s1321 + $0xe8] sm:$0xff]
      %v1352 = vld [vmem:[%s1321 + $0xf0] sm:$0xff]
      %v1353 = vld [vmem:[%s1321 + $0xf8] sm:$0xff]
      %v1354 = vld [vmem:[%s1321 + $0x100] sm:$0xff]
      %v1355 = vld [vmem:[%s1321 + $0x108] sm:$0xff]
      %v1356 = vld [vmem:[%s1321 + $0x110] sm:$0xff]
      %v1357 = vld [vmem:[%s1321 + $0x118] sm:$0xff]
      %v1358 = vld [vmem:[%s1321 + $0x120] sm:$0xff]
      %v1359 = vld [vmem:[%s1321 + $0x128] sm:$0xff]
      %v1360 = vld [vmem:[%s1321 + $0x130] sm:$0xff]
      %v1361 = vld [vmem:[%s1321 + $0x138] sm:$0xff]
      %v1362 = vld [vmem:[%s1321 + $0x140] sm:$0xff]
      %v1363 = vld [vmem:[%s1321 + $0x148] sm:$0xff]
      %v1364 = vld [vmem:[%s1321 + $0x150] sm:$0xff]
      %v1365 = vld [vmem:[%s1321 + $0x158] sm:$0xff]
      %v1366 = vld [vmem:[%s1321 + $0x160] sm:$0xff]
      %v1367 = vld [vmem:[%s1321 + $0x168] sm:$0xff]
      %v1368 = vld [vmem:[%s1321 + $0x170] sm:$0xff]
      %v1369 = vld [vmem:[%s1321 + $0x178] sm:$0xff]
      %v1370 = vmax.f32 %v1322, 0.0
      %v1371 = vmax.f32 %v1323, 0.0
      %v1372 = vmax.f32 %v1324, 0.0
      %v1373 = vmax.f32 %v1325, 0.0
      %v1374 = vmax.f32 %v1326, 0.0
      %v1375 = vmax.f32 %v1327, 0.0
      %v1376 = vmax.f32 %v1328, 0.0
      %v1377 = vmax.f32 %v1329, 0.0
      %v1378 = vmax.f32 %v1330, 0.0
      %v1379 = vmax.f32 %v1331, 0.0
      %v1380 = vmax.f32 %v1332, 0.0
      %v1381 = vmax.f32 %v1333, 0.0
      %v1382 = vmax.f32 %v1334, 0.0
      %v1383 = vmax.f32 %v1335, 0.0
      %v1384 = vmax.f32 %v1336, 0.0
      %v1385 = vmax.f32 %v1337, 0.0
      %v1386 = vmax.f32 %v1338, 0.0
      %v1387 = vmax.f32 %v1339, 0.0
      %v1388 = vmax.f32 %v1340, 0.0
      %v1389 = vmax.f32 %v1341, 0.0
      %v1390 = vmax.f32 %v1342, 0.0
      %v1391 = vmax.f32 %v1343, 0.0
      %v1392 = vmax.f32 %v1344, 0.0
      %v1393 = vmax.f32 %v1345, 0.0
      %v1394 = vmax.f32 %v1346, 0.0
      %v1395 = vmax.f32 %v1347, 0.0
      %v1396 = vmax.f32 %v1348, 0.0
      %v1397 = vmax.f32 %v1349, 0.0
      %v1398 = vmax.f32 %v1350, 0.0
      %v1399 = vmax.f32 %v1351, 0.0
      %v1400 = vmax.f32 %v1352, 0.0
      %v1401 = vmax.f32 %v1353, 0.0
      %v1402 = vmax.f32 %v1354, 0.0
      %v1403 = vmax.f32 %v1355, 0.0
      %v1404 = vmax.f32 %v1356, 0.0
      %v1405 = vmax.f32 %v1357, 0.0
      %v1406 = vmax.f32 %v1358, 0.0
      %v1407 = vmax.f32 %v1359, 0.0
      %v1408 = vmax.f32 %v1360, 0.0
      %v1409 = vmax.f32 %v1361, 0.0
      %v1410 = vmax.f32 %v1362, 0.0
      %v1411 = vmax.f32 %v1363, 0.0
      %v1412 = vmax.f32 %v1364, 0.0
      %v1413 = vmax.f32 %v1365, 0.0
      %v1414 = vmax.f32 %v1366, 0.0
      %v1415 = vmax.f32 %v1367, 0.0
      %v1416 = vmax.f32 %v1368, 0.0
      %v1417 = vmax.f32 %v1369, 0.0
      %v1418 = vrot.slane %v1370, 7
      %v1419 = vrot.slane %v1373, 7
      %v1420 = vrot.slane %v1376, 7
      %v1421 = vrot.slane %v1379, 7
      %v1422 = vrot.slane %v1382, 7
      %v1423 = vrot.slane %v1385, 7
      %v1424 = vrot.slane %v1388, 7
      %v1425 = vrot.slane %v1391, 7
      %v1426 = vrot.slane %v1394, 7
      %v1427 = vrot.slane %v1397, 7
      %v1428 = vrot.slane %v1400, 7
      %v1429 = vrot.slane %v1403, 7
      %v1430 = vrot.slane %v1406, 7
      %v1431 = vrot.slane %v1409, 7
      %v1432 = vrot.slane %v1412, 7
      %v1433 = vrot.slane %v1415, 7
      %v1434 = vrot.slane %v1371, 7
      %v1435 = vrot.slane %v1374, 7
      %v1436 = vrot.slane %v1377, 7
      %v1437 = vrot.slane %v1380, 7
      %v1438 = vrot.slane %v1383, 7
      %v1439 = vrot.slane %v1386, 7
      %v1440 = vrot.slane %v1389, 7
      %v1441 = vrot.slane %v1392, 7
      %v1442 = vrot.slane %v1395, 7
      %v1443 = vrot.slane %v1398, 7
      %v1444 = vrot.slane %v1401, 7
      %v1445 = vrot.slane %v1404, 7
      %v1446 = vrot.slane %v1407, 7
      %v1447 = vrot.slane %v1410, 7
      %v1448 = vrot.slane %v1413, 7
      %v1449 = vrot.slane %v1416, 7
      %v1450 = vrot.slane %v1372, 7
      %v1451 = vrot.slane %v1375, 7
      %v1452 = vrot.slane %v1378, 7
      %v1453 = vrot.slane %v1381, 7
      %v1454 = vrot.slane %v1384, 7
      %v1455 = vrot.slane %v1387, 7
      %v1456 = vrot.slane %v1390, 7
      %v1457 = vrot.slane %v1393, 7
      %v1458 = vrot.slane %v1396, 7
      %v1459 = vrot.slane %v1399, 7
      %v1460 = vrot.slane %v1402, 7
      %v1461 = vrot.slane %v1405, 7
      %v1462 = vrot.slane %v1408, 7
      %v1463 = vrot.slane %v1411, 7
      %v1464 = vrot.slane %v1414, 7
      %v1465 = vrot.slane %v1417, 7
      %v1466 = vsel %vm345, %v1434, %v1450
      %v1467 = vsel %vm345, %v1435, %v1451
      %v1468 = vsel %vm345, %v1436, %v1452
      %v1469 = vsel %vm345, %v1437, %v1453
      %v1470 = vsel %vm345, %v1438, %v1454
      %v1471 = vsel %vm345, %v1439, %v1455
      %v1472 = vsel %vm345, %v1440, %v1456
      %v1473 = vsel %vm345, %v1441, %v1457
      %v1474 = vsel %vm345, %v1442, %v1458
      %v1475 = vsel %vm345, %v1443, %v1459
      %v1476 = vsel %vm345, %v1444, %v1460
      %v1477 = vsel %vm345, %v1445, %v1461
      %v1478 = vsel %vm345, %v1446, %v1462
      %v1479 = vsel %vm345, %v1447, %v1463
      %v1480 = vsel %vm345, %v1448, %v1464
      %v1481 = vsel %vm345, %v1449, %v1465
      %v1482 = vsel %vm345, %v1418, %v1434
      %v1483 = vsel %vm345, %v1419, %v1435
      %v1484 = vsel %vm345, %v1420, %v1436
      %v1485 = vsel %vm345, %v1421, %v1437
      %v1486 = vsel %vm345, %v1422, %v1438
      %v1487 = vsel %vm345, %v1423, %v1439
      %v1488 = vsel %vm345, %v1424, %v1440
      %v1489 = vsel %vm345, %v1425, %v1441
      %v1490 = vsel %vm345, %v1426, %v1442
      %v1491 = vsel %vm345, %v1427, %v1443
      %v1492 = vsel %vm345, %v1428, %v1444
      %v1493 = vsel %vm345, %v1429, %v1445
      %v1494 = vsel %vm345, %v1430, %v1446
      %v1495 = vsel %vm345, %v1431, %v1447
      %v1496 = vsel %vm345, %v1432, %v1448
      %v1497 = vsel %vm345, %v1433, %v1449
      %v1498 = vsel %vm345, %v1450, %v1418
      %v1499 = vsel %vm345, %v1451, %v1419
      %v1500 = vsel %vm345, %v1452, %v1420
      %v1501 = vsel %vm345, %v1453, %v1421
      %v1502 = vsel %vm345, %v1454, %v1422
      %v1503 = vsel %vm345, %v1455, %v1423
      %v1504 = vsel %vm345, %v1456, %v1424
      %v1505 = vsel %vm345, %v1457, %v1425
      %v1506 = vsel %vm345, %v1458, %v1426
      %v1507 = vsel %vm345, %v1459, %v1427
      %v1508 = vsel %vm345, %v1460, %v1428
      %v1509 = vsel %vm345, %v1461, %v1429
      %v1510 = vsel %vm345, %v1462, %v1430
      %v1511 = vsel %vm345, %v1463, %v1431
      %v1512 = vsel %vm345, %v1464, %v1432
      %v1513 = vsel %vm345, %v1465, %v1433
      %s1514 = scalar_lea.vmem %s1, 8
      %v1515 = vld [vmem:[%s1514] sm:$0x1]
      %v1516 = vperm.slane %v1515, 0
      %v1517 = vmul.f32 %v1498, %v1516
      %v1518 = vmul.f32 %v1482, %v1516
      %v1519 = vmul.f32 %v1466, %v1516
      %v1520 = vmul.f32 %v1499, %v1516
      %v1521 = vmul.f32 %v1483, %v1516
      %v1522 = vmul.f32 %v1467, %v1516
      %v1523 = vmul.f32 %v1500, %v1516
      %v1524 = vmul.f32 %v1484, %v1516
      %v1525 = vmul.f32 %v1468, %v1516
      %v1526 = vmul.f32 %v1501, %v1516
      %v1527 = vmul.f32 %v1485, %v1516
      %v1528 = vmul.f32 %v1469, %v1516
      %v1529 = vmul.f32 %v1502, %v1516
      %v1530 = vmul.f32 %v1486, %v1516
      %v1531 = vmul.f32 %v1470, %v1516
      %v1532 = vmul.f32 %v1503, %v1516
      %v1533 = vmul.f32 %v1487, %v1516
      %v1534 = vmul.f32 %v1471, %v1516
      %v1535 = vmul.f32 %v1504, %v1516
      %v1536 = vmul.f32 %v1488, %v1516
      %v1537 = vmul.f32 %v1472, %v1516
      %v1538 = vmul.f32 %v1505, %v1516
      %v1539 = vmul.f32 %v1489, %v1516
      %v1540 = vmul.f32 %v1473, %v1516
      %v1541 = vmul.f32 %v1506, %v1516
      %v1542 = vmul.f32 %v1490, %v1516
      %v1543 = vmul.f32 %v1474, %v1516
      %v1544 = vmul.f32 %v1507, %v1516
      %v1545 = vmul.f32 %v1491, %v1516
      %v1546 = vmul.f32 %v1475, %v1516
      %v1547 = vmul.f32 %v1508, %v1516
      %v1548 = vmul.f32 %v1492, %v1516
      %v1549 = vmul.f32 %v1476, %v1516
      %v1550 = vmul.f32 %v1509, %v1516
      %v1551 = vmul.f32 %v1493, %v1516
      %v1552 = vmul.f32 %v1477, %v1516
      %v1553 = vmul.f32 %v1510, %v1516
      %v1554 = vmul.f32 %v1494, %v1516
      %v1555 = vmul.f32 %v1478, %v1516
      %v1556 = vmul.f32 %v1511, %v1516
      %v1557 = vmul.f32 %v1495, %v1516
      %v1558 = vmul.f32 %v1479, %v1516
      %v1559 = vmul.f32 %v1512, %v1516
      %v1560 = vmul.f32 %v1496, %v1516
      %v1561 = vmul.f32 %v1480, %v1516
      %v1562 = vmul.f32 %v1513, %v1516
      %v1563 = vmul.f32 %v1497, %v1516
      %v1564 = vmul.f32 %v1481, %v1516
      %v1565 = vadd.f32 %v1273, %v1517
      %v1566 = vadd.f32 %v1274, %v1518
      %v1567 = vadd.f32 %v1275, %v1519
      %v1568 = vadd.f32 %v1276, %v1520
      %v1569 = vadd.f32 %v1277, %v1521
      %v1570 = vadd.f32 %v1278, %v1522
      %v1571 = vadd.f32 %v1279, %v1523
      %v1572 = vadd.f32 %v1280, %v1524
      %v1573 = vadd.f32 %v1281, %v1525
      %v1574 = vadd.f32 %v1282, %v1526
      %v1575 = vadd.f32 %v1283, %v1527
      %v1576 = vadd.f32 %v1284, %v1528
      %v1577 = vadd.f32 %v1285, %v1529
      %v1578 = vadd.f32 %v1286, %v1530
      %v1579 = vadd.f32 %v1287, %v1531
      %v1580 = vadd.f32 %v1288, %v1532
      %v1581 = vadd.f32 %v1289, %v1533
      %v1582 = vadd.f32 %v1290, %v1534
      %v1583 = vadd.f32 %v1291, %v1535
      %v1584 = vadd.f32 %v1292, %v1536
      %v1585 = vadd.f32 %v1293, %v1537
      %v1586 = vadd.f32 %v1294, %v1538
      %v1587 = vadd.f32 %v1295, %v1539
      %v1588 = vadd.f32 %v1296, %v1540
      %v1589 = vadd.f32 %v1297, %v1541
      %v1590 = vadd.f32 %v1298, %v1542
      %v1591 = vadd.f32 %v1299, %v1543
      %v1592 = vadd.f32 %v1300, %v1544
      %v1593 = vadd.f32 %v1301, %v1545
      %v1594 = vadd.f32 %v1302, %v1546
      %v1595 = vadd.f32 %v1303, %v1547
      %v1596 = vadd.f32 %v1304, %v1548
      %v1597 = vadd.f32 %v1305, %v1549
      %v1598 = vadd.f32 %v1306, %v1550
      %v1599 = vadd.f32 %v1307, %v1551
      %v1600 = vadd.f32 %v1308, %v1552
      %v1601 = vadd.f32 %v1309, %v1553
      %v1602 = vadd.f32 %v1310, %v1554
      %v1603 = vadd.f32 %v1311, %v1555
      %v1604 = vadd.f32 %v1312, %v1556
      %v1605 = vadd.f32 %v1313, %v1557
      %v1606 = vadd.f32 %v1314, %v1558
      %v1607 = vadd.f32 %v1315, %v1559
      %v1608 = vadd.f32 %v1316, %v1560
      %v1609 = vadd.f32 %v1317, %v1561
      %v1610 = vadd.f32 %v1318, %v1562
      %v1611 = vadd.f32 %v1319, %v1563
      %v1612 = vadd.f32 %v1320, %v1564
      %v1613 = vld [vmem:[%s1514 + $0x1] sm:$0x1]
      %v1614 = vperm.slane %v1613, 0
      %v1615 = vmul.f32 %v1370, %v1614
      %v1616 = vmul.f32 %v1371, %v1614
      %v1617 = vmul.f32 %v1372, %v1614
      %v1618 = vmul.f32 %v1373, %v1614
      %v1619 = vmul.f32 %v1374, %v1614
      %v1620 = vmul.f32 %v1375, %v1614
      %v1621 = vmul.f32 %v1376, %v1614
      %v1622 = vmul.f32 %v1377, %v1614
      %v1623 = vmul.f32 %v1378, %v1614
      %v1624 = vmul.f32 %v1379, %v1614
      %v1625 = vmul.f32 %v1380, %v1614
      %v1626 = vmul.f32 %v1381, %v1614
      %v1627 = vmul.f32 %v1382, %v1614
      %v1628 = vmul.f32 %v1383, %v1614
      %v1629 = vmul.f32 %v1384, %v1614
      %v1630 = vmul.f32 %v1385, %v1614
      %v1631 = vmul.f32 %v1386, %v1614
      %v1632 = vmul.f32 %v1387, %v1614
      %v1633 = vmul.f32 %v1388, %v1614
      %v1634 = vmul.f32 %v1389, %v1614
      %v1635 = vmul.f32 %v1390, %v1614
      %v1636 = vmul.f32 %v1391, %v1614
      %v1637 = vmul.f32 %v1392, %v1614
      %v1638 = vmul.f32 %v1393, %v1614
      %v1639 = vmul.f32 %v1394, %v1614
      %v1640 = vmul.f32 %v1395, %v1614
      %v1641 = vmul.f32 %v1396, %v1614
      %v1642 = vmul.f32 %v1397, %v1614
      %v1643 = vmul.f32 %v1398, %v1614
      %v1644 = vmul.f32 %v1399, %v1614
      %v1645 = vmul.f32 %v1400, %v1614
      %v1646 = vmul.f32 %v1401, %v1614
      %v1647 = vmul.f32 %v1402, %v1614
      %v1648 = vmul.f32 %v1403, %v1614
      %v1649 = vmul.f32 %v1404, %v1614
      %v1650 = vmul.f32 %v1405, %v1614
      %v1651 = vmul.f32 %v1406, %v1614
      %v1652 = vmul.f32 %v1407, %v1614
      %v1653 = vmul.f32 %v1408, %v1614
      %v1654 = vmul.f32 %v1409, %v1614
      %v1655 = vmul.f32 %v1410, %v1614
      %v1656 = vmul.f32 %v1411, %v1614
      %v1657 = vmul.f32 %v1412, %v1614
      %v1658 = vmul.f32 %v1413, %v1614
      %v1659 = vmul.f32 %v1414, %v1614
      %v1660 = vmul.f32 %v1415, %v1614
      %v1661 = vmul.f32 %v1416, %v1614
      %v1662 = vmul.f32 %v1417, %v1614
      %v1663 = vadd.f32 %v1565, %v1615
      %v1664 = vadd.f32 %v1566, %v1616
      %v1665 = vadd.f32 %v1567, %v1617
      %v1666 = vadd.f32 %v1568, %v1618
      %v1667 = vadd.f32 %v1569, %v1619
      %v1668 = vadd.f32 %v1570, %v1620
      %v1669 = vadd.f32 %v1571, %v1621
      %v1670 = vadd.f32 %v1572, %v1622
      %v1671 = vadd.f32 %v1573, %v1623
      %v1672 = vadd.f32 %v1574, %v1624
      %v1673 = vadd.f32 %v1575, %v1625
      %v1674 = vadd.f32 %v1576, %v1626
      %v1675 = vadd.f32 %v1577, %v1627
      %v1676 = vadd.f32 %v1578, %v1628
      %v1677 = vadd.f32 %v1579, %v1629
      %v1678 = vadd.f32 %v1580, %v1630
      %v1679 = vadd.f32 %v1581, %v1631
      %v1680 = vadd.f32 %v1582, %v1632
      %v1681 = vadd.f32 %v1583, %v1633
      %v1682 = vadd.f32 %v1584, %v1634
      %v1683 = vadd.f32 %v1585, %v1635
      %v1684 = vadd.f32 %v1586, %v1636
      %v1685 = vadd.f32 %v1587, %v1637
      %v1686 = vadd.f32 %v1588, %v1638
      %v1687 = vadd.f32 %v1589, %v1639
      %v1688 = vadd.f32 %v1590, %v1640
      %v1689 = vadd.f32 %v1591, %v1641
      %v1690 = vadd.f32 %v1592, %v1642
      %v1691 = vadd.f32 %v1593, %v1643
      %v1692 = vadd.f32 %v1594, %v1644
      %v1693 = vadd.f32 %v1595, %v1645
      %v1694 = vadd.f32 %v1596, %v1646
      %v1695 = vadd.f32 %v1597, %v1647
      %v1696 = vadd.f32 %v1598, %v1648
      %v1697 = vadd.f32 %v1599, %v1649
      %v1698 = vadd.f32 %v1600, %v1650
      %v1699 = vadd.f32 %v1601, %v1651
      %v1700 = vadd.f32 %v1602, %v1652
      %v1701 = vadd.f32 %v1603, %v1653
      %v1702 = vadd.f32 %v1604, %v1654
      %v1703 = vadd.f32 %v1605, %v1655
      %v1704 = vadd.f32 %v1606, %v1656
      %v1705 = vadd.f32 %v1607, %v1657
      %v1706 = vadd.f32 %v1608, %v1658
      %v1707 = vadd.f32 %v1609, %v1659
      %v1708 = vadd.f32 %v1610, %v1660
      %v1709 = vadd.f32 %v1611, %v1661
      %v1710 = vadd.f32 %v1612, %v1662
      %v1711 = vrot.slane %v1370, 1
      %v1712 = vrot.slane %v1373, 1
      %v1713 = vrot.slane %v1376, 1
      %v1714 = vrot.slane %v1379, 1
      %v1715 = vrot.slane %v1382, 1
      %v1716 = vrot.slane %v1385, 1
      %v1717 = vrot.slane %v1388, 1
      %v1718 = vrot.slane %v1391, 1
      %v1719 = vrot.slane %v1394, 1
      %v1720 = vrot.slane %v1397, 1
      %v1721 = vrot.slane %v1400, 1
      %v1722 = vrot.slane %v1403, 1
      %v1723 = vrot.slane %v1406, 1
      %v1724 = vrot.slane %v1409, 1
      %v1725 = vrot.slane %v1412, 1
      %v1726 = vrot.slane %v1415, 1
      %v1727 = vrot.slane %v1371, 1
      %v1728 = vrot.slane %v1374, 1
      %v1729 = vrot.slane %v1377, 1
      %v1730 = vrot.slane %v1380, 1
      %v1731 = vrot.slane %v1383, 1
      %v1732 = vrot.slane %v1386, 1
      %v1733 = vrot.slane %v1389, 1
      %v1734 = vrot.slane %v1392, 1
      %v1735 = vrot.slane %v1395, 1
      %v1736 = vrot.slane %v1398, 1
      %v1737 = vrot.slane %v1401, 1
      %v1738 = vrot.slane %v1404, 1
      %v1739 = vrot.slane %v1407, 1
      %v1740 = vrot.slane %v1410, 1
      %v1741 = vrot.slane %v1413, 1
      %v1742 = vrot.slane %v1416, 1
      %v1743 = vrot.slane %v1372, 1
      %v1744 = vrot.slane %v1375, 1
      %v1745 = vrot.slane %v1378, 1
      %v1746 = vrot.slane %v1381, 1
      %v1747 = vrot.slane %v1384, 1
      %v1748 = vrot.slane %v1387, 1
      %v1749 = vrot.slane %v1390, 1
      %v1750 = vrot.slane %v1393, 1
      %v1751 = vrot.slane %v1396, 1
      %v1752 = vrot.slane %v1399, 1
      %v1753 = vrot.slane %v1402, 1
      %v1754 = vrot.slane %v1405, 1
      %v1755 = vrot.slane %v1408, 1
      %v1756 = vrot.slane %v1411, 1
      %v1757 = vrot.slane %v1414, 1
      %v1758 = vrot.slane %v1417, 1
      %v1759 = vsel %vm590, %v1727, %v1743
      %v1760 = vsel %vm590, %v1728, %v1744
      %v1761 = vsel %vm590, %v1729, %v1745
      %v1762 = vsel %vm590, %v1730, %v1746
      %v1763 = vsel %vm590, %v1731, %v1747
      %v1764 = vsel %vm590, %v1732, %v1748
      %v1765 = vsel %vm590, %v1733, %v1749
      %v1766 = vsel %vm590, %v1734, %v1750
      %v1767 = vsel %vm590, %v1735, %v1751
      %v1768 = vsel %vm590, %v1736, %v1752
      %v1769 = vsel %vm590, %v1737, %v1753
      %v1770 = vsel %vm590, %v1738, %v1754
      %v1771 = vsel %vm590, %v1739, %v1755
      %v1772 = vsel %vm590, %v1740, %v1756
      %v1773 = vsel %vm590, %v1741, %v1757
      %v1774 = vsel %vm590, %v1742, %v1758
      %v1775 = vsel %vm590, %v1711, %v1727
      %v1776 = vsel %vm590, %v1712, %v1728
      %v1777 = vsel %vm590, %v1713, %v1729
      %v1778 = vsel %vm590, %v1714, %v1730
      %v1779 = vsel %vm590, %v1715, %v1731
      %v1780 = vsel %vm590, %v1716, %v1732
      %v1781 = vsel %vm590, %v1717, %v1733
      %v1782 = vsel %vm590, %v1718, %v1734
      %v1783 = vsel %vm590, %v1719, %v1735
      %v1784 = vsel %vm590, %v1720, %v1736
      %v1785 = vsel %vm590, %v1721, %v1737
      %v1786 = vsel %vm590, %v1722, %v1738
      %v1787 = vsel %vm590, %v1723, %v1739
      %v1788 = vsel %vm590, %v1724, %v1740
      %v1789 = vsel %vm590, %v1725, %v1741
      %v1790 = vsel %vm590, %v1726, %v1742
      %v1791 = vsel %vm590, %v1743, %v1711
      %v1792 = vsel %vm590, %v1744, %v1712
      %v1793 = vsel %vm590, %v1745, %v1713
      %v1794 = vsel %vm590, %v1746, %v1714
      %v1795 = vsel %vm590, %v1747, %v1715
      %v1796 = vsel %vm590, %v1748, %v1716
      %v1797 = vsel %vm590, %v1749, %v1717
      %v1798 = vsel %vm590, %v1750, %v1718
      %v1799 = vsel %vm590, %v1751, %v1719
      %v1800 = vsel %vm590, %v1752, %v1720
      %v1801 = vsel %vm590, %v1753, %v1721
      %v1802 = vsel %vm590, %v1754, %v1722
      %v1803 = vsel %vm590, %v1755, %v1723
      %v1804 = vsel %vm590, %v1756, %v1724
      %v1805 = vsel %vm590, %v1757, %v1725
      %v1806 = vsel %vm590, %v1758, %v1726
      %v1807 = vld [vmem:[%s1514 + $0x2] sm:$0x1]
      %v1808 = vperm.slane %v1807, 0
      %v1809 = vmul.f32 %v1775, %v1808
      %v1810 = vmul.f32 %v1759, %v1808
      %v1811 = vmul.f32 %v1791, %v1808
      %v1812 = vmul.f32 %v1776, %v1808
      %v1813 = vmul.f32 %v1760, %v1808
      %v1814 = vmul.f32 %v1792, %v1808
      %v1815 = vmul.f32 %v1777, %v1808
      %v1816 = vmul.f32 %v1761, %v1808
      %v1817 = vmul.f32 %v1793, %v1808
      %v1818 = vmul.f32 %v1778, %v1808
      %v1819 = vmul.f32 %v1762, %v1808
      %v1820 = vmul.f32 %v1794, %v1808
      %v1821 = vmul.f32 %v1779, %v1808
      %v1822 = vmul.f32 %v1763, %v1808
      %v1823 = vmul.f32 %v1795, %v1808
      %v1824 = vmul.f32 %v1780, %v1808
      %v1825 = vmul.f32 %v1764, %v1808
      %v1826 = vmul.f32 %v1796, %v1808
      %v1827 = vmul.f32 %v1781, %v1808
      %v1828 = vmul.f32 %v1765, %v1808
      %v1829 = vmul.f32 %v1797, %v1808
      %v1830 = vmul.f32 %v1782, %v1808
      %v1831 = vmul.f32 %v1766, %v1808
      %v1832 = vmul.f32 %v1798, %v1808
      %v1833 = vmul.f32 %v1783, %v1808
      %v1834 = vmul.f32 %v1767, %v1808
      %v1835 = vmul.f32 %v1799, %v1808
      %v1836 = vmul.f32 %v1784, %v1808
      %v1837 = vmul.f32 %v1768, %v1808
      %v1838 = vmul.f32 %v1800, %v1808
      %v1839 = vmul.f32 %v1785, %v1808
      %v1840 = vmul.f32 %v1769, %v1808
      %v1841 = vmul.f32 %v1801, %v1808
      %v1842 = vmul.f32 %v1786, %v1808
      %v1843 = vmul.f32 %v1770, %v1808
      %v1844 = vmul.f32 %v1802, %v1808
      %v1845 = vmul.f32 %v1787, %v1808
      %v1846 = vmul.f32 %v1771, %v1808
      %v1847 = vmul.f32 %v1803, %v1808
      %v1848 = vmul.f32 %v1788, %v1808
      %v1849 = vmul.f32 %v1772, %v1808
      %v1850 = vmul.f32 %v1804, %v1808
      %v1851 = vmul.f32 %v1789, %v1808
      %v1852 = vmul.f32 %v1773, %v1808
      %v1853 = vmul.f32 %v1805, %v1808
      %v1854 = vmul.f32 %v1790, %v1808
      %v1855 = vmul.f32 %v1774, %v1808
      %v1856 = vmul.f32 %v1806, %v1808
      %v1857 = vadd.f32 %v1663, %v1809
      %v1858 = vadd.f32 %v1664, %v1810
      %v1859 = vadd.f32 %v1665, %v1811
      %v1860 = vadd.f32 %v1666, %v1812
      %v1861 = vadd.f32 %v1667, %v1813
      %v1862 = vadd.f32 %v1668, %v1814
      %v1863 = vadd.f32 %v1669, %v1815
      %v1864 = vadd.f32 %v1670, %v1816
      %v1865 = vadd.f32 %v1671, %v1817
      %v1866 = vadd.f32 %v1672, %v1818
      %v1867 = vadd.f32 %v1673, %v1819
      %v1868 = vadd.f32 %v1674, %v1820
      %v1869 = vadd.f32 %v1675, %v1821
      %v1870 = vadd.f32 %v1676, %v1822
      %v1871 = vadd.f32 %v1677, %v1823
      %v1872 = vadd.f32 %v1678, %v1824
      %v1873 = vadd.f32 %v1679, %v1825
      %v1874 = vadd.f32 %v1680, %v1826
      %v1875 = vadd.f32 %v1681, %v1827
      %v1876 = vadd.f32 %v1682, %v1828
      %v1877 = vadd.f32 %v1683, %v1829
      %v1878 = vadd.f32 %v1684, %v1830
      %v1879 = vadd.f32 %v1685, %v1831
      %v1880 = vadd.f32 %v1686, %v1832
      %v1881 = vadd.f32 %v1687, %v1833
      %v1882 = vadd.f32 %v1688, %v1834
      %v1883 = vadd.f32 %v1689, %v1835
      %v1884 = vadd.f32 %v1690, %v1836
      %v1885 = vadd.f32 %v1691, %v1837
      %v1886 = vadd.f32 %v1692, %v1838
      %v1887 = vadd.f32 %v1693, %v1839
      %v1888 = vadd.f32 %v1694, %v1840
      %v1889 = vadd.f32 %v1695, %v1841
      %v1890 = vadd.f32 %v1696, %v1842
      %v1891 = vadd.f32 %v1697, %v1843
      %v1892 = vadd.f32 %v1698, %v1844
      %v1893 = vadd.f32 %v1699, %v1845
      %v1894 = vadd.f32 %v1700, %v1846
      %v1895 = vadd.f32 %v1701, %v1847
      %v1896 = vadd.f32 %v1702, %v1848
      %v1897 = vadd.f32 %v1703, %v1849
      %v1898 = vadd.f32 %v1704, %v1850
      %v1899 = vadd.f32 %v1705, %v1851
      %v1900 = vadd.f32 %v1706, %v1852
      %v1901 = vadd.f32 %v1707, %v1853
      %v1902 = vadd.f32 %v1708, %v1854
      %v1903 = vadd.f32 %v1709, %v1855
      %v1904 = vadd.f32 %v1710, %v1856
      %v1905 = vpack.c.bf16 %v1857, %v1857
      %v1906 = vpack.c.bf16 %v1858, %v1858
      %v1907 = vpack.c.bf16 %v1859, %v1859
      %v1908 = vpack.c.bf16 %v1860, %v1860
      %v1909 = vpack.c.bf16 %v1861, %v1861
      %v1910 = vpack.c.bf16 %v1862, %v1862
      %v1911 = vpack.c.bf16 %v1863, %v1863
      %v1912 = vpack.c.bf16 %v1864, %v1864
      %v1913 = vpack.c.bf16 %v1865, %v1865
      %v1914 = vpack.c.bf16 %v1866, %v1866
      %v1915 = vpack.c.bf16 %v1867, %v1867
      %v1916 = vpack.c.bf16 %v1868, %v1868
      %v1917 = vpack.c.bf16 %v1869, %v1869
      %v1918 = vpack.c.bf16 %v1870, %v1870
      %v1919 = vpack.c.bf16 %v1871, %v1871
      %v1920 = vpack.c.bf16 %v1872, %v1872
      %v1921 = vpack.c.bf16 %v1873, %v1873
      %v1922 = vpack.c.bf16 %v1874, %v1874
      %v1923 = vpack.c.bf16 %v1875, %v1875
      %v1924 = vpack.c.bf16 %v1876, %v1876
      %v1925 = vpack.c.bf16 %v1877, %v1877
      %v1926 = vpack.c.bf16 %v1878, %v1878
      %v1927 = vpack.c.bf16 %v1879, %v1879
      %v1928 = vpack.c.bf16 %v1880, %v1880
      %v1929 = vpack.c.bf16 %v1881, %v1881
      %v1930 = vpack.c.bf16 %v1882, %v1882
      %v1931 = vpack.c.bf16 %v1883, %v1883
      %v1932 = vpack.c.bf16 %v1884, %v1884
      %v1933 = vpack.c.bf16 %v1885, %v1885
      %v1934 = vpack.c.bf16 %v1886, %v1886
      %v1935 = vpack.c.bf16 %v1887, %v1887
      %v1936 = vpack.c.bf16 %v1888, %v1888
      %v1937 = vpack.c.bf16 %v1889, %v1889
      %v1938 = vpack.c.bf16 %v1890, %v1890
      %v1939 = vpack.c.bf16 %v1891, %v1891
      %v1940 = vpack.c.bf16 %v1892, %v1892
      %v1941 = vpack.c.bf16 %v1893, %v1893
      %v1942 = vpack.c.bf16 %v1894, %v1894
      %v1943 = vpack.c.bf16 %v1895, %v1895
      %v1944 = vpack.c.bf16 %v1896, %v1896
      %v1945 = vpack.c.bf16 %v1897, %v1897
      %v1946 = vpack.c.bf16 %v1898, %v1898
      %v1947 = vpack.c.bf16 %v1899, %v1899
      %v1948 = vpack.c.bf16 %v1900, %v1900
      %v1949 = vpack.c.bf16 %v1901, %v1901
      %v1950 = vpack.c.bf16 %v1902, %v1902
      %v1951 = vpack.c.bf16 %v1903, %v1903
      %v1952 = vpack.c.bf16 %v1904, %v1904
      %v1953 = vld [vmem:[%s2] sm:$0xf]
      %v1954 = vld [vmem:[%s2 + $0x4] sm:$0xf]
      %v1955 = vld [vmem:[%s2 + $0x8] sm:$0xf]
      %v1956 = vld [vmem:[%s2 + $0xc] sm:$0xf]
      %v1957 = vld [vmem:[%s2 + $0x10] sm:$0xf]
      %v1958 = vld [vmem:[%s2 + $0x14] sm:$0xf]
      %v1959 = vld [vmem:[%s2 + $0x18] sm:$0xf]
      %v1960 = vld [vmem:[%s2 + $0x1c] sm:$0xf]
      %v1961 = vld [vmem:[%s2 + $0x20] sm:$0xf]
      %v1962 = vld [vmem:[%s2 + $0x24] sm:$0xf]
      %v1963 = vld [vmem:[%s2 + $0x28] sm:$0xf]
      %v1964 = vld [vmem:[%s2 + $0x2c] sm:$0xf]
      %v1965 = vld [vmem:[%s2 + $0x30] sm:$0xf]
      %v1966 = vld [vmem:[%s2 + $0x34] sm:$0xf]
      %v1967 = vld [vmem:[%s2 + $0x38] sm:$0xf]
      %v1968 = vld [vmem:[%s2 + $0x3c] sm:$0xf]
      %v1969 = vld [vmem:[%s3] sm:$0x1]
      %v1971 = vperm.slane %v1969, 0
      %v2021 = vunpack.c.l.b16 %v1905
      %v2022 = vunpack.c.l.b16 %v1906
      %v2023 = vunpack.c.l.b16 %v1907
      %v2024 = vunpack.c.l.b16 %v1908
      %v2025 = vunpack.c.l.b16 %v1909
      %v2026 = vunpack.c.l.b16 %v1910
      %v2027 = vunpack.c.l.b16 %v1911
      %v2028 = vunpack.c.l.b16 %v1912
      %v2029 = vunpack.c.l.b16 %v1913
      %v2030 = vunpack.c.l.b16 %v1914
      %v2031 = vunpack.c.l.b16 %v1915
      %v2032 = vunpack.c.l.b16 %v1916
      %v2033 = vunpack.c.l.b16 %v1917
      %v2034 = vunpack.c.l.b16 %v1918
      %v2035 = vunpack.c.l.b16 %v1919
      %v2036 = vunpack.c.l.b16 %v1920
      %v2037 = vunpack.c.l.b16 %v1921
      %v2038 = vunpack.c.l.b16 %v1922
      %v2039 = vunpack.c.l.b16 %v1923
      %v2040 = vunpack.c.l.b16 %v1924
      %v2041 = vunpack.c.l.b16 %v1925
      %v2042 = vunpack.c.l.b16 %v1926
      %v2043 = vunpack.c.l.b16 %v1927
      %v2044 = vunpack.c.l.b16 %v1928
      %v2045 = vunpack.c.l.b16 %v1929
      %v2046 = vunpack.c.l.b16 %v1930
      %v2047 = vunpack.c.l.b16 %v1931
      %v2048 = vunpack.c.l.b16 %v1932
      %v2049 = vunpack.c.l.b16 %v1933
      %v2050 = vunpack.c.l.b16 %v1934
      %v2051 = vunpack.c.l.b16 %v1935
      %v2052 = vunpack.c.l.b16 %v1936
      %v2053 = vunpack.c.l.b16 %v1937
      %v2054 = vunpack.c.l.b16 %v1938
      %v2055 = vunpack.c.l.b16 %v1939
      %v2056 = vunpack.c.l.b16 %v1940
      %v2057 = vunpack.c.l.b16 %v1941
      %v2058 = vunpack.c.l.b16 %v1942
      %v2059 = vunpack.c.l.b16 %v1943
      %v2060 = vunpack.c.l.b16 %v1944
      %v2061 = vunpack.c.l.b16 %v1945
      %v2062 = vunpack.c.l.b16 %v1946
      %v2063 = vunpack.c.l.b16 %v1947
      %v2064 = vunpack.c.l.b16 %v1948
      %v2065 = vunpack.c.l.b16 %v1949
      %v2066 = vunpack.c.l.b16 %v1950
      %v2067 = vunpack.c.l.b16 %v1951
      %v2068 = vunpack.c.l.b16 %v1952
      %v2069 = vpack.c.b16 %v2022, %v2021
      %v2070 = vpack.c.b16 %v2024, %v2023
      %v2071 = vpack.c.b16 %v2026, %v2025
      %v2072 = vpack.c.b16 %v2028, %v2027
      %v2073 = vpack.c.b16 %v2030, %v2029
      %v2074 = vpack.c.b16 %v2032, %v2031
      %v2075 = vpack.c.b16 %v2034, %v2033
      %v2076 = vpack.c.b16 %v2036, %v2035
      %v2077 = vpack.c.b16 %v2038, %v2037
      %v2078 = vpack.c.b16 %v2040, %v2039
      %v2079 = vpack.c.b16 %v2042, %v2041
      %v2080 = vpack.c.b16 %v2044, %v2043
      %v2081 = vpack.c.b16 %v2046, %v2045
      %v2082 = vpack.c.b16 %v2048, %v2047
      %v2083 = vpack.c.b16 %v2050, %v2049
      %v2084 = vpack.c.b16 %v2052, %v2051
      %v2085 = vpack.c.b16 %v2054, %v2053
      %v2086 = vpack.c.b16 %v2056, %v2055
      %v2087 = vpack.c.b16 %v2058, %v2057
      %v2088 = vpack.c.b16 %v2060, %v2059
      %v2089 = vpack.c.b16 %v2062, %v2061
      %v2090 = vpack.c.b16 %v2064, %v2063
      %v2091 = vpack.c.b16 %v2066, %v2065
      %v2092 = vpack.c.b16 %v2068, %v2067
      %v2133 = vunpack.c.l.b16 %v1953
      %v2134 = vunpack.c.l.b16 %v1954
      %v2135 = vunpack.c.l.b16 %v1955
      %v2136 = vunpack.c.l.b16 %v1956
      %v2137 = vunpack.c.l.b16 %v1957
      %v2138 = vunpack.c.l.b16 %v1958
      %v2139 = vunpack.c.l.b16 %v1959
      %v2140 = vunpack.c.l.b16 %v1960
      %v2141 = vunpack.c.l.b16 %v1961
      %v2142 = vunpack.c.l.b16 %v1962
      %v2143 = vunpack.c.l.b16 %v1963
      %v2144 = vunpack.c.l.b16 %v1964
      %v2145 = vunpack.c.l.b16 %v1965
      %v2146 = vunpack.c.l.b16 %v1966
      %v2147 = vunpack.c.l.b16 %v1967
      %v2148 = vunpack.c.l.b16 %v1968
      %v2149 = vpack.c.b16 %v2134, %v2133
      %v2150 = vpack.c.b16 %v2136, %v2135
      %v2151 = vpack.c.b16 %v2138, %v2137
      %v2152 = vpack.c.b16 %v2140, %v2139
      %v2153 = vpack.c.b16 %v2142, %v2141
      %v2154 = vpack.c.b16 %v2144, %v2143
      %v2155 = vpack.c.b16 %v2146, %v2145
      %v2156 = vpack.c.b16 %v2148, %v2147
      %2165 = vmatpush.bf16.msra.mxu0 %v2156
      %2166 = vmatpush.bf16.msra.mxu0 %v2155
      %2167 = vmatpush.bf16.msra.mxu0 %v2154
      %2168 = vmatpush.bf16.msra.mxu0 %v2153
      %2169 = vmatpush.bf16.msra.mxu0 %v2152
      %2170 = vmatpush.bf16.msra.mxu0 %v2151
      %2171 = vmatpush.bf16.msra.mxu0 %v2150
      %2172 = vmatpush.bf16.msra.mxu0 %v2149
      %2173 = vmatmul.bf16.gmra.mxu0 %v2069
      %v2174 = vpop.f32.mrf.mxu0
      %v2175 = vadd.f32 %v1971, %v2174
      %v2176 = vpop.f32.mrf.mxu0
      %v2177 = vadd.f32 %v1971, %v2176
      %2178 = vmatmul.bf16.gmra.mxu0 %v2070
      %v2179 = vpop.f32.mrf.mxu0
      %v2180 = vadd.f32 %v1971, %v2179
      %v2181 = vpop.f32.mrf.mxu0
      %v2182 = vadd.f32 %v1971, %v2181
      %2183 = vmatmul.bf16.gmra.mxu0 %v2071
      %v2184 = vpop.f32.mrf.mxu0
      %v2185 = vadd.f32 %v1971, %v2184
      %v2186 = vpop.f32.mrf.mxu0
      %v2187 = vadd.f32 %v1971, %v2186
      %2188 = vmatmul.bf16.gmra.mxu0 %v2072
      %v2189 = vpop.f32.mrf.mxu0
      %v2190 = vadd.f32 %v1971, %v2189
      %v2191 = vpop.f32.mrf.mxu0
      %v2192 = vadd.f32 %v1971, %v2191
      %2193 = vmatmul.bf16.gmra.mxu0 %v2073
      %v2194 = vpop.f32.mrf.mxu0
      %v2195 = vadd.f32 %v1971, %v2194
      %v2196 = vpop.f32.mrf.mxu0
      %v2197 = vadd.f32 %v1971, %v2196
      %2198 = vmatmul.bf16.gmra.mxu0 %v2074
      %v2199 = vpop.f32.mrf.mxu0
      %v2200 = vadd.f32 %v1971, %v2199
      %v2201 = vpop.f32.mrf.mxu0
      %v2202 = vadd.f32 %v1971, %v2201
      %2203 = vmatmul.bf16.gmra.mxu0 %v2075
      %v2204 = vpop.f32.mrf.mxu0
      %v2205 = vadd.f32 %v1971, %v2204
      %v2206 = vpop.f32.mrf.mxu0
      %v2207 = vadd.f32 %v1971, %v2206
      %2208 = vmatmul.bf16.gmra.mxu0 %v2076
      %v2209 = vpop.f32.mrf.mxu0
      %v2210 = vadd.f32 %v1971, %v2209
      %v2211 = vpop.f32.mrf.mxu0
      %v2212 = vadd.f32 %v1971, %v2211
      %2213 = vmatmul.bf16.gmra.mxu0 %v2077
      %v2214 = vpop.f32.mrf.mxu0
      %v2215 = vadd.f32 %v1971, %v2214
      %v2216 = vpop.f32.mrf.mxu0
      %v2217 = vadd.f32 %v1971, %v2216
      %2218 = vmatmul.bf16.gmra.mxu0 %v2078
      %v2219 = vpop.f32.mrf.mxu0
      %v2220 = vadd.f32 %v1971, %v2219
      %v2221 = vpop.f32.mrf.mxu0
      %v2222 = vadd.f32 %v1971, %v2221
      %2223 = vmatmul.bf16.gmra.mxu0 %v2079
      %v2224 = vpop.f32.mrf.mxu0
      %v2225 = vadd.f32 %v1971, %v2224
      %v2226 = vpop.f32.mrf.mxu0
      %v2227 = vadd.f32 %v1971, %v2226
      %2228 = vmatmul.bf16.gmra.mxu0 %v2080
      %v2229 = vpop.f32.mrf.mxu0
      %v2230 = vadd.f32 %v1971, %v2229
      %v2231 = vpop.f32.mrf.mxu0
      %v2232 = vadd.f32 %v1971, %v2231
      %2233 = vmatmul.bf16.gmra.mxu0 %v2081
      %v2234 = vpop.f32.mrf.mxu0
      %v2235 = vadd.f32 %v1971, %v2234
      %v2236 = vpop.f32.mrf.mxu0
      %v2237 = vadd.f32 %v1971, %v2236
      %2238 = vmatmul.bf16.gmra.mxu0 %v2082
      %v2239 = vpop.f32.mrf.mxu0
      %v2240 = vadd.f32 %v1971, %v2239
      %v2241 = vpop.f32.mrf.mxu0
      %v2242 = vadd.f32 %v1971, %v2241
      %2243 = vmatmul.bf16.gmra.mxu0 %v2083
      %v2244 = vpop.f32.mrf.mxu0
      %v2245 = vadd.f32 %v1971, %v2244
      %v2246 = vpop.f32.mrf.mxu0
      %v2247 = vadd.f32 %v1971, %v2246
      %2248 = vmatmul.bf16.gmra.mxu0 %v2084
      %v2249 = vpop.f32.mrf.mxu0
      %v2250 = vadd.f32 %v1971, %v2249
      %v2251 = vpop.f32.mrf.mxu0
      %v2252 = vadd.f32 %v1971, %v2251
      %2253 = vmatmul.bf16.gmra.mxu0 %v2085
      %v2254 = vpop.f32.mrf.mxu0
      %v2255 = vadd.f32 %v1971, %v2254
      %v2256 = vpop.f32.mrf.mxu0
      %v2257 = vadd.f32 %v1971, %v2256
      %2258 = vmatmul.bf16.gmra.mxu0 %v2086
      %v2259 = vpop.f32.mrf.mxu0
      %v2260 = vadd.f32 %v1971, %v2259
      %v2261 = vpop.f32.mrf.mxu0
      %v2262 = vadd.f32 %v1971, %v2261
      %2263 = vmatmul.bf16.gmra.mxu0 %v2087
      %v2264 = vpop.f32.mrf.mxu0
      %v2265 = vadd.f32 %v1971, %v2264
      %v2266 = vpop.f32.mrf.mxu0
      %v2267 = vadd.f32 %v1971, %v2266
      %2268 = vmatmul.bf16.gmra.mxu0 %v2088
      %v2269 = vpop.f32.mrf.mxu0
      %v2270 = vadd.f32 %v1971, %v2269
      %v2271 = vpop.f32.mrf.mxu0
      %v2272 = vadd.f32 %v1971, %v2271
      %2273 = vmatmul.bf16.gmra.mxu0 %v2089
      %v2274 = vpop.f32.mrf.mxu0
      %v2275 = vadd.f32 %v1971, %v2274
      %v2276 = vpop.f32.mrf.mxu0
      %v2277 = vadd.f32 %v1971, %v2276
      %2278 = vmatmul.bf16.gmra.mxu0 %v2090
      %v2279 = vpop.f32.mrf.mxu0
      %v2280 = vadd.f32 %v1971, %v2279
      %v2281 = vpop.f32.mrf.mxu0
      %v2282 = vadd.f32 %v1971, %v2281
      %2283 = vmatmul.bf16.gmra.mxu0 %v2091
      %v2284 = vpop.f32.mrf.mxu0
      %v2285 = vadd.f32 %v1971, %v2284
      %v2286 = vpop.f32.mrf.mxu0
      %v2287 = vadd.f32 %v1971, %v2286
      %2288 = vmatmul.bf16.gmra.mxu0 %v2092
      %v2289 = vpop.f32.mrf.mxu0
      %v2290 = vadd.f32 %v1971, %v2289
      %v2291 = vpop.f32.mrf.mxu0
      %v2292 = vadd.f32 %v1971, %v2291
      %2293 = vdwg.mxu0
      %v2294 = vadd.s32 %v344, 8
      %v2295 = vadd.s32 %v344, 16
      %vm2296 = vcmp.lt.s32.totalorder %v344, 16
      %vm2297 = vcmp.lt.s32.totalorder %v2294, 16
      %vm2298 = vcmp.lt.s32.totalorder %v2295, 16
      %v2299 = vsel %vm2296, 1, 0
      %v2300 = vsel %vm2297, 1, 0
      %v2301 = vsel %vm2298, 1, 0
      %vm2302 = vcmp.eq.s32.totalorder %v2299, 1
      %vm2303 = vcmp.eq.s32.totalorder %v2300, 1
      %vm2304 = vcmp.eq.s32.totalorder %v2301, 1
      %v2305 = vsel %vm2302, %v2175, 0.0
      %v2306 = vsel %vm2303, %v2177, 0.0
      %v2307 = vsel %vm2304, %v2180, 0.0
      %v2308 = vsel %vm2302, %v2182, 0.0
      %v2309 = vsel %vm2303, %v2185, 0.0
      %v2310 = vsel %vm2304, %v2187, 0.0
      %v2311 = vsel %vm2302, %v2190, 0.0
      %v2312 = vsel %vm2303, %v2192, 0.0
      %v2313 = vsel %vm2304, %v2195, 0.0
      %v2314 = vsel %vm2302, %v2197, 0.0
      %v2315 = vsel %vm2303, %v2200, 0.0
      %v2316 = vsel %vm2304, %v2202, 0.0
      %v2317 = vsel %vm2302, %v2205, 0.0
      %v2318 = vsel %vm2303, %v2207, 0.0
      %v2319 = vsel %vm2304, %v2210, 0.0
      %v2320 = vsel %vm2302, %v2212, 0.0
      %v2321 = vsel %vm2303, %v2215, 0.0
      %v2322 = vsel %vm2304, %v2217, 0.0
      %v2323 = vsel %vm2302, %v2220, 0.0
      %v2324 = vsel %vm2303, %v2222, 0.0
      %v2325 = vsel %vm2304, %v2225, 0.0
      %v2326 = vsel %vm2302, %v2227, 0.0
      %v2327 = vsel %vm2303, %v2230, 0.0
      %v2328 = vsel %vm2304, %v2232, 0.0
      %v2329 = vsel %vm2302, %v2235, 0.0
      %v2330 = vsel %vm2303, %v2237, 0.0
      %v2331 = vsel %vm2304, %v2240, 0.0
      %v2332 = vsel %vm2302, %v2242, 0.0
      %v2333 = vsel %vm2303, %v2245, 0.0
      %v2334 = vsel %vm2304, %v2247, 0.0
      %v2335 = vsel %vm2302, %v2250, 0.0
      %v2336 = vsel %vm2303, %v2252, 0.0
      %v2337 = vsel %vm2304, %v2255, 0.0
      %v2338 = vsel %vm2302, %v2257, 0.0
      %v2339 = vsel %vm2303, %v2260, 0.0
      %v2340 = vsel %vm2304, %v2262, 0.0
      %v2341 = vsel %vm2302, %v2265, 0.0
      %v2342 = vsel %vm2303, %v2267, 0.0
      %v2343 = vsel %vm2304, %v2270, 0.0
      %v2344 = vsel %vm2302, %v2272, 0.0
      %v2345 = vsel %vm2303, %v2275, 0.0
      %v2346 = vsel %vm2304, %v2277, 0.0
      %v2347 = vsel %vm2302, %v2280, 0.0
      %v2348 = vsel %vm2303, %v2282, 0.0
      %v2349 = vsel %vm2304, %v2285, 0.0
      %v2350 = vsel %vm2302, %v2287, 0.0
      %v2351 = vsel %vm2303, %v2290, 0.0
      %v2352 = vsel %vm2304, %v2292, 0.0
      %v2353 = vpack.c.bf16 %v2305, %v2305
      %v2354 = vpack.c.bf16 %v2306, %v2306
      %v2355 = vpack.c.bf16 %v2307, %v2307
      %v2356 = vpack.c.bf16 %v2308, %v2308
      %v2357 = vpack.c.bf16 %v2309, %v2309
      %v2358 = vpack.c.bf16 %v2310, %v2310
      %v2359 = vpack.c.bf16 %v2311, %v2311
      %v2360 = vpack.c.bf16 %v2312, %v2312
      %v2361 = vpack.c.bf16 %v2313, %v2313
      %v2362 = vpack.c.bf16 %v2314, %v2314
      %v2363 = vpack.c.bf16 %v2315, %v2315
      %v2364 = vpack.c.bf16 %v2316, %v2316
      %v2365 = vpack.c.bf16 %v2317, %v2317
      %v2366 = vpack.c.bf16 %v2318, %v2318
      %v2367 = vpack.c.bf16 %v2319, %v2319
      %v2368 = vpack.c.bf16 %v2320, %v2320
      %v2369 = vpack.c.bf16 %v2321, %v2321
      %v2370 = vpack.c.bf16 %v2322, %v2322
      %v2371 = vpack.c.bf16 %v2323, %v2323
      %v2372 = vpack.c.bf16 %v2324, %v2324
      %v2373 = vpack.c.bf16 %v2325, %v2325
      %v2374 = vpack.c.bf16 %v2326, %v2326
      %v2375 = vpack.c.bf16 %v2327, %v2327
      %v2376 = vpack.c.bf16 %v2328, %v2328
      %v2377 = vpack.c.bf16 %v2329, %v2329
      %v2378 = vpack.c.bf16 %v2330, %v2330
      %v2379 = vpack.c.bf16 %v2331, %v2331
      %v2380 = vpack.c.bf16 %v2332, %v2332
      %v2381 = vpack.c.bf16 %v2333, %v2333
      %v2382 = vpack.c.bf16 %v2334, %v2334
      %v2383 = vpack.c.bf16 %v2335, %v2335
      %v2384 = vpack.c.bf16 %v2336, %v2336
      %v2385 = vpack.c.bf16 %v2337, %v2337
      %v2386 = vpack.c.bf16 %v2338, %v2338
      %v2387 = vpack.c.bf16 %v2339, %v2339
      %v2388 = vpack.c.bf16 %v2340, %v2340
      %v2389 = vpack.c.bf16 %v2341, %v2341
      %v2390 = vpack.c.bf16 %v2342, %v2342
      %v2391 = vpack.c.bf16 %v2343, %v2343
      %v2392 = vpack.c.bf16 %v2344, %v2344
      %v2393 = vpack.c.bf16 %v2345, %v2345
      %v2394 = vpack.c.bf16 %v2346, %v2346
      %v2395 = vpack.c.bf16 %v2347, %v2347
      %v2396 = vpack.c.bf16 %v2348, %v2348
      %v2397 = vpack.c.bf16 %v2349, %v2349
      %v2398 = vpack.c.bf16 %v2350, %v2350
      %v2399 = vpack.c.bf16 %v2351, %v2351
      %v2400 = vpack.c.bf16 %v2352, %v2352
      %s2401 = scalar_lea.vmem %s197, 12
      %2402 = vst [vmem:[%s2401] sm:$0xf] %v2353
      %2403 = vst [vmem:[%s2401 + $0x4] sm:$0xf] %v2354
      %2404 = vst [vmem:[%s2401 + $0x8] sm:$0xf] %v2355
      %2405 = vst [vmem:[%s2401 + $0xc] sm:$0xf] %v2356
      %2406 = vst [vmem:[%s2401 + $0x10] sm:$0xf] %v2357
      %2407 = vst [vmem:[%s2401 + $0x14] sm:$0xf] %v2358
      %2408 = vst [vmem:[%s2401 + $0x18] sm:$0xf] %v2359
      %2409 = vst [vmem:[%s2401 + $0x1c] sm:$0xf] %v2360
      %2410 = vst [vmem:[%s2401 + $0x20] sm:$0xf] %v2361
      %2411 = vst [vmem:[%s2401 + $0x24] sm:$0xf] %v2362
      %2412 = vst [vmem:[%s2401 + $0x28] sm:$0xf] %v2363
      %2413 = vst [vmem:[%s2401 + $0x2c] sm:$0xf] %v2364
      %2414 = vst [vmem:[%s2401 + $0x30] sm:$0xf] %v2365
      %2415 = vst [vmem:[%s2401 + $0x34] sm:$0xf] %v2366
      %2416 = vst [vmem:[%s2401 + $0x38] sm:$0xf] %v2367
      %2417 = vst [vmem:[%s2401 + $0x3c] sm:$0xf] %v2368
      %2418 = vst [vmem:[%s2401 + $0x40] sm:$0xf] %v2369
      %2419 = vst [vmem:[%s2401 + $0x44] sm:$0xf] %v2370
      %2420 = vst [vmem:[%s2401 + $0x48] sm:$0xf] %v2371
      %2421 = vst [vmem:[%s2401 + $0x4c] sm:$0xf] %v2372
      %2422 = vst [vmem:[%s2401 + $0x50] sm:$0xf] %v2373
      %2423 = vst [vmem:[%s2401 + $0x54] sm:$0xf] %v2374
      %2424 = vst [vmem:[%s2401 + $0x58] sm:$0xf] %v2375
      %2425 = vst [vmem:[%s2401 + $0x5c] sm:$0xf] %v2376
      %2426 = vst [vmem:[%s2401 + $0x60] sm:$0xf] %v2377
      %2427 = vst [vmem:[%s2401 + $0x64] sm:$0xf] %v2378
      %2428 = vst [vmem:[%s2401 + $0x68] sm:$0xf] %v2379
      %2429 = vst [vmem:[%s2401 + $0x6c] sm:$0xf] %v2380
      %2430 = vst [vmem:[%s2401 + $0x70] sm:$0xf] %v2381
      %2431 = vst [vmem:[%s2401 + $0x74] sm:$0xf] %v2382
      %2432 = vst [vmem:[%s2401 + $0x78] sm:$0xf] %v2383
      %2433 = vst [vmem:[%s2401 + $0x7c] sm:$0xf] %v2384
      %2434 = vst [vmem:[%s2401 + $0x80] sm:$0xf] %v2385
      %2435 = vst [vmem:[%s2401 + $0x84] sm:$0xf] %v2386
      %2436 = vst [vmem:[%s2401 + $0x88] sm:$0xf] %v2387
      %2437 = vst [vmem:[%s2401 + $0x8c] sm:$0xf] %v2388
      %2438 = vst [vmem:[%s2401 + $0x90] sm:$0xf] %v2389
      %2439 = vst [vmem:[%s2401 + $0x94] sm:$0xf] %v2390
      %2440 = vst [vmem:[%s2401 + $0x98] sm:$0xf] %v2391
      %2441 = vst [vmem:[%s2401 + $0x9c] sm:$0xf] %v2392
      %2442 = vst [vmem:[%s2401 + $0xa0] sm:$0xf] %v2393
      %2443 = vst [vmem:[%s2401 + $0xa4] sm:$0xf] %v2394
      %2444 = vst [vmem:[%s2401 + $0xa8] sm:$0xf] %v2395
      %2445 = vst [vmem:[%s2401 + $0xac] sm:$0xf] %v2396
      %2446 = vst [vmem:[%s2401 + $0xb0] sm:$0xf] %v2397
      %2447 = vst [vmem:[%s2401 + $0xb4] sm:$0xf] %v2398
      %2448 = vst [vmem:[%s2401 + $0xb8] sm:$0xf] %v2399
      %2449 = vst [vmem:[%s2401 + $0xbc] sm:$0xf] %v2400
      %2450 = vst [vmem:[%s197] sm:$0xf] 0
      %2451 = vst [vmem:[%s197 + $0x4] sm:$0xf] 0
      %2452 = vst [vmem:[%s197 + $0x8] sm:$0xf] 0
      %s2453 = scalar_lea.vmem %s197, 204
      %2454 = vst [vmem:[%s2453] sm:$0xf] 0
      %2455 = vst [vmem:[%s2453 + $0x4] sm:$0xf] 0
      %2456 = vst [vmem:[%s2453 + $0x8] sm:$0xf] 0
      %p2457 = scmp.lt.s32.totalorder %s15, 1
      %s2458 = scalar_select %p2457, %s15, 1
      %s2459 = smul.addr %s2458, 54
      %s2460 = smul.addr %s2459, 4
      %s2461 = scalar_lea.vmem %s4, %s2460
      // Predicated region
      $region37: #{exitflow_pallas.4} parent=35 // pred_check
        %p2462 = pneg %p122
      $region38: #{exitflow_pallas.4} parent=35 // pred_check_branch
        %2464 = sbr.rel (%p2462) target = $region40
      $region39: #{exitflow_pallas.4} parent=35 // pred_region
        _
      $region40: #{exitflow_pallas.4} parent=35 // pred_fallthru
        _
    $region36: #{exitflow_pallas.4} parent=5 // pred_fallthru
      _
    %p2465 = scmp.le.s32.totalorder 2, %s10
    // Predicated region
    $region41: #{exitflow_pallas.4} parent=5 // pred_check
      %p2466 = pneg %p2465
    $region42: #{exitflow_pallas.4} parent=5 // pred_check_branch
      %2468 = sbr.rel (%p2466) target = $region44
    $region43: #{exitflow_pallas.4} parent=5 // pred_region
      %s2469 = ssub.s32 %s10, 2
      // Predicated region
      $region45: #{exitflow_pallas.4} parent=43 // pred_check
        %p2470 = pneg %p128
      $region46: #{exitflow_pallas.4} parent=43 // pred_check_branch
        %2472 = sbr.rel (%p2470) target = $region48
      $region47: #{exitflow_pallas.4} parent=43 // pred_region
        %p2473 = scmp.lt.s32.totalorder %s16, 1
        %s2474 = scalar_select %p2473, %s16, 1
        %s2475 = smul.addr %s2474, 54
        %s2476 = smul.addr %s2475, 4
        %s2477 = scalar_lea.vmem %s4, %s2476
      $region48: #{exitflow_pallas.4} parent=43 // pred_fallthru
        _
    $region44: #{exitflow_pallas.4} parent=5 // pred_fallthru
      _
  $region6: #{exitflow_pallas.4} parent=0 // loop_footer
    %s14 = sadd.s32 1, %s10
  $region7: #{exitflow_pallas.4} parent=0 // loop_footer_branch
    %9 = sbr.rel target = $region3
  $region8: #{exitflow_pallas.4} parent=0 // loop_exit
    _

// kernel: exitflow_pallas.5
$region0: #{exitflow_pallas.5}
  #allocation0 [shape = 'u32[]', space=smem, size = 0x4, offset = 0x4, fixed_abs, tag = 'smem constant byte address 0x4 - core index']
  #allocation1 [shape = 'u32[72,128]{1,0:T(1,128)}', space=vmem, size = 0x9000, scoped, tag = 'internal scratch']
  %s0 = inlined_call_operand.vmem [shape: bf16[2,18,24,128], index: 0, kind: input, shape index: {}]
  %s1 = inlined_call_operand.vmem [shape: bf16[2,8,16,128], index: 1, kind: input, shape index: {}]
  %s2 = inlined_call_operand.vmem [shape: bf16[128,384], index: 2, kind: input, shape index: {}]
  %s3 = inlined_call_operand.vmem [shape: f32[3,3,128], index: 3, kind: input, shape index: {}]
  %s4 = inlined_call_operand.vmem [shape: bf16[128,128], index: 4, kind: input, shape index: {}]
  %s5 = inlined_call_operand.vmem [shape: f32[1,128], index: 5, kind: input, shape index: {}]
  %s6 = inlined_call_operand.vmem [shape: bf16[128,128], index: 6, kind: input, shape index: {}]
  %s7 = inlined_call_operand.vmem [shape: f32[1,128], index: 7, kind: input, shape index: {}]
  %s8 = inlined_call_operand.vmem [shape: bf16[2,10,16,128], index: 8, kind: output, shape index: {}]
  %s9 = sld [smem:[#allocation0]]
  $region65: #{exitflow_pallas.5} parent=0
    _
  %s11 = ssub.s32 1, %s9
  %s12 = scalar_select 0, %s11, %s9
  loop: start=0, step=1, limit=4
  $region2: #{exitflow_pallas.5} parent=0 // loop_pre_header
    _
  $region3: #{exitflow_pallas.5} parent=0 // loop_header
    %s14 = sphi 0, %s18
    %p15 = scmp.ge.s32.totalorder %s14, 4
    %s24 = sphi 0, %s26
    %s27 = sphi 0, %s24
    %s28 = sphi 0, %s27
    %s44 = sphi 0, %s28
    %s50 = sphi 0, %s52
    %s53 = sphi 0, %s50
    %s54 = sphi 0, %s53
    %s70 = sphi 0, %s54
    %s74 = sphi 0, %s74
    %s76 = sphi 0, %s74
    %s77 = sphi 0, %s76
    %s91 = sphi 0, %s77
    %s95 = sphi 0, %s95
    %s97 = sphi 0, %s95
    %s98 = sphi 0, %s97
    %s112 = sphi 0, %s98
    %s116 = sphi 0, %s116
    %s118 = sphi 0, %s116
    %s119 = sphi 0, %s118
    %s133 = sphi 0, %s119
    %s137 = sphi 0, %s137
    %s139 = sphi 0, %s137
    %s140 = sphi 0, %s139
    %s154 = sphi 0, %s140
    %s158 = sphi 0, %s158
    %s160 = sphi 0, %s158
    %s161 = sphi 0, %s160
    %s175 = sphi 0, %s161
    %s179 = sphi 0, %s179
    %s181 = sphi 0, %s179
    %s182 = sphi 0, %s181
    %s196 = sphi 0, %s182
    %s202 = sphi 0, %s204
    %s205 = sphi 0, %s202
    %s206 = sphi 0, %s205
    %s222 = sphi 0, %s206
  $region4: #{exitflow_pallas.5} parent=0 // loop_header_branch
    %17 = sbr.rel (%p15) target = $region8
  $region5: #{exitflow_pallas.5} parent=0 // loop_body
    %s19 = ssub.s32 %s14, 1
    %s20 = ssub.s32 %s14, 2
    %s21 = sadd.s32 %s14, 1
    %s22 = ssub.s32 %s14, %s21
    %p23 = scmp.eq.s32.totalorder %s22, 0
    %s25 = sadd.s32 %s24, 1
    %s26 = scalar_select %p23, %s24, %s25
    %p29 = pneg %p23
    %p30 = scmp.eq.s32.totalorder %s14, 1
    %p31 = por %p29, %p30
    %p32 = scmp.ne.s32.totalorder %s24, %s27
    %p33 = scmp.eq.s32.totalorder %s14, 0
    %p34 = por %p32, %p33
    %p35 = scmp.ne.s32.totalorder %s24, %s27
    %p36 = scmp.eq.s32.totalorder %s19, 1
    %p37 = por %p35, %p36
    %p38 = scmp.ne.s32.totalorder %s27, %s28
    %p39 = scmp.eq.s32.totalorder %s19, 0
    %p40 = por %p38, %p39
    %p41 = scmp.ne.s32.totalorder %s27, %s28
    %p42 = scmp.eq.s32.totalorder %s20, 1
    %p43 = por %p41, %p42
    %p45 = scmp.ne.s32.totalorder %s28, %s44
    %p46 = scmp.eq.s32.totalorder %s20, 0
    %p47 = por %p45, %p46
    %s48 = ssub.s32 %s14, %s21
    %p49 = scmp.eq.s32.totalorder %s48, 0
    %s51 = sadd.s32 %s50, 1
    %s52 = scalar_select %p49, %s50, %s51
    %p55 = pneg %p49
    %p56 = scmp.eq.s32.totalorder %s14, 1
    %p57 = por %p55, %p56
    %p58 = scmp.ne.s32.totalorder %s50, %s53
    %p59 = scmp.eq.s32.totalorder %s14, 0
    %p60 = por %p58, %p59
    %p61 = scmp.ne.s32.totalorder %s50, %s53
    %p62 = scmp.eq.s32.totalorder %s19, 1
    %p63 = por %p61, %p62
    %p64 = scmp.ne.s32.totalorder %s53, %s54
    %p65 = scmp.eq.s32.totalorder %s19, 0
    %p66 = por %p64, %p65
    %p67 = scmp.ne.s32.totalorder %s53, %s54
    %p68 = scmp.eq.s32.totalorder %s20, 1
    %p69 = por %p67, %p68
    %p71 = scmp.ne.s32.totalorder %s54, %s70
    %p72 = scmp.eq.s32.totalorder %s20, 0
    %p73 = por %p71, %p72
    %s75 = sadd.s32 %s74, 1
    %p78 = scmp.eq.s32.totalorder %s14, 1
    %p79 = scmp.ne.s32.totalorder %s74, %s76
    %p80 = scmp.eq.s32.totalorder %s14, 0
    %p81 = por %p79, %p80
    %p82 = scmp.ne.s32.totalorder %s74, %s76
    %p83 = scmp.eq.s32.totalorder %s19, 1
    %p84 = por %p82, %p83
    %p85 = scmp.ne.s32.totalorder %s76, %s77
    %p86 = scmp.eq.s32.totalorder %s19, 0
    %p87 = por %p85, %p86
    %p88 = scmp.ne.s32.totalorder %s76, %s77
    %p89 = scmp.eq.s32.totalorder %s20, 1
    %p90 = por %p88, %p89
    %p92 = scmp.ne.s32.totalorder %s77, %s91
    %p93 = scmp.eq.s32.totalorder %s20, 0
    %p94 = por %p92, %p93
    %s96 = sadd.s32 %s95, 1
    %p99 = scmp.eq.s32.totalorder %s14, 1
    %p100 = scmp.ne.s32.totalorder %s95, %s97
    %p101 = scmp.eq.s32.totalorder %s14, 0
    %p102 = por %p100, %p101
    %p103 = scmp.ne.s32.totalorder %s95, %s97
    %p104 = scmp.eq.s32.totalorder %s19, 1
    %p105 = por %p103, %p104
    %p106 = scmp.ne.s32.totalorder %s97, %s98
    %p107 = scmp.eq.s32.totalorder %s19, 0
    %p108 = por %p106, %p107
    %p109 = scmp.ne.s32.totalorder %s97, %s98
    %p110 = scmp.eq.s32.totalorder %s20, 1
    %p111 = por %p109, %p110
    %p113 = scmp.ne.s32.totalorder %s98, %s112
    %p114 = scmp.eq.s32.totalorder %s20, 0
    %p115 = por %p113, %p114
    %s117 = sadd.s32 %s116, 1
    %p120 = scmp.eq.s32.totalorder %s14, 1
    %p121 = scmp.ne.s32.totalorder %s116, %s118
    %p122 = scmp.eq.s32.totalorder %s14, 0
    %p123 = por %p121, %p122
    %p124 = scmp.ne.s32.totalorder %s116, %s118
    %p125 = scmp.eq.s32.totalorder %s19, 1
    %p126 = por %p124, %p125
    %p127 = scmp.ne.s32.totalorder %s118, %s119
    %p128 = scmp.eq.s32.totalorder %s19, 0
    %p129 = por %p127, %p128
    %p130 = scmp.ne.s32.totalorder %s118, %s119
    %p131 = scmp.eq.s32.totalorder %s20, 1
    %p132 = por %p130, %p131
    %p134 = scmp.ne.s32.totalorder %s119, %s133
    %p135 = scmp.eq.s32.totalorder %s20, 0
    %p136 = por %p134, %p135
    %s138 = sadd.s32 %s137, 1
    %p141 = scmp.eq.s32.totalorder %s14, 1
    %p142 = scmp.ne.s32.totalorder %s137, %s139
    %p143 = scmp.eq.s32.totalorder %s14, 0
    %p144 = por %p142, %p143
    %p145 = scmp.ne.s32.totalorder %s137, %s139
    %p146 = scmp.eq.s32.totalorder %s19, 1
    %p147 = por %p145, %p146
    %p148 = scmp.ne.s32.totalorder %s139, %s140
    %p149 = scmp.eq.s32.totalorder %s19, 0
    %p150 = por %p148, %p149
    %p151 = scmp.ne.s32.totalorder %s139, %s140
    %p152 = scmp.eq.s32.totalorder %s20, 1
    %p153 = por %p151, %p152
    %p155 = scmp.ne.s32.totalorder %s140, %s154
    %p156 = scmp.eq.s32.totalorder %s20, 0
    %p157 = por %p155, %p156
    %s159 = sadd.s32 %s158, 1
    %p162 = scmp.eq.s32.totalorder %s14, 1
    %p163 = scmp.ne.s32.totalorder %s158, %s160
    %p164 = scmp.eq.s32.totalorder %s14, 0
    %p165 = por %p163, %p164
    %p166 = scmp.ne.s32.totalorder %s158, %s160
    %p167 = scmp.eq.s32.totalorder %s19, 1
    %p168 = por %p166, %p167
    %p169 = scmp.ne.s32.totalorder %s160, %s161
    %p170 = scmp.eq.s32.totalorder %s19, 0
    %p171 = por %p169, %p170
    %p172 = scmp.ne.s32.totalorder %s160, %s161
    %p173 = scmp.eq.s32.totalorder %s20, 1
    %p174 = por %p172, %p173
    %p176 = scmp.ne.s32.totalorder %s161, %s175
    %p177 = scmp.eq.s32.totalorder %s20, 0
    %p178 = por %p176, %p177
    %s180 = sadd.s32 %s179, 1
    %p183 = scmp.eq.s32.totalorder %s14, 1
    %p184 = scmp.ne.s32.totalorder %s179, %s181
    %p185 = scmp.eq.s32.totalorder %s14, 0
    %p186 = por %p184, %p185
    %p187 = scmp.ne.s32.totalorder %s179, %s181
    %p188 = scmp.eq.s32.totalorder %s19, 1
    %p189 = por %p187, %p188
    %p190 = scmp.ne.s32.totalorder %s181, %s182
    %p191 = scmp.eq.s32.totalorder %s19, 0
    %p192 = por %p190, %p191
    %p193 = scmp.ne.s32.totalorder %s181, %s182
    %p194 = scmp.eq.s32.totalorder %s20, 1
    %p195 = por %p193, %p194
    %p197 = scmp.ne.s32.totalorder %s182, %s196
    %p198 = scmp.eq.s32.totalorder %s20, 0
    %p199 = por %p197, %p198
    %s200 = ssub.s32 %s14, %s21
    %p201 = scmp.eq.s32.totalorder %s200, 0
    %s203 = sadd.s32 %s202, 1
    %s204 = scalar_select %p201, %s202, %s203
    %p207 = pneg %p201
    %p208 = scmp.eq.s32.totalorder %s14, 1
    %p209 = por %p207, %p208
    %p210 = scmp.ne.s32.totalorder %s202, %s205
    %p211 = scmp.eq.s32.totalorder %s14, 0
    %p212 = por %p210, %p211
    %p213 = scmp.ne.s32.totalorder %s202, %s205
    %p214 = scmp.eq.s32.totalorder %s19, 1
    %p215 = por %p213, %p214
    %p216 = scmp.ne.s32.totalorder %s205, %s206
    %p217 = scmp.eq.s32.totalorder %s19, 0
    %p218 = por %p216, %p217
    %p219 = scmp.ne.s32.totalorder %s205, %s206
    %p220 = scmp.eq.s32.totalorder %s20, 1
    %p221 = por %p219, %p220
    %p223 = scmp.ne.s32.totalorder %s206, %s222
    %p224 = scmp.eq.s32.totalorder %s20, 0
    %p225 = por %p223, %p224
    %p226 = scmp.le.s32.totalorder 1, %s14
    %p227 = scmp.lt.s32.totalorder %s14, 3
    %p228 = pnand %p226, %p227
    %p229 = pneg %p228
    // Predicated region
    $region9: #{exitflow_pallas.5} parent=5 // pred_check
      _
    $region10: #{exitflow_pallas.5} parent=5 // pred_check_branch
      %231 = sbr.rel (%p228) target = $region12
    $region11: #{exitflow_pallas.5} parent=5 // pred_region
      %s232 = ssub.s32 %s14, 1
      // Predicated region
      $region13: #{exitflow_pallas.5} parent=11 // pred_check
        %p233 = pneg %p87
      $region14: #{exitflow_pallas.5} parent=11 // pred_check_branch
        %235 = sbr.rel (%p233) target = $region16
      $region15: #{exitflow_pallas.5} parent=11 // pred_region
        _
      $region16: #{exitflow_pallas.5} parent=11 // pred_fallthru
        _
      // Predicated region
      $region17: #{exitflow_pallas.5} parent=11 // pred_check
        %p236 = pneg %p108
      $region18: #{exitflow_pallas.5} parent=11 // pred_check_branch
        %238 = sbr.rel (%p236) target = $region20
      $region19: #{exitflow_pallas.5} parent=11 // pred_region
        _
      $region20: #{exitflow_pallas.5} parent=11 // pred_fallthru
        _
      // Predicated region
      $region21: #{exitflow_pallas.5} parent=11 // pred_check
        %p239 = pneg %p129
      $region22: #{exitflow_pallas.5} parent=11 // pred_check_branch
        %241 = sbr.rel (%p239) target = $region24
      $region23: #{exitflow_pallas.5} parent=11 // pred_region
        _
      $region24: #{exitflow_pallas.5} parent=11 // pred_fallthru
        _
      // Predicated region
      $region25: #{exitflow_pallas.5} parent=11 // pred_check
        %p242 = pneg %p150
      $region26: #{exitflow_pallas.5} parent=11 // pred_check_branch
        %244 = sbr.rel (%p242) target = $region28
      $region27: #{exitflow_pallas.5} parent=11 // pred_region
        _
      $region28: #{exitflow_pallas.5} parent=11 // pred_fallthru
        _
      // Predicated region
      $region29: #{exitflow_pallas.5} parent=11 // pred_check
        %p245 = pneg %p171
      $region30: #{exitflow_pallas.5} parent=11 // pred_check_branch
        %247 = sbr.rel (%p245) target = $region32
      $region31: #{exitflow_pallas.5} parent=11 // pred_region
        _
      $region32: #{exitflow_pallas.5} parent=11 // pred_fallthru
        _
      // Predicated region
      $region33: #{exitflow_pallas.5} parent=11 // pred_check
        %p248 = pneg %p192
      $region34: #{exitflow_pallas.5} parent=11 // pred_check_branch
        %250 = sbr.rel (%p248) target = $region36
      $region35: #{exitflow_pallas.5} parent=11 // pred_region
        _
      $region36: #{exitflow_pallas.5} parent=11 // pred_fallthru
        _
    $region12: #{exitflow_pallas.5} parent=5 // pred_fallthru
      _
    %p251 = scmp.lt.s32.totalorder %s14, 2
    // Predicated region
    $region37: #{exitflow_pallas.5} parent=5 // pred_check
      %p252 = pneg %p251
    $region38: #{exitflow_pallas.5} parent=5 // pred_check_branch
      %254 = sbr.rel (%p252) target = $region40
    $region39: #{exitflow_pallas.5} parent=5 // pred_region
      // Predicated region
      $region41: #{exitflow_pallas.5} parent=39 // pred_check
        %p255 = pneg %p34
      $region42: #{exitflow_pallas.5} parent=39 // pred_check_branch
        %257 = sbr.rel (%p255) target = $region44
      $region43: #{exitflow_pallas.5} parent=39 // pred_region
        %p258 = scmp.lt.s32.totalorder %s14, 1
        %s259 = scalar_select %p258, %s14, 1
        %s260 = smul.addr %s259, 54
        %s261 = smul.addr %s260, 4
        %s262 = scalar_lea.vmem %s0, %s261
      $region44: #{exitflow_pallas.5} parent=39 // pred_fallthru
        _
      // Predicated region
      $region45: #{exitflow_pallas.5} parent=39 // pred_check
        %p263 = pneg %p60
      $region46: #{exitflow_pallas.5} parent=39 // pred_check_branch
        %265 = sbr.rel (%p263) target = $region48
      $region47: #{exitflow_pallas.5} parent=39 // pred_region
        %p266 = scmp.lt.s32.totalorder %s14, 1
        %s267 = scalar_select %p266, %s14, 1
        %s268 = smul.addr %s267, 16
        %s269 = smul.addr %s268, 4
        %s270 = scalar_lea.vmem %s1, %s269
      $region48: #{exitflow_pallas.5} parent=39 // pred_fallthru
        _
    $region40: #{exitflow_pallas.5} parent=5 // pred_fallthru
      _
    %p271 = scmp.le.s32.totalorder 1, %s14
    %p272 = scmp.lt.s32.totalorder %s14, 3
    %p273 = pnand %p271, %p272
    %p274 = pneg %p273
    // Predicated region
    $region49: #{exitflow_pallas.5} parent=5 // pred_check
      _
    $region50: #{exitflow_pallas.5} parent=5 // pred_check_branch
      %276 = sbr.rel (%p273) target = $region52
    $region51: #{exitflow_pallas.5} parent=5 // pred_region
      %s277 = ssub.s32 %s14, 1
      %p278 = scmp.lt.s32.totalorder %s19, 1
      %s279 = scalar_select %p278, %s19, 1
      %s280 = smul.addr %s279, 54
      %s281 = smul.addr %s280, 4
      %s282 = scalar_lea.vmem %s0, %s281
      %p283 = pneg %p40
      %p284 = pneg %p37
      %p285 = scmp.lt.s32.totalorder %s19, 1
      %s286 = scalar_select %p285, %s19, 1
      %s287 = smul.addr %s286, 16
      %s288 = smul.addr %s287, 4
      %s289 = scalar_lea.vmem %s1, %s288
      %p290 = pneg %p66
      %p291 = pneg %p63
      %p292 = pneg %p87
      %p293 = pneg %p84
      %p294 = pneg %p108
      %p295 = pneg %p105
      %p296 = pneg %p129
      %p297 = pneg %p126
      %p298 = pneg %p150
      %p299 = pneg %p147
      %p300 = pneg %p171
      %p301 = pneg %p168
      %p302 = pneg %p192
      %p303 = pneg %p189
      %p304 = pneg %p218
      %p305 = pneg %p215
      %p306 = scmp.lt.s32.totalorder %s19, 1
      %s307 = scalar_select %p306, %s19, 1
      %s308 = smul.addr %s307, 20
      %s309 = smul.addr %s308, 4
      %s310 = scalar_lea.vmem %s8, %s309
      %p311 = scmp.lt.s32.totalorder %s19, 1
      %s312 = scalar_select %p311, %s19, 1
      %s313 = smul.addr %s312, 54
      %s314 = smul.addr %s313, 4
      %s315 = scalar_lea.vmem %s0, %s314
      %p316 = scmp.lt.s32.totalorder %s19, 1
      %s317 = scalar_select %p316, %s19, 1
      %s318 = smul.addr %s317, 16
      %s319 = smul.addr %s318, 4
      %s320 = scalar_lea.vmem %s1, %s319
      %p321 = scmp.lt.s32.totalorder %s19, 1
      %s322 = scalar_select %p321, %s19, 1
      %s323 = smul.addr %s322, 20
      %s324 = smul.addr %s323, 4
      %s325 = scalar_lea.vmem %s8, %s324
      %v327 = vld [vmem:[%s315] sm:$0xf]
      %v328 = vld [vmem:[%s315 + $0x4] sm:$0xf]
      %v329 = vld [vmem:[%s315 + $0x8] sm:$0xf]
      %v330 = vld [vmem:[%s315 + $0xc] sm:$0xf]
      %v331 = vld [vmem:[%s315 + $0x10] sm:$0xf]
      %v332 = vld [vmem:[%s315 + $0x14] sm:$0xf]
      %v333 = vld [vmem:[%s315 + $0x18] sm:$0xf]
      %v334 = vld [vmem:[%s315 + $0x1c] sm:$0xf]
      %v335 = vld [vmem:[%s315 + $0x20] sm:$0xf]
      %v336 = vld [vmem:[%s315 + $0x24] sm:$0xf]
      %v337 = vld [vmem:[%s315 + $0x28] sm:$0xf]
      %v338 = vld [vmem:[%s315 + $0x2c] sm:$0xf]
      %v339 = vld [vmem:[%s315 + $0x30] sm:$0xf]
      %v340 = vld [vmem:[%s315 + $0x34] sm:$0xf]
      %v341 = vld [vmem:[%s315 + $0x38] sm:$0xf]
      %v342 = vld [vmem:[%s315 + $0x3c] sm:$0xf]
      %v343 = vld [vmem:[%s315 + $0x40] sm:$0xf]
      %v344 = vld [vmem:[%s315 + $0x44] sm:$0xf]
      %v345 = vld [vmem:[%s315 + $0x48] sm:$0xf]
      %v346 = vld [vmem:[%s315 + $0x4c] sm:$0xf]
      %v347 = vld [vmem:[%s315 + $0x50] sm:$0xf]
      %v348 = vld [vmem:[%s315 + $0x54] sm:$0xf]
      %v349 = vld [vmem:[%s315 + $0x58] sm:$0xf]
      %v350 = vld [vmem:[%s315 + $0x5c] sm:$0xf]
      %v351 = vld [vmem:[%s315 + $0x60] sm:$0xf]
      %v352 = vld [vmem:[%s315 + $0x64] sm:$0xf]
      %v353 = vld [vmem:[%s315 + $0x68] sm:$0xf]
      %v354 = vld [vmem:[%s315 + $0x6c] sm:$0xf]
      %v355 = vld [vmem:[%s315 + $0x70] sm:$0xf]
      %v356 = vld [vmem:[%s315 + $0x74] sm:$0xf]
      %v357 = vld [vmem:[%s315 + $0x78] sm:$0xf]
      %v358 = vld [vmem:[%s315 + $0x7c] sm:$0xf]
      %v359 = vld [vmem:[%s315 + $0x80] sm:$0xf]
      %v360 = vld [vmem:[%s315 + $0x84] sm:$0xf]
      %v361 = vld [vmem:[%s315 + $0x88] sm:$0xf]
      %v362 = vld [vmem:[%s315 + $0x8c] sm:$0xf]
      %v363 = vld [vmem:[%s315 + $0x90] sm:$0xf]
      %v364 = vld [vmem:[%s315 + $0x94] sm:$0xf]
      %v365 = vld [vmem:[%s315 + $0x98] sm:$0xf]
      %v366 = vld [vmem:[%s315 + $0x9c] sm:$0xf]
      %v367 = vld [vmem:[%s315 + $0xa0] sm:$0xf]
      %v368 = vld [vmem:[%s315 + $0xa4] sm:$0xf]
      %v369 = vld [vmem:[%s315 + $0xa8] sm:$0xf]
      %v370 = vld [vmem:[%s315 + $0xac] sm:$0xf]
      %v371 = vld [vmem:[%s315 + $0xb0] sm:$0xf]
      %v372 = vld [vmem:[%s315 + $0xb4] sm:$0xf]
      %v373 = vld [vmem:[%s315 + $0xb8] sm:$0xf]
      %v374 = vld [vmem:[%s315 + $0xbc] sm:$0xf]
      %v375 = vunpack.c.l.bf16 %v327
      %v376 = vunpack.c.l.bf16 %v328
      %v377 = vunpack.c.l.bf16 %v329
      %v378 = vunpack.c.l.bf16 %v330
      %v379 = vunpack.c.l.bf16 %v331
      %v380 = vunpack.c.l.bf16 %v332
      %v381 = vunpack.c.l.bf16 %v333
      %v382 = vunpack.c.l.bf16 %v334
      %v383 = vunpack.c.l.bf16 %v335
      %v384 = vunpack.c.l.bf16 %v336
      %v385 = vunpack.c.l.bf16 %v337
      %v386 = vunpack.c.l.bf16 %v338
      %v387 = vunpack.c.l.bf16 %v339
      %v388 = vunpack.c.l.bf16 %v340
      %v389 = vunpack.c.l.bf16 %v341
      %v390 = vunpack.c.l.bf16 %v342
      %v391 = vunpack.c.l.bf16 %v343
      %v392 = vunpack.c.l.bf16 %v344
      %v393 = vunpack.c.l.bf16 %v345
      %v394 = vunpack.c.l.bf16 %v346
      %v395 = vunpack.c.l.bf16 %v347
      %v396 = vunpack.c.l.bf16 %v348
      %v397 = vunpack.c.l.bf16 %v349
      %v398 = vunpack.c.l.bf16 %v350
      %v399 = vunpack.c.l.bf16 %v351
      %v400 = vunpack.c.l.bf16 %v352
      %v401 = vunpack.c.l.bf16 %v353
      %v402 = vunpack.c.l.bf16 %v354
      %v403 = vunpack.c.l.bf16 %v355
      %v404 = vunpack.c.l.bf16 %v356
      %v405 = vunpack.c.l.bf16 %v357
      %v406 = vunpack.c.l.bf16 %v358
      %v407 = vunpack.c.l.bf16 %v359
      %v408 = vunpack.c.l.bf16 %v360
      %v409 = vunpack.c.l.bf16 %v361
      %v410 = vunpack.c.l.bf16 %v362
      %v411 = vunpack.c.l.bf16 %v363
      %v412 = vunpack.c.l.bf16 %v364
      %v413 = vunpack.c.l.bf16 %v365
      %v414 = vunpack.c.l.bf16 %v366
      %v415 = vunpack.c.l.bf16 %v367
      %v416 = vunpack.c.l.bf16 %v368
      %v417 = vunpack.c.l.bf16 %v369
      %v418 = vunpack.c.l.bf16 %v370
      %v419 = vunpack.c.l.bf16 %v371
      %v420 = vunpack.c.l.bf16 %v372
      %v421 = vunpack.c.l.bf16 %v373
      %v422 = vunpack.c.l.bf16 %v374
      %v423 = vmax.f32 %v375, 0.0
      %v424 = vmax.f32 %v376, 0.0
      %v425 = vmax.f32 %v377, 0.0
      %v426 = vmax.f32 %v378, 0.0
      %v427 = vmax.f32 %v379, 0.0
      %v428 = vmax.f32 %v380, 0.0
      %v429 = vmax.f32 %v381, 0.0
      %v430 = vmax.f32 %v382, 0.0
      %v431 = vmax.f32 %v383, 0.0
      %v432 = vmax.f32 %v384, 0.0
      %v433 = vmax.f32 %v385, 0.0
      %v434 = vmax.f32 %v386, 0.0
      %v435 = vmax.f32 %v387, 0.0
      %v436 = vmax.f32 %v388, 0.0
      %v437 = vmax.f32 %v389, 0.0
      %v438 = vmax.f32 %v390, 0.0
      %v439 = vmax.f32 %v391, 0.0
      %v440 = vmax.f32 %v392, 0.0
      %v441 = vmax.f32 %v393, 0.0
      %v442 = vmax.f32 %v394, 0.0
      %v443 = vmax.f32 %v395, 0.0
      %v444 = vmax.f32 %v396, 0.0
      %v445 = vmax.f32 %v397, 0.0
      %v446 = vmax.f32 %v398, 0.0
      %v447 = vmax.f32 %v399, 0.0
      %v448 = vmax.f32 %v400, 0.0
      %v449 = vmax.f32 %v401, 0.0
      %v450 = vmax.f32 %v402, 0.0
      %v451 = vmax.f32 %v403, 0.0
      %v452 = vmax.f32 %v404, 0.0
      %v453 = vmax.f32 %v405, 0.0
      %v454 = vmax.f32 %v406, 0.0
      %v455 = vmax.f32 %v407, 0.0
      %v456 = vmax.f32 %v408, 0.0
      %v457 = vmax.f32 %v409, 0.0
      %v458 = vmax.f32 %v410, 0.0
      %v459 = vmax.f32 %v411, 0.0
      %v460 = vmax.f32 %v412, 0.0
      %v461 = vmax.f32 %v413, 0.0
      %v462 = vmax.f32 %v414, 0.0
      %v463 = vmax.f32 %v415, 0.0
      %v464 = vmax.f32 %v416, 0.0
      %v465 = vmax.f32 %v417, 0.0
      %v466 = vmax.f32 %v418, 0.0
      %v467 = vmax.f32 %v419, 0.0
      %v468 = vmax.f32 %v420, 0.0
      %v469 = vmax.f32 %v421, 0.0
      %v470 = vmax.f32 %v422, 0.0
      %v471 = vrot.slane %v423, 7
      %v472 = vrot.slane %v426, 7
      %v473 = vrot.slane %v429, 7
      %v474 = vrot.slane %v432, 7
      %v475 = vrot.slane %v435, 7
      %v476 = vrot.slane %v438, 7
      %v477 = vrot.slane %v441, 7
      %v478 = vrot.slane %v444, 7
      %v479 = vrot.slane %v447, 7
      %v480 = vrot.slane %v450, 7
      %v481 = vrot.slane %v453, 7
      %v482 = vrot.slane %v456, 7
      %v483 = vrot.slane %v459, 7
      %v484 = vrot.slane %v462, 7
      %v485 = vrot.slane %v465, 7
      %v486 = vrot.slane %v468, 7
      %v487 = vrot.slane %v424, 7
      %v488 = vrot.slane %v427, 7
      %v489 = vrot.slane %v430, 7
      %v490 = vrot.slane %v433, 7
      %v491 = vrot.slane %v436, 7
      %v492 = vrot.slane %v439, 7
      %v493 = vrot.slane %v442, 7
      %v494 = vrot.slane %v445, 7
      %v495 = vrot.slane %v448, 7
      %v496 = vrot.slane %v451, 7
      %v497 = vrot.slane %v454, 7
      %v498 = vrot.slane %v457, 7
      %v499 = vrot.slane %v460, 7
      %v500 = vrot.slane %v463, 7
      %v501 = vrot.slane %v466, 7
      %v502 = vrot.slane %v469, 7
      %v503 = vrot.slane %v425, 7
      %v504 = vrot.slane %v428, 7
      %v505 = vrot.slane %v431, 7
      %v506 = vrot.slane %v434, 7
      %v507 = vrot.slane %v437, 7
      %v508 = vrot.slane %v440, 7
      %v509 = vrot.slane %v443, 7
      %v510 = vrot.slane %v446, 7
      %v511 = vrot.slane %v449, 7
      %v512 = vrot.slane %v452, 7
      %v513 = vrot.slane %v455, 7
      %v514 = vrot.slane %v458, 7
      %v515 = vrot.slane %v461, 7
      %v516 = vrot.slane %v464, 7
      %v517 = vrot.slane %v467, 7
      %v518 = vrot.slane %v470, 7
      %v519 = vlaneseq
      %v520 = vshrl.u32 %v519, 7
      %vm521 = vcmp.lt.s32.totalorder %v520, 1
      %v522 = vsel %vm521, %v487, %v503
      %v523 = vsel %vm521, %v488, %v504
      %v524 = vsel %vm521, %v489, %v505
      %v525 = vsel %vm521, %v490, %v506
      %v526 = vsel %vm521, %v491, %v507
      %v527 = vsel %vm521, %v492, %v508
      %v528 = vsel %vm521, %v493, %v509
      %v529 = vsel %vm521, %v494, %v510
      %v530 = vsel %vm521, %v495, %v511
      %v531 = vsel %vm521, %v496, %v512
      %v532 = vsel %vm521, %v497, %v513
      %v533 = vsel %vm521, %v498, %v514
      %v534 = vsel %vm521, %v499, %v515
      %v535 = vsel %vm521, %v500, %v516
      %v536 = vsel %vm521, %v501, %v517
      %v537 = vsel %vm521, %v502, %v518
      %v538 = vsel %vm521, %v471, %v487
      %v539 = vsel %vm521, %v472, %v488
      %v540 = vsel %vm521, %v473, %v489
      %v541 = vsel %vm521, %v474, %v490
      %v542 = vsel %vm521, %v475, %v491
      %v543 = vsel %vm521, %v476, %v492
      %v544 = vsel %vm521, %v477, %v493
      %v545 = vsel %vm521, %v478, %v494
      %v546 = vsel %vm521, %v479, %v495
      %v547 = vsel %vm521, %v480, %v496
      %v548 = vsel %vm521, %v481, %v497
      %v549 = vsel %vm521, %v482, %v498
      %v550 = vsel %vm521, %v483, %v499
      %v551 = vsel %vm521, %v484, %v500
      %v552 = vsel %vm521, %v485, %v501
      %v553 = vsel %vm521, %v486, %v502
      %v554 = vsel %vm521, %v503, %v471
      %v555 = vsel %vm521, %v504, %v472
      %v556 = vsel %vm521, %v505, %v473
      %v557 = vsel %vm521, %v506, %v474
      %v558 = vsel %vm521, %v507, %v475
      %v559 = vsel %vm521, %v508, %v476
      %v560 = vsel %vm521, %v509, %v477
      %v561 = vsel %vm521, %v510, %v478
      %v562 = vsel %vm521, %v511, %v479
      %v563 = vsel %vm521, %v512, %v480
      %v564 = vsel %vm521, %v513, %v481
      %v565 = vsel %vm521, %v514, %v482
      %v566 = vsel %vm521, %v515, %v483
      %v567 = vsel %vm521, %v516, %v484
      %v568 = vsel %vm521, %v517, %v485
      %v569 = vsel %vm521, %v518, %v486
      %v570 = vld [vmem:[%s3] sm:$0x1]
      %v571 = vperm.slane %v570, 0
      %v572 = vmul.f32 %v554, %v571
      %v573 = vmul.f32 %v538, %v571
      %v574 = vmul.f32 %v522, %v571
      %v575 = vmul.f32 %v555, %v571
      %v576 = vmul.f32 %v539, %v571
      %v577 = vmul.f32 %v523, %v571
      %v578 = vmul.f32 %v556, %v571
      %v579 = vmul.f32 %v540, %v571
      %v580 = vmul.f32 %v524, %v571
      %v581 = vmul.f32 %v557, %v571
      %v582 = vmul.f32 %v541, %v571
      %v583 = vmul.f32 %v525, %v571
      %v584 = vmul.f32 %v558, %v571
      %v585 = vmul.f32 %v542, %v571
      %v586 = vmul.f32 %v526, %v571
      %v587 = vmul.f32 %v559, %v571
      %v588 = vmul.f32 %v543, %v571
      %v589 = vmul.f32 %v527, %v571
      %v590 = vmul.f32 %v560, %v571
      %v591 = vmul.f32 %v544, %v571
      %v592 = vmul.f32 %v528, %v571
      %v593 = vmul.f32 %v561, %v571
      %v594 = vmul.f32 %v545, %v571
      %v595 = vmul.f32 %v529, %v571
      %v596 = vmul.f32 %v562, %v571
      %v597 = vmul.f32 %v546, %v571
      %v598 = vmul.f32 %v530, %v571
      %v599 = vmul.f32 %v563, %v571
      %v600 = vmul.f32 %v547, %v571
      %v601 = vmul.f32 %v531, %v571
      %v602 = vmul.f32 %v564, %v571
      %v603 = vmul.f32 %v548, %v571
      %v604 = vmul.f32 %v532, %v571
      %v605 = vmul.f32 %v565, %v571
      %v606 = vmul.f32 %v549, %v571
      %v607 = vmul.f32 %v533, %v571
      %v608 = vmul.f32 %v566, %v571
      %v609 = vmul.f32 %v550, %v571
      %v610 = vmul.f32 %v534, %v571
      %v611 = vmul.f32 %v567, %v571
      %v612 = vmul.f32 %v551, %v571
      %v613 = vmul.f32 %v535, %v571
      %v614 = vmul.f32 %v568, %v571
      %v615 = vmul.f32 %v552, %v571
      %v616 = vmul.f32 %v536, %v571
      %v617 = vmul.f32 %v569, %v571
      %v618 = vmul.f32 %v553, %v571
      %v619 = vmul.f32 %v537, %v571
      %v620 = vld [vmem:[%s3 + $0x1] sm:$0x1]
      %v621 = vperm.slane %v620, 0
      %v622 = vmul.f32 %v423, %v621
      %v623 = vmul.f32 %v424, %v621
      %v624 = vmul.f32 %v425, %v621
      %v625 = vmul.f32 %v426, %v621
      %v626 = vmul.f32 %v427, %v621
      %v627 = vmul.f32 %v428, %v621
      %v628 = vmul.f32 %v429, %v621
      %v629 = vmul.f32 %v430, %v621
      %v630 = vmul.f32 %v431, %v621
      %v631 = vmul.f32 %v432, %v621
      %v632 = vmul.f32 %v433, %v621
      %v633 = vmul.f32 %v434, %v621
      %v634 = vmul.f32 %v435, %v621
      %v635 = vmul.f32 %v436, %v621
      %v636 = vmul.f32 %v437, %v621
      %v637 = vmul.f32 %v438, %v621
      %v638 = vmul.f32 %v439, %v621
      %v639 = vmul.f32 %v440, %v621
      %v640 = vmul.f32 %v441, %v621
      %v641 = vmul.f32 %v442, %v621
      %v642 = vmul.f32 %v443, %v621
      %v643 = vmul.f32 %v444, %v621
      %v644 = vmul.f32 %v445, %v621
      %v645 = vmul.f32 %v446, %v621
      %v646 = vmul.f32 %v447, %v621
      %v647 = vmul.f32 %v448, %v621
      %v648 = vmul.f32 %v449, %v621
      %v649 = vmul.f32 %v450, %v621
      %v650 = vmul.f32 %v451, %v621
      %v651 = vmul.f32 %v452, %v621
      %v652 = vmul.f32 %v453, %v621
      %v653 = vmul.f32 %v454, %v621
      %v654 = vmul.f32 %v455, %v621
      %v655 = vmul.f32 %v456, %v621
      %v656 = vmul.f32 %v457, %v621
      %v657 = vmul.f32 %v458, %v621
      %v658 = vmul.f32 %v459, %v621
      %v659 = vmul.f32 %v460, %v621
      %v660 = vmul.f32 %v461, %v621
      %v661 = vmul.f32 %v462, %v621
      %v662 = vmul.f32 %v463, %v621
      %v663 = vmul.f32 %v464, %v621
      %v664 = vmul.f32 %v465, %v621
      %v665 = vmul.f32 %v466, %v621
      %v666 = vmul.f32 %v467, %v621
      %v667 = vmul.f32 %v468, %v621
      %v668 = vmul.f32 %v469, %v621
      %v669 = vmul.f32 %v470, %v621
      %v670 = vadd.f32 %v572, %v622
      %v671 = vadd.f32 %v573, %v623
      %v672 = vadd.f32 %v574, %v624
      %v673 = vadd.f32 %v575, %v625
      %v674 = vadd.f32 %v576, %v626
      %v675 = vadd.f32 %v577, %v627
      %v676 = vadd.f32 %v578, %v628
      %v677 = vadd.f32 %v579, %v629
      %v678 = vadd.f32 %v580, %v630
      %v679 = vadd.f32 %v581, %v631
      %v680 = vadd.f32 %v582, %v632
      %v681 = vadd.f32 %v583, %v633
      %v682 = vadd.f32 %v584, %v634
      %v683 = vadd.f32 %v585, %v635
      %v684 = vadd.f32 %v586, %v636
      %v685 = vadd.f32 %v587, %v637
      %v686 = vadd.f32 %v588, %v638
      %v687 = vadd.f32 %v589, %v639
      %v688 = vadd.f32 %v590, %v640
      %v689 = vadd.f32 %v591, %v641
      %v690 = vadd.f32 %v592, %v642
      %v691 = vadd.f32 %v593, %v643
      %v692 = vadd.f32 %v594, %v644
      %v693 = vadd.f32 %v595, %v645
      %v694 = vadd.f32 %v596, %v646
      %v695 = vadd.f32 %v597, %v647
      %v696 = vadd.f32 %v598, %v648
      %v697 = vadd.f32 %v599, %v649
      %v698 = vadd.f32 %v600, %v650
      %v699 = vadd.f32 %v601, %v651
      %v700 = vadd.f32 %v602, %v652
      %v701 = vadd.f32 %v603, %v653
      %v702 = vadd.f32 %v604, %v654
      %v703 = vadd.f32 %v605, %v655
      %v704 = vadd.f32 %v606, %v656
      %v705 = vadd.f32 %v607, %v657
      %v706 = vadd.f32 %v608, %v658
      %v707 = vadd.f32 %v609, %v659
      %v708 = vadd.f32 %v610, %v660
      %v709 = vadd.f32 %v611, %v661
      %v710 = vadd.f32 %v612, %v662
      %v711 = vadd.f32 %v613, %v663
      %v712 = vadd.f32 %v614, %v664
      %v713 = vadd.f32 %v615, %v665
      %v714 = vadd.f32 %v616, %v666
      %v715 = vadd.f32 %v617, %v667
      %v716 = vadd.f32 %v618, %v668
      %v717 = vadd.f32 %v619, %v669
      %v718 = vrot.slane %v423, 1
      %v719 = vrot.slane %v426, 1
      %v720 = vrot.slane %v429, 1
      %v721 = vrot.slane %v432, 1
      %v722 = vrot.slane %v435, 1
      %v723 = vrot.slane %v438, 1
      %v724 = vrot.slane %v441, 1
      %v725 = vrot.slane %v444, 1
      %v726 = vrot.slane %v447, 1
      %v727 = vrot.slane %v450, 1
      %v728 = vrot.slane %v453, 1
      %v729 = vrot.slane %v456, 1
      %v730 = vrot.slane %v459, 1
      %v731 = vrot.slane %v462, 1
      %v732 = vrot.slane %v465, 1
      %v733 = vrot.slane %v468, 1
      %v734 = vrot.slane %v424, 1
      %v735 = vrot.slane %v427, 1
      %v736 = vrot.slane %v430, 1
      %v737 = vrot.slane %v433, 1
      %v738 = vrot.slane %v436, 1
      %v739 = vrot.slane %v439, 1
      %v740 = vrot.slane %v442, 1
      %v741 = vrot.slane %v445, 1
      %v742 = vrot.slane %v448, 1
      %v743 = vrot.slane %v451, 1
      %v744 = vrot.slane %v454, 1
      %v745 = vrot.slane %v457, 1
      %v746 = vrot.slane %v460, 1
      %v747 = vrot.slane %v463, 1
      %v748 = vrot.slane %v466, 1
      %v749 = vrot.slane %v469, 1
      %v750 = vrot.slane %v425, 1
      %v751 = vrot.slane %v428, 1
      %v752 = vrot.slane %v431, 1
      %v753 = vrot.slane %v434, 1
      %v754 = vrot.slane %v437, 1
      %v755 = vrot.slane %v440, 1
      %v756 = vrot.slane %v443, 1
      %v757 = vrot.slane %v446, 1
      %v758 = vrot.slane %v449, 1
      %v759 = vrot.slane %v452, 1
      %v760 = vrot.slane %v455, 1
      %v761 = vrot.slane %v458, 1
      %v762 = vrot.slane %v461, 1
      %v763 = vrot.slane %v464, 1
      %v764 = vrot.slane %v467, 1
      %v765 = vrot.slane %v470, 1
      %vm766 = vcmp.lt.s32.totalorder %v520, 7
      %v767 = vsel %vm766, %v734, %v750
      %v768 = vsel %vm766, %v735, %v751
      %v769 = vsel %vm766, %v736, %v752
      %v770 = vsel %vm766, %v737, %v753
      %v771 = vsel %vm766, %v738, %v754
      %v772 = vsel %vm766, %v739, %v755
      %v773 = vsel %vm766, %v740, %v756
      %v774 = vsel %vm766, %v741, %v757
      %v775 = vsel %vm766, %v742, %v758
      %v776 = vsel %vm766, %v743, %v759
      %v777 = vsel %vm766, %v744, %v760
      %v778 = vsel %vm766, %v745, %v761
      %v779 = vsel %vm766, %v746, %v762
      %v780 = vsel %vm766, %v747, %v763
      %v781 = vsel %vm766, %v748, %v764
      %v782 = vsel %vm766, %v749, %v765
      %v783 = vsel %vm766, %v718, %v734
      %v784 = vsel %vm766, %v719, %v735
      %v785 = vsel %vm766, %v720, %v736
      %v786 = vsel %vm766, %v721, %v737
      %v787 = vsel %vm766, %v722, %v738
      %v788 = vsel %vm766, %v723, %v739
      %v789 = vsel %vm766, %v724, %v740
      %v790 = vsel %vm766, %v725, %v741
      %v791 = vsel %vm766, %v726, %v742
      %v792 = vsel %vm766, %v727, %v743
      %v793 = vsel %vm766, %v728, %v744
      %v794 = vsel %vm766, %v729, %v745
      %v795 = vsel %vm766, %v730, %v746
      %v796 = vsel %vm766, %v731, %v747
      %v797 = vsel %vm766, %v732, %v748
      %v798 = vsel %vm766, %v733, %v749
      %v799 = vsel %vm766, %v750, %v718
      %v800 = vsel %vm766, %v751, %v719
      %v801 = vsel %vm766, %v752, %v720
      %v802 = vsel %vm766, %v753, %v721
      %v803 = vsel %vm766, %v754, %v722
      %v804 = vsel %vm766, %v755, %v723
      %v805 = vsel %vm766, %v756, %v724
      %v806 = vsel %vm766, %v757, %v725
      %v807 = vsel %vm766, %v758, %v726
      %v808 = vsel %vm766, %v759, %v727
      %v809 = vsel %vm766, %v760, %v728
      %v810 = vsel %vm766, %v761, %v729
      %v811 = vsel %vm766, %v762, %v730
      %v812 = vsel %vm766, %v763, %v731
      %v813 = vsel %vm766, %v764, %v732
      %v814 = vsel %vm766, %v765, %v733
      %v815 = vld [vmem:[%s3 + $0x2] sm:$0x1]
      %v816 = vperm.slane %v815, 0
      %v817 = vmul.f32 %v783, %v816
      %v818 = vmul.f32 %v767, %v816
      %v819 = vmul.f32 %v799, %v816
      %v820 = vmul.f32 %v784, %v816
      %v821 = vmul.f32 %v768, %v816
      %v822 = vmul.f32 %v800, %v816
      %v823 = vmul.f32 %v785, %v816
      %v824 = vmul.f32 %v769, %v816
      %v825 = vmul.f32 %v801, %v816
      %v826 = vmul.f32 %v786, %v816
      %v827 = vmul.f32 %v770, %v816
      %v828 = vmul.f32 %v802, %v816
      %v829 = vmul.f32 %v787, %v816
      %v830 = vmul.f32 %v771, %v816
      %v831 = vmul.f32 %v803, %v816
      %v832 = vmul.f32 %v788, %v816
      %v833 = vmul.f32 %v772, %v816
      %v834 = vmul.f32 %v804, %v816
      %v835 = vmul.f32 %v789, %v816
      %v836 = vmul.f32 %v773, %v816
      %v837 = vmul.f32 %v805, %v816
      %v838 = vmul.f32 %v790, %v816
      %v839 = vmul.f32 %v774, %v816
      %v840 = vmul.f32 %v806, %v816
      %v841 = vmul.f32 %v791, %v816
      %v842 = vmul.f32 %v775, %v816
      %v843 = vmul.f32 %v807, %v816
      %v844 = vmul.f32 %v792, %v816
      %v845 = vmul.f32 %v776, %v816
      %v846 = vmul.f32 %v808, %v816
      %v847 = vmul.f32 %v793, %v816
      %v848 = vmul.f32 %v777, %v816
      %v849 = vmul.f32 %v809, %v816
      %v850 = vmul.f32 %v794, %v816
      %v851 = vmul.f32 %v778, %v816
      %v852 = vmul.f32 %v810, %v816
      %v853 = vmul.f32 %v795, %v816
      %v854 = vmul.f32 %v779, %v816
      %v855 = vmul.f32 %v811, %v816
      %v856 = vmul.f32 %v796, %v816
      %v857 = vmul.f32 %v780, %v816
      %v858 = vmul.f32 %v812, %v816
      %v859 = vmul.f32 %v797, %v816
      %v860 = vmul.f32 %v781, %v816
      %v861 = vmul.f32 %v813, %v816
      %v862 = vmul.f32 %v798, %v816
      %v863 = vmul.f32 %v782, %v816
      %v864 = vmul.f32 %v814, %v816
      %v865 = vadd.f32 %v670, %v817
      %v866 = vadd.f32 %v671, %v818
      %v867 = vadd.f32 %v672, %v819
      %v868 = vadd.f32 %v673, %v820
      %v869 = vadd.f32 %v674, %v821
      %v870 = vadd.f32 %v675, %v822
      %v871 = vadd.f32 %v676, %v823
      %v872 = vadd.f32 %v677, %v824
      %v873 = vadd.f32 %v678, %v825
      %v874 = vadd.f32 %v679, %v826
      %v875 = vadd.f32 %v680, %v827
      %v876 = vadd.f32 %v681, %v828
      %v877 = vadd.f32 %v682, %v829
      %v878 = vadd.f32 %v683, %v830
      %v879 = vadd.f32 %v684, %v831
      %v880 = vadd.f32 %v685, %v832
      %v881 = vadd.f32 %v686, %v833
      %v882 = vadd.f32 %v687, %v834
      %v883 = vadd.f32 %v688, %v835
      %v884 = vadd.f32 %v689, %v836
      %v885 = vadd.f32 %v690, %v837
      %v886 = vadd.f32 %v691, %v838
      %v887 = vadd.f32 %v692, %v839
      %v888 = vadd.f32 %v693, %v840
      %v889 = vadd.f32 %v694, %v841
      %v890 = vadd.f32 %v695, %v842
      %v891 = vadd.f32 %v696, %v843
      %v892 = vadd.f32 %v697, %v844
      %v893 = vadd.f32 %v698, %v845
      %v894 = vadd.f32 %v699, %v846
      %v895 = vadd.f32 %v700, %v847
      %v896 = vadd.f32 %v701, %v848
      %v897 = vadd.f32 %v702, %v849
      %v898 = vadd.f32 %v703, %v850
      %v899 = vadd.f32 %v704, %v851
      %v900 = vadd.f32 %v705, %v852
      %v901 = vadd.f32 %v706, %v853
      %v902 = vadd.f32 %v707, %v854
      %v903 = vadd.f32 %v708, %v855
      %v904 = vadd.f32 %v709, %v856
      %v905 = vadd.f32 %v710, %v857
      %v906 = vadd.f32 %v711, %v858
      %v907 = vadd.f32 %v712, %v859
      %v908 = vadd.f32 %v713, %v860
      %v909 = vadd.f32 %v714, %v861
      %v910 = vadd.f32 %v715, %v862
      %v911 = vadd.f32 %v716, %v863
      %v912 = vadd.f32 %v717, %v864
      %s913 = scalar_lea.vmem %s315, 12
      %v914 = vld [vmem:[%s913] sm:$0xf]
      %v915 = vld [vmem:[%s913 + $0x4] sm:$0xf]
      %v916 = vld [vmem:[%s913 + $0x8] sm:$0xf]
      %v917 = vld [vmem:[%s913 + $0xc] sm:$0xf]
      %v918 = vld [vmem:[%s913 + $0x10] sm:$0xf]
      %v919 = vld [vmem:[%s913 + $0x14] sm:$0xf]
      %v920 = vld [vmem:[%s913 + $0x18] sm:$0xf]
      %v921 = vld [vmem:[%s913 + $0x1c] sm:$0xf]
      %v922 = vld [vmem:[%s913 + $0x20] sm:$0xf]
      %v923 = vld [vmem:[%s913 + $0x24] sm:$0xf]
      %v924 = vld [vmem:[%s913 + $0x28] sm:$0xf]
      %v925 = vld [vmem:[%s913 + $0x2c] sm:$0xf]
      %v926 = vld [vmem:[%s913 + $0x30] sm:$0xf]
      %v927 = vld [vmem:[%s913 + $0x34] sm:$0xf]
      %v928 = vld [vmem:[%s913 + $0x38] sm:$0xf]
      %v929 = vld [vmem:[%s913 + $0x3c] sm:$0xf]
      %v930 = vld [vmem:[%s913 + $0x40] sm:$0xf]
      %v931 = vld [vmem:[%s913 + $0x44] sm:$0xf]
      %v932 = vld [vmem:[%s913 + $0x48] sm:$0xf]
      %v933 = vld [vmem:[%s913 + $0x4c] sm:$0xf]
      %v934 = vld [vmem:[%s913 + $0x50] sm:$0xf]
      %v935 = vld [vmem:[%s913 + $0x54] sm:$0xf]
      %v936 = vld [vmem:[%s913 + $0x58] sm:$0xf]
      %v937 = vld [vmem:[%s913 + $0x5c] sm:$0xf]
      %v938 = vld [vmem:[%s913 + $0x60] sm:$0xf]
      %v939 = vld [vmem:[%s913 + $0x64] sm:$0xf]
      %v940 = vld [vmem:[%s913 + $0x68] sm:$0xf]
      %v941 = vld [vmem:[%s913 + $0x6c] sm:$0xf]
      %v942 = vld [vmem:[%s913 + $0x70] sm:$0xf]
      %v943 = vld [vmem:[%s913 + $0x74] sm:$0xf]
      %v944 = vld [vmem:[%s913 + $0x78] sm:$0xf]
      %v945 = vld [vmem:[%s913 + $0x7c] sm:$0xf]
      %v946 = vld [vmem:[%s913 + $0x80] sm:$0xf]
      %v947 = vld [vmem:[%s913 + $0x84] sm:$0xf]
      %v948 = vld [vmem:[%s913 + $0x88] sm:$0xf]
      %v949 = vld [vmem:[%s913 + $0x8c] sm:$0xf]
      %v950 = vld [vmem:[%s913 + $0x90] sm:$0xf]
      %v951 = vld [vmem:[%s913 + $0x94] sm:$0xf]
      %v952 = vld [vmem:[%s913 + $0x98] sm:$0xf]
      %v953 = vld [vmem:[%s913 + $0x9c] sm:$0xf]
      %v954 = vld [vmem:[%s913 + $0xa0] sm:$0xf]
      %v955 = vld [vmem:[%s913 + $0xa4] sm:$0xf]
      %v956 = vld [vmem:[%s913 + $0xa8] sm:$0xf]
      %v957 = vld [vmem:[%s913 + $0xac] sm:$0xf]
      %v958 = vld [vmem:[%s913 + $0xb0] sm:$0xf]
      %v959 = vld [vmem:[%s913 + $0xb4] sm:$0xf]
      %v960 = vld [vmem:[%s913 + $0xb8] sm:$0xf]
      %v961 = vld [vmem:[%s913 + $0xbc] sm:$0xf]
      %v962 = vunpack.c.l.bf16 %v914
      %v963 = vunpack.c.l.bf16 %v915
      %v964 = vunpack.c.l.bf16 %v916
      %v965 = vunpack.c.l.bf16 %v917
      %v966 = vunpack.c.l.bf16 %v918
      %v967 = vunpack.c.l.bf16 %v919
      %v968 = vunpack.c.l.bf16 %v920
      %v969 = vunpack.c.l.bf16 %v921
      %v970 = vunpack.c.l.bf16 %v922
      %v971 = vunpack.c.l.bf16 %v923
      %v972 = vunpack.c.l.bf16 %v924
      %v973 = vunpack.c.l.bf16 %v925
      %v974 = vunpack.c.l.bf16 %v926
      %v975 = vunpack.c.l.bf16 %v927
      %v976 = vunpack.c.l.bf16 %v928
      %v977 = vunpack.c.l.bf16 %v929
      %v978 = vunpack.c.l.bf16 %v930
      %v979 = vunpack.c.l.bf16 %v931
      %v980 = vunpack.c.l.bf16 %v932
      %v981 = vunpack.c.l.bf16 %v933
      %v982 = vunpack.c.l.bf16 %v934
      %v983 = vunpack.c.l.bf16 %v935
      %v984 = vunpack.c.l.bf16 %v936
      %v985 = vunpack.c.l.bf16 %v937
      %v986 = vunpack.c.l.bf16 %v938
      %v987 = vunpack.c.l.bf16 %v939
      %v988 = vunpack.c.l.bf16 %v940
      %v989 = vunpack.c.l.bf16 %v941
      %v990 = vunpack.c.l.bf16 %v942
      %v991 = vunpack.c.l.bf16 %v943
      %v992 = vunpack.c.l.bf16 %v944
      %v993 = vunpack.c.l.bf16 %v945
      %v994 = vunpack.c.l.bf16 %v946
      %v995 = vunpack.c.l.bf16 %v947
      %v996 = vunpack.c.l.bf16 %v948
      %v997 = vunpack.c.l.bf16 %v949
      %v998 = vunpack.c.l.bf16 %v950
      %v999 = vunpack.c.l.bf16 %v951
      %v1000 = vunpack.c.l.bf16 %v952
      %v1001 = vunpack.c.l.bf16 %v953
      %v1002 = vunpack.c.l.bf16 %v954
      %v1003 = vunpack.c.l.bf16 %v955
      %v1004 = vunpack.c.l.bf16 %v956
      %v1005 = vunpack.c.l.bf16 %v957
      %v1006 = vunpack.c.l.bf16 %v958
      %v1007 = vunpack.c.l.bf16 %v959
      %v1008 = vunpack.c.l.bf16 %v960
      %v1009 = vunpack.c.l.bf16 %v961
      %v1010 = vmax.f32 %v962, 0.0
      %v1011 = vmax.f32 %v963, 0.0
      %v1012 = vmax.f32 %v964, 0.0
      %v1013 = vmax.f32 %v965, 0.0
      %v1014 = vmax.f32 %v966, 0.0
      %v1015 = vmax.f32 %v967, 0.0
      %v1016 = vmax.f32 %v968, 0.0
      %v1017 = vmax.f32 %v969, 0.0
      %v1018 = vmax.f32 %v970, 0.0
      %v1019 = vmax.f32 %v971, 0.0
      %v1020 = vmax.f32 %v972, 0.0
      %v1021 = vmax.f32 %v973, 0.0
      %v1022 = vmax.f32 %v974, 0.0
      %v1023 = vmax.f32 %v975, 0.0
      %v1024 = vmax.f32 %v976, 0.0
      %v1025 = vmax.f32 %v977, 0.0
      %v1026 = vmax.f32 %v978, 0.0
      %v1027 = vmax.f32 %v979, 0.0
      %v1028 = vmax.f32 %v980, 0.0
      %v1029 = vmax.f32 %v981, 0.0
      %v1030 = vmax.f32 %v982, 0.0
      %v1031 = vmax.f32 %v983, 0.0
      %v1032 = vmax.f32 %v984, 0.0
      %v1033 = vmax.f32 %v985, 0.0
      %v1034 = vmax.f32 %v986, 0.0
      %v1035 = vmax.f32 %v987, 0.0
      %v1036 = vmax.f32 %v988, 0.0
      %v1037 = vmax.f32 %v989, 0.0
      %v1038 = vmax.f32 %v990, 0.0
      %v1039 = vmax.f32 %v991, 0.0
      %v1040 = vmax.f32 %v992, 0.0
      %v1041 = vmax.f32 %v993, 0.0
      %v1042 = vmax.f32 %v994, 0.0
      %v1043 = vmax.f32 %v995, 0.0
      %v1044 = vmax.f32 %v996, 0.0
      %v1045 = vmax.f32 %v997, 0.0
      %v1046 = vmax.f32 %v998, 0.0
      %v1047 = vmax.f32 %v999, 0.0
      %v1048 = vmax.f32 %v1000, 0.0
      %v1049 = vmax.f32 %v1001, 0.0
      %v1050 = vmax.f32 %v1002, 0.0
      %v1051 = vmax.f32 %v1003, 0.0
      %v1052 = vmax.f32 %v1004, 0.0
      %v1053 = vmax.f32 %v1005, 0.0
      %v1054 = vmax.f32 %v1006, 0.0
      %v1055 = vmax.f32 %v1007, 0.0
      %v1056 = vmax.f32 %v1008, 0.0
      %v1057 = vmax.f32 %v1009, 0.0
      %v1058 = vrot.slane %v1010, 7
      %v1059 = vrot.slane %v1013, 7
      %v1060 = vrot.slane %v1016, 7
      %v1061 = vrot.slane %v1019, 7
      %v1062 = vrot.slane %v1022, 7
      %v1063 = vrot.slane %v1025, 7
      %v1064 = vrot.slane %v1028, 7
      %v1065 = vrot.slane %v1031, 7
      %v1066 = vrot.slane %v1034, 7
      %v1067 = vrot.slane %v1037, 7
      %v1068 = vrot.slane %v1040, 7
      %v1069 = vrot.slane %v1043, 7
      %v1070 = vrot.slane %v1046, 7
      %v1071 = vrot.slane %v1049, 7
      %v1072 = vrot.slane %v1052, 7
      %v1073 = vrot.slane %v1055, 7
      %v1074 = vrot.slane %v1011, 7
      %v1075 = vrot.slane %v1014, 7
      %v1076 = vrot.slane %v1017, 7
      %v1077 = vrot.slane %v1020, 7
      %v1078 = vrot.slane %v1023, 7
      %v1079 = vrot.slane %v1026, 7
      %v1080 = vrot.slane %v1029, 7
      %v1081 = vrot.slane %v1032, 7
      %v1082 = vrot.slane %v1035, 7
      %v1083 = vrot.slane %v1038, 7
      %v1084 = vrot.slane %v1041, 7
      %v1085 = vrot.slane %v1044, 7
      %v1086 = vrot.slane %v1047, 7
      %v1087 = vrot.slane %v1050, 7
      %v1088 = vrot.slane %v1053, 7
      %v1089 = vrot.slane %v1056, 7
      %v1090 = vrot.slane %v1012, 7
      %v1091 = vrot.slane %v1015, 7
      %v1092 = vrot.slane %v1018, 7
      %v1093 = vrot.slane %v1021, 7
      %v1094 = vrot.slane %v1024, 7
      %v1095 = vrot.slane %v1027, 7
      %v1096 = vrot.slane %v1030, 7
      %v1097 = vrot.slane %v1033, 7
      %v1098 = vrot.slane %v1036, 7
      %v1099 = vrot.slane %v1039, 7
      %v1100 = vrot.slane %v1042, 7
      %v1101 = vrot.slane %v1045, 7
      %v1102 = vrot.slane %v1048, 7
      %v1103 = vrot.slane %v1051, 7
      %v1104 = vrot.slane %v1054, 7
      %v1105 = vrot.slane %v1057, 7
      %v1106 = vsel %vm521, %v1074, %v1090
      %v1107 = vsel %vm521, %v1075, %v1091
      %v1108 = vsel %vm521, %v1076, %v1092
      %v1109 = vsel %vm521, %v1077, %v1093
      %v1110 = vsel %vm521, %v1078, %v1094
      %v1111 = vsel %vm521, %v1079, %v1095
      %v1112 = vsel %vm521, %v1080, %v1096
      %v1113 = vsel %vm521, %v1081, %v1097
      %v1114 = vsel %vm521, %v1082, %v1098
      %v1115 = vsel %vm521, %v1083, %v1099
      %v1116 = vsel %vm521, %v1084, %v1100
      %v1117 = vsel %vm521, %v1085, %v1101
      %v1118 = vsel %vm521, %v1086, %v1102
      %v1119 = vsel %vm521, %v1087, %v1103
      %v1120 = vsel %vm521, %v1088, %v1104
      %v1121 = vsel %vm521, %v1089, %v1105
      %v1122 = vsel %vm521, %v1058, %v1074
      %v1123 = vsel %vm521, %v1059, %v1075
      %v1124 = vsel %vm521, %v1060, %v1076
      %v1125 = vsel %vm521, %v1061, %v1077
      %v1126 = vsel %vm521, %v1062, %v1078
      %v1127 = vsel %vm521, %v1063, %v1079
      %v1128 = vsel %vm521, %v1064, %v1080
      %v1129 = vsel %vm521, %v1065, %v1081
      %v1130 = vsel %vm521, %v1066, %v1082
      %v1131 = vsel %vm521, %v1067, %v1083
      %v1132 = vsel %vm521, %v1068, %v1084
      %v1133 = vsel %vm521, %v1069, %v1085
      %v1134 = vsel %vm521, %v1070, %v1086
      %v1135 = vsel %vm521, %v1071, %v1087
      %v1136 = vsel %vm521, %v1072, %v1088
      %v1137 = vsel %vm521, %v1073, %v1089
      %v1138 = vsel %vm521, %v1090, %v1058
      %v1139 = vsel %vm521, %v1091, %v1059
      %v1140 = vsel %vm521, %v1092, %v1060
      %v1141 = vsel %vm521, %v1093, %v1061
      %v1142 = vsel %vm521, %v1094, %v1062
      %v1143 = vsel %vm521, %v1095, %v1063
      %v1144 = vsel %vm521, %v1096, %v1064
      %v1145 = vsel %vm521, %v1097, %v1065
      %v1146 = vsel %vm521, %v1098, %v1066
      %v1147 = vsel %vm521, %v1099, %v1067
      %v1148 = vsel %vm521, %v1100, %v1068
      %v1149 = vsel %vm521, %v1101, %v1069
      %v1150 = vsel %vm521, %v1102, %v1070
      %v1151 = vsel %vm521, %v1103, %v1071
      %v1152 = vsel %vm521, %v1104, %v1072
      %v1153 = vsel %vm521, %v1105, %v1073
      %s1154 = scalar_lea.vmem %s3, 4
      %v1155 = vld [vmem:[%s1154] sm:$0x1]
      %v1156 = vperm.slane %v1155, 0
      %v1157 = vmul.f32 %v1138, %v1156
      %v1158 = vmul.f32 %v1122, %v1156
      %v1159 = vmul.f32 %v1106, %v1156
      %v1160 = vmul.f32 %v1139, %v1156
      %v1161 = vmul.f32 %v1123, %v1156
      %v1162 = vmul.f32 %v1107, %v1156
      %v1163 = vmul.f32 %v1140, %v1156
      %v1164 = vmul.f32 %v1124, %v1156
      %v1165 = vmul.f32 %v1108, %v1156
      %v1166 = vmul.f32 %v1141, %v1156
      %v1167 = vmul.f32 %v1125, %v1156
      %v1168 = vmul.f32 %v1109, %v1156
      %v1169 = vmul.f32 %v1142, %v1156
      %v1170 = vmul.f32 %v1126, %v1156
      %v1171 = vmul.f32 %v1110, %v1156
      %v1172 = vmul.f32 %v1143, %v1156
      %v1173 = vmul.f32 %v1127, %v1156
      %v1174 = vmul.f32 %v1111, %v1156
      %v1175 = vmul.f32 %v1144, %v1156
      %v1176 = vmul.f32 %v1128, %v1156
      %v1177 = vmul.f32 %v1112, %v1156
      %v1178 = vmul.f32 %v1145, %v1156
      %v1179 = vmul.f32 %v1129, %v1156
      %v1180 = vmul.f32 %v1113, %v1156
      %v1181 = vmul.f32 %v1146, %v1156
      %v1182 = vmul.f32 %v1130, %v1156
      %v1183 = vmul.f32 %v1114, %v1156
      %v1184 = vmul.f32 %v1147, %v1156
      %v1185 = vmul.f32 %v1131, %v1156
      %v1186 = vmul.f32 %v1115, %v1156
      %v1187 = vmul.f32 %v1148, %v1156
      %v1188 = vmul.f32 %v1132, %v1156
      %v1189 = vmul.f32 %v1116, %v1156
      %v1190 = vmul.f32 %v1149, %v1156
      %v1191 = vmul.f32 %v1133, %v1156
      %v1192 = vmul.f32 %v1117, %v1156
      %v1193 = vmul.f32 %v1150, %v1156
      %v1194 = vmul.f32 %v1134, %v1156
      %v1195 = vmul.f32 %v1118, %v1156
      %v1196 = vmul.f32 %v1151, %v1156
      %v1197 = vmul.f32 %v1135, %v1156
      %v1198 = vmul.f32 %v1119, %v1156
      %v1199 = vmul.f32 %v1152, %v1156
      %v1200 = vmul.f32 %v1136, %v1156
      %v1201 = vmul.f32 %v1120, %v1156
      %v1202 = vmul.f32 %v1153, %v1156
      %v1203 = vmul.f32 %v1137, %v1156
      %v1204 = vmul.f32 %v1121, %v1156
      %v1205 = vadd.f32 %v865, %v1157
      %v1206 = vadd.f32 %v866, %v1158
      %v1207 = vadd.f32 %v867, %v1159
      %v1208 = vadd.f32 %v868, %v1160
      %v1209 = vadd.f32 %v869, %v1161
      %v1210 = vadd.f32 %v870, %v1162
      %v1211 = vadd.f32 %v871, %v1163
      %v1212 = vadd.f32 %v872, %v1164
      %v1213 = vadd.f32 %v873, %v1165
      %v1214 = vadd.f32 %v874, %v1166
      %v1215 = vadd.f32 %v875, %v1167
      %v1216 = vadd.f32 %v876, %v1168
      %v1217 = vadd.f32 %v877, %v1169
      %v1218 = vadd.f32 %v878, %v1170
      %v1219 = vadd.f32 %v879, %v1171
      %v1220 = vadd.f32 %v880, %v1172
      %v1221 = vadd.f32 %v881, %v1173
      %v1222 = vadd.f32 %v882, %v1174
      %v1223 = vadd.f32 %v883, %v1175
      %v1224 = vadd.f32 %v884, %v1176
      %v1225 = vadd.f32 %v885, %v1177
      %v1226 = vadd.f32 %v886, %v1178
      %v1227 = vadd.f32 %v887, %v1179
      %v1228 = vadd.f32 %v888, %v1180
      %v1229 = vadd.f32 %v889, %v1181
      %v1230 = vadd.f32 %v890, %v1182
      %v1231 = vadd.f32 %v891, %v1183
      %v1232 = vadd.f32 %v892, %v1184
      %v1233 = vadd.f32 %v893, %v1185
      %v1234 = vadd.f32 %v894, %v1186
      %v1235 = vadd.f32 %v895, %v1187
      %v1236 = vadd.f32 %v896, %v1188
      %v1237 = vadd.f32 %v897, %v1189
      %v1238 = vadd.f32 %v898, %v1190
      %v1239 = vadd.f32 %v899, %v1191
      %v1240 = vadd.f32 %v900, %v1192
      %v1241 = vadd.f32 %v901, %v1193
      %v1242 = vadd.f32 %v902, %v1194
      %v1243 = vadd.f32 %v903, %v1195
      %v1244 = vadd.f32 %v904, %v1196
      %v1245 = vadd.f32 %v905, %v1197
      %v1246 = vadd.f32 %v906, %v1198
      %v1247 = vadd.f32 %v907, %v1199
      %v1248 = vadd.f32 %v908, %v1200
      %v1249 = vadd.f32 %v909, %v1201
      %v1250 = vadd.f32 %v910, %v1202
      %v1251 = vadd.f32 %v911, %v1203
      %v1252 = vadd.f32 %v912, %v1204
      %v1253 = vld [vmem:[%s1154 + $0x1] sm:$0x1]
      %v1254 = vperm.slane %v1253, 0
      %v1255 = vmul.f32 %v1010, %v1254
      %v1256 = vmul.f32 %v1011, %v1254
      %v1257 = vmul.f32 %v1012, %v1254
      %v1258 = vmul.f32 %v1013, %v1254
      %v1259 = vmul.f32 %v1014, %v1254
      %v1260 = vmul.f32 %v1015, %v1254
      %v1261 = vmul.f32 %v1016, %v1254
      %v1262 = vmul.f32 %v1017, %v1254
      %v1263 = vmul.f32 %v1018, %v1254
      %v1264 = vmul.f32 %v1019, %v1254
      %v1265 = vmul.f32 %v1020, %v1254
      %v1266 = vmul.f32 %v1021, %v1254
      %v1267 = vmul.f32 %v1022, %v1254
      %v1268 = vmul.f32 %v1023, %v1254
      %v1269 = vmul.f32 %v1024, %v1254
      %v1270 = vmul.f32 %v1025, %v1254
      %v1271 = vmul.f32 %v1026, %v1254
      %v1272 = vmul.f32 %v1027, %v1254
      %v1273 = vmul.f32 %v1028, %v1254
      %v1274 = vmul.f32 %v1029, %v1254
      %v1275 = vmul.f32 %v1030, %v1254
      %v1276 = vmul.f32 %v1031, %v1254
      %v1277 = vmul.f32 %v1032, %v1254
      %v1278 = vmul.f32 %v1033, %v1254
      %v1279 = vmul.f32 %v1034, %v1254
      %v1280 = vmul.f32 %v1035, %v1254
      %v1281 = vmul.f32 %v1036, %v1254
      %v1282 = vmul.f32 %v1037, %v1254
      %v1283 = vmul.f32 %v1038, %v1254
      %v1284 = vmul.f32 %v1039, %v1254
      %v1285 = vmul.f32 %v1040, %v1254
      %v1286 = vmul.f32 %v1041, %v1254
      %v1287 = vmul.f32 %v1042, %v1254
      %v1288 = vmul.f32 %v1043, %v1254
      %v1289 = vmul.f32 %v1044, %v1254
      %v1290 = vmul.f32 %v1045, %v1254
      %v1291 = vmul.f32 %v1046, %v1254
      %v1292 = vmul.f32 %v1047, %v1254
      %v1293 = vmul.f32 %v1048, %v1254
      %v1294 = vmul.f32 %v1049, %v1254
      %v1295 = vmul.f32 %v1050, %v1254
      %v1296 = vmul.f32 %v1051, %v1254
      %v1297 = vmul.f32 %v1052, %v1254
      %v1298 = vmul.f32 %v1053, %v1254
      %v1299 = vmul.f32 %v1054, %v1254
      %v1300 = vmul.f32 %v1055, %v1254
      %v1301 = vmul.f32 %v1056, %v1254
      %v1302 = vmul.f32 %v1057, %v1254
      %v1303 = vadd.f32 %v1205, %v1255
      %v1304 = vadd.f32 %v1206, %v1256
      %v1305 = vadd.f32 %v1207, %v1257
      %v1306 = vadd.f32 %v1208, %v1258
      %v1307 = vadd.f32 %v1209, %v1259
      %v1308 = vadd.f32 %v1210, %v1260
      %v1309 = vadd.f32 %v1211, %v1261
      %v1310 = vadd.f32 %v1212, %v1262
      %v1311 = vadd.f32 %v1213, %v1263
      %v1312 = vadd.f32 %v1214, %v1264
      %v1313 = vadd.f32 %v1215, %v1265
      %v1314 = vadd.f32 %v1216, %v1266
      %v1315 = vadd.f32 %v1217, %v1267
      %v1316 = vadd.f32 %v1218, %v1268
      %v1317 = vadd.f32 %v1219, %v1269
      %v1318 = vadd.f32 %v1220, %v1270
      %v1319 = vadd.f32 %v1221, %v1271
      %v1320 = vadd.f32 %v1222, %v1272
      %v1321 = vadd.f32 %v1223, %v1273
      %v1322 = vadd.f32 %v1224, %v1274
      %v1323 = vadd.f32 %v1225, %v1275
      %v1324 = vadd.f32 %v1226, %v1276
      %v1325 = vadd.f32 %v1227, %v1277
      %v1326 = vadd.f32 %v1228, %v1278
      %v1327 = vadd.f32 %v1229, %v1279
      %v1328 = vadd.f32 %v1230, %v1280
      %v1329 = vadd.f32 %v1231, %v1281
      %v1330 = vadd.f32 %v1232, %v1282
      %v1331 = vadd.f32 %v1233, %v1283
      %v1332 = vadd.f32 %v1234, %v1284
      %v1333 = vadd.f32 %v1235, %v1285
      %v1334 = vadd.f32 %v1236, %v1286
      %v1335 = vadd.f32 %v1237, %v1287
      %v1336 = vadd.f32 %v1238, %v1288
      %v1337 = vadd.f32 %v1239, %v1289
      %v1338 = vadd.f32 %v1240, %v1290
      %v1339 = vadd.f32 %v1241, %v1291
      %v1340 = vadd.f32 %v1242, %v1292
      %v1341 = vadd.f32 %v1243, %v1293
      %v1342 = vadd.f32 %v1244, %v1294
      %v1343 = vadd.f32 %v1245, %v1295
      %v1344 = vadd.f32 %v1246, %v1296
      %v1345 = vadd.f32 %v1247, %v1297
      %v1346 = vadd.f32 %v1248, %v1298
      %v1347 = vadd.f32 %v1249, %v1299
      %v1348 = vadd.f32 %v1250, %v1300
      %v1349 = vadd.f32 %v1251, %v1301
      %v1350 = vadd.f32 %v1252, %v1302
      %v1351 = vrot.slane %v1010, 1
      %v1352 = vrot.slane %v1013, 1
      %v1353 = vrot.slane %v1016, 1
      %v1354 = vrot.slane %v1019, 1
      %v1355 = vrot.slane %v1022, 1
      %v1356 = vrot.slane %v1025, 1
      %v1357 = vrot.slane %v1028, 1
      %v1358 = vrot.slane %v1031, 1
      %v1359 = vrot.slane %v1034, 1
      %v1360 = vrot.slane %v1037, 1
      %v1361 = vrot.slane %v1040, 1
      %v1362 = vrot.slane %v1043, 1
      %v1363 = vrot.slane %v1046, 1
      %v1364 = vrot.slane %v1049, 1
      %v1365 = vrot.slane %v1052, 1
      %v1366 = vrot.slane %v1055, 1
      %v1367 = vrot.slane %v1011, 1
      %v1368 = vrot.slane %v1014, 1
      %v1369 = vrot.slane %v1017, 1
      %v1370 = vrot.slane %v1020, 1
      %v1371 = vrot.slane %v1023, 1
      %v1372 = vrot.slane %v1026, 1
      %v1373 = vrot.slane %v1029, 1
      %v1374 = vrot.slane %v1032, 1
      %v1375 = vrot.slane %v1035, 1
      %v1376 = vrot.slane %v1038, 1
      %v1377 = vrot.slane %v1041, 1
      %v1378 = vrot.slane %v1044, 1
      %v1379 = vrot.slane %v1047, 1
      %v1380 = vrot.slane %v1050, 1
      %v1381 = vrot.slane %v1053, 1
      %v1382 = vrot.slane %v1056, 1
      %v1383 = vrot.slane %v1012, 1
      %v1384 = vrot.slane %v1015, 1
      %v1385 = vrot.slane %v1018, 1
      %v1386 = vrot.slane %v1021, 1
      %v1387 = vrot.slane %v1024, 1
      %v1388 = vrot.slane %v1027, 1
      %v1389 = vrot.slane %v1030, 1
      %v1390 = vrot.slane %v1033, 1
      %v1391 = vrot.slane %v1036, 1
      %v1392 = vrot.slane %v1039, 1
      %v1393 = vrot.slane %v1042, 1
      %v1394 = vrot.slane %v1045, 1
      %v1395 = vrot.slane %v1048, 1
      %v1396 = vrot.slane %v1051, 1
      %v1397 = vrot.slane %v1054, 1
      %v1398 = vrot.slane %v1057, 1
      %v1399 = vsel %vm766, %v1367, %v1383
      %v1400 = vsel %vm766, %v1368, %v1384
      %v1401 = vsel %vm766, %v1369, %v1385
      %v1402 = vsel %vm766, %v1370, %v1386
      %v1403 = vsel %vm766, %v1371, %v1387
      %v1404 = vsel %vm766, %v1372, %v1388
      %v1405 = vsel %vm766, %v1373, %v1389
      %v1406 = vsel %vm766, %v1374, %v1390
      %v1407 = vsel %vm766, %v1375, %v1391
      %v1408 = vsel %vm766, %v1376, %v1392
      %v1409 = vsel %vm766, %v1377, %v1393
      %v1410 = vsel %vm766, %v1378, %v1394
      %v1411 = vsel %vm766, %v1379, %v1395
      %v1412 = vsel %vm766, %v1380, %v1396
      %v1413 = vsel %vm766, %v1381, %v1397
      %v1414 = vsel %vm766, %v1382, %v1398
      %v1415 = vsel %vm766, %v1351, %v1367
      %v1416 = vsel %vm766, %v1352, %v1368
      %v1417 = vsel %vm766, %v1353, %v1369
      %v1418 = vsel %vm766, %v1354, %v1370
      %v1419 = vsel %vm766, %v1355, %v1371
      %v1420 = vsel %vm766, %v1356, %v1372
      %v1421 = vsel %vm766, %v1357, %v1373
      %v1422 = vsel %vm766, %v1358, %v1374
      %v1423 = vsel %vm766, %v1359, %v1375
      %v1424 = vsel %vm766, %v1360, %v1376
      %v1425 = vsel %vm766, %v1361, %v1377
      %v1426 = vsel %vm766, %v1362, %v1378
      %v1427 = vsel %vm766, %v1363, %v1379
      %v1428 = vsel %vm766, %v1364, %v1380
      %v1429 = vsel %vm766, %v1365, %v1381
      %v1430 = vsel %vm766, %v1366, %v1382
      %v1431 = vsel %vm766, %v1383, %v1351
      %v1432 = vsel %vm766, %v1384, %v1352
      %v1433 = vsel %vm766, %v1385, %v1353
      %v1434 = vsel %vm766, %v1386, %v1354
      %v1435 = vsel %vm766, %v1387, %v1355
      %v1436 = vsel %vm766, %v1388, %v1356
      %v1437 = vsel %vm766, %v1389, %v1357
      %v1438 = vsel %vm766, %v1390, %v1358
      %v1439 = vsel %vm766, %v1391, %v1359
      %v1440 = vsel %vm766, %v1392, %v1360
      %v1441 = vsel %vm766, %v1393, %v1361
      %v1442 = vsel %vm766, %v1394, %v1362
      %v1443 = vsel %vm766, %v1395, %v1363
      %v1444 = vsel %vm766, %v1396, %v1364
      %v1445 = vsel %vm766, %v1397, %v1365
      %v1446 = vsel %vm766, %v1398, %v1366
      %v1447 = vld [vmem:[%s1154 + $0x2] sm:$0x1]
      %v1448 = vperm.slane %v1447, 0
      %v1449 = vmul.f32 %v1415, %v1448
      %v1450 = vmul.f32 %v1399, %v1448
      %v1451 = vmul.f32 %v1431, %v1448
      %v1452 = vmul.f32 %v1416, %v1448
      %v1453 = vmul.f32 %v1400, %v1448
      %v1454 = vmul.f32 %v1432, %v1448
      %v1455 = vmul.f32 %v1417, %v1448
      %v1456 = vmul.f32 %v1401, %v1448
      %v1457 = vmul.f32 %v1433, %v1448
      %v1458 = vmul.f32 %v1418, %v1448
      %v1459 = vmul.f32 %v1402, %v1448
      %v1460 = vmul.f32 %v1434, %v1448
      %v1461 = vmul.f32 %v1419, %v1448
      %v1462 = vmul.f32 %v1403, %v1448
      %v1463 = vmul.f32 %v1435, %v1448
      %v1464 = vmul.f32 %v1420, %v1448
      %v1465 = vmul.f32 %v1404, %v1448
      %v1466 = vmul.f32 %v1436, %v1448
      %v1467 = vmul.f32 %v1421, %v1448
      %v1468 = vmul.f32 %v1405, %v1448
      %v1469 = vmul.f32 %v1437, %v1448
      %v1470 = vmul.f32 %v1422, %v1448
      %v1471 = vmul.f32 %v1406, %v1448
      %v1472 = vmul.f32 %v1438, %v1448
      %v1473 = vmul.f32 %v1423, %v1448
      %v1474 = vmul.f32 %v1407, %v1448
      %v1475 = vmul.f32 %v1439, %v1448
      %v1476 = vmul.f32 %v1424, %v1448
      %v1477 = vmul.f32 %v1408, %v1448
      %v1478 = vmul.f32 %v1440, %v1448
      %v1479 = vmul.f32 %v1425, %v1448
      %v1480 = vmul.f32 %v1409, %v1448
      %v1481 = vmul.f32 %v1441, %v1448
      %v1482 = vmul.f32 %v1426, %v1448
      %v1483 = vmul.f32 %v1410, %v1448
      %v1484 = vmul.f32 %v1442, %v1448
      %v1485 = vmul.f32 %v1427, %v1448
      %v1486 = vmul.f32 %v1411, %v1448
      %v1487 = vmul.f32 %v1443, %v1448
      %v1488 = vmul.f32 %v1428, %v1448
      %v1489 = vmul.f32 %v1412, %v1448
      %v1490 = vmul.f32 %v1444, %v1448
      %v1491 = vmul.f32 %v1429, %v1448
      %v1492 = vmul.f32 %v1413, %v1448
      %v1493 = vmul.f32 %v1445, %v1448
      %v1494 = vmul.f32 %v1430, %v1448
      %v1495 = vmul.f32 %v1414, %v1448
      %v1496 = vmul.f32 %v1446, %v1448
      %v1497 = vadd.f32 %v1303, %v1449
      %v1498 = vadd.f32 %v1304, %v1450
      %v1499 = vadd.f32 %v1305, %v1451
      %v1500 = vadd.f32 %v1306, %v1452
      %v1501 = vadd.f32 %v1307, %v1453
      %v1502 = vadd.f32 %v1308, %v1454
      %v1503 = vadd.f32 %v1309, %v1455
      %v1504 = vadd.f32 %v1310, %v1456
      %v1505 = vadd.f32 %v1311, %v1457
      %v1506 = vadd.f32 %v1312, %v1458
      %v1507 = vadd.f32 %v1313, %v1459
      %v1508 = vadd.f32 %v1314, %v1460
      %v1509 = vadd.f32 %v1315, %v1461
      %v1510 = vadd.f32 %v1316, %v1462
      %v1511 = vadd.f32 %v1317, %v1463
      %v1512 = vadd.f32 %v1318, %v1464
      %v1513 = vadd.f32 %v1319, %v1465
      %v1514 = vadd.f32 %v1320, %v1466
      %v1515 = vadd.f32 %v1321, %v1467
      %v1516 = vadd.f32 %v1322, %v1468
      %v1517 = vadd.f32 %v1323, %v1469
      %v1518 = vadd.f32 %v1324, %v1470
      %v1519 = vadd.f32 %v1325, %v1471
      %v1520 = vadd.f32 %v1326, %v1472
      %v1521 = vadd.f32 %v1327, %v1473
      %v1522 = vadd.f32 %v1328, %v1474
      %v1523 = vadd.f32 %v1329, %v1475
      %v1524 = vadd.f32 %v1330, %v1476
      %v1525 = vadd.f32 %v1331, %v1477
      %v1526 = vadd.f32 %v1332, %v1478
      %v1527 = vadd.f32 %v1333, %v1479
      %v1528 = vadd.f32 %v1334, %v1480
      %v1529 = vadd.f32 %v1335, %v1481
      %v1530 = vadd.f32 %v1336, %v1482
      %v1531 = vadd.f32 %v1337, %v1483
      %v1532 = vadd.f32 %v1338, %v1484
      %v1533 = vadd.f32 %v1339, %v1485
      %v1534 = vadd.f32 %v1340, %v1486
      %v1535 = vadd.f32 %v1341, %v1487
      %v1536 = vadd.f32 %v1342, %v1488
      %v1537 = vadd.f32 %v1343, %v1489
      %v1538 = vadd.f32 %v1344, %v1490
      %v1539 = vadd.f32 %v1345, %v1491
      %v1540 = vadd.f32 %v1346, %v1492
      %v1541 = vadd.f32 %v1347, %v1493
      %v1542 = vadd.f32 %v1348, %v1494
      %v1543 = vadd.f32 %v1349, %v1495
      %v1544 = vadd.f32 %v1350, %v1496
      %s1545 = scalar_lea.vmem %s315, 24
      %v1546 = vld [vmem:[%s1545] sm:$0xf]
      %v1547 = vld [vmem:[%s1545 + $0x4] sm:$0xf]
      %v1548 = vld [vmem:[%s1545 + $0x8] sm:$0xf]
      %v1549 = vld [vmem:[%s1545 + $0xc] sm:$0xf]
      %v1550 = vld [vmem:[%s1545 + $0x10] sm:$0xf]
      %v1551 = vld [vmem:[%s1545 + $0x14] sm:$0xf]
      %v1552 = vld [vmem:[%s1545 + $0x18] sm:$0xf]
      %v1553 = vld [vmem:[%s1545 + $0x1c] sm:$0xf]
      %v1554 = vld [vmem:[%s1545 + $0x20] sm:$0xf]
      %v1555 = vld [vmem:[%s1545 + $0x24] sm:$0xf]
      %v1556 = vld [vmem:[%s1545 + $0x28] sm:$0xf]
      %v1557 = vld [vmem:[%s1545 + $0x2c] sm:$0xf]
      %v1558 = vld [vmem:[%s1545 + $0x30] sm:$0xf]
      %v1559 = vld [vmem:[%s1545 + $0x34] sm:$0xf]
      %v1560 = vld [vmem:[%s1545 + $0x38] sm:$0xf]
      %v1561 = vld [vmem:[%s1545 + $0x3c] sm:$0xf]
      %v1562 = vld [vmem:[%s1545 + $0x40] sm:$0xf]
      %v1563 = vld [vmem:[%s1545 + $0x44] sm:$0xf]
      %v1564 = vld [vmem:[%s1545 + $0x48] sm:$0xf]
      %v1565 = vld [vmem:[%s1545 + $0x4c] sm:$0xf]
      %v1566 = vld [vmem:[%s1545 + $0x50] sm:$0xf]
      %v1567 = vld [vmem:[%s1545 + $0x54] sm:$0xf]
      %v1568 = vld [vmem:[%s1545 + $0x58] sm:$0xf]
      %v1569 = vld [vmem:[%s1545 + $0x5c] sm:$0xf]
      %v1570 = vld [vmem:[%s1545 + $0x60] sm:$0xf]
      %v1571 = vld [vmem:[%s1545 + $0x64] sm:$0xf]
      %v1572 = vld [vmem:[%s1545 + $0x68] sm:$0xf]
      %v1573 = vld [vmem:[%s1545 + $0x6c] sm:$0xf]
      %v1574 = vld [vmem:[%s1545 + $0x70] sm:$0xf]
      %v1575 = vld [vmem:[%s1545 + $0x74] sm:$0xf]
      %v1576 = vld [vmem:[%s1545 + $0x78] sm:$0xf]
      %v1577 = vld [vmem:[%s1545 + $0x7c] sm:$0xf]
      %v1578 = vld [vmem:[%s1545 + $0x80] sm:$0xf]
      %v1579 = vld [vmem:[%s1545 + $0x84] sm:$0xf]
      %v1580 = vld [vmem:[%s1545 + $0x88] sm:$0xf]
      %v1581 = vld [vmem:[%s1545 + $0x8c] sm:$0xf]
      %v1582 = vld [vmem:[%s1545 + $0x90] sm:$0xf]
      %v1583 = vld [vmem:[%s1545 + $0x94] sm:$0xf]
      %v1584 = vld [vmem:[%s1545 + $0x98] sm:$0xf]
      %v1585 = vld [vmem:[%s1545 + $0x9c] sm:$0xf]
      %v1586 = vld [vmem:[%s1545 + $0xa0] sm:$0xf]
      %v1587 = vld [vmem:[%s1545 + $0xa4] sm:$0xf]
      %v1588 = vld [vmem:[%s1545 + $0xa8] sm:$0xf]
      %v1589 = vld [vmem:[%s1545 + $0xac] sm:$0xf]
      %v1590 = vld [vmem:[%s1545 + $0xb0] sm:$0xf]
      %v1591 = vld [vmem:[%s1545 + $0xb4] sm:$0xf]
      %v1592 = vld [vmem:[%s1545 + $0xb8] sm:$0xf]
      %v1593 = vld [vmem:[%s1545 + $0xbc] sm:$0xf]
      %v1594 = vunpack.c.l.bf16 %v1546
      %v1595 = vunpack.c.l.bf16 %v1547
      %v1596 = vunpack.c.l.bf16 %v1548
      %v1597 = vunpack.c.l.bf16 %v1549
      %v1598 = vunpack.c.l.bf16 %v1550
      %v1599 = vunpack.c.l.bf16 %v1551
      %v1600 = vunpack.c.l.bf16 %v1552
      %v1601 = vunpack.c.l.bf16 %v1553
      %v1602 = vunpack.c.l.bf16 %v1554
      %v1603 = vunpack.c.l.bf16 %v1555
      %v1604 = vunpack.c.l.bf16 %v1556
      %v1605 = vunpack.c.l.bf16 %v1557
      %v1606 = vunpack.c.l.bf16 %v1558
      %v1607 = vunpack.c.l.bf16 %v1559
      %v1608 = vunpack.c.l.bf16 %v1560
      %v1609 = vunpack.c.l.bf16 %v1561
      %v1610 = vunpack.c.l.bf16 %v1562
      %v1611 = vunpack.c.l.bf16 %v1563
      %v1612 = vunpack.c.l.bf16 %v1564
      %v1613 = vunpack.c.l.bf16 %v1565
      %v1614 = vunpack.c.l.bf16 %v1566
      %v1615 = vunpack.c.l.bf16 %v1567
      %v1616 = vunpack.c.l.bf16 %v1568
      %v1617 = vunpack.c.l.bf16 %v1569
      %v1618 = vunpack.c.l.bf16 %v1570
      %v1619 = vunpack.c.l.bf16 %v1571
      %v1620 = vunpack.c.l.bf16 %v1572
      %v1621 = vunpack.c.l.bf16 %v1573
      %v1622 = vunpack.c.l.bf16 %v1574
      %v1623 = vunpack.c.l.bf16 %v1575
      %v1624 = vunpack.c.l.bf16 %v1576
      %v1625 = vunpack.c.l.bf16 %v1577
      %v1626 = vunpack.c.l.bf16 %v1578
      %v1627 = vunpack.c.l.bf16 %v1579
      %v1628 = vunpack.c.l.bf16 %v1580
      %v1629 = vunpack.c.l.bf16 %v1581
      %v1630 = vunpack.c.l.bf16 %v1582
      %v1631 = vunpack.c.l.bf16 %v1583
      %v1632 = vunpack.c.l.bf16 %v1584
      %v1633 = vunpack.c.l.bf16 %v1585
      %v1634 = vunpack.c.l.bf16 %v1586
      %v1635 = vunpack.c.l.bf16 %v1587
      %v1636 = vunpack.c.l.bf16 %v1588
      %v1637 = vunpack.c.l.bf16 %v1589
      %v1638 = vunpack.c.l.bf16 %v1590
      %v1639 = vunpack.c.l.bf16 %v1591
      %v1640 = vunpack.c.l.bf16 %v1592
      %v1641 = vunpack.c.l.bf16 %v1593
      %v1642 = vmax.f32 %v1594, 0.0
      %v1643 = vmax.f32 %v1595, 0.0
      %v1644 = vmax.f32 %v1596, 0.0
      %v1645 = vmax.f32 %v1597, 0.0
      %v1646 = vmax.f32 %v1598, 0.0
      %v1647 = vmax.f32 %v1599, 0.0
      %v1648 = vmax.f32 %v1600, 0.0
      %v1649 = vmax.f32 %v1601, 0.0
      %v1650 = vmax.f32 %v1602, 0.0
      %v1651 = vmax.f32 %v1603, 0.0
      %v1652 = vmax.f32 %v1604, 0.0
      %v1653 = vmax.f32 %v1605, 0.0
      %v1654 = vmax.f32 %v1606, 0.0
      %v1655 = vmax.f32 %v1607, 0.0
      %v1656 = vmax.f32 %v1608, 0.0
      %v1657 = vmax.f32 %v1609, 0.0
      %v1658 = vmax.f32 %v1610, 0.0
      %v1659 = vmax.f32 %v1611, 0.0
      %v1660 = vmax.f32 %v1612, 0.0
      %v1661 = vmax.f32 %v1613, 0.0
      %v1662 = vmax.f32 %v1614, 0.0
      %v1663 = vmax.f32 %v1615, 0.0
      %v1664 = vmax.f32 %v1616, 0.0
      %v1665 = vmax.f32 %v1617, 0.0
      %v1666 = vmax.f32 %v1618, 0.0
      %v1667 = vmax.f32 %v1619, 0.0
      %v1668 = vmax.f32 %v1620, 0.0
      %v1669 = vmax.f32 %v1621, 0.0
      %v1670 = vmax.f32 %v1622, 0.0
      %v1671 = vmax.f32 %v1623, 0.0
      %v1672 = vmax.f32 %v1624, 0.0
      %v1673 = vmax.f32 %v1625, 0.0
      %v1674 = vmax.f32 %v1626, 0.0
      %v1675 = vmax.f32 %v1627, 0.0
      %v1676 = vmax.f32 %v1628, 0.0
      %v1677 = vmax.f32 %v1629, 0.0
      %v1678 = vmax.f32 %v1630, 0.0
      %v1679 = vmax.f32 %v1631, 0.0
      %v1680 = vmax.f32 %v1632, 0.0
      %v1681 = vmax.f32 %v1633, 0.0
      %v1682 = vmax.f32 %v1634, 0.0
      %v1683 = vmax.f32 %v1635, 0.0
      %v1684 = vmax.f32 %v1636, 0.0
      %v1685 = vmax.f32 %v1637, 0.0
      %v1686 = vmax.f32 %v1638, 0.0
      %v1687 = vmax.f32 %v1639, 0.0
      %v1688 = vmax.f32 %v1640, 0.0
      %v1689 = vmax.f32 %v1641, 0.0
      %v1690 = vrot.slane %v1642, 7
      %v1691 = vrot.slane %v1645, 7
      %v1692 = vrot.slane %v1648, 7
      %v1693 = vrot.slane %v1651, 7
      %v1694 = vrot.slane %v1654, 7
      %v1695 = vrot.slane %v1657, 7
      %v1696 = vrot.slane %v1660, 7
      %v1697 = vrot.slane %v1663, 7
      %v1698 = vrot.slane %v1666, 7
      %v1699 = vrot.slane %v1669, 7
      %v1700 = vrot.slane %v1672, 7
      %v1701 = vrot.slane %v1675, 7
      %v1702 = vrot.slane %v1678, 7
      %v1703 = vrot.slane %v1681, 7
      %v1704 = vrot.slane %v1684, 7
      %v1705 = vrot.slane %v1687, 7
      %v1706 = vrot.slane %v1643, 7
      %v1707 = vrot.slane %v1646, 7
      %v1708 = vrot.slane %v1649, 7
      %v1709 = vrot.slane %v1652, 7
      %v1710 = vrot.slane %v1655, 7
      %v1711 = vrot.slane %v1658, 7
      %v1712 = vrot.slane %v1661, 7
      %v1713 = vrot.slane %v1664, 7
      %v1714 = vrot.slane %v1667, 7
      %v1715 = vrot.slane %v1670, 7
      %v1716 = vrot.slane %v1673, 7
      %v1717 = vrot.slane %v1676, 7
      %v1718 = vrot.slane %v1679, 7
      %v1719 = vrot.slane %v1682, 7
      %v1720 = vrot.slane %v1685, 7
      %v1721 = vrot.slane %v1688, 7
      %v1722 = vrot.slane %v1644, 7
      %v1723 = vrot.slane %v1647, 7
      %v1724 = vrot.slane %v1650, 7
      %v1725 = vrot.slane %v1653, 7
      %v1726 = vrot.slane %v1656, 7
      %v1727 = vrot.slane %v1659, 7
      %v1728 = vrot.slane %v1662, 7
      %v1729 = vrot.slane %v1665, 7
      %v1730 = vrot.slane %v1668, 7
      %v1731 = vrot.slane %v1671, 7
      %v1732 = vrot.slane %v1674, 7
      %v1733 = vrot.slane %v1677, 7
      %v1734 = vrot.slane %v1680, 7
      %v1735 = vrot.slane %v1683, 7
      %v1736 = vrot.slane %v1686, 7
      %v1737 = vrot.slane %v1689, 7
      %v1738 = vsel %vm521, %v1706, %v1722
      %v1739 = vsel %vm521, %v1707, %v1723
      %v1740 = vsel %vm521, %v1708, %v1724
      %v1741 = vsel %vm521, %v1709, %v1725
      %v1742 = vsel %vm521, %v1710, %v1726
      %v1743 = vsel %vm521, %v1711, %v1727
      %v1744 = vsel %vm521, %v1712, %v1728
      %v1745 = vsel %vm521, %v1713, %v1729
      %v1746 = vsel %vm521, %v1714, %v1730
      %v1747 = vsel %vm521, %v1715, %v1731
      %v1748 = vsel %vm521, %v1716, %v1732
      %v1749 = vsel %vm521, %v1717, %v1733
      %v1750 = vsel %vm521, %v1718, %v1734
      %v1751 = vsel %vm521, %v1719, %v1735
      %v1752 = vsel %vm521, %v1720, %v1736
      %v1753 = vsel %vm521, %v1721, %v1737
      %v1754 = vsel %vm521, %v1690, %v1706
      %v1755 = vsel %vm521, %v1691, %v1707
      %v1756 = vsel %vm521, %v1692, %v1708
      %v1757 = vsel %vm521, %v1693, %v1709
      %v1758 = vsel %vm521, %v1694, %v1710
      %v1759 = vsel %vm521, %v1695, %v1711
      %v1760 = vsel %vm521, %v1696, %v1712
      %v1761 = vsel %vm521, %v1697, %v1713
      %v1762 = vsel %vm521, %v1698, %v1714
      %v1763 = vsel %vm521, %v1699, %v1715
      %v1764 = vsel %vm521, %v1700, %v1716
      %v1765 = vsel %vm521, %v1701, %v1717
      %v1766 = vsel %vm521, %v1702, %v1718
      %v1767 = vsel %vm521, %v1703, %v1719
      %v1768 = vsel %vm521, %v1704, %v1720
      %v1769 = vsel %vm521, %v1705, %v1721
      %v1770 = vsel %vm521, %v1722, %v1690
      %v1771 = vsel %vm521, %v1723, %v1691
      %v1772 = vsel %vm521, %v1724, %v1692
      %v1773 = vsel %vm521, %v1725, %v1693
      %v1774 = vsel %vm521, %v1726, %v1694
      %v1775 = vsel %vm521, %v1727, %v1695
      %v1776 = vsel %vm521, %v1728, %v1696
      %v1777 = vsel %vm521, %v1729, %v1697
      %v1778 = vsel %vm521, %v1730, %v1698
      %v1779 = vsel %vm521, %v1731, %v1699
      %v1780 = vsel %vm521, %v1732, %v1700
      %v1781 = vsel %vm521, %v1733, %v1701
      %v1782 = vsel %vm521, %v1734, %v1702
      %v1783 = vsel %vm521, %v1735, %v1703
      %v1784 = vsel %vm521, %v1736, %v1704
      %v1785 = vsel %vm521, %v1737, %v1705
      %s1786 = scalar_lea.vmem %s3, 8
      %v1787 = vld [vmem:[%s1786] sm:$0x1]
      %v1788 = vperm.slane %v1787, 0
      %v1789 = vmul.f32 %v1770, %v1788
      %v1790 = vmul.f32 %v1754, %v1788
      %v1791 = vmul.f32 %v1738, %v1788
      %v1792 = vmul.f32 %v1771, %v1788
      %v1793 = vmul.f32 %v1755, %v1788
      %v1794 = vmul.f32 %v1739, %v1788
      %v1795 = vmul.f32 %v1772, %v1788
      %v1796 = vmul.f32 %v1756, %v1788
      %v1797 = vmul.f32 %v1740, %v1788
      %v1798 = vmul.f32 %v1773, %v1788
      %v1799 = vmul.f32 %v1757, %v1788
      %v1800 = vmul.f32 %v1741, %v1788
      %v1801 = vmul.f32 %v1774, %v1788
      %v1802 = vmul.f32 %v1758, %v1788
      %v1803 = vmul.f32 %v1742, %v1788
      %v1804 = vmul.f32 %v1775, %v1788
      %v1805 = vmul.f32 %v1759, %v1788
      %v1806 = vmul.f32 %v1743, %v1788
      %v1807 = vmul.f32 %v1776, %v1788
      %v1808 = vmul.f32 %v1760, %v1788
      %v1809 = vmul.f32 %v1744, %v1788
      %v1810 = vmul.f32 %v1777, %v1788
      %v1811 = vmul.f32 %v1761, %v1788
      %v1812 = vmul.f32 %v1745, %v1788
      %v1813 = vmul.f32 %v1778, %v1788
      %v1814 = vmul.f32 %v1762, %v1788
      %v1815 = vmul.f32 %v1746, %v1788
      %v1816 = vmul.f32 %v1779, %v1788
      %v1817 = vmul.f32 %v1763, %v1788
      %v1818 = vmul.f32 %v1747, %v1788
      %v1819 = vmul.f32 %v1780, %v1788
      %v1820 = vmul.f32 %v1764, %v1788
      %v1821 = vmul.f32 %v1748, %v1788
      %v1822 = vmul.f32 %v1781, %v1788
      %v1823 = vmul.f32 %v1765, %v1788
      %v1824 = vmul.f32 %v1749, %v1788
      %v1825 = vmul.f32 %v1782, %v1788
      %v1826 = vmul.f32 %v1766, %v1788
      %v1827 = vmul.f32 %v1750, %v1788
      %v1828 = vmul.f32 %v1783, %v1788
      %v1829 = vmul.f32 %v1767, %v1788
      %v1830 = vmul.f32 %v1751, %v1788
      %v1831 = vmul.f32 %v1784, %v1788
      %v1832 = vmul.f32 %v1768, %v1788
      %v1833 = vmul.f32 %v1752, %v1788
      %v1834 = vmul.f32 %v1785, %v1788
      %v1835 = vmul.f32 %v1769, %v1788
      %v1836 = vmul.f32 %v1753, %v1788
      %v1837 = vadd.f32 %v1497, %v1789
      %v1838 = vadd.f32 %v1498, %v1790
      %v1839 = vadd.f32 %v1499, %v1791
      %v1840 = vadd.f32 %v1500, %v1792
      %v1841 = vadd.f32 %v1501, %v1793
      %v1842 = vadd.f32 %v1502, %v1794
      %v1843 = vadd.f32 %v1503, %v1795
      %v1844 = vadd.f32 %v1504, %v1796
      %v1845 = vadd.f32 %v1505, %v1797
      %v1846 = vadd.f32 %v1506, %v1798
      %v1847 = vadd.f32 %v1507, %v1799
      %v1848 = vadd.f32 %v1508, %v1800
      %v1849 = vadd.f32 %v1509, %v1801
      %v1850 = vadd.f32 %v1510, %v1802
      %v1851 = vadd.f32 %v1511, %v1803
      %v1852 = vadd.f32 %v1512, %v1804
      %v1853 = vadd.f32 %v1513, %v1805
      %v1854 = vadd.f32 %v1514, %v1806
      %v1855 = vadd.f32 %v1515, %v1807
      %v1856 = vadd.f32 %v1516, %v1808
      %v1857 = vadd.f32 %v1517, %v1809
      %v1858 = vadd.f32 %v1518, %v1810
      %v1859 = vadd.f32 %v1519, %v1811
      %v1860 = vadd.f32 %v1520, %v1812
      %v1861 = vadd.f32 %v1521, %v1813
      %v1862 = vadd.f32 %v1522, %v1814
      %v1863 = vadd.f32 %v1523, %v1815
      %v1864 = vadd.f32 %v1524, %v1816
      %v1865 = vadd.f32 %v1525, %v1817
      %v1866 = vadd.f32 %v1526, %v1818
      %v1867 = vadd.f32 %v1527, %v1819
      %v1868 = vadd.f32 %v1528, %v1820
      %v1869 = vadd.f32 %v1529, %v1821
      %v1870 = vadd.f32 %v1530, %v1822
      %v1871 = vadd.f32 %v1531, %v1823
      %v1872 = vadd.f32 %v1532, %v1824
      %v1873 = vadd.f32 %v1533, %v1825
      %v1874 = vadd.f32 %v1534, %v1826
      %v1875 = vadd.f32 %v1535, %v1827
      %v1876 = vadd.f32 %v1536, %v1828
      %v1877 = vadd.f32 %v1537, %v1829
      %v1878 = vadd.f32 %v1538, %v1830
      %v1879 = vadd.f32 %v1539, %v1831
      %v1880 = vadd.f32 %v1540, %v1832
      %v1881 = vadd.f32 %v1541, %v1833
      %v1882 = vadd.f32 %v1542, %v1834
      %v1883 = vadd.f32 %v1543, %v1835
      %v1884 = vadd.f32 %v1544, %v1836
      %v1885 = vld [vmem:[%s1786 + $0x1] sm:$0x1]
      %v1886 = vperm.slane %v1885, 0
      %v1887 = vmul.f32 %v1642, %v1886
      %v1888 = vmul.f32 %v1643, %v1886
      %v1889 = vmul.f32 %v1644, %v1886
      %v1890 = vmul.f32 %v1645, %v1886
      %v1891 = vmul.f32 %v1646, %v1886
      %v1892 = vmul.f32 %v1647, %v1886
      %v1893 = vmul.f32 %v1648, %v1886
      %v1894 = vmul.f32 %v1649, %v1886
      %v1895 = vmul.f32 %v1650, %v1886
      %v1896 = vmul.f32 %v1651, %v1886
      %v1897 = vmul.f32 %v1652, %v1886
      %v1898 = vmul.f32 %v1653, %v1886
      %v1899 = vmul.f32 %v1654, %v1886
      %v1900 = vmul.f32 %v1655, %v1886
      %v1901 = vmul.f32 %v1656, %v1886
      %v1902 = vmul.f32 %v1657, %v1886
      %v1903 = vmul.f32 %v1658, %v1886
      %v1904 = vmul.f32 %v1659, %v1886
      %v1905 = vmul.f32 %v1660, %v1886
      %v1906 = vmul.f32 %v1661, %v1886
      %v1907 = vmul.f32 %v1662, %v1886
      %v1908 = vmul.f32 %v1663, %v1886
      %v1909 = vmul.f32 %v1664, %v1886
      %v1910 = vmul.f32 %v1665, %v1886
      %v1911 = vmul.f32 %v1666, %v1886
      %v1912 = vmul.f32 %v1667, %v1886
      %v1913 = vmul.f32 %v1668, %v1886
      %v1914 = vmul.f32 %v1669, %v1886
      %v1915 = vmul.f32 %v1670, %v1886
      %v1916 = vmul.f32 %v1671, %v1886
      %v1917 = vmul.f32 %v1672, %v1886
      %v1918 = vmul.f32 %v1673, %v1886
      %v1919 = vmul.f32 %v1674, %v1886
      %v1920 = vmul.f32 %v1675, %v1886
      %v1921 = vmul.f32 %v1676, %v1886
      %v1922 = vmul.f32 %v1677, %v1886
      %v1923 = vmul.f32 %v1678, %v1886
      %v1924 = vmul.f32 %v1679, %v1886
      %v1925 = vmul.f32 %v1680, %v1886
      %v1926 = vmul.f32 %v1681, %v1886
      %v1927 = vmul.f32 %v1682, %v1886
      %v1928 = vmul.f32 %v1683, %v1886
      %v1929 = vmul.f32 %v1684, %v1886
      %v1930 = vmul.f32 %v1685, %v1886
      %v1931 = vmul.f32 %v1686, %v1886
      %v1932 = vmul.f32 %v1687, %v1886
      %v1933 = vmul.f32 %v1688, %v1886
      %v1934 = vmul.f32 %v1689, %v1886
      %v1935 = vadd.f32 %v1837, %v1887
      %v1936 = vadd.f32 %v1838, %v1888
      %v1937 = vadd.f32 %v1839, %v1889
      %v1938 = vadd.f32 %v1840, %v1890
      %v1939 = vadd.f32 %v1841, %v1891
      %v1940 = vadd.f32 %v1842, %v1892
      %v1941 = vadd.f32 %v1843, %v1893
      %v1942 = vadd.f32 %v1844, %v1894
      %v1943 = vadd.f32 %v1845, %v1895
      %v1944 = vadd.f32 %v1846, %v1896
      %v1945 = vadd.f32 %v1847, %v1897
      %v1946 = vadd.f32 %v1848, %v1898
      %v1947 = vadd.f32 %v1849, %v1899
      %v1948 = vadd.f32 %v1850, %v1900
      %v1949 = vadd.f32 %v1851, %v1901
      %v1950 = vadd.f32 %v1852, %v1902
      %v1951 = vadd.f32 %v1853, %v1903
      %v1952 = vadd.f32 %v1854, %v1904
      %v1953 = vadd.f32 %v1855, %v1905
      %v1954 = vadd.f32 %v1856, %v1906
      %v1955 = vadd.f32 %v1857, %v1907
      %v1956 = vadd.f32 %v1858, %v1908
      %v1957 = vadd.f32 %v1859, %v1909
      %v1958 = vadd.f32 %v1860, %v1910
      %v1959 = vadd.f32 %v1861, %v1911
      %v1960 = vadd.f32 %v1862, %v1912
      %v1961 = vadd.f32 %v1863, %v1913
      %v1962 = vadd.f32 %v1864, %v1914
      %v1963 = vadd.f32 %v1865, %v1915
      %v1964 = vadd.f32 %v1866, %v1916
      %v1965 = vadd.f32 %v1867, %v1917
      %v1966 = vadd.f32 %v1868, %v1918
      %v1967 = vadd.f32 %v1869, %v1919
      %v1968 = vadd.f32 %v1870, %v1920
      %v1969 = vadd.f32 %v1871, %v1921
      %v1970 = vadd.f32 %v1872, %v1922
      %v1971 = vadd.f32 %v1873, %v1923
      %v1972 = vadd.f32 %v1874, %v1924
      %v1973 = vadd.f32 %v1875, %v1925
      %v1974 = vadd.f32 %v1876, %v1926
      %v1975 = vadd.f32 %v1877, %v1927
      %v1976 = vadd.f32 %v1878, %v1928
      %v1977 = vadd.f32 %v1879, %v1929
      %v1978 = vadd.f32 %v1880, %v1930
      %v1979 = vadd.f32 %v1881, %v1931
      %v1980 = vadd.f32 %v1882, %v1932
      %v1981 = vadd.f32 %v1883, %v1933
      %v1982 = vadd.f32 %v1884, %v1934
      %v1983 = vrot.slane %v1642, 1
      %v1984 = vrot.slane %v1645, 1
      %v1985 = vrot.slane %v1648, 1
      %v1986 = vrot.slane %v1651, 1
      %v1987 = vrot.slane %v1654, 1
      %v1988 = vrot.slane %v1657, 1
      %v1989 = vrot.slane %v1660, 1
      %v1990 = vrot.slane %v1663, 1
      %v1991 = vrot.slane %v1666, 1
      %v1992 = vrot.slane %v1669, 1
      %v1993 = vrot.slane %v1672, 1
      %v1994 = vrot.slane %v1675, 1
      %v1995 = vrot.slane %v1678, 1
      %v1996 = vrot.slane %v1681, 1
      %v1997 = vrot.slane %v1684, 1
      %v1998 = vrot.slane %v1687, 1
      %v1999 = vrot.slane %v1643, 1
      %v2000 = vrot.slane %v1646, 1
      %v2001 = vrot.slane %v1649, 1
      %v2002 = vrot.slane %v1652, 1
      %v2003 = vrot.slane %v1655, 1
      %v2004 = vrot.slane %v1658, 1
      %v2005 = vrot.slane %v1661, 1
      %v2006 = vrot.slane %v1664, 1
      %v2007 = vrot.slane %v1667, 1
      %v2008 = vrot.slane %v1670, 1
      %v2009 = vrot.slane %v1673, 1
      %v2010 = vrot.slane %v1676, 1
      %v2011 = vrot.slane %v1679, 1
      %v2012 = vrot.slane %v1682, 1
      %v2013 = vrot.slane %v1685, 1
      %v2014 = vrot.slane %v1688, 1
      %v2015 = vrot.slane %v1644, 1
      %v2016 = vrot.slane %v1647, 1
      %v2017 = vrot.slane %v1650, 1
      %v2018 = vrot.slane %v1653, 1
      %v2019 = vrot.slane %v1656, 1
      %v2020 = vrot.slane %v1659, 1
      %v2021 = vrot.slane %v1662, 1
      %v2022 = vrot.slane %v1665, 1
      %v2023 = vrot.slane %v1668, 1
      %v2024 = vrot.slane %v1671, 1
      %v2025 = vrot.slane %v1674, 1
      %v2026 = vrot.slane %v1677, 1
      %v2027 = vrot.slane %v1680, 1
      %v2028 = vrot.slane %v1683, 1
      %v2029 = vrot.slane %v1686, 1
      %v2030 = vrot.slane %v1689, 1
      %v2031 = vsel %vm766, %v1999, %v2015
      %v2032 = vsel %vm766, %v2000, %v2016
      %v2033 = vsel %vm766, %v2001, %v2017
      %v2034 = vsel %vm766, %v2002, %v2018
      %v2035 = vsel %vm766, %v2003, %v2019
      %v2036 = vsel %vm766, %v2004, %v2020
      %v2037 = vsel %vm766, %v2005, %v2021
      %v2038 = vsel %vm766, %v2006, %v2022
      %v2039 = vsel %vm766, %v2007, %v2023
      %v2040 = vsel %vm766, %v2008, %v2024
      %v2041 = vsel %vm766, %v2009, %v2025
      %v2042 = vsel %vm766, %v2010, %v2026
      %v2043 = vsel %vm766, %v2011, %v2027
      %v2044 = vsel %vm766, %v2012, %v2028
      %v2045 = vsel %vm766, %v2013, %v2029
      %v2046 = vsel %vm766, %v2014, %v2030
      %v2047 = vsel %vm766, %v1983, %v1999
      %v2048 = vsel %vm766, %v1984, %v2000
      %v2049 = vsel %vm766, %v1985, %v2001
      %v2050 = vsel %vm766, %v1986, %v2002
      %v2051 = vsel %vm766, %v1987, %v2003
      %v2052 = vsel %vm766, %v1988, %v2004
      %v2053 = vsel %vm766, %v1989, %v2005
      %v2054 = vsel %vm766, %v1990, %v2006
      %v2055 = vsel %vm766, %v1991, %v2007
      %v2056 = vsel %vm766, %v1992, %v2008
      %v2057 = vsel %vm766, %v1993, %v2009
      %v2058 = vsel %vm766, %v1994, %v2010
      %v2059 = vsel %vm766, %v1995, %v2011
      %v2060 = vsel %vm766, %v1996, %v2012
      %v2061 = vsel %vm766, %v1997, %v2013
      %v2062 = vsel %vm766, %v1998, %v2014
      %v2063 = vsel %vm766, %v2015, %v1983
      %v2064 = vsel %vm766, %v2016, %v1984
      %v2065 = vsel %vm766, %v2017, %v1985
      %v2066 = vsel %vm766, %v2018, %v1986
      %v2067 = vsel %vm766, %v2019, %v1987
      %v2068 = vsel %vm766, %v2020, %v1988
      %v2069 = vsel %vm766, %v2021, %v1989
      %v2070 = vsel %vm766, %v2022, %v1990
      %v2071 = vsel %vm766, %v2023, %v1991
      %v2072 = vsel %vm766, %v2024, %v1992
      %v2073 = vsel %vm766, %v2025, %v1993
      %v2074 = vsel %vm766, %v2026, %v1994
      %v2075 = vsel %vm766, %v2027, %v1995
      %v2076 = vsel %vm766, %v2028, %v1996
      %v2077 = vsel %vm766, %v2029, %v1997
      %v2078 = vsel %vm766, %v2030, %v1998
      %v2079 = vld [vmem:[%s1786 + $0x2] sm:$0x1]
      %v2080 = vperm.slane %v2079, 0
      %v2081 = vmul.f32 %v2047, %v2080
      %v2082 = vmul.f32 %v2031, %v2080
      %v2083 = vmul.f32 %v2063, %v2080
      %v2084 = vmul.f32 %v2048, %v2080
      %v2085 = vmul.f32 %v2032, %v2080
      %v2086 = vmul.f32 %v2064, %v2080
      %v2087 = vmul.f32 %v2049, %v2080
      %v2088 = vmul.f32 %v2033, %v2080
      %v2089 = vmul.f32 %v2065, %v2080
      %v2090 = vmul.f32 %v2050, %v2080
      %v2091 = vmul.f32 %v2034, %v2080
      %v2092 = vmul.f32 %v2066, %v2080
      %v2093 = vmul.f32 %v2051, %v2080
      %v2094 = vmul.f32 %v2035, %v2080
      %v2095 = vmul.f32 %v2067, %v2080
      %v2096 = vmul.f32 %v2052, %v2080
      %v2097 = vmul.f32 %v2036, %v2080
      %v2098 = vmul.f32 %v2068, %v2080
      %v2099 = vmul.f32 %v2053, %v2080
      %v2100 = vmul.f32 %v2037, %v2080
      %v2101 = vmul.f32 %v2069, %v2080
      %v2102 = vmul.f32 %v2054, %v2080
      %v2103 = vmul.f32 %v2038, %v2080
      %v2104 = vmul.f32 %v2070, %v2080
      %v2105 = vmul.f32 %v2055, %v2080
      %v2106 = vmul.f32 %v2039, %v2080
      %v2107 = vmul.f32 %v2071, %v2080
      %v2108 = vmul.f32 %v2056, %v2080
      %v2109 = vmul.f32 %v2040, %v2080
      %v2110 = vmul.f32 %v2072, %v2080
      %v2111 = vmul.f32 %v2057, %v2080
      %v2112 = vmul.f32 %v2041, %v2080
      %v2113 = vmul.f32 %v2073, %v2080
      %v2114 = vmul.f32 %v2058, %v2080
      %v2115 = vmul.f32 %v2042, %v2080
      %v2116 = vmul.f32 %v2074, %v2080
      %v2117 = vmul.f32 %v2059, %v2080
      %v2118 = vmul.f32 %v2043, %v2080
      %v2119 = vmul.f32 %v2075, %v2080
      %v2120 = vmul.f32 %v2060, %v2080
      %v2121 = vmul.f32 %v2044, %v2080
      %v2122 = vmul.f32 %v2076, %v2080
      %v2123 = vmul.f32 %v2061, %v2080
      %v2124 = vmul.f32 %v2045, %v2080
      %v2125 = vmul.f32 %v2077, %v2080
      %v2126 = vmul.f32 %v2062, %v2080
      %v2127 = vmul.f32 %v2046, %v2080
      %v2128 = vmul.f32 %v2078, %v2080
      %v2129 = vadd.f32 %v1935, %v2081
      %v2130 = vadd.f32 %v1936, %v2082
      %v2131 = vadd.f32 %v1937, %v2083
      %v2132 = vadd.f32 %v1938, %v2084
      %v2133 = vadd.f32 %v1939, %v2085
      %v2134 = vadd.f32 %v1940, %v2086
      %v2135 = vadd.f32 %v1941, %v2087
      %v2136 = vadd.f32 %v1942, %v2088
      %v2137 = vadd.f32 %v1943, %v2089
      %v2138 = vadd.f32 %v1944, %v2090
      %v2139 = vadd.f32 %v1945, %v2091
      %v2140 = vadd.f32 %v1946, %v2092
      %v2141 = vadd.f32 %v1947, %v2093
      %v2142 = vadd.f32 %v1948, %v2094
      %v2143 = vadd.f32 %v1949, %v2095
      %v2144 = vadd.f32 %v1950, %v2096
      %v2145 = vadd.f32 %v1951, %v2097
      %v2146 = vadd.f32 %v1952, %v2098
      %v2147 = vadd.f32 %v1953, %v2099
      %v2148 = vadd.f32 %v1954, %v2100
      %v2149 = vadd.f32 %v1955, %v2101
      %v2150 = vadd.f32 %v1956, %v2102
      %v2151 = vadd.f32 %v1957, %v2103
      %v2152 = vadd.f32 %v1958, %v2104
      %v2153 = vadd.f32 %v1959, %v2105
      %v2154 = vadd.f32 %v1960, %v2106
      %v2155 = vadd.f32 %v1961, %v2107
      %v2156 = vadd.f32 %v1962, %v2108
      %v2157 = vadd.f32 %v1963, %v2109
      %v2158 = vadd.f32 %v1964, %v2110
      %v2159 = vadd.f32 %v1965, %v2111
      %v2160 = vadd.f32 %v1966, %v2112
      %v2161 = vadd.f32 %v1967, %v2113
      %v2162 = vadd.f32 %v1968, %v2114
      %v2163 = vadd.f32 %v1969, %v2115
      %v2164 = vadd.f32 %v1970, %v2116
      %v2165 = vadd.f32 %v1971, %v2117
      %v2166 = vadd.f32 %v1972, %v2118
      %v2167 = vadd.f32 %v1973, %v2119
      %v2168 = vadd.f32 %v1974, %v2120
      %v2169 = vadd.f32 %v1975, %v2121
      %v2170 = vadd.f32 %v1976, %v2122
      %v2171 = vadd.f32 %v1977, %v2123
      %v2172 = vadd.f32 %v1978, %v2124
      %v2173 = vadd.f32 %v1979, %v2125
      %v2174 = vadd.f32 %v1980, %v2126
      %v2175 = vadd.f32 %v1981, %v2127
      %v2176 = vadd.f32 %v1982, %v2128
      %v2177 = vpack.c.bf16 %v2129, %v2129
      %v2178 = vpack.c.bf16 %v2130, %v2130
      %v2179 = vpack.c.bf16 %v2131, %v2131
      %v2180 = vpack.c.bf16 %v2132, %v2132
      %v2181 = vpack.c.bf16 %v2133, %v2133
      %v2182 = vpack.c.bf16 %v2134, %v2134
      %v2183 = vpack.c.bf16 %v2135, %v2135
      %v2184 = vpack.c.bf16 %v2136, %v2136
      %v2185 = vpack.c.bf16 %v2137, %v2137
      %v2186 = vpack.c.bf16 %v2138, %v2138
      %v2187 = vpack.c.bf16 %v2139, %v2139
      %v2188 = vpack.c.bf16 %v2140, %v2140
      %v2189 = vpack.c.bf16 %v2141, %v2141
      %v2190 = vpack.c.bf16 %v2142, %v2142
      %v2191 = vpack.c.bf16 %v2143, %v2143
      %v2192 = vpack.c.bf16 %v2144, %v2144
      %v2193 = vpack.c.bf16 %v2145, %v2145
      %v2194 = vpack.c.bf16 %v2146, %v2146
      %v2195 = vpack.c.bf16 %v2147, %v2147
      %v2196 = vpack.c.bf16 %v2148, %v2148
      %v2197 = vpack.c.bf16 %v2149, %v2149
      %v2198 = vpack.c.bf16 %v2150, %v2150
      %v2199 = vpack.c.bf16 %v2151, %v2151
      %v2200 = vpack.c.bf16 %v2152, %v2152
      %v2201 = vpack.c.bf16 %v2153, %v2153
      %v2202 = vpack.c.bf16 %v2154, %v2154
      %v2203 = vpack.c.bf16 %v2155, %v2155
      %v2204 = vpack.c.bf16 %v2156, %v2156
      %v2205 = vpack.c.bf16 %v2157, %v2157
      %v2206 = vpack.c.bf16 %v2158, %v2158
      %v2207 = vpack.c.bf16 %v2159, %v2159
      %v2208 = vpack.c.bf16 %v2160, %v2160
      %v2209 = vpack.c.bf16 %v2161, %v2161
      %v2210 = vpack.c.bf16 %v2162, %v2162
      %v2211 = vpack.c.bf16 %v2163, %v2163
      %v2212 = vpack.c.bf16 %v2164, %v2164
      %v2213 = vpack.c.bf16 %v2165, %v2165
      %v2214 = vpack.c.bf16 %v2166, %v2166
      %v2215 = vpack.c.bf16 %v2167, %v2167
      %v2216 = vpack.c.bf16 %v2168, %v2168
      %v2217 = vpack.c.bf16 %v2169, %v2169
      %v2218 = vpack.c.bf16 %v2170, %v2170
      %v2219 = vpack.c.bf16 %v2171, %v2171
      %v2220 = vpack.c.bf16 %v2172, %v2172
      %v2221 = vpack.c.bf16 %v2173, %v2173
      %v2222 = vpack.c.bf16 %v2174, %v2174
      %v2223 = vpack.c.bf16 %v2175, %v2175
      %v2224 = vpack.c.bf16 %v2176, %v2176
      %v2225 = vld [vmem:[%s4] sm:$0xf]
      %v2226 = vld [vmem:[%s4 + $0x4] sm:$0xf]
      %v2227 = vld [vmem:[%s4 + $0x8] sm:$0xf]
      %v2228 = vld [vmem:[%s4 + $0xc] sm:$0xf]
      %v2229 = vld [vmem:[%s4 + $0x10] sm:$0xf]
      %v2230 = vld [vmem:[%s4 + $0x14] sm:$0xf]
      %v2231 = vld [vmem:[%s4 + $0x18] sm:$0xf]
      %v2232 = vld [vmem:[%s4 + $0x1c] sm:$0xf]
      %v2233 = vld [vmem:[%s4 + $0x20] sm:$0xf]
      %v2234 = vld [vmem:[%s4 + $0x24] sm:$0xf]
      %v2235 = vld [vmem:[%s4 + $0x28] sm:$0xf]
      %v2236 = vld [vmem:[%s4 + $0x2c] sm:$0xf]
      %v2237 = vld [vmem:[%s4 + $0x30] sm:$0xf]
      %v2238 = vld [vmem:[%s4 + $0x34] sm:$0xf]
      %v2239 = vld [vmem:[%s4 + $0x38] sm:$0xf]
      %v2240 = vld [vmem:[%s4 + $0x3c] sm:$0xf]
      %v2241 = vld [vmem:[%s5] sm:$0x1]
      %v2243 = vperm.slane %v2241, 0
      %v2293 = vunpack.c.l.b16 %v2177
      %v2294 = vunpack.c.l.b16 %v2178
      %v2295 = vunpack.c.l.b16 %v2179
      %v2296 = vunpack.c.l.b16 %v2180
      %v2297 = vunpack.c.l.b16 %v2181
      %v2298 = vunpack.c.l.b16 %v2182
      %v2299 = vunpack.c.l.b16 %v2183
      %v2300 = vunpack.c.l.b16 %v2184
      %v2301 = vunpack.c.l.b16 %v2185
      %v2302 = vunpack.c.l.b16 %v2186
      %v2303 = vunpack.c.l.b16 %v2187
      %v2304 = vunpack.c.l.b16 %v2188
      %v2305 = vunpack.c.l.b16 %v2189
      %v2306 = vunpack.c.l.b16 %v2190
      %v2307 = vunpack.c.l.b16 %v2191
      %v2308 = vunpack.c.l.b16 %v2192
      %v2309 = vunpack.c.l.b16 %v2193
      %v2310 = vunpack.c.l.b16 %v2194
      %v2311 = vunpack.c.l.b16 %v2195
      %v2312 = vunpack.c.l.b16 %v2196
      %v2313 = vunpack.c.l.b16 %v2197
      %v2314 = vunpack.c.l.b16 %v2198
      %v2315 = vunpack.c.l.b16 %v2199
      %v2316 = vunpack.c.l.b16 %v2200
      %v2317 = vunpack.c.l.b16 %v2201
      %v2318 = vunpack.c.l.b16 %v2202
      %v2319 = vunpack.c.l.b16 %v2203
      %v2320 = vunpack.c.l.b16 %v2204
      %v2321 = vunpack.c.l.b16 %v2205
      %v2322 = vunpack.c.l.b16 %v2206
      %v2323 = vunpack.c.l.b16 %v2207
      %v2324 = vunpack.c.l.b16 %v2208
      %v2325 = vunpack.c.l.b16 %v2209
      %v2326 = vunpack.c.l.b16 %v2210
      %v2327 = vunpack.c.l.b16 %v2211
      %v2328 = vunpack.c.l.b16 %v2212
      %v2329 = vunpack.c.l.b16 %v2213
      %v2330 = vunpack.c.l.b16 %v2214
      %v2331 = vunpack.c.l.b16 %v2215
      %v2332 = vunpack.c.l.b16 %v2216
      %v2333 = vunpack.c.l.b16 %v2217
      %v2334 = vunpack.c.l.b16 %v2218
      %v2335 = vunpack.c.l.b16 %v2219
      %v2336 = vunpack.c.l.b16 %v2220
      %v2337 = vunpack.c.l.b16 %v2221
      %v2338 = vunpack.c.l.b16 %v2222
      %v2339 = vunpack.c.l.b16 %v2223
      %v2340 = vunpack.c.l.b16 %v2224
      %v2341 = vpack.c.b16 %v2294, %v2293
      %v2342 = vpack.c.b16 %v2296, %v2295
      %v2343 = vpack.c.b16 %v2298, %v2297
      %v2344 = vpack.c.b16 %v2300, %v2299
      %v2345 = vpack.c.b16 %v2302, %v2301
      %v2346 = vpack.c.b16 %v2304, %v2303
      %v2347 = vpack.c.b16 %v2306, %v2305
      %v2348 = vpack.c.b16 %v2308, %v2307
      %v2349 = vpack.c.b16 %v2310, %v2309
      %v2350 = vpack.c.b16 %v2312, %v2311
      %v2351 = vpack.c.b16 %v2314, %v2313
      %v2352 = vpack.c.b16 %v2316, %v2315
      %v2353 = vpack.c.b16 %v2318, %v2317
      %v2354 = vpack.c.b16 %v2320, %v2319
      %v2355 = vpack.c.b16 %v2322, %v2321
      %v2356 = vpack.c.b16 %v2324, %v2323
      %v2357 = vpack.c.b16 %v2326, %v2325
      %v2358 = vpack.c.b16 %v2328, %v2327
      %v2359 = vpack.c.b16 %v2330, %v2329
      %v2360 = vpack.c.b16 %v2332, %v2331
      %v2361 = vpack.c.b16 %v2334, %v2333
      %v2362 = vpack.c.b16 %v2336, %v2335
      %v2363 = vpack.c.b16 %v2338, %v2337
      %v2364 = vpack.c.b16 %v2340, %v2339
      %v2405 = vunpack.c.l.b16 %v2225
      %v2406 = vunpack.c.l.b16 %v2226
      %v2407 = vunpack.c.l.b16 %v2227
      %v2408 = vunpack.c.l.b16 %v2228
      %v2409 = vunpack.c.l.b16 %v2229
      %v2410 = vunpack.c.l.b16 %v2230
      %v2411 = vunpack.c.l.b16 %v2231
      %v2412 = vunpack.c.l.b16 %v2232
      %v2413 = vunpack.c.l.b16 %v2233
      %v2414 = vunpack.c.l.b16 %v2234
      %v2415 = vunpack.c.l.b16 %v2235
      %v2416 = vunpack.c.l.b16 %v2236
      %v2417 = vunpack.c.l.b16 %v2237
      %v2418 = vunpack.c.l.b16 %v2238
      %v2419 = vunpack.c.l.b16 %v2239
      %v2420 = vunpack.c.l.b16 %v2240
      %v2421 = vpack.c.b16 %v2406, %v2405
      %v2422 = vpack.c.b16 %v2408, %v2407
      %v2423 = vpack.c.b16 %v2410, %v2409
      %v2424 = vpack.c.b16 %v2412, %v2411
      %v2425 = vpack.c.b16 %v2414, %v2413
      %v2426 = vpack.c.b16 %v2416, %v2415
      %v2427 = vpack.c.b16 %v2418, %v2417
      %v2428 = vpack.c.b16 %v2420, %v2419
      %2437 = vmatpush.bf16.msra.mxu0 %v2428
      %2438 = vmatpush.bf16.msra.mxu0 %v2427
      %2439 = vmatpush.bf16.msra.mxu0 %v2426
      %2440 = vmatpush.bf16.msra.mxu0 %v2425
      %2441 = vmatpush.bf16.msra.mxu0 %v2424
      %2442 = vmatpush.bf16.msra.mxu0 %v2423
      %2443 = vmatpush.bf16.msra.mxu0 %v2422
      %2444 = vmatpush.bf16.msra.mxu0 %v2421
      %2445 = vmatmul.bf16.gmra.mxu0 %v2341
      %v2446 = vpop.f32.mrf.mxu0
      %v2447 = vadd.f32 %v2243, %v2446
      %v2448 = vpop.f32.mrf.mxu0
      %v2449 = vadd.f32 %v2243, %v2448
      %2450 = vmatmul.bf16.gmra.mxu0 %v2342
      %v2451 = vpop.f32.mrf.mxu0
      %v2452 = vadd.f32 %v2243, %v2451
      %v2453 = vpop.f32.mrf.mxu0
      %v2454 = vadd.f32 %v2243, %v2453
      %2455 = vmatmul.bf16.gmra.mxu0 %v2343
      %v2456 = vpop.f32.mrf.mxu0
      %v2457 = vadd.f32 %v2243, %v2456
      %v2458 = vpop.f32.mrf.mxu0
      %v2459 = vadd.f32 %v2243, %v2458
      %2460 = vmatmul.bf16.gmra.mxu0 %v2344
      %v2461 = vpop.f32.mrf.mxu0
      %v2462 = vadd.f32 %v2243, %v2461
      %v2463 = vpop.f32.mrf.mxu0
      %v2464 = vadd.f32 %v2243, %v2463
      %2465 = vmatmul.bf16.gmra.mxu0 %v2345
      %v2466 = vpop.f32.mrf.mxu0
      %v2467 = vadd.f32 %v2243, %v2466
      %v2468 = vpop.f32.mrf.mxu0
      %v2469 = vadd.f32 %v2243, %v2468
      %2470 = vmatmul.bf16.gmra.mxu0 %v2346
      %v2471 = vpop.f32.mrf.mxu0
      %v2472 = vadd.f32 %v2243, %v2471
      %v2473 = vpop.f32.mrf.mxu0
      %v2474 = vadd.f32 %v2243, %v2473
      %2475 = vmatmul.bf16.gmra.mxu0 %v2347
      %v2476 = vpop.f32.mrf.mxu0
      %v2477 = vadd.f32 %v2243, %v2476
      %v2478 = vpop.f32.mrf.mxu0
      %v2479 = vadd.f32 %v2243, %v2478
      %2480 = vmatmul.bf16.gmra.mxu0 %v2348
      %v2481 = vpop.f32.mrf.mxu0
      %v2482 = vadd.f32 %v2243, %v2481
      %v2483 = vpop.f32.mrf.mxu0
      %v2484 = vadd.f32 %v2243, %v2483
      %2485 = vmatmul.bf16.gmra.mxu0 %v2349
      %v2486 = vpop.f32.mrf.mxu0
      %v2487 = vadd.f32 %v2243, %v2486
      %v2488 = vpop.f32.mrf.mxu0
      %v2489 = vadd.f32 %v2243, %v2488
      %2490 = vmatmul.bf16.gmra.mxu0 %v2350
      %v2491 = vpop.f32.mrf.mxu0
      %v2492 = vadd.f32 %v2243, %v2491
      %v2493 = vpop.f32.mrf.mxu0
      %v2494 = vadd.f32 %v2243, %v2493
      %2495 = vmatmul.bf16.gmra.mxu0 %v2351
      %v2496 = vpop.f32.mrf.mxu0
      %v2497 = vadd.f32 %v2243, %v2496
      %v2498 = vpop.f32.mrf.mxu0
      %v2499 = vadd.f32 %v2243, %v2498
      %2500 = vmatmul.bf16.gmra.mxu0 %v2352
      %v2501 = vpop.f32.mrf.mxu0
      %v2502 = vadd.f32 %v2243, %v2501
      %v2503 = vpop.f32.mrf.mxu0
      %v2504 = vadd.f32 %v2243, %v2503
      %2505 = vmatmul.bf16.gmra.mxu0 %v2353
      %v2506 = vpop.f32.mrf.mxu0
      %v2507 = vadd.f32 %v2243, %v2506
      %v2508 = vpop.f32.mrf.mxu0
      %v2509 = vadd.f32 %v2243, %v2508
      %2510 = vmatmul.bf16.gmra.mxu0 %v2354
      %v2511 = vpop.f32.mrf.mxu0
      %v2512 = vadd.f32 %v2243, %v2511
      %v2513 = vpop.f32.mrf.mxu0
      %v2514 = vadd.f32 %v2243, %v2513
      %2515 = vmatmul.bf16.gmra.mxu0 %v2355
      %v2516 = vpop.f32.mrf.mxu0
      %v2517 = vadd.f32 %v2243, %v2516
      %v2518 = vpop.f32.mrf.mxu0
      %v2519 = vadd.f32 %v2243, %v2518
      %2520 = vmatmul.bf16.gmra.mxu0 %v2356
      %v2521 = vpop.f32.mrf.mxu0
      %v2522 = vadd.f32 %v2243, %v2521
      %v2523 = vpop.f32.mrf.mxu0
      %v2524 = vadd.f32 %v2243, %v2523
      %2525 = vmatmul.bf16.gmra.mxu0 %v2357
      %v2526 = vpop.f32.mrf.mxu0
      %v2527 = vadd.f32 %v2243, %v2526
      %v2528 = vpop.f32.mrf.mxu0
      %v2529 = vadd.f32 %v2243, %v2528
      %2530 = vmatmul.bf16.gmra.mxu0 %v2358
      %v2531 = vpop.f32.mrf.mxu0
      %v2532 = vadd.f32 %v2243, %v2531
      %v2533 = vpop.f32.mrf.mxu0
      %v2534 = vadd.f32 %v2243, %v2533
      %2535 = vmatmul.bf16.gmra.mxu0 %v2359
      %v2536 = vpop.f32.mrf.mxu0
      %v2537 = vadd.f32 %v2243, %v2536
      %v2538 = vpop.f32.mrf.mxu0
      %v2539 = vadd.f32 %v2243, %v2538
      %2540 = vmatmul.bf16.gmra.mxu0 %v2360
      %v2541 = vpop.f32.mrf.mxu0
      %v2542 = vadd.f32 %v2243, %v2541
      %v2543 = vpop.f32.mrf.mxu0
      %v2544 = vadd.f32 %v2243, %v2543
      %2545 = vmatmul.bf16.gmra.mxu0 %v2361
      %v2546 = vpop.f32.mrf.mxu0
      %v2547 = vadd.f32 %v2243, %v2546
      %v2548 = vpop.f32.mrf.mxu0
      %v2549 = vadd.f32 %v2243, %v2548
      %2550 = vmatmul.bf16.gmra.mxu0 %v2362
      %v2551 = vpop.f32.mrf.mxu0
      %v2552 = vadd.f32 %v2243, %v2551
      %v2553 = vpop.f32.mrf.mxu0
      %v2554 = vadd.f32 %v2243, %v2553
      %2555 = vmatmul.bf16.gmra.mxu0 %v2363
      %v2556 = vpop.f32.mrf.mxu0
      %v2557 = vadd.f32 %v2243, %v2556
      %v2558 = vpop.f32.mrf.mxu0
      %v2559 = vadd.f32 %v2243, %v2558
      %2560 = vmatmul.bf16.gmra.mxu0 %v2364
      %v2561 = vpop.f32.mrf.mxu0
      %v2562 = vadd.f32 %v2243, %v2561
      %v2563 = vpop.f32.mrf.mxu0
      %v2564 = vadd.f32 %v2243, %v2563
      %2565 = vdwg.mxu0
      %v2566 = vadd.s32 %v520, 8
      %v2567 = vadd.s32 %v520, 16
      %vm2568 = vcmp.lt.s32.totalorder %v520, 16
      %vm2569 = vcmp.lt.s32.totalorder %v2566, 16
      %vm2570 = vcmp.lt.s32.totalorder %v2567, 16
      %v2571 = vsel %vm2568, 1, 0
      %v2572 = vsel %vm2569, 1, 0
      %v2573 = vsel %vm2570, 1, 0
      %vm2574 = vcmp.eq.s32.totalorder %v2571, 1
      %vm2575 = vcmp.eq.s32.totalorder %v2572, 1
      %vm2576 = vcmp.eq.s32.totalorder %v2573, 1
      %v2577 = vsel %vm2574, %v2447, -1e+30
      %v2578 = vsel %vm2575, %v2449, -1e+30
      %v2579 = vsel %vm2576, %v2452, -1e+30
      %v2580 = vsel %vm2574, %v2454, -1e+30
      %v2581 = vsel %vm2575, %v2457, -1e+30
      %v2582 = vsel %vm2576, %v2459, -1e+30
      %v2583 = vsel %vm2574, %v2462, -1e+30
      %v2584 = vsel %vm2575, %v2464, -1e+30
      %v2585 = vsel %vm2576, %v2467, -1e+30
      %v2586 = vsel %vm2574, %v2469, -1e+30
      %v2587 = vsel %vm2575, %v2472, -1e+30
      %v2588 = vsel %vm2576, %v2474, -1e+30
      %v2589 = vsel %vm2574, %v2477, -1e+30
      %v2590 = vsel %vm2575, %v2479, -1e+30
      %v2591 = vsel %vm2576, %v2482, -1e+30
      %v2592 = vsel %vm2574, %v2484, -1e+30
      %v2593 = vsel %vm2575, %v2487, -1e+30
      %v2594 = vsel %vm2576, %v2489, -1e+30
      %v2595 = vsel %vm2574, %v2492, -1e+30
      %v2596 = vsel %vm2575, %v2494, -1e+30
      %v2597 = vsel %vm2576, %v2497, -1e+30
      %v2598 = vsel %vm2574, %v2499, -1e+30
      %v2599 = vsel %vm2575, %v2502, -1e+30
      %v2600 = vsel %vm2576, %v2504, -1e+30
      %v2601 = vsel %vm2574, %v2507, -1e+30
      %v2602 = vsel %vm2575, %v2509, -1e+30
      %v2603 = vsel %vm2576, %v2512, -1e+30
      %v2604 = vsel %vm2574, %v2514, -1e+30
      %v2605 = vsel %vm2575, %v2517, -1e+30
      %v2606 = vsel %vm2576, %v2519, -1e+30
      %v2607 = vsel %vm2574, %v2522, -1e+30
      %v2608 = vsel %vm2575, %v2524, -1e+30
      %v2609 = vsel %vm2576, %v2527, -1e+30
      %v2610 = vsel %vm2574, %v2529, -1e+30
      %v2611 = vsel %vm2575, %v2532, -1e+30
      %v2612 = vsel %vm2576, %v2534, -1e+30
      %v2613 = vsel %vm2574, %v2537, -1e+30
      %v2614 = vsel %vm2575, %v2539, -1e+30
      %v2615 = vsel %vm2576, %v2542, -1e+30
      %v2616 = vsel %vm2574, %v2544, -1e+30
      %v2617 = vsel %vm2575, %v2547, -1e+30
      %v2618 = vsel %vm2576, %v2549, -1e+30
      %v2619 = vsel %vm2574, %v2552, -1e+30
      %v2620 = vsel %vm2575, %v2554, -1e+30
      %v2621 = vsel %vm2576, %v2557, -1e+30
      %v2622 = vsel %vm2574, %v2559, -1e+30
      %v2623 = vsel %vm2575, %v2562, -1e+30
      %v2624 = vsel %vm2576, %v2564, -1e+30
      %v2625 = vrot.slane %v2577, 7
      %v2626 = vrot.slane %v2580, 7
      %v2627 = vrot.slane %v2583, 7
      %v2628 = vrot.slane %v2586, 7
      %v2629 = vrot.slane %v2589, 7
      %v2630 = vrot.slane %v2592, 7
      %v2631 = vrot.slane %v2595, 7
      %v2632 = vrot.slane %v2598, 7
      %v2633 = vrot.slane %v2601, 7
      %v2634 = vrot.slane %v2604, 7
      %v2635 = vrot.slane %v2607, 7
      %v2636 = vrot.slane %v2610, 7
      %v2637 = vrot.slane %v2613, 7
      %v2638 = vrot.slane %v2616, 7
      %v2639 = vrot.slane %v2619, 7
      %v2640 = vrot.slane %v2622, 7
      %v2641 = vrot.slane %v2578, 7
      %v2642 = vrot.slane %v2581, 7
      %v2643 = vrot.slane %v2584, 7
      %v2644 = vrot.slane %v2587, 7
      %v2645 = vrot.slane %v2590, 7
      %v2646 = vrot.slane %v2593, 7
      %v2647 = vrot.slane %v2596, 7
      %v2648 = vrot.slane %v2599, 7
      %v2649 = vrot.slane %v2602, 7
      %v2650 = vrot.slane %v2605, 7
      %v2651 = vrot.slane %v2608, 7
      %v2652 = vrot.slane %v2611, 7
      %v2653 = vrot.slane %v2614, 7
      %v2654 = vrot.slane %v2617, 7
      %v2655 = vrot.slane %v2620, 7
      %v2656 = vrot.slane %v2623, 7
      %v2657 = vrot.slane %v2579, 7
      %v2658 = vrot.slane %v2582, 7
      %v2659 = vrot.slane %v2585, 7
      %v2660 = vrot.slane %v2588, 7
      %v2661 = vrot.slane %v2591, 7
      %v2662 = vrot.slane %v2594, 7
      %v2663 = vrot.slane %v2597, 7
      %v2664 = vrot.slane %v2600, 7
      %v2665 = vrot.slane %v2603, 7
      %v2666 = vrot.slane %v2606, 7
      %v2667 = vrot.slane %v2609, 7
      %v2668 = vrot.slane %v2612, 7
      %v2669 = vrot.slane %v2615, 7
      %v2670 = vrot.slane %v2618, 7
      %v2671 = vrot.slane %v2621, 7
      %v2672 = vrot.slane %v2624, 7
      %v2673 = vsel %vm521, %v2641, %v2657
      %v2674 = vsel %vm521, %v2642, %v2658
      %v2675 = vsel %vm521, %v2643, %v2659
      %v2676 = vsel %vm521, %v2644, %v2660
      %v2677 = vsel %vm521, %v2645, %v2661
      %v2678 = vsel %vm521, %v2646, %v2662
      %v2679 = vsel %vm521, %v2647, %v2663
      %v2680 = vsel %vm521, %v2648, %v2664
      %v2681 = vsel %vm521, %v2649, %v2665
      %v2682 = vsel %vm521, %v2650, %v2666
      %v2683 = vsel %vm521, %v2651, %v2667
      %v2684 = vsel %vm521, %v2652, %v2668
      %v2685 = vsel %vm521, %v2653, %v2669
      %v2686 = vsel %vm521, %v2654, %v2670
      %v2687 = vsel %vm521, %v2655, %v2671
      %v2688 = vsel %vm521, %v2656, %v2672
      %v2689 = vsel %vm521, %v2625, %v2641
      %v2690 = vsel %vm521, %v2626, %v2642
      %v2691 = vsel %vm521, %v2627, %v2643
      %v2692 = vsel %vm521, %v2628, %v2644
      %v2693 = vsel %vm521, %v2629, %v2645
      %v2694 = vsel %vm521, %v2630, %v2646
      %v2695 = vsel %vm521, %v2631, %v2647
      %v2696 = vsel %vm521, %v2632, %v2648
      %v2697 = vsel %vm521, %v2633, %v2649
      %v2698 = vsel %vm521, %v2634, %v2650
      %v2699 = vsel %vm521, %v2635, %v2651
      %v2700 = vsel %vm521, %v2636, %v2652
      %v2701 = vsel %vm521, %v2637, %v2653
      %v2702 = vsel %vm521, %v2638, %v2654
      %v2703 = vsel %vm521, %v2639, %v2655
      %v2704 = vsel %vm521, %v2640, %v2656
      %v2705 = vsel %vm521, %v2657, %v2625
      %v2706 = vsel %vm521, %v2658, %v2626
      %v2707 = vsel %vm521, %v2659, %v2627
      %v2708 = vsel %vm521, %v2660, %v2628
      %v2709 = vsel %vm521, %v2661, %v2629
      %v2710 = vsel %vm521, %v2662, %v2630
      %v2711 = vsel %vm521, %v2663, %v2631
      %v2712 = vsel %vm521, %v2664, %v2632
      %v2713 = vsel %vm521, %v2665, %v2633
      %v2714 = vsel %vm521, %v2666, %v2634
      %v2715 = vsel %vm521, %v2667, %v2635
      %v2716 = vsel %vm521, %v2668, %v2636
      %v2717 = vsel %vm521, %v2669, %v2637
      %v2718 = vsel %vm521, %v2670, %v2638
      %v2719 = vsel %vm521, %v2671, %v2639
      %v2720 = vsel %vm521, %v2672, %v2640
      %v2721 = vmax.f32 %v2577, %v2705
      %v2722 = vmax.f32 %v2578, %v2689
      %v2723 = vmax.f32 %v2579, %v2673
      %v2724 = vmax.f32 %v2580, %v2706
      %v2725 = vmax.f32 %v2581, %v2690
      %v2726 = vmax.f32 %v2582, %v2674
      %v2727 = vmax.f32 %v2583, %v2707
      %v2728 = vmax.f32 %v2584, %v2691
      %v2729 = vmax.f32 %v2585, %v2675
      %v2730 = vmax.f32 %v2586, %v2708
      %v2731 = vmax.f32 %v2587, %v2692
      %v2732 = vmax.f32 %v2588, %v2676
      %v2733 = vmax.f32 %v2589, %v2709
      %v2734 = vmax.f32 %v2590, %v2693
      %v2735 = vmax.f32 %v2591, %v2677
      %v2736 = vmax.f32 %v2592, %v2710
      %v2737 = vmax.f32 %v2593, %v2694
      %v2738 = vmax.f32 %v2594, %v2678
      %v2739 = vmax.f32 %v2595, %v2711
      %v2740 = vmax.f32 %v2596, %v2695
      %v2741 = vmax.f32 %v2597, %v2679
      %v2742 = vmax.f32 %v2598, %v2712
      %v2743 = vmax.f32 %v2599, %v2696
      %v2744 = vmax.f32 %v2600, %v2680
      %v2745 = vmax.f32 %v2601, %v2713
      %v2746 = vmax.f32 %v2602, %v2697
      %v2747 = vmax.f32 %v2603, %v2681
      %v2748 = vmax.f32 %v2604, %v2714
      %v2749 = vmax.f32 %v2605, %v2698
      %v2750 = vmax.f32 %v2606, %v2682
      %v2751 = vmax.f32 %v2607, %v2715
      %v2752 = vmax.f32 %v2608, %v2699
      %v2753 = vmax.f32 %v2609, %v2683
      %v2754 = vmax.f32 %v2610, %v2716
      %v2755 = vmax.f32 %v2611, %v2700
      %v2756 = vmax.f32 %v2612, %v2684
      %v2757 = vmax.f32 %v2613, %v2717
      %v2758 = vmax.f32 %v2614, %v2701
      %v2759 = vmax.f32 %v2615, %v2685
      %v2760 = vmax.f32 %v2616, %v2718
      %v2761 = vmax.f32 %v2617, %v2702
      %v2762 = vmax.f32 %v2618, %v2686
      %v2763 = vmax.f32 %v2619, %v2719
      %v2764 = vmax.f32 %v2620, %v2703
      %v2765 = vmax.f32 %v2621, %v2687
      %v2766 = vmax.f32 %v2622, %v2720
      %v2767 = vmax.f32 %v2623, %v2704
      %v2768 = vmax.f32 %v2624, %v2688
      %v2769 = vrot.slane %v2577, 1
      %v2770 = vrot.slane %v2580, 1
      %v2771 = vrot.slane %v2583, 1
      %v2772 = vrot.slane %v2586, 1
      %v2773 = vrot.slane %v2589, 1
      %v2774 = vrot.slane %v2592, 1
      %v2775 = vrot.slane %v2595, 1
      %v2776 = vrot.slane %v2598, 1
      %v2777 = vrot.slane %v2601, 1
      %v2778 = vrot.slane %v2604, 1
      %v2779 = vrot.slane %v2607, 1
      %v2780 = vrot.slane %v2610, 1
      %v2781 = vrot.slane %v2613, 1
      %v2782 = vrot.slane %v2616, 1
      %v2783 = vrot.slane %v2619, 1
      %v2784 = vrot.slane %v2622, 1
      %v2785 = vrot.slane %v2578, 1
      %v2786 = vrot.slane %v2581, 1
      %v2787 = vrot.slane %v2584, 1
      %v2788 = vrot.slane %v2587, 1
      %v2789 = vrot.slane %v2590, 1
      %v2790 = vrot.slane %v2593, 1
      %v2791 = vrot.slane %v2596, 1
      %v2792 = vrot.slane %v2599, 1
      %v2793 = vrot.slane %v2602, 1
      %v2794 = vrot.slane %v2605, 1
      %v2795 = vrot.slane %v2608, 1
      %v2796 = vrot.slane %v2611, 1
      %v2797 = vrot.slane %v2614, 1
      %v2798 = vrot.slane %v2617, 1
      %v2799 = vrot.slane %v2620, 1
      %v2800 = vrot.slane %v2623, 1
      %v2801 = vrot.slane %v2579, 1
      %v2802 = vrot.slane %v2582, 1
      %v2803 = vrot.slane %v2585, 1
      %v2804 = vrot.slane %v2588, 1
      %v2805 = vrot.slane %v2591, 1
      %v2806 = vrot.slane %v2594, 1
      %v2807 = vrot.slane %v2597, 1
      %v2808 = vrot.slane %v2600, 1
      %v2809 = vrot.slane %v2603, 1
      %v2810 = vrot.slane %v2606, 1
      %v2811 = vrot.slane %v2609, 1
      %v2812 = vrot.slane %v2612, 1
      %v2813 = vrot.slane %v2615, 1
      %v2814 = vrot.slane %v2618, 1
      %v2815 = vrot.slane %v2621, 1
      %v2816 = vrot.slane %v2624, 1
      %v2817 = vsel %vm766, %v2785, %v2801
      %v2818 = vsel %vm766, %v2786, %v2802
      %v2819 = vsel %vm766, %v2787, %v2803
      %v2820 = vsel %vm766, %v2788, %v2804
      %v2821 = vsel %vm766, %v2789, %v2805
      %v2822 = vsel %vm766, %v2790, %v2806
      %v2823 = vsel %vm766, %v2791, %v2807
      %v2824 = vsel %vm766, %v2792, %v2808
      %v2825 = vsel %vm766, %v2793, %v2809
      %v2826 = vsel %vm766, %v2794, %v2810
      %v2827 = vsel %vm766, %v2795, %v2811
      %v2828 = vsel %vm766, %v2796, %v2812
      %v2829 = vsel %vm766, %v2797, %v2813
      %v2830 = vsel %vm766, %v2798, %v2814
      %v2831 = vsel %vm766, %v2799, %v2815
      %v2832 = vsel %vm766, %v2800, %v2816
      %v2833 = vsel %vm766, %v2769, %v2785
      %v2834 = vsel %vm766, %v2770, %v2786
      %v2835 = vsel %vm766, %v2771, %v2787
      %v2836 = vsel %vm766, %v2772, %v2788
      %v2837 = vsel %vm766, %v2773, %v2789
      %v2838 = vsel %vm766, %v2774, %v2790
      %v2839 = vsel %vm766, %v2775, %v2791
      %v2840 = vsel %vm766, %v2776, %v2792
      %v2841 = vsel %vm766, %v2777, %v2793
      %v2842 = vsel %vm766, %v2778, %v2794
      %v2843 = vsel %vm766, %v2779, %v2795
      %v2844 = vsel %vm766, %v2780, %v2796
      %v2845 = vsel %vm766, %v2781, %v2797
      %v2846 = vsel %vm766, %v2782, %v2798
      %v2847 = vsel %vm766, %v2783, %v2799
      %v2848 = vsel %vm766, %v2784, %v2800
      %v2849 = vsel %vm766, %v2801, %v2769
      %v2850 = vsel %vm766, %v2802, %v2770
      %v2851 = vsel %vm766, %v2803, %v2771
      %v2852 = vsel %vm766, %v2804, %v2772
      %v2853 = vsel %vm766, %v2805, %v2773
      %v2854 = vsel %vm766, %v2806, %v2774
      %v2855 = vsel %vm766, %v2807, %v2775
      %v2856 = vsel %vm766, %v2808, %v2776
      %v2857 = vsel %vm766, %v2809, %v2777
      %v2858 = vsel %vm766, %v2810, %v2778
      %v2859 = vsel %vm766, %v2811, %v2779
      %v2860 = vsel %vm766, %v2812, %v2780
      %v2861 = vsel %vm766, %v2813, %v2781
      %v2862 = vsel %vm766, %v2814, %v2782
      %v2863 = vsel %vm766, %v2815, %v2783
      %v2864 = vsel %vm766, %v2816, %v2784
      %v2865 = vmax.f32 %v2721, %v2833
      %v2866 = vmax.f32 %v2722, %v2817
      %v2867 = vmax.f32 %v2723, %v2849
      %v2868 = vmax.f32 %v2724, %v2834
      %v2869 = vmax.f32 %v2725, %v2818
      %v2870 = vmax.f32 %v2726, %v2850
      %v2871 = vmax.f32 %v2727, %v2835
      %v2872 = vmax.f32 %v2728, %v2819
      %v2873 = vmax.f32 %v2729, %v2851
      %v2874 = vmax.f32 %v2730, %v2836
      %v2875 = vmax.f32 %v2731, %v2820
      %v2876 = vmax.f32 %v2732, %v2852
      %v2877 = vmax.f32 %v2733, %v2837
      %v2878 = vmax.f32 %v2734, %v2821
      %v2879 = vmax.f32 %v2735, %v2853
      %v2880 = vmax.f32 %v2736, %v2838
      %v2881 = vmax.f32 %v2737, %v2822
      %v2882 = vmax.f32 %v2738, %v2854
      %v2883 = vmax.f32 %v2739, %v2839
      %v2884 = vmax.f32 %v2740, %v2823
      %v2885 = vmax.f32 %v2741, %v2855
      %v2886 = vmax.f32 %v2742, %v2840
      %v2887 = vmax.f32 %v2743, %v2824
      %v2888 = vmax.f32 %v2744, %v2856
      %v2889 = vmax.f32 %v2745, %v2841
      %v2890 = vmax.f32 %v2746, %v2825
      %v2891 = vmax.f32 %v2747, %v2857
      %v2892 = vmax.f32 %v2748, %v2842
      %v2893 = vmax.f32 %v2749, %v2826
      %v2894 = vmax.f32 %v2750, %v2858
      %v2895 = vmax.f32 %v2751, %v2843
      %v2896 = vmax.f32 %v2752, %v2827
      %v2897 = vmax.f32 %v2753, %v2859
      %v2898 = vmax.f32 %v2754, %v2844
      %v2899 = vmax.f32 %v2755, %v2828
      %v2900 = vmax.f32 %v2756, %v2860
      %v2901 = vmax.f32 %v2757, %v2845
      %v2902 = vmax.f32 %v2758, %v2829
      %v2903 = vmax.f32 %v2759, %v2861
      %v2904 = vmax.f32 %v2760, %v2846
      %v2905 = vmax.f32 %v2761, %v2830
      %v2906 = vmax.f32 %v2762, %v2862
      %v2907 = vmax.f32 %v2763, %v2847
      %v2908 = vmax.f32 %v2764, %v2831
      %v2909 = vmax.f32 %v2765, %v2863
      %v2910 = vmax.f32 %v2766, %v2848
      %v2911 = vmax.f32 %v2767, %v2832
      %v2912 = vmax.f32 %v2768, %v2864
      %v2913 = vmax.f32 %v2865, -1e+30
      %v2914 = vmax.f32 %v2866, -1e+30
      %v2915 = vmax.f32 %v2867, -1e+30
      %v2916 = vmax.f32 %v2868, %v2865
      %v2917 = vmax.f32 %v2869, %v2866
      %v2918 = vmax.f32 %v2870, %v2867
      %v2919 = vmax.f32 %v2871, %v2868
      %v2920 = vmax.f32 %v2872, %v2869
      %v2921 = vmax.f32 %v2873, %v2870
      %v2922 = vmax.f32 %v2874, %v2871
      %v2923 = vmax.f32 %v2875, %v2872
      %v2924 = vmax.f32 %v2876, %v2873
      %v2925 = vmax.f32 %v2877, %v2874
      %v2926 = vmax.f32 %v2878, %v2875
      %v2927 = vmax.f32 %v2879, %v2876
      %v2928 = vmax.f32 %v2880, %v2877
      %v2929 = vmax.f32 %v2881, %v2878
      %v2930 = vmax.f32 %v2882, %v2879
      %v2931 = vmax.f32 %v2883, %v2880
      %v2932 = vmax.f32 %v2884, %v2881
      %v2933 = vmax.f32 %v2885, %v2882
      %v2934 = vmax.f32 %v2886, %v2883
      %v2935 = vmax.f32 %v2887, %v2884
      %v2936 = vmax.f32 %v2888, %v2885
      %v2937 = vmax.f32 %v2889, %v2886
      %v2938 = vmax.f32 %v2890, %v2887
      %v2939 = vmax.f32 %v2891, %v2888
      %v2940 = vmax.f32 %v2892, %v2889
      %v2941 = vmax.f32 %v2893, %v2890
      %v2942 = vmax.f32 %v2894, %v2891
      %v2943 = vmax.f32 %v2895, %v2892
      %v2944 = vmax.f32 %v2896, %v2893
      %v2945 = vmax.f32 %v2897, %v2894
      %v2946 = vmax.f32 %v2898, %v2895
      %v2947 = vmax.f32 %v2899, %v2896
      %v2948 = vmax.f32 %v2900, %v2897
      %v2949 = vmax.f32 %v2901, %v2898
      %v2950 = vmax.f32 %v2902, %v2899
      %v2951 = vmax.f32 %v2903, %v2900
      %v2952 = vmax.f32 %v2904, %v2901
      %v2953 = vmax.f32 %v2905, %v2902
      %v2954 = vmax.f32 %v2906, %v2903
      %v2955 = vmax.f32 %v2907, %v2904
      %v2956 = vmax.f32 %v2908, %v2905
      %v2957 = vmax.f32 %v2909, %v2906
      %v2958 = vmax.f32 %v2910, %v2907
      %v2959 = vmax.f32 %v2911, %v2908
      %v2960 = vmax.f32 %v2912, %v2909
      %v2961 = vmax.f32 %v2913, %v2868
      %v2962 = vmax.f32 %v2914, %v2869
      %v2963 = vmax.f32 %v2915, %v2870
      %v2964 = vmax.f32 %v2916, %v2871
      %v2965 = vmax.f32 %v2917, %v2872
      %v2966 = vmax.f32 %v2918, %v2873
      %v2967 = vmax.f32 %v2919, %v2874
      %v2968 = vmax.f32 %v2920, %v2875
      %v2969 = vmax.f32 %v2921, %v2876
      %v2970 = vmax.f32 %v2922, %v2877
      %v2971 = vmax.f32 %v2923, %v2878
      %v2972 = vmax.f32 %v2924, %v2879
      %v2973 = vmax.f32 %v2925, %v2880
      %v2974 = vmax.f32 %v2926, %v2881
      %v2975 = vmax.f32 %v2927, %v2882
      %v2976 = vmax.f32 %v2928, %v2883
      %v2977 = vmax.f32 %v2929, %v2884
      %v2978 = vmax.f32 %v2930, %v2885
      %v2979 = vmax.f32 %v2931, %v2886
      %v2980 = vmax.f32 %v2932, %v2887
      %v2981 = vmax.f32 %v2933, %v2888
      %v2982 = vmax.f32 %v2934, %v2889
      %v2983 = vmax.f32 %v2935, %v2890
      %v2984 = vmax.f32 %v2936, %v2891
      %v2985 = vmax.f32 %v2937, %v2892
      %v2986 = vmax.f32 %v2938, %v2893
      %v2987 = vmax.f32 %v2939, %v2894
      %v2988 = vmax.f32 %v2940, %v2895
      %v2989 = vmax.f32 %v2941, %v2896
      %v2990 = vmax.f32 %v2942, %v2897
      %v2991 = vmax.f32 %v2943, %v2898
      %v2992 = vmax.f32 %v2944, %v2899
      %v2993 = vmax.f32 %v2945, %v2900
      %v2994 = vmax.f32 %v2946, %v2901
      %v2995 = vmax.f32 %v2947, %v2902
      %v2996 = vmax.f32 %v2948, %v2903
      %v2997 = vmax.f32 %v2949, %v2904
      %v2998 = vmax.f32 %v2950, %v2905
      %v2999 = vmax.f32 %v2951, %v2906
      %v3000 = vmax.f32 %v2952, %v2907
      %v3001 = vmax.f32 %v2953, %v2908
      %v3002 = vmax.f32 %v2954, %v2909
      %v3003 = vmax.f32 %v2955, %v2910
      %v3004 = vmax.f32 %v2956, %v2911
      %v3005 = vmax.f32 %v2957, %v2912
      %v3006 = vmax.f32 %v2958, -1e+30
      %v3007 = vmax.f32 %v2959, -1e+30
      %v3008 = vmax.f32 %v2960, -1e+30
      %v3009 = vld [vmem:[%s2] sm:$0xff]
      %v3010 = vld [vmem:[%s2 + $0x8] sm:$0xf]
      %v3011 = vld [vmem:[%s2 + $0xc] sm:$0xff]
      %v3012 = vld [vmem:[%s2 + $0x14] sm:$0xf]
      %v3013 = vld [vmem:[%s2 + $0x18] sm:$0xff]
      %v3014 = vld [vmem:[%s2 + $0x20] sm:$0xf]
      %v3015 = vld [vmem:[%s2 + $0x24] sm:$0xff]
      %v3016 = vld [vmem:[%s2 + $0x2c] sm:$0xf]
      %v3017 = vld [vmem:[%s2 + $0x30] sm:$0xff]
      %v3018 = vld [vmem:[%s2 + $0x38] sm:$0xf]
      %v3019 = vld [vmem:[%s2 + $0x3c] sm:$0xff]
      %v3020 = vld [vmem:[%s2 + $0x44] sm:$0xf]
      %v3021 = vld [vmem:[%s2 + $0x48] sm:$0xff]
      %v3022 = vld [vmem:[%s2 + $0x50] sm:$0xf]
      %v3023 = vld [vmem:[%s2 + $0x54] sm:$0xff]
      %v3024 = vld [vmem:[%s2 + $0x5c] sm:$0xf]
      %v3025 = vld [vmem:[%s2 + $0x60] sm:$0xff]
      %v3026 = vld [vmem:[%s2 + $0x68] sm:$0xf]
      %v3027 = vld [vmem:[%s2 + $0x6c] sm:$0xff]
      %v3028 = vld [vmem:[%s2 + $0x74] sm:$0xf]
      %v3029 = vld [vmem:[%s2 + $0x78] sm:$0xff]
      %v3030 = vld [vmem:[%s2 + $0x80] sm:$0xf]
      %v3031 = vld [vmem:[%s2 + $0x84] sm:$0xff]
      %v3032 = vld [vmem:[%s2 + $0x8c] sm:$0xf]
      %v3033 = vld [vmem:[%s2 + $0x90] sm:$0xff]
      %v3034 = vld [vmem:[%s2 + $0x98] sm:$0xf]
      %v3035 = vld [vmem:[%s2 + $0x9c] sm:$0xff]
      %v3036 = vld [vmem:[%s2 + $0xa4] sm:$0xf]
      %v3037 = vld [vmem:[%s2 + $0xa8] sm:$0xff]
      %v3038 = vld [vmem:[%s2 + $0xb0] sm:$0xf]
      %v3039 = vld [vmem:[%s2 + $0xb4] sm:$0xff]
      %v3040 = vld [vmem:[%s2 + $0xbc] sm:$0xf]
      %v3041 = vpack.c.bf16 %v2962, %v2961
      %v3042 = vpack.c.bf16 %v2964, %v2963
      %v3043 = vpack.c.bf16 %v2966, %v2965
      %v3044 = vpack.c.bf16 %v2968, %v2967
      %v3045 = vpack.c.bf16 %v2970, %v2969
      %v3046 = vpack.c.bf16 %v2972, %v2971
      %v3047 = vpack.c.bf16 %v2974, %v2973
      %v3048 = vpack.c.bf16 %v2976, %v2975
      %v3049 = vpack.c.bf16 %v2978, %v2977
      %v3050 = vpack.c.bf16 %v2980, %v2979
      %v3051 = vpack.c.bf16 %v2982, %v2981
      %v3052 = vpack.c.bf16 %v2984, %v2983
      %v3053 = vpack.c.bf16 %v2986, %v2985
      %v3054 = vpack.c.bf16 %v2988, %v2987
      %v3055 = vpack.c.bf16 %v2990, %v2989
      %v3056 = vpack.c.bf16 %v2992, %v2991
      %v3057 = vpack.c.bf16 %v2994, %v2993
      %v3058 = vpack.c.bf16 %v2996, %v2995
      %v3059 = vpack.c.bf16 %v2998, %v2997
      %v3060 = vpack.c.bf16 %v3000, %v2999
      %v3061 = vpack.c.bf16 %v3002, %v3001
      %v3062 = vpack.c.bf16 %v3004, %v3003
      %v3063 = vpack.c.bf16 %v3006, %v3005
      %v3064 = vpack.c.bf16 %v3008, %v3007
      %v3065 = vld [vmem:[%s320] sm:$0xf]
      %v3066 = vld [vmem:[%s320 + $0x4] sm:$0xf]
      %v3067 = vld [vmem:[%s320 + $0x8] sm:$0xf]
      %v3068 = vld [vmem:[%s320 + $0xc] sm:$0xf]
      %v3069 = vld [vmem:[%s320 + $0x10] sm:$0xf]
      %v3070 = vld [vmem:[%s320 + $0x14] sm:$0xf]
      %v3071 = vld [vmem:[%s320 + $0x18] sm:$0xf]
      %v3072 = vld [vmem:[%s320 + $0x1c] sm:$0xf]
      %v3073 = vld [vmem:[%s320 + $0x20] sm:$0xf]
      %v3074 = vld [vmem:[%s320 + $0x24] sm:$0xf]
      %v3075 = vld [vmem:[%s320 + $0x28] sm:$0xf]
      %v3076 = vld [vmem:[%s320 + $0x2c] sm:$0xf]
      %v3077 = vld [vmem:[%s320 + $0x30] sm:$0xf]
      %v3078 = vld [vmem:[%s320 + $0x34] sm:$0xf]
      %v3079 = vld [vmem:[%s320 + $0x38] sm:$0xf]
      %v3080 = vld [vmem:[%s320 + $0x3c] sm:$0xf]
      %v3081 = vld [vmem:[%s6] sm:$0xf]
      %v3082 = vld [vmem:[%s6 + $0x4] sm:$0xf]
      %v3083 = vld [vmem:[%s6 + $0x8] sm:$0xf]
      %v3084 = vld [vmem:[%s6 + $0xc] sm:$0xf]
      %v3085 = vld [vmem:[%s6 + $0x10] sm:$0xf]
      %v3086 = vld [vmem:[%s6 + $0x14] sm:$0xf]
      %v3087 = vld [vmem:[%s6 + $0x18] sm:$0xf]
      %v3088 = vld [vmem:[%s6 + $0x1c] sm:$0xf]
      %v3089 = vld [vmem:[%s6 + $0x20] sm:$0xf]
      %v3090 = vld [vmem:[%s6 + $0x24] sm:$0xf]
      %v3091 = vld [vmem:[%s6 + $0x28] sm:$0xf]
      %v3092 = vld [vmem:[%s6 + $0x2c] sm:$0xf]
      %v3093 = vld [vmem:[%s6 + $0x30] sm:$0xf]
      %v3094 = vld [vmem:[%s6 + $0x34] sm:$0xf]
      %v3095 = vld [vmem:[%s6 + $0x38] sm:$0xf]
      %v3096 = vld [vmem:[%s6 + $0x3c] sm:$0xf]
      %v3097 = vld [vmem:[%s7] sm:$0x1]
      %v3099 = vperm.slane %v3097, 0
      %v3117 = vunpack.c.l.b16 %v3065
      %v3118 = vunpack.c.l.b16 %v3066
      %v3119 = vunpack.c.l.b16 %v3067
      %v3120 = vunpack.c.l.b16 %v3068
      %v3121 = vunpack.c.l.b16 %v3069
      %v3122 = vunpack.c.l.b16 %v3070
      %v3123 = vunpack.c.l.b16 %v3071
      %v3124 = vunpack.c.l.b16 %v3072
      %v3125 = vunpack.c.l.b16 %v3073
      %v3126 = vunpack.c.l.b16 %v3074
      %v3127 = vunpack.c.l.b16 %v3075
      %v3128 = vunpack.c.l.b16 %v3076
      %v3129 = vunpack.c.l.b16 %v3077
      %v3130 = vunpack.c.l.b16 %v3078
      %v3131 = vunpack.c.l.b16 %v3079
      %v3132 = vunpack.c.l.b16 %v3080
      %v3133 = vpack.c.b16 %v3118, %v3117
      %v3134 = vpack.c.b16 %v3120, %v3119
      %v3135 = vpack.c.b16 %v3122, %v3121
      %v3136 = vpack.c.b16 %v3124, %v3123
      %v3137 = vpack.c.b16 %v3126, %v3125
      %v3138 = vpack.c.b16 %v3128, %v3127
      %v3139 = vpack.c.b16 %v3130, %v3129
      %v3140 = vpack.c.b16 %v3132, %v3131
      %v3165 = vunpack.c.l.b16 %v3081
      %v3166 = vunpack.c.l.b16 %v3082
      %v3167 = vunpack.c.l.b16 %v3083
      %v3168 = vunpack.c.l.b16 %v3084
      %v3169 = vunpack.c.l.b16 %v3085
      %v3170 = vunpack.c.l.b16 %v3086
      %v3171 = vunpack.c.l.b16 %v3087
      %v3172 = vunpack.c.l.b16 %v3088
      %v3173 = vunpack.c.l.b16 %v3089
      %v3174 = vunpack.c.l.b16 %v3090
      %v3175 = vunpack.c.l.b16 %v3091
      %v3176 = vunpack.c.l.b16 %v3092
      %v3177 = vunpack.c.l.b16 %v3093
      %v3178 = vunpack.c.l.b16 %v3094
      %v3179 = vunpack.c.l.b16 %v3095
      %v3180 = vunpack.c.l.b16 %v3096
      %v3181 = vpack.c.b16 %v3166, %v3165
      %v3182 = vpack.c.b16 %v3168, %v3167
      %v3183 = vpack.c.b16 %v3170, %v3169
      %v3184 = vpack.c.b16 %v3172, %v3171
      %v3185 = vpack.c.b16 %v3174, %v3173
      %v3186 = vpack.c.b16 %v3176, %v3175
      %v3187 = vpack.c.b16 %v3178, %v3177
      %v3188 = vpack.c.b16 %v3180, %v3179
      %3197 = vmatpush.bf16.msra.mxu0 %v3188
      %3198 = vmatpush.bf16.msra.mxu0 %v3187
      %3199 = vmatpush.bf16.msra.mxu0 %v3186
      %3200 = vmatpush.bf16.msra.mxu0 %v3185
      %3201 = vmatpush.bf16.msra.mxu0 %v3184
      %3202 = vmatpush.bf16.msra.mxu0 %v3183
      %3203 = vmatpush.bf16.msra.mxu0 %v3182
      %3204 = vmatpush.bf16.msra.mxu0 %v3181
      %3205 = vmatmul.bf16.gmra.mxu0 %v3133
      %v3206 = vpop.f32.mrf.mxu0
      %v3207 = vadd.f32 %v3099, %v3206
      %v3208 = vpop.f32.mrf.mxu0
      %v3209 = vadd.f32 %v3099, %v3208
      %3210 = vmatmul.bf16.gmra.mxu0 %v3134
      %v3211 = vpop.f32.mrf.mxu0
      %v3212 = vadd.f32 %v3099, %v3211
      %v3213 = vpop.f32.mrf.mxu0
      %v3214 = vadd.f32 %v3099, %v3213
      %3215 = vmatmul.bf16.gmra.mxu0 %v3135
      %v3216 = vpop.f32.mrf.mxu0
      %v3217 = vadd.f32 %v3099, %v3216
      %v3218 = vpop.f32.mrf.mxu0
      %v3219 = vadd.f32 %v3099, %v3218
      %3220 = vmatmul.bf16.gmra.mxu0 %v3136
      %v3221 = vpop.f32.mrf.mxu0
      %v3222 = vadd.f32 %v3099, %v3221
      %v3223 = vpop.f32.mrf.mxu0
      %v3224 = vadd.f32 %v3099, %v3223
      %3225 = vmatmul.bf16.gmra.mxu0 %v3137
      %v3226 = vpop.f32.mrf.mxu0
      %v3227 = vadd.f32 %v3099, %v3226
      %v3228 = vpop.f32.mrf.mxu0
      %v3229 = vadd.f32 %v3099, %v3228
      %3230 = vmatmul.bf16.gmra.mxu0 %v3138
      %v3231 = vpop.f32.mrf.mxu0
      %v3232 = vadd.f32 %v3099, %v3231
      %v3233 = vpop.f32.mrf.mxu0
      %v3234 = vadd.f32 %v3099, %v3233
      %3235 = vmatmul.bf16.gmra.mxu0 %v3139
      %v3236 = vpop.f32.mrf.mxu0
      %v3237 = vadd.f32 %v3099, %v3236
      %v3238 = vpop.f32.mrf.mxu0
      %v3239 = vadd.f32 %v3099, %v3238
      %3240 = vmatmul.bf16.gmra.mxu0 %v3140
      %v3241 = vpop.f32.mrf.mxu0
      %v3242 = vadd.f32 %v3099, %v3241
      %v3243 = vpop.f32.mrf.mxu0
      %v3244 = vadd.f32 %v3099, %v3243
      %3245 = vdwg.mxu0
      %v3278 = vunpack.c.l.b16 %v3009
      %v3279 = vunpack.c.h.b16 %v3009
      %v3280 = vunpack.c.l.b16 %v3010
      %v3281 = vunpack.c.l.b16 %v3011
      %v3282 = vunpack.c.h.b16 %v3011
      %v3283 = vunpack.c.l.b16 %v3012
      %v3284 = vunpack.c.l.b16 %v3013
      %v3285 = vunpack.c.h.b16 %v3013
      %v3286 = vunpack.c.l.b16 %v3014
      %v3287 = vunpack.c.l.b16 %v3015
      %v3288 = vunpack.c.h.b16 %v3015
      %v3289 = vunpack.c.l.b16 %v3016
      %v3290 = vunpack.c.l.b16 %v3017
      %v3291 = vunpack.c.h.b16 %v3017
      %v3292 = vunpack.c.l.b16 %v3018
      %v3293 = vunpack.c.l.b16 %v3019
      %v3294 = vunpack.c.h.b16 %v3019
      %v3295 = vunpack.c.l.b16 %v3020
      %v3296 = vunpack.c.l.b16 %v3021
      %v3297 = vunpack.c.h.b16 %v3021
      %v3298 = vunpack.c.l.b16 %v3022
      %v3299 = vunpack.c.l.b16 %v3023
      %v3300 = vunpack.c.h.b16 %v3023
      %v3301 = vunpack.c.l.b16 %v3024
      %v3302 = vunpack.c.l.b16 %v3025
      %v3303 = vunpack.c.h.b16 %v3025
      %v3304 = vunpack.c.l.b16 %v3026
      %v3305 = vunpack.c.l.b16 %v3027
      %v3306 = vunpack.c.h.b16 %v3027
      %v3307 = vunpack.c.l.b16 %v3028
      %v3308 = vunpack.c.l.b16 %v3029
      %v3309 = vunpack.c.h.b16 %v3029
      %v3310 = vunpack.c.l.b16 %v3030
      %v3311 = vunpack.c.l.b16 %v3031
      %v3312 = vunpack.c.h.b16 %v3031
      %v3313 = vunpack.c.l.b16 %v3032
      %v3314 = vunpack.c.l.b16 %v3033
      %v3315 = vunpack.c.h.b16 %v3033
      %v3316 = vunpack.c.l.b16 %v3034
      %v3317 = vunpack.c.l.b16 %v3035
      %v3318 = vunpack.c.h.b16 %v3035
      %v3319 = vunpack.c.l.b16 %v3036
      %v3320 = vunpack.c.l.b16 %v3037
      %v3321 = vunpack.c.h.b16 %v3037
      %v3322 = vunpack.c.l.b16 %v3038
      %v3323 = vunpack.c.l.b16 %v3039
      %v3324 = vunpack.c.h.b16 %v3039
      %v3325 = vunpack.c.l.b16 %v3040
      %v3326 = vpack.c.b16 %v3281, %v3278
      %v3327 = vpack.c.b16 %v3282, %v3279
      %v3328 = vpack.c.b16 %v3283, %v3280
      %v3329 = vpack.c.b16 %v3287, %v3284
      %v3330 = vpack.c.b16 %v3288, %v3285
      %v3331 = vpack.c.b16 %v3289, %v3286
      %v3332 = vpack.c.b16 %v3293, %v3290
      %v3333 = vpack.c.b16 %v3294, %v3291
      %v3334 = vpack.c.b16 %v3295, %v3292
      %v3335 = vpack.c.b16 %v3299, %v3296
      %v3336 = vpack.c.b16 %v3300, %v3297
      %v3337 = vpack.c.b16 %v3301, %v3298
      %v3338 = vpack.c.b16 %v3305, %v3302
      %v3339 = vpack.c.b16 %v3306, %v3303
      %v3340 = vpack.c.b16 %v3307, %v3304
      %v3341 = vpack.c.b16 %v3311, %v3308
      %v3342 = vpack.c.b16 %v3312, %v3309
      %v3343 = vpack.c.b16 %v3313, %v3310
      %v3344 = vpack.c.b16 %v3317, %v3314
      %v3345 = vpack.c.b16 %v3318, %v3315
      %v3346 = vpack.c.b16 %v3319, %v3316
      %v3347 = vpack.c.b16 %v3323, %v3320
      %v3348 = vpack.c.b16 %v3324, %v3321
      %v3349 = vpack.c.b16 %v3325, %v3322
      %3374 = vmatpush.bf16.msra.mxu0 %v3048
      %3375 = vmatpush.bf16.msra.mxu0 %v3047
      %3376 = vmatpush.bf16.msra.mxu0 %v3046
      %3377 = vmatpush.bf16.msra.mxu0 %v3045
      %3378 = vmatpush.bf16.msra.mxu0 %v3044
      %3379 = vmatpush.bf16.msra.mxu0 %v3043
      %3380 = vmatpush.bf16.msra.mxu0 %v3042
      %3381 = vmatpush.bf16.msra.mxu0 %v3041
      %3382 = vmatmul.bf16.gmra.mxu0 %v3326
      %v3383 = vpop.f32.mrf.mxu0
      %v3384 = vadd.f32 %v3207, %v3383
      %v3385 = vpop.f32.mrf.mxu0
      %v3386 = vadd.f32 %v3209, %v3385
      %3387 = vmatmul.bf16.gmra.mxu0 %v3329
      %v3388 = vpop.f32.mrf.mxu0
      %v3389 = vadd.f32 %v3212, %v3388
      %v3390 = vpop.f32.mrf.mxu0
      %v3391 = vadd.f32 %v3214, %v3390
      %3392 = vmatmul.bf16.gmra.mxu0 %v3332
      %v3393 = vpop.f32.mrf.mxu0
      %v3394 = vadd.f32 %v3217, %v3393
      %v3395 = vpop.f32.mrf.mxu0
      %v3396 = vadd.f32 %v3219, %v3395
      %3397 = vmatmul.bf16.gmra.mxu0 %v3335
      %v3398 = vpop.f32.mrf.mxu0
      %v3399 = vadd.f32 %v3222, %v3398
      %v3400 = vpop.f32.mrf.mxu0
      %v3401 = vadd.f32 %v3224, %v3400
      %3402 = vmatmul.bf16.gmra.mxu0 %v3338
      %v3403 = vpop.f32.mrf.mxu0
      %v3404 = vadd.f32 %v3227, %v3403
      %v3405 = vpop.f32.mrf.mxu0
      %v3406 = vadd.f32 %v3229, %v3405
      %3407 = vmatmul.bf16.gmra.mxu0 %v3341
      %v3408 = vpop.f32.mrf.mxu0
      %v3409 = vadd.f32 %v3232, %v3408
      %v3410 = vpop.f32.mrf.mxu0
      %v3411 = vadd.f32 %v3234, %v3410
      %3412 = vmatmul.bf16.gmra.mxu0 %v3344
      %v3413 = vpop.f32.mrf.mxu0
      %v3414 = vadd.f32 %v3237, %v3413
      %v3415 = vpop.f32.mrf.mxu0
      %v3416 = vadd.f32 %v3239, %v3415
      %3417 = vmatmul.bf16.gmra.mxu0 %v3347
      %v3418 = vpop.f32.mrf.mxu0
      %v3419 = vadd.f32 %v3242, %v3418
      %v3420 = vpop.f32.mrf.mxu0
      %v3421 = vadd.f32 %v3244, %v3420
      %3422 = vdwg.mxu0
      %3423 = vmatpush.bf16.msra.mxu0 %v3056
      %3424 = vmatpush.bf16.msra.mxu0 %v3055
      %3425 = vmatpush.bf16.msra.mxu0 %v3054
      %3426 = vmatpush.bf16.msra.mxu0 %v3053
      %3427 = vmatpush.bf16.msra.mxu0 %v3052
      %3428 = vmatpush.bf16.msra.mxu0 %v3051
      %3429 = vmatpush.bf16.msra.mxu0 %v3050
      %3430 = vmatpush.bf16.msra.mxu0 %v3049
      %3431 = vmatmul.bf16.gmra.mxu0 %v3327
      %v3432 = vpop.f32.mrf.mxu0
      %v3433 = vadd.f32 %v3384, %v3432
      %v3434 = vpop.f32.mrf.mxu0
      %v3435 = vadd.f32 %v3386, %v3434
      %3436 = vmatmul.bf16.gmra.mxu0 %v3330
      %v3437 = vpop.f32.mrf.mxu0
      %v3438 = vadd.f32 %v3389, %v3437
      %v3439 = vpop.f32.mrf.mxu0
      %v3440 = vadd.f32 %v3391, %v3439
      %3441 = vmatmul.bf16.gmra.mxu0 %v3333
      %v3442 = vpop.f32.mrf.mxu0
      %v3443 = vadd.f32 %v3394, %v3442
      %v3444 = vpop.f32.mrf.mxu0
      %v3445 = vadd.f32 %v3396, %v3444
      %3446 = vmatmul.bf16.gmra.mxu0 %v3336
      %v3447 = vpop.f32.mrf.mxu0
      %v3448 = vadd.f32 %v3399, %v3447
      %v3449 = vpop.f32.mrf.mxu0
      %v3450 = vadd.f32 %v3401, %v3449
      %3451 = vmatmul.bf16.gmra.mxu0 %v3339
      %v3452 = vpop.f32.mrf.mxu0
      %v3453 = vadd.f32 %v3404, %v3452
      %v3454 = vpop.f32.mrf.mxu0
      %v3455 = vadd.f32 %v3406, %v3454
      %3456 = vmatmul.bf16.gmra.mxu0 %v3342
      %v3457 = vpop.f32.mrf.mxu0
      %v3458 = vadd.f32 %v3409, %v3457
      %v3459 = vpop.f32.mrf.mxu0
      %v3460 = vadd.f32 %v3411, %v3459
      %3461 = vmatmul.bf16.gmra.mxu0 %v3345
      %v3462 = vpop.f32.mrf.mxu0
      %v3463 = vadd.f32 %v3414, %v3462
      %v3464 = vpop.f32.mrf.mxu0
      %v3465 = vadd.f32 %v3416, %v3464
      %3466 = vmatmul.bf16.gmra.mxu0 %v3348
      %v3467 = vpop.f32.mrf.mxu0
      %v3468 = vadd.f32 %v3419, %v3467
      %v3469 = vpop.f32.mrf.mxu0
      %v3470 = vadd.f32 %v3421, %v3469
      %3471 = vdwg.mxu0
      %3472 = vmatpush.bf16.msra.mxu0 %v3064
      %3473 = vmatpush.bf16.msra.mxu0 %v3063
      %3474 = vmatpush.bf16.msra.mxu0 %v3062
      %3475 = vmatpush.bf16.msra.mxu0 %v3061
      %3476 = vmatpush.bf16.msra.mxu0 %v3060
      %3477 = vmatpush.bf16.msra.mxu0 %v3059
      %3478 = vmatpush.bf16.msra.mxu0 %v3058
      %3479 = vmatpush.bf16.msra.mxu0 %v3057
      %3480 = vmatmul.bf16.gmra.mxu0 %v3328
      %v3481 = vpop.f32.mrf.mxu0
      %v3482 = vadd.f32 %v3433, %v3481
      %v3483 = vpop.f32.mrf.mxu0
      %v3484 = vadd.f32 %v3435, %v3483
      %3485 = vmatmul.bf16.gmra.mxu0 %v3331
      %v3486 = vpop.f32.mrf.mxu0
      %v3487 = vadd.f32 %v3438, %v3486
      %v3488 = vpop.f32.mrf.mxu0
      %v3489 = vadd.f32 %v3440, %v3488
      %3490 = vmatmul.bf16.gmra.mxu0 %v3334
      %v3491 = vpop.f32.mrf.mxu0
      %v3492 = vadd.f32 %v3443, %v3491
      %v3493 = vpop.f32.mrf.mxu0
      %v3494 = vadd.f32 %v3445, %v3493
      %3495 = vmatmul.bf16.gmra.mxu0 %v3337
      %v3496 = vpop.f32.mrf.mxu0
      %v3497 = vadd.f32 %v3448, %v3496
      %v3498 = vpop.f32.mrf.mxu0
      %v3499 = vadd.f32 %v3450, %v3498
      %3500 = vmatmul.bf16.gmra.mxu0 %v3340
      %v3501 = vpop.f32.mrf.mxu0
      %v3502 = vadd.f32 %v3453, %v3501
      %v3503 = vpop.f32.mrf.mxu0
      %v3504 = vadd.f32 %v3455, %v3503
      %3505 = vmatmul.bf16.gmra.mxu0 %v3343
      %v3506 = vpop.f32.mrf.mxu0
      %v3507 = vadd.f32 %v3458, %v3506
      %v3508 = vpop.f32.mrf.mxu0
      %v3509 = vadd.f32 %v3460, %v3508
      %3510 = vmatmul.bf16.gmra.mxu0 %v3346
      %v3511 = vpop.f32.mrf.mxu0
      %v3512 = vadd.f32 %v3463, %v3511
      %v3513 = vpop.f32.mrf.mxu0
      %v3514 = vadd.f32 %v3465, %v3513
      %3515 = vmatmul.bf16.gmra.mxu0 %v3349
      %v3516 = vpop.f32.mrf.mxu0
      %v3517 = vadd.f32 %v3468, %v3516
      %v3518 = vpop.f32.mrf.mxu0
      %v3519 = vadd.f32 %v3470, %v3518
      %3520 = vdwg.mxu0
      %vm3521 = vcmp.lt.s32.totalorder %v520, 8
      %vm3522 = vcmp.lt.s32.totalorder %v2566, 8
      %v3523 = vsel %vm3521, 1, 0
      %v3524 = vsel %vm3522, 1, 0
      %vm3525 = vcmp.eq.s32.totalorder %v3523, 1
      %vm3526 = vcmp.eq.s32.totalorder %v3524, 1
      %v3527 = vsel %vm3525, %v3482, 0.0
      %v3528 = vsel %vm3526, %v3484, 0.0
      %v3529 = vsel %vm3525, %v3487, 0.0
      %v3530 = vsel %vm3526, %v3489, 0.0
      %v3531 = vsel %vm3525, %v3492, 0.0
      %v3532 = vsel %vm3526, %v3494, 0.0
      %v3533 = vsel %vm3525, %v3497, 0.0
      %v3534 = vsel %vm3526, %v3499, 0.0
      %v3535 = vsel %vm3525, %v3502, 0.0
      %v3536 = vsel %vm3526, %v3504, 0.0
      %v3537 = vsel %vm3525, %v3507, 0.0
      %v3538 = vsel %vm3526, %v3509, 0.0
      %v3539 = vsel %vm3525, %v3512, 0.0
      %v3540 = vsel %vm3526, %v3514, 0.0
      %v3541 = vsel %vm3525, %v3517, 0.0
      %v3542 = vsel %vm3526, %v3519, 0.0
      %v3543 = vpack.c.bf16 %v3527, %v3527
      %v3544 = vpack.c.bf16 %v3528, %v3528
      %v3545 = vpack.c.bf16 %v3529, %v3529
      %v3546 = vpack.c.bf16 %v3530, %v3530
      %v3547 = vpack.c.bf16 %v3531, %v3531
      %v3548 = vpack.c.bf16 %v3532, %v3532
      %v3549 = vpack.c.bf16 %v3533, %v3533
      %v3550 = vpack.c.bf16 %v3534, %v3534
      %v3551 = vpack.c.bf16 %v3535, %v3535
      %v3552 = vpack.c.bf16 %v3536, %v3536
      %v3553 = vpack.c.bf16 %v3537, %v3537
      %v3554 = vpack.c.bf16 %v3538, %v3538
      %v3555 = vpack.c.bf16 %v3539, %v3539
      %v3556 = vpack.c.bf16 %v3540, %v3540
      %v3557 = vpack.c.bf16 %v3541, %v3541
      %v3558 = vpack.c.bf16 %v3542, %v3542
      %s3559 = scalar_lea.vmem %s325, 8
      %3560 = vst [vmem:[%s3559] sm:$0xf] %v3543
      %3561 = vst [vmem:[%s3559 + $0x4] sm:$0xf] %v3544
      %3562 = vst [vmem:[%s3559 + $0x8] sm:$0xf] %v3545
      %3563 = vst [vmem:[%s3559 + $0xc] sm:$0xf] %v3546
      %3564 = vst [vmem:[%s3559 + $0x10] sm:$0xf] %v3547
      %3565 = vst [vmem:[%s3559 + $0x14] sm:$0xf] %v3548
      %3566 = vst [vmem:[%s3559 + $0x18] sm:$0xf] %v3549
      %3567 = vst [vmem:[%s3559 + $0x1c] sm:$0xf] %v3550
      %3568 = vst [vmem:[%s3559 + $0x20] sm:$0xf] %v3551
      %3569 = vst [vmem:[%s3559 + $0x24] sm:$0xf] %v3552
      %3570 = vst [vmem:[%s3559 + $0x28] sm:$0xf] %v3553
      %3571 = vst [vmem:[%s3559 + $0x2c] sm:$0xf] %v3554
      %3572 = vst [vmem:[%s3559 + $0x30] sm:$0xf] %v3555
      %3573 = vst [vmem:[%s3559 + $0x34] sm:$0xf] %v3556
      %3574 = vst [vmem:[%s3559 + $0x38] sm:$0xf] %v3557
      %3575 = vst [vmem:[%s3559 + $0x3c] sm:$0xf] %v3558
      %3576 = vst [vmem:[%s325] sm:$0xf] 0
      %3577 = vst [vmem:[%s325 + $0x4] sm:$0xf] 0
      %s3578 = scalar_lea.vmem %s325, 72
      %3579 = vst [vmem:[%s3578] sm:$0xf] 0
      %3580 = vst [vmem:[%s3578 + $0x4] sm:$0xf] 0
      %p3581 = scmp.lt.s32.totalorder %s19, 1
      %s3582 = scalar_select %p3581, %s19, 1
      %s3583 = smul.addr %s3582, 20
      %s3584 = smul.addr %s3583, 4
      %s3585 = scalar_lea.vmem %s8, %s3584
      // Predicated region
      $region53: #{exitflow_pallas.5} parent=51 // pred_check
        %p3586 = pneg %p215
      $region54: #{exitflow_pallas.5} parent=51 // pred_check_branch
        %3588 = sbr.rel (%p3586) target = $region56
      $region55: #{exitflow_pallas.5} parent=51 // pred_region
        _
      $region56: #{exitflow_pallas.5} parent=51 // pred_fallthru
        _
    $region52: #{exitflow_pallas.5} parent=5 // pred_fallthru
      _
    %p3589 = scmp.le.s32.totalorder 2, %s14
    // Predicated region
    $region57: #{exitflow_pallas.5} parent=5 // pred_check
      %p3590 = pneg %p3589
    $region58: #{exitflow_pallas.5} parent=5 // pred_check_branch
      %3592 = sbr.rel (%p3590) target = $region60
    $region59: #{exitflow_pallas.5} parent=5 // pred_region
      %s3593 = ssub.s32 %s14, 2
      // Predicated region
      $region61: #{exitflow_pallas.5} parent=59 // pred_check
        %p3594 = pneg %p221
      $region62: #{exitflow_pallas.5} parent=59 // pred_check_branch
        %3596 = sbr.rel (%p3594) target = $region64
      $region63: #{exitflow_pallas.5} parent=59 // pred_region
        %p3597 = scmp.lt.s32.totalorder %s20, 1
        %s3598 = scalar_select %p3597, %s20, 1
        %s3599 = smul.addr %s3598, 20
        %s3600 = smul.addr %s3599, 4
        %s3601 = scalar_lea.vmem %s8, %s3600
      $region64: #{exitflow_pallas.5} parent=59 // pred_fallthru
        _
    $region60: #{exitflow_pallas.5} parent=5 // pred_fallthru
      _
  $region6: #{exitflow_pallas.5} parent=0 // loop_footer
    %s18 = sadd.s32 1, %s14
  $region7: #{exitflow_pallas.5} parent=0 // loop_footer_branch
    %13 = sbr.rel target = $region3
  $region8: #{exitflow_pallas.5} parent=0 // loop_exit
    _

</llo_original>
